<compile_context>
chip_gen: v7x
topology: tpu7x:2x2x1
jax: 0.10.0
libtpu: 0.0.40
codegen_flags: <defaults>
</compile_context>

<pallas_src>
import jax
import jax.numpy as jnp
from jax import lax
from jax.experimental import pallas as pl
from jax.experimental.pallas import tpu as pltpu


# Each branch = 4 depthwise convs: (kernel_size, dilation, axis)
#   axis 'w' == kernel (1, k) (conv along width)
#   axis 'h' == kernel (k, 1) (conv along height)
STAGES_11 = ((3, 1, "w"), (3, 1, "h"), (5, 2, "w"), (5, 2, "h"))
STAGES_23 = ((5, 1, "w"), (5, 1, "h"), (7, 3, "w"), (7, 3, "h"))
STAGES_35 = ((5, 1, "w"), (5, 1, "h"), (11, 3, "w"), (11, 3, "h"))
BRANCHES = (("lska11", STAGES_11), ("lska23", STAGES_23), ("lska35", STAGES_35))

_SUBLANE = 8


def _round_up(n, m):
    return (n + m - 1) // m * m


def _make_fused_kernel(C, gc, id_ch, H, W, PT, PL):
    """One kernel body: identity passthrough + all 3 LSKA branches."""
    n_in = 1 + 5 * len(BRANCHES)  # x + per branch (4 weights + 1 bias array)

    def kernel(*args):
        x_ref = args[0]
        o_ref = args[n_in]
        slab_a = args[n_in + 1]
        slab_b = args[n_in + 2]

        # Zero both padded slabs once per grid step.  Every stage fully
        # overwrites the interior, so the halo stays zero for every branch
        # and stage (no per-stage re-zeroing).
        slab_a[...] = jnp.zeros_like(slab_a)
        slab_b[...] = jnp.zeros_like(slab_b)

        # Identity channels pass straight through to the output block.
        if id_ch > 0:
            o_ref[0, :id_ch, :, :] = x_ref[0, :id_ch, :, :]

        for br, (_, stages) in enumerate(BRANCHES):
            w_refs = args[1 + 5 * br: 1 + 5 * br + 4]
            b_ref = args[1 + 5 * br + 4]
            cs = id_ch + br * gc  # static channel offset of this branch

            # Branch input -> interior of slab A (f32).
            slab_a[:, PT:PT + H, PL:PL + W] = (
                x_ref[0, cs:cs + gc, :, :].astype(jnp.float32))

            src, dst = slab_a, slab_b
            n_stage = len(stages)
            for s, ((k, dil, axis), w_ref) in enumerate(zip(stages, w_refs)):
                pad = dil * (k - 1) // 2  # "same" padding (matches PyTorch)
                n_acc = 2 if k <= 5 else 4  # break the serial add chain
                acc = [None] * n_acc
                for i in range(k):  # static unroll over taps
                    off = i * dil - pad  # python int, |off| <= PT
                    wi = w_ref[i]        # (gc, 1, W) lane vector
                    if axis == "w":
                        sl = src[:, PT:PT + H, PL + off:PL + off + W]
                    else:
                        sl = src[:, PT + off:PT + off + H, PL:PL + W]
                    term = wi * sl
                    j = i % n_acc
                    acc[j] = term if acc[j] is None else acc[j] + term
                # tree-sum the partial accumulators
                parts = [a for a in acc if a is not None]
                while len(parts) > 1:
                    nxt = [parts[t] + parts[t + 1]
                           for t in range(0, len(parts) - 1, 2)]
                    if len(parts) % 2:
                        nxt.append(parts[-1])
                    parts = nxt
                res = parts[0] + b_ref[s]  # (gc, 1, W) bias, sublane broadcast

                if s == n_stage - 1:
                    # Last stage writes straight into the output block.
                    o_ref[0, cs:cs + gc, :, :] = res.astype(o_ref.dtype)
                else:
                    dst[:, PT:PT + H, PL:PL + W] = res
                    src, dst = dst, src

    return kernel


def multiscale_lsk(x, params, gc):
    """Forward pass of MultiscaleLSK. x: (B, C, H, W), NCHW."""
    B, C, H, W = x.shape
    id_ch = C - 3 * gc

    # Max "same" padding across every stage of every branch (= 15 here).
    P = max(d * (k - 1) // 2 for _, stages in BRANCHES for (k, d, _) in stages)
    PT = _round_up(max(P, 1), _SUBLANE)   # sublane-aligned interior origin
    PL = PT
    HP = _round_up(PT + H + P, _SUBLANE)  # padded slab height
    WP = _round_up(PL + W + P, _SUBLANE)  # padded slab width

    args = [x]
    in_specs = [pl.BlockSpec((1, C, H, W), lambda b: (b, 0, 0, 0))]
    for name, stages in BRANCHES:
        ws, bs = params[name]
        # Per-stage tap weights as (k, gc, 1, W) lane vectors (VMEM).
        for (k, d, ax), w in zip(stages, ws):
            wb = jnp.broadcast_to(
                w.T.astype(jnp.float32)[:, :, None, None], (k, gc, 1, W))
            args.append(wb)
            in_specs.append(
                pl.BlockSpec((k, gc, 1, W), lambda b: (0, 0, 0, 0)))
        # Per-stage biases stacked: (n_stage, gc, 1, W).
        bias = jnp.stack([b.astype(jnp.float32) for b in bs], axis=0)
        bias_b = jnp.broadcast_to(bias[:, :, None, None],
                                  (len(stages), gc, 1, W))
        args.append(bias_b)
        in_specs.append(
            pl.BlockSpec((len(stages), gc, 1, W), lambda b: (0, 0, 0, 0)))

    kernel = _make_fused_kernel(C, gc, id_ch, H, W, PT, PL)

    return pl.pallas_call(
        kernel,
        out_shape=jax.ShapeDtypeStruct((B, C, H, W), x.dtype),
        grid=(B,),
        in_specs=in_specs,
        out_specs=pl.BlockSpec((1, C, H, W), lambda b: (b, 0, 0, 0)),
        scratch_shapes=[pltpu.VMEM((gc, HP, WP), jnp.float32),
                        pltpu.VMEM((gc, HP, WP), jnp.float32)],
        compiler_params=pltpu.CompilerParams(
            dimension_semantics=("parallel",),
            vmem_limit_bytes=32 * 1024 * 1024),
    )(*args)


# ----------------------------- pure-JAX reference -----------------------------
def _depthwise_conv_ref(x, w_flat, bias, k, dil, axis):
    gc = x.shape[1]
    pad = dil * (k - 1) // 2
    if axis == "w":
        w = w_flat.reshape(gc, 1, 1, k)
        rhs_dil, padding = (1, dil), ((0, 0), (pad, pad))
    else:
        w = w_flat.reshape(gc, 1, k, 1)
        rhs_dil, padding = (dil, 1), ((pad, pad), (0, 0))
    out = lax.conv_general_dilated(
        x, w, window_strides=(1, 1), padding=padding, rhs_dilation=rhs_dil,
        feature_group_count=gc, dimension_numbers=("NCHW", "OIHW", "NCHW"))
    return out + bias.reshape(1, gc, 1, 1)


def multiscale_lsk_ref(x, params, gc):
    C = x.shape[1]
    id_ch = C - 3 * gc
    outs = [x[:, :id_ch]]
    for i, (name, stages) in enumerate(BRANCHES):
        xb = x[:, id_ch + i * gc: id_ch + (i + 1) * gc]
        ws, bs = params[name]
        cur = xb
        for (k, dil, axis), w, b in zip(stages, ws, bs):
            cur = _depthwise_conv_ref(cur, w, b, k, dil, axis)
        outs.append(cur)
    return jnp.concatenate(outs, axis=1)


# ----------------------------- parameter init ---------------------------------
def init_params(key, gc):
    """Deterministic conv weights/biases (PyTorch-style uniform bounds)."""
    params = {}
    for name, stages in BRANCHES:
        ws, bs = [], []
        for (k, _, _) in stages:
            key, kw, kb = jax.random.split(key, 3)
            bound = 1.0 / (k ** 0.5)  # fan_in of a depthwise 1-D conv = k
            ws.append(jax.random.uniform(kw, (gc, k), jnp.float32, -bound, bound))
            bs.append(jax.random.uniform(kb, (gc,), jnp.float32, -bound, bound))
        params[name] = (ws, bs)
    return params


if __name__ == "__main__":
    B, C, H, W = 2, 16, 16, 16
    branch_ratio = 0.25
    gc = int(C * branch_ratio)  # 4, split_indexes = (4, 4, 4, 4)

    key = jax.random.PRNGKey(0)
    kx, kp = jax.random.split(key)
    x = jax.random.normal(kx, (B, C, H, W), jnp.float32)
    params = init_params(kp, gc)

    out = multiscale_lsk(x, params, gc)
    out = jax.block_until_ready(out)

    ref = multiscale_lsk_ref(x, params, gc)
    assert out.shape == (B, C, H, W)
    if not bool(jnp.allclose(out, ref, atol=1e-4, rtol=1e-4)):
        raise RuntimeError("Pallas MultiscaleLSK does not match JAX reference")
    print("KERNEL_OK")
</pallas_src>

<mosaic_0001>
module attributes {stable_mosaic.version = 11 : i64} {
  func.func @kernel(%arg0: i32, %arg1: memref<1x16x16x16xf32, #tpu.memory_space<vmem>>, %arg2: memref<3x4x1x16xf32, #tpu.memory_space<vmem>>, %arg3: memref<3x4x1x16xf32, #tpu.memory_space<vmem>>, %arg4: memref<5x4x1x16xf32, #tpu.memory_space<vmem>>, %arg5: memref<5x4x1x16xf32, #tpu.memory_space<vmem>>, %arg6: memref<4x4x1x16xf32, #tpu.memory_space<vmem>>, %arg7: memref<5x4x1x16xf32, #tpu.memory_space<vmem>>, %arg8: memref<5x4x1x16xf32, #tpu.memory_space<vmem>>, %arg9: memref<7x4x1x16xf32, #tpu.memory_space<vmem>>, %arg10: memref<7x4x1x16xf32, #tpu.memory_space<vmem>>, %arg11: memref<4x4x1x16xf32, #tpu.memory_space<vmem>>, %arg12: memref<5x4x1x16xf32, #tpu.memory_space<vmem>>, %arg13: memref<5x4x1x16xf32, #tpu.memory_space<vmem>>, %arg14: memref<11x4x1x16xf32, #tpu.memory_space<vmem>>, %arg15: memref<11x4x1x16xf32, #tpu.memory_space<vmem>>, %arg16: memref<4x4x1x16xf32, #tpu.memory_space<vmem>>, %arg17: memref<1x16x16x16xf32, #tpu.memory_space<vmem>>, %arg18: memref<4x48x48xf32, #tpu.memory_space<vmem>>, %arg19: memref<4x48x48xf32, #tpu.memory_space<vmem>>) attributes {dimension_semantics = [#tpu.dimension_semantics<parallel>], iteration_bounds = array<i64: 2>, scalar_prefetch = 0 : i64, scratch_operands = 2 : i64, tpu.core_type = #tpu.core_type<tc>, window_params = [{transform_indices = @transform_0, window_bounds = array<i64: 1, 16, 16, 16>}, {pipeline_mode = #tpu.pipeline_mode<synchronous>, transform_indices = @transform_1, window_bounds = array<i64: 3, 4, 1, 16>}, {pipeline_mode = #tpu.pipeline_mode<synchronous>, transform_indices = @transform_2, window_bounds = array<i64: 3, 4, 1, 16>}, {pipeline_mode = #tpu.pipeline_mode<synchronous>, transform_indices = @transform_3, window_bounds = array<i64: 5, 4, 1, 16>}, {pipeline_mode = #tpu.pipeline_mode<synchronous>, transform_indices = @transform_4, window_bounds = array<i64: 5, 4, 1, 16>}, {pipeline_mode = #tpu.pipeline_mode<synchronous>, transform_indices = @transform_5, window_bounds = array<i64: 4, 4, 1, 16>}, {pipeline_mode = #tpu.pipeline_mode<synchronous>, transform_indices = @transform_6, window_bounds = array<i64: 5, 4, 1, 16>}, {pipeline_mode = #tpu.pipeline_mode<synchronous>, transform_indices = @transform_7, window_bounds = array<i64: 5, 4, 1, 16>}, {pipeline_mode = #tpu.pipeline_mode<synchronous>, transform_indices = @transform_8, window_bounds = array<i64: 7, 4, 1, 16>}, {pipeline_mode = #tpu.pipeline_mode<synchronous>, transform_indices = @transform_9, window_bounds = array<i64: 7, 4, 1, 16>}, {pipeline_mode = #tpu.pipeline_mode<synchronous>, transform_indices = @transform_10, window_bounds = array<i64: 4, 4, 1, 16>}, {pipeline_mode = #tpu.pipeline_mode<synchronous>, transform_indices = @transform_11, window_bounds = array<i64: 5, 4, 1, 16>}, {pipeline_mode = #tpu.pipeline_mode<synchronous>, transform_indices = @transform_12, window_bounds = array<i64: 5, 4, 1, 16>}, {pipeline_mode = #tpu.pipeline_mode<synchronous>, transform_indices = @transform_13, window_bounds = array<i64: 11, 4, 1, 16>}, {pipeline_mode = #tpu.pipeline_mode<synchronous>, transform_indices = @transform_14, window_bounds = array<i64: 11, 4, 1, 16>}, {pipeline_mode = #tpu.pipeline_mode<synchronous>, transform_indices = @transform_15, window_bounds = array<i64: 4, 4, 1, 16>}, {transform_indices = @transform_16, window_bounds = array<i64: 1, 16, 16, 16>}]} {
    %cst = arith.constant 0.000000e+00 : f32
    %0 = vector.broadcast %cst : f32 to vector<4x48x48xf32>
    %c0 = arith.constant 0 : index
    %c0_0 = arith.constant 0 : index
    %c0_1 = arith.constant 0 : index
    %1 = vector.load %arg18[%c0, %c0_0, %c0_1] : memref<4x48x48xf32, #tpu.memory_space<vmem>>, vector<4x48x48xf32>
    tpu.vector_store %arg18[%c0, %c0_0, %c0_1], %0 {strides = array<i32>} : memref<4x48x48xf32, #tpu.memory_space<vmem>>, vector<4x48x48xf32>,
    %cst_2 = arith.constant 0.000000e+00 : f32
    %2 = vector.broadcast %cst_2 : f32 to vector<4x48x48xf32>
    %c0_3 = arith.constant 0 : index
    %c0_4 = arith.constant 0 : index
    %c0_5 = arith.constant 0 : index
    %3 = vector.load %arg19[%c0_3, %c0_4, %c0_5] : memref<4x48x48xf32, #tpu.memory_space<vmem>>, vector<4x48x48xf32>
    tpu.vector_store %arg19[%c0_3, %c0_4, %c0_5], %2 {strides = array<i32>} : memref<4x48x48xf32, #tpu.memory_space<vmem>>, vector<4x48x48xf32>,
    %c0_6 = arith.constant 0 : index
    %c0_7 = arith.constant 0 : index
    %c0_8 = arith.constant 0 : index
    %c0_9 = arith.constant 0 : index
    %4 = vector.load %arg1[%c0_6, %c0_7, %c0_8, %c0_9] : memref<1x16x16x16xf32, #tpu.memory_space<vmem>>, vector<1x4x16x16xf32>
    %5 = vector.shape_cast %4 : vector<1x4x16x16xf32> to vector<4x16x16xf32>
    %c0_10 = arith.constant 0 : index
    %c0_11 = arith.constant 0 : index
    %c0_12 = arith.constant 0 : index
    %c0_13 = arith.constant 0 : index
    %6 = vector.load %arg17[%c0_10, %c0_11, %c0_12, %c0_13] : memref<1x16x16x16xf32, #tpu.memory_space<vmem>>, vector<1x4x16x16xf32>
    %7 = vector.shape_cast %6 : vector<1x4x16x16xf32> to vector<4x16x16xf32>
    %8 = vector.shape_cast %5 : vector<4x16x16xf32> to vector<1x4x16x16xf32>
    tpu.vector_store %arg17[%c0_10, %c0_11, %c0_12, %c0_13], %8 {strides = array<i32>} : memref<1x16x16x16xf32, #tpu.memory_space<vmem>>, vector<1x4x16x16xf32>,
    %c0_14 = arith.constant 0 : index
    %c4 = arith.constant 4 : index
    %c0_15 = arith.constant 0 : index
    %c0_16 = arith.constant 0 : index
    %9 = vector.load %arg1[%c0_14, %c4, %c0_15, %c0_16] : memref<1x16x16x16xf32, #tpu.memory_space<vmem>>, vector<1x4x16x16xf32>
    %10 = vector.shape_cast %9 : vector<1x4x16x16xf32> to vector<4x16x16xf32>
    %c0_17 = arith.constant 0 : index
    %c16 = arith.constant 16 : index
    %c16_18 = arith.constant 16 : index
    %11 = vector.load %arg18[%c0_17, %c16, %c16_18] : memref<4x48x48xf32, #tpu.memory_space<vmem>>, vector<4x16x16xf32>
    tpu.vector_store %arg18[%c0_17, %c16, %c16_18], %10 {strides = array<i32>} : memref<4x48x48xf32, #tpu.memory_space<vmem>>, vector<4x16x16xf32>,
    %c0_19 = arith.constant 0 : index
    %c0_20 = arith.constant 0 : index
    %c0_21 = arith.constant 0 : index
    %c0_22 = arith.constant 0 : index
    %12 = vector.load %arg2[%c0_19, %c0_20, %c0_21, %c0_22] : memref<3x4x1x16xf32, #tpu.memory_space<vmem>>, vector<1x4x1x16xf32>
    %13 = vector.shape_cast %12 : vector<1x4x1x16xf32> to vector<4x1x16xf32>
    %c0_23 = arith.constant 0 : index
    %c16_24 = arith.constant 16 : index
    %c15 = arith.constant 15 : index
    %14 = vector.load %arg18[%c0_23, %c16_24, %c15] : memref<4x48x48xf32, #tpu.memory_space<vmem>>, vector<4x16x16xf32>
    %15 = vector.broadcast %13 : vector<4x1x16xf32> to vector<4x16x16xf32>
    %16 = arith.mulf %15, %14 : vector<4x16x16xf32>
    %c1 = arith.constant 1 : index
    %c0_25 = arith.constant 0 : index
    %c0_26 = arith.constant 0 : index
    %c0_27 = arith.constant 0 : index
    %17 = vector.load %arg2[%c1, %c0_25, %c0_26, %c0_27] : memref<3x4x1x16xf32, #tpu.memory_space<vmem>>, vector<1x4x1x16xf32>
    %18 = vector.shape_cast %17 : vector<1x4x1x16xf32> to vector<4x1x16xf32>
    %c0_28 = arith.constant 0 : index
    %c16_29 = arith.constant 16 : index
    %c16_30 = arith.constant 16 : index
    %19 = vector.load %arg18[%c0_28, %c16_29, %c16_30] : memref<4x48x48xf32, #tpu.memory_space<vmem>>, vector<4x16x16xf32>
    %20 = vector.broadcast %18 : vector<4x1x16xf32> to vector<4x16x16xf32>
    %21 = arith.mulf %20, %19 : vector<4x16x16xf32>
    %c2 = arith.constant 2 : index
    %c0_31 = arith.constant 0 : index
    %c0_32 = arith.constant 0 : index
    %c0_33 = arith.constant 0 : index
    %22 = vector.load %arg2[%c2, %c0_31, %c0_32, %c0_33] : memref<3x4x1x16xf32, #tpu.memory_space<vmem>>, vector<1x4x1x16xf32>
    %23 = vector.shape_cast %22 : vector<1x4x1x16xf32> to vector<4x1x16xf32>
    %c0_34 = arith.constant 0 : index
    %c16_35 = arith.constant 16 : index
    %c17 = arith.constant 17 : index
    %24 = vector.load %arg18[%c0_34, %c16_35, %c17] : memref<4x48x48xf32, #tpu.memory_space<vmem>>, vector<4x16x16xf32>
    %25 = vector.broadcast %23 : vector<4x1x16xf32> to vector<4x16x16xf32>
    %26 = arith.mulf %25, %24 : vector<4x16x16xf32>
    %27 = arith.addf %16, %26 : vector<4x16x16xf32>
    %28 = arith.addf %27, %21 : vector<4x16x16xf32>
    %c0_36 = arith.constant 0 : index
    %c0_37 = arith.constant 0 : index
    %c0_38 = arith.constant 0 : index
    %c0_39 = arith.constant 0 : index
    %29 = vector.load %arg6[%c0_36, %c0_37, %c0_38, %c0_39] : memref<4x4x1x16xf32, #tpu.memory_space<vmem>>, vector<1x4x1x16xf32>
    %30 = vector.shape_cast %29 : vector<1x4x1x16xf32> to vector<4x1x16xf32>
    %31 = vector.broadcast %30 : vector<4x1x16xf32> to vector<4x16x16xf32>
    %32 = arith.addf %28, %31 : vector<4x16x16xf32>
    %c0_40 = arith.constant 0 : index
    %c16_41 = arith.constant 16 : index
    %c16_42 = arith.constant 16 : index
    %33 = vector.load %arg19[%c0_40, %c16_41, %c16_42] : memref<4x48x48xf32, #tpu.memory_space<vmem>>, vector<4x16x16xf32>
    tpu.vector_store %arg19[%c0_40, %c16_41, %c16_42], %32 {strides = array<i32>} : memref<4x48x48xf32, #tpu.memory_space<vmem>>, vector<4x16x16xf32>,
    %c0_43 = arith.constant 0 : index
    %c0_44 = arith.constant 0 : index
    %c0_45 = arith.constant 0 : index
    %c0_46 = arith.constant 0 : index
    %34 = vector.load %arg3[%c0_43, %c0_44, %c0_45, %c0_46] : memref<3x4x1x16xf32, #tpu.memory_space<vmem>>, vector<1x4x1x16xf32>
    %35 = vector.shape_cast %34 : vector<1x4x1x16xf32> to vector<4x1x16xf32>
    %c0_47 = arith.constant 0 : index
    %c15_48 = arith.constant 15 : index
    %c16_49 = arith.constant 16 : index
    %36 = vector.load %arg19[%c0_47, %c15_48, %c16_49] : memref<4x48x48xf32, #tpu.memory_space<vmem>>, vector<4x16x16xf32>
    %37 = vector.broadcast %35 : vector<4x1x16xf32> to vector<4x16x16xf32>
    %38 = arith.mulf %37, %36 : vector<4x16x16xf32>
    %c1_50 = arith.constant 1 : index
    %c0_51 = arith.constant 0 : index
    %c0_52 = arith.constant 0 : index
    %c0_53 = arith.constant 0 : index
    %39 = vector.load %arg3[%c1_50, %c0_51, %c0_52, %c0_53] : memref<3x4x1x16xf32, #tpu.memory_space<vmem>>, vector<1x4x1x16xf32>
    %40 = vector.shape_cast %39 : vector<1x4x1x16xf32> to vector<4x1x16xf32>
    %c0_54 = arith.constant 0 : index
    %c16_55 = arith.constant 16 : index
    %c16_56 = arith.constant 16 : index
    %41 = vector.load %arg19[%c0_54, %c16_55, %c16_56] : memref<4x48x48xf32, #tpu.memory_space<vmem>>, vector<4x16x16xf32>
    %42 = vector.broadcast %40 : vector<4x1x16xf32> to vector<4x16x16xf32>
    %43 = arith.mulf %42, %41 : vector<4x16x16xf32>
    %c2_57 = arith.constant 2 : index
    %c0_58 = arith.constant 0 : index
    %c0_59 = arith.constant 0 : index
    %c0_60 = arith.constant 0 : index
    %44 = vector.load %arg3[%c2_57, %c0_58, %c0_59, %c0_60] : memref<3x4x1x16xf32, #tpu.memory_space<vmem>>, vector<1x4x1x16xf32>
    %45 = vector.shape_cast %44 : vector<1x4x1x16xf32> to vector<4x1x16xf32>
    %c0_61 = arith.constant 0 : index
    %c17_62 = arith.constant 17 : index
    %c16_63 = arith.constant 16 : index
    %46 = vector.load %arg19[%c0_61, %c17_62, %c16_63] : memref<4x48x48xf32, #tpu.memory_space<vmem>>, vector<4x16x16xf32>
    %47 = vector.broadcast %45 : vector<4x1x16xf32> to vector<4x16x16xf32>
    %48 = arith.mulf %47, %46 : vector<4x16x16xf32>
    %49 = arith.addf %38, %48 : vector<4x16x16xf32>
    %50 = arith.addf %49, %43 : vector<4x16x16xf32>
    %c1_64 = arith.constant 1 : index
    %c0_65 = arith.constant 0 : index
    %c0_66 = arith.constant 0 : index
    %c0_67 = arith.constant 0 : index
    %51 = vector.load %arg6[%c1_64, %c0_65, %c0_66, %c0_67] : memref<4x4x1x16xf32, #tpu.memory_space<vmem>>, vector<1x4x1x16xf32>
    %52 = vector.shape_cast %51 : vector<1x4x1x16xf32> to vector<4x1x16xf32>
    %53 = vector.broadcast %52 : vector<4x1x16xf32> to vector<4x16x16xf32>
    %54 = arith.addf %50, %53 : vector<4x16x16xf32>
    %c0_68 = arith.constant 0 : index
    %c16_69 = arith.constant 16 : index
    %c16_70 = arith.constant 16 : index
    %55 = vector.load %arg18[%c0_68, %c16_69, %c16_70] : memref<4x48x48xf32, #tpu.memory_space<vmem>>, vector<4x16x16xf32>
    tpu.vector_store %arg18[%c0_68, %c16_69, %c16_70], %54 {strides = array<i32>} : memref<4x48x48xf32, #tpu.memory_space<vmem>>, vector<4x16x16xf32>,
    %c0_71 = arith.constant 0 : index
    %c0_72 = arith.constant 0 : index
    %c0_73 = arith.constant 0 : index
    %c0_74 = arith.constant 0 : index
    %56 = vector.load %arg4[%c0_71, %c0_72, %c0_73, %c0_74] : memref<5x4x1x16xf32, #tpu.memory_space<vmem>>, vector<1x4x1x16xf32>
    %57 = vector.shape_cast %56 : vector<1x4x1x16xf32> to vector<4x1x16xf32>
    %c0_75 = arith.constant 0 : index
    %c16_76 = arith.constant 16 : index
    %c12 = arith.constant 12 : index
    %58 = vector.load %arg18[%c0_75, %c16_76, %c12] : memref<4x48x48xf32, #tpu.memory_space<vmem>>, vector<4x16x16xf32>
    %59 = vector.broadcast %57 : vector<4x1x16xf32> to vector<4x16x16xf32>
    %60 = arith.mulf %59, %58 : vector<4x16x16xf32>
    %c1_77 = arith.constant 1 : index
    %c0_78 = arith.constant 0 : index
    %c0_79 = arith.constant 0 : index
    %c0_80 = arith.constant 0 : index
    %61 = vector.load %arg4[%c1_77, %c0_78, %c0_79, %c0_80] : memref<5x4x1x16xf32, #tpu.memory_space<vmem>>, vector<1x4x1x16xf32>
    %62 = vector.shape_cast %61 : vector<1x4x1x16xf32> to vector<4x1x16xf32>
    %c0_81 = arith.constant 0 : index
    %c16_82 = arith.constant 16 : index
    %c14 = arith.constant 14 : index
    %63 = vector.load %arg18[%c0_81, %c16_82, %c14] : memref<4x48x48xf32, #tpu.memory_space<vmem>>, vector<4x16x16xf32>
    %64 = vector.broadcast %62 : vector<4x1x16xf32> to vector<4x16x16xf32>
    %65 = arith.mulf %64, %63 : vector<4x16x16xf32>
    %c2_83 = arith.constant 2 : index
    %c0_84 = arith.constant 0 : index
    %c0_85 = arith.constant 0 : index
    %c0_86 = arith.constant 0 : index
    %66 = vector.load %arg4[%c2_83, %c0_84, %c0_85, %c0_86] : memref<5x4x1x16xf32, #tpu.memory_space<vmem>>, vector<1x4x1x16xf32>
    %67 = vector.shape_cast %66 : vector<1x4x1x16xf32> to vector<4x1x16xf32>
    %c0_87 = arith.constant 0 : index
    %c16_88 = arith.constant 16 : index
    %c16_89 = arith.constant 16 : index
    %68 = vector.load %arg18[%c0_87, %c16_88, %c16_89] : memref<4x48x48xf32, #tpu.memory_space<vmem>>, vector<4x16x16xf32>
    %69 = vector.broadcast %67 : vector<4x1x16xf32> to vector<4x16x16xf32>
    %70 = arith.mulf %69, %68 : vector<4x16x16xf32>
    %71 = arith.addf %60, %70 : vector<4x16x16xf32>
    %c3 = arith.constant 3 : index
    %c0_90 = arith.constant 0 : index
    %c0_91 = arith.constant 0 : index
    %c0_92 = arith.constant 0 : index
    %72 = vector.load %arg4[%c3, %c0_90, %c0_91, %c0_92] : memref<5x4x1x16xf32, #tpu.memory_space<vmem>>, vector<1x4x1x16xf32>
    %73 = vector.shape_cast %72 : vector<1x4x1x16xf32> to vector<4x1x16xf32>
    %c0_93 = arith.constant 0 : index
    %c16_94 = arith.constant 16 : index
    %c18 = arith.constant 18 : index
    %74 = vector.load %arg18[%c0_93, %c16_94, %c18] : memref<4x48x48xf32, #tpu.memory_space<vmem>>, vector<4x16x16xf32>
    %75 = vector.broadcast %73 : vector<4x1x16xf32> to vector<4x16x16xf32>
    %76 = arith.mulf %75, %74 : vector<4x16x16xf32>
    %77 = arith.addf %65, %76 : vector<4x16x16xf32>
    %c4_95 = arith.constant 4 : index
    %c0_96 = arith.constant 0 : index
    %c0_97 = arith.constant 0 : index
    %c0_98 = arith.constant 0 : index
    %78 = vector.load %arg4[%c4_95, %c0_96, %c0_97, %c0_98] : memref<5x4x1x16xf32, #tpu.memory_space<vmem>>, vector<1x4x1x16xf32>
    %79 = vector.shape_cast %78 : vector<1x4x1x16xf32> to vector<4x1x16xf32>
    %c0_99 = arith.constant 0 : index
    %c16_100 = arith.constant 16 : index
    %c20 = arith.constant 20 : index
    %80 = vector.load %arg18[%c0_99, %c16_100, %c20] : memref<4x48x48xf32, #tpu.memory_space<vmem>>, vector<4x16x16xf32>
    %81 = vector.broadcast %79 : vector<4x1x16xf32> to vector<4x16x16xf32>
    %82 = arith.mulf %81, %80 : vector<4x16x16xf32>
    %83 = arith.addf %71, %82 : vector<4x16x16xf32>
    %84 = arith.addf %83, %77 : vector<4x16x16xf32>
    %c2_101 = arith.constant 2 : index
    %c0_102 = arith.constant 0 : index
    %c0_103 = arith.constant 0 : index
    %c0_104 = arith.constant 0 : index
    %85 = vector.load %arg6[%c2_101, %c0_102, %c0_103, %c0_104] : memref<4x4x1x16xf32, #tpu.memory_space<vmem>>, vector<1x4x1x16xf32>
    %86 = vector.shape_cast %85 : vector<1x4x1x16xf32> to vector<4x1x16xf32>
    %87 = vector.broadcast %86 : vector<4x1x16xf32> to vector<4x16x16xf32>
    %88 = arith.addf %84, %87 : vector<4x16x16xf32>
    %c0_105 = arith.constant 0 : index
    %c16_106 = arith.constant 16 : index
    %c16_107 = arith.constant 16 : index
    %89 = vector.load %arg19[%c0_105, %c16_106, %c16_107] : memref<4x48x48xf32, #tpu.memory_space<vmem>>, vector<4x16x16xf32>
    tpu.vector_store %arg19[%c0_105, %c16_106, %c16_107], %88 {strides = array<i32>} : memref<4x48x48xf32, #tpu.memory_space<vmem>>, vector<4x16x16xf32>,
    %c0_108 = arith.constant 0 : index
    %c0_109 = arith.constant 0 : index
    %c0_110 = arith.constant 0 : index
    %c0_111 = arith.constant 0 : index
    %90 = vector.load %arg5[%c0_108, %c0_109, %c0_110, %c0_111] : memref<5x4x1x16xf32, #tpu.memory_space<vmem>>, vector<1x4x1x16xf32>
    %91 = vector.shape_cast %90 : vector<1x4x1x16xf32> to vector<4x1x16xf32>
    %c0_112 = arith.constant 0 : index
    %c12_113 = arith.constant 12 : index
    %c16_114 = arith.constant 16 : index
    %92 = vector.load %arg19[%c0_112, %c12_113, %c16_114] : memref<4x48x48xf32, #tpu.memory_space<vmem>>, vector<4x16x16xf32>
    %93 = vector.broadcast %91 : vector<4x1x16xf32> to vector<4x16x16xf32>
    %94 = arith.mulf %93, %92 : vector<4x16x16xf32>
    %c1_115 = arith.constant 1 : index
    %c0_116 = arith.constant 0 : index
    %c0_117 = arith.constant 0 : index
    %c0_118 = arith.constant 0 : index
    %95 = vector.load %arg5[%c1_115, %c0_116, %c0_117, %c0_118] : memref<5x4x1x16xf32, #tpu.memory_space<vmem>>, vector<1x4x1x16xf32>
    %96 = vector.shape_cast %95 : vector<1x4x1x16xf32> to vector<4x1x16xf32>
    %c0_119 = arith.constant 0 : index
    %c14_120 = arith.constant 14 : index
    %c16_121 = arith.constant 16 : index
    %97 = vector.load %arg19[%c0_119, %c14_120, %c16_121] : memref<4x48x48xf32, #tpu.memory_space<vmem>>, vector<4x16x16xf32>
    %98 = vector.broadcast %96 : vector<4x1x16xf32> to vector<4x16x16xf32>
    %99 = arith.mulf %98, %97 : vector<4x16x16xf32>
    %c2_122 = arith.constant 2 : index
    %c0_123 = arith.constant 0 : index
    %c0_124 = arith.constant 0 : index
    %c0_125 = arith.constant 0 : index
    %100 = vector.load %arg5[%c2_122, %c0_123, %c0_124, %c0_125] : memref<5x4x1x16xf32, #tpu.memory_space<vmem>>, vector<1x4x1x16xf32>
    %101 = vector.shape_cast %100 : vector<1x4x1x16xf32> to vector<4x1x16xf32>
    %c0_126 = arith.constant 0 : index
    %c16_127 = arith.constant 16 : index
    %c16_128 = arith.constant 16 : index
    %102 = vector.load %arg19[%c0_126, %c16_127, %c16_128] : memref<4x48x48xf32, #tpu.memory_space<vmem>>, vector<4x16x16xf32>
    %103 = vector.broadcast %101 : vector<4x1x16xf32> to vector<4x16x16xf32>
    %104 = arith.mulf %103, %102 : vector<4x16x16xf32>
    %105 = arith.addf %94, %104 : vector<4x16x16xf32>
    %c3_129 = arith.constant 3 : index
    %c0_130 = arith.constant 0 : index
    %c0_131 = arith.constant 0 : index
    %c0_132 = arith.constant 0 : index
    %106 = vector.load %arg5[%c3_129, %c0_130, %c0_131, %c0_132] : memref<5x4x1x16xf32, #tpu.memory_space<vmem>>, vector<1x4x1x16xf32>
    %107 = vector.shape_cast %106 : vector<1x4x1x16xf32> to vector<4x1x16xf32>
    %c0_133 = arith.constant 0 : index
    %c18_134 = arith.constant 18 : index
    %c16_135 = arith.constant 16 : index
    %108 = vector.load %arg19[%c0_133, %c18_134, %c16_135] : memref<4x48x48xf32, #tpu.memory_space<vmem>>, vector<4x16x16xf32>
    %109 = vector.broadcast %107 : vector<4x1x16xf32> to vector<4x16x16xf32>
    %110 = arith.mulf %109, %108 : vector<4x16x16xf32>
    %111 = arith.addf %99, %110 : vector<4x16x16xf32>
    %c4_136 = arith.constant 4 : index
    %c0_137 = arith.constant 0 : index
    %c0_138 = arith.constant 0 : index
    %c0_139 = arith.constant 0 : index
    %112 = vector.load %arg5[%c4_136, %c0_137, %c0_138, %c0_139] : memref<5x4x1x16xf32, #tpu.memory_space<vmem>>, vector<1x4x1x16xf32>
    %113 = vector.shape_cast %112 : vector<1x4x1x16xf32> to vector<4x1x16xf32>
    %c0_140 = arith.constant 0 : index
    %c20_141 = arith.constant 20 : index
    %c16_142 = arith.constant 16 : index
    %114 = vector.load %arg19[%c0_140, %c20_141, %c16_142] : memref<4x48x48xf32, #tpu.memory_space<vmem>>, vector<4x16x16xf32>
    %115 = vector.broadcast %113 : vector<4x1x16xf32> to vector<4x16x16xf32>
    %116 = arith.mulf %115, %114 : vector<4x16x16xf32>
    %117 = arith.addf %105, %116 : vector<4x16x16xf32>
    %118 = arith.addf %117, %111 : vector<4x16x16xf32>
    %c3_143 = arith.constant 3 : index
    %c0_144 = arith.constant 0 : index
    %c0_145 = arith.constant 0 : index
    %c0_146 = arith.constant 0 : index
    %119 = vector.load %arg6[%c3_143, %c0_144, %c0_145, %c0_146] : memref<4x4x1x16xf32, #tpu.memory_space<vmem>>, vector<1x4x1x16xf32>
    %120 = vector.shape_cast %119 : vector<1x4x1x16xf32> to vector<4x1x16xf32>
    %121 = vector.broadcast %120 : vector<4x1x16xf32> to vector<4x16x16xf32>
    %122 = arith.addf %118, %121 : vector<4x16x16xf32>
    %c0_147 = arith.constant 0 : index
    %c4_148 = arith.constant 4 : index
    %c0_149 = arith.constant 0 : index
    %c0_150 = arith.constant 0 : index
    %123 = vector.load %arg17[%c0_147, %c4_148, %c0_149, %c0_150] : memref<1x16x16x16xf32, #tpu.memory_space<vmem>>, vector<1x4x16x16xf32>
    %124 = vector.shape_cast %123 : vector<1x4x16x16xf32> to vector<4x16x16xf32>
    %125 = vector.shape_cast %122 : vector<4x16x16xf32> to vector<1x4x16x16xf32>
    tpu.vector_store %arg17[%c0_147, %c4_148, %c0_149, %c0_150], %125 {strides = array<i32>} : memref<1x16x16x16xf32, #tpu.memory_space<vmem>>, vector<1x4x16x16xf32>,
    %c0_151 = arith.constant 0 : index
    %c8 = arith.constant 8 : index
    %c0_152 = arith.constant 0 : index
    %c0_153 = arith.constant 0 : index
    %126 = vector.load %arg1[%c0_151, %c8, %c0_152, %c0_153] : memref<1x16x16x16xf32, #tpu.memory_space<vmem>>, vector<1x4x16x16xf32>
    %127 = vector.shape_cast %126 : vector<1x4x16x16xf32> to vector<4x16x16xf32>
    %c0_154 = arith.constant 0 : index
    %c16_155 = arith.constant 16 : index
    %c16_156 = arith.constant 16 : index
    %128 = vector.load %arg18[%c0_154, %c16_155, %c16_156] : memref<4x48x48xf32, #tpu.memory_space<vmem>>, vector<4x16x16xf32>
    tpu.vector_store %arg18[%c0_154, %c16_155, %c16_156], %127 {strides = array<i32>} : memref<4x48x48xf32, #tpu.memory_space<vmem>>, vector<4x16x16xf32>,
    %c0_157 = arith.constant 0 : index
    %c0_158 = arith.constant 0 : index
    %c0_159 = arith.constant 0 : index
    %c0_160 = arith.constant 0 : index
    %129 = vector.load %arg7[%c0_157, %c0_158, %c0_159, %c0_160] : memref<5x4x1x16xf32, #tpu.memory_space<vmem>>, vector<1x4x1x16xf32>
    %130 = vector.shape_cast %129 : vector<1x4x1x16xf32> to vector<4x1x16xf32>
    %c0_161 = arith.constant 0 : index
    %c16_162 = arith.constant 16 : index
    %c14_163 = arith.constant 14 : index
    %131 = vector.load %arg18[%c0_161, %c16_162, %c14_163] : memref<4x48x48xf32, #tpu.memory_space<vmem>>, vector<4x16x16xf32>
    %132 = vector.broadcast %130 : vector<4x1x16xf32> to vector<4x16x16xf32>
    %133 = arith.mulf %132, %131 : vector<4x16x16xf32>
    %c1_164 = arith.constant 1 : index
    %c0_165 = arith.constant 0 : index
    %c0_166 = arith.constant 0 : index
    %c0_167 = arith.constant 0 : index
    %134 = vector.load %arg7[%c1_164, %c0_165, %c0_166, %c0_167] : memref<5x4x1x16xf32, #tpu.memory_space<vmem>>, vector<1x4x1x16xf32>
    %135 = vector.shape_cast %134 : vector<1x4x1x16xf32> to vector<4x1x16xf32>
    %c0_168 = arith.constant 0 : index
    %c16_169 = arith.constant 16 : index
    %c15_170 = arith.constant 15 : index
    %136 = vector.load %arg18[%c0_168, %c16_169, %c15_170] : memref<4x48x48xf32, #tpu.memory_space<vmem>>, vector<4x16x16xf32>
    %137 = vector.broadcast %135 : vector<4x1x16xf32> to vector<4x16x16xf32>
    %138 = arith.mulf %137, %136 : vector<4x16x16xf32>
    %c2_171 = arith.constant 2 : index
    %c0_172 = arith.constant 0 : index
    %c0_173 = arith.constant 0 : index
    %c0_174 = arith.constant 0 : index
    %139 = vector.load %arg7[%c2_171, %c0_172, %c0_173, %c0_174] : memref<5x4x1x16xf32, #tpu.memory_space<vmem>>, vector<1x4x1x16xf32>
    %140 = vector.shape_cast %139 : vector<1x4x1x16xf32> to vector<4x1x16xf32>
    %c0_175 = arith.constant 0 : index
    %c16_176 = arith.constant 16 : index
    %c16_177 = arith.constant 16 : index
    %141 = vector.load %arg18[%c0_175, %c16_176, %c16_177] : memref<4x48x48xf32, #tpu.memory_space<vmem>>, vector<4x16x16xf32>
    %142 = vector.broadcast %140 : vector<4x1x16xf32> to vector<4x16x16xf32>
    %143 = arith.mulf %142, %141 : vector<4x16x16xf32>
    %144 = arith.addf %133, %143 : vector<4x16x16xf32>
    %c3_178 = arith.constant 3 : index
    %c0_179 = arith.constant 0 : index
    %c0_180 = arith.constant 0 : index
    %c0_181 = arith.constant 0 : index
    %145 = vector.load %arg7[%c3_178, %c0_179, %c0_180, %c0_181] : memref<5x4x1x16xf32, #tpu.memory_space<vmem>>, vector<1x4x1x16xf32>
    %146 = vector.shape_cast %145 : vector<1x4x1x16xf32> to vector<4x1x16xf32>
    %c0_182 = arith.constant 0 : index
    %c16_183 = arith.constant 16 : index
    %c17_184 = arith.constant 17 : index
    %147 = vector.load %arg18[%c0_182, %c16_183, %c17_184] : memref<4x48x48xf32, #tpu.memory_space<vmem>>, vector<4x16x16xf32>
    %148 = vector.broadcast %146 : vector<4x1x16xf32> to vector<4x16x16xf32>
    %149 = arith.mulf %148, %147 : vector<4x16x16xf32>
    %150 = arith.addf %138, %149 : vector<4x16x16xf32>
    %c4_185 = arith.constant 4 : index
    %c0_186 = arith.constant 0 : index
    %c0_187 = arith.constant 0 : index
    %c0_188 = arith.constant 0 : index
    %151 = vector.load %arg7[%c4_185, %c0_186, %c0_187, %c0_188] : memref<5x4x1x16xf32, #tpu.memory_space<vmem>>, vector<1x4x1x16xf32>
    %152 = vector.shape_cast %151 : vector<1x4x1x16xf32> to vector<4x1x16xf32>
    %c0_189 = arith.constant 0 : index
    %c16_190 = arith.constant 16 : index
    %c18_191 = arith.constant 18 : index
    %153 = vector.load %arg18[%c0_189, %c16_190, %c18_191] : memref<4x48x48xf32, #tpu.memory_space<vmem>>, vector<4x16x16xf32>
    %154 = vector.broadcast %152 : vector<4x1x16xf32> to vector<4x16x16xf32>
    %155 = arith.mulf %154, %153 : vector<4x16x16xf32>
    %156 = arith.addf %144, %155 : vector<4x16x16xf32>
    %157 = arith.addf %156, %150 : vector<4x16x16xf32>
    %c0_192 = arith.constant 0 : index
    %c0_193 = arith.constant 0 : index
    %c0_194 = arith.constant 0 : index
    %c0_195 = arith.constant 0 : index
    %158 = vector.load %arg11[%c0_192, %c0_193, %c0_194, %c0_195] : memref<4x4x1x16xf32, #tpu.memory_space<vmem>>, vector<1x4x1x16xf32>
    %159 = vector.shape_cast %158 : vector<1x4x1x16xf32> to vector<4x1x16xf32>
    %160 = vector.broadcast %159 : vector<4x1x16xf32> to vector<4x16x16xf32>
    %161 = arith.addf %157, %160 : vector<4x16x16xf32>
    %c0_196 = arith.constant 0 : index
    %c16_197 = arith.constant 16 : index
    %c16_198 = arith.constant 16 : index
    %162 = vector.load %arg19[%c0_196, %c16_197, %c16_198] : memref<4x48x48xf32, #tpu.memory_space<vmem>>, vector<4x16x16xf32>
    tpu.vector_store %arg19[%c0_196, %c16_197, %c16_198], %161 {strides = array<i32>} : memref<4x48x48xf32, #tpu.memory_space<vmem>>, vector<4x16x16xf32>,
    %c0_199 = arith.constant 0 : index
    %c0_200 = arith.constant 0 : index
    %c0_201 = arith.constant 0 : index
    %c0_202 = arith.constant 0 : index
    %163 = vector.load %arg8[%c0_199, %c0_200, %c0_201, %c0_202] : memref<5x4x1x16xf32, #tpu.memory_space<vmem>>, vector<1x4x1x16xf32>
    %164 = vector.shape_cast %163 : vector<1x4x1x16xf32> to vector<4x1x16xf32>
    %c0_203 = arith.constant 0 : index
    %c14_204 = arith.constant 14 : index
    %c16_205 = arith.constant 16 : index
    %165 = vector.load %arg19[%c0_203, %c14_204, %c16_205] : memref<4x48x48xf32, #tpu.memory_space<vmem>>, vector<4x16x16xf32>
    %166 = vector.broadcast %164 : vector<4x1x16xf32> to vector<4x16x16xf32>
    %167 = arith.mulf %166, %165 : vector<4x16x16xf32>
    %c1_206 = arith.constant 1 : index
    %c0_207 = arith.constant 0 : index
    %c0_208 = arith.constant 0 : index
    %c0_209 = arith.constant 0 : index
    %168 = vector.load %arg8[%c1_206, %c0_207, %c0_208, %c0_209] : memref<5x4x1x16xf32, #tpu.memory_space<vmem>>, vector<1x4x1x16xf32>
    %169 = vector.shape_cast %168 : vector<1x4x1x16xf32> to vector<4x1x16xf32>
    %c0_210 = arith.constant 0 : index
    %c15_211 = arith.constant 15 : index
    %c16_212 = arith.constant 16 : index
    %170 = vector.load %arg19[%c0_210, %c15_211, %c16_212] : memref<4x48x48xf32, #tpu.memory_space<vmem>>, vector<4x16x16xf32>
    %171 = vector.broadcast %169 : vector<4x1x16xf32> to vector<4x16x16xf32>
    %172 = arith.mulf %171, %170 : vector<4x16x16xf32>
    %c2_213 = arith.constant 2 : index
    %c0_214 = arith.constant 0 : index
    %c0_215 = arith.constant 0 : index
    %c0_216 = arith.constant 0 : index
    %173 = vector.load %arg8[%c2_213, %c0_214, %c0_215, %c0_216] : memref<5x4x1x16xf32, #tpu.memory_space<vmem>>, vector<1x4x1x16xf32>
    %174 = vector.shape_cast %173 : vector<1x4x1x16xf32> to vector<4x1x16xf32>
    %c0_217 = arith.constant 0 : index
    %c16_218 = arith.constant 16 : index
    %c16_219 = arith.constant 16 : index
    %175 = vector.load %arg19[%c0_217, %c16_218, %c16_219] : memref<4x48x48xf32, #tpu.memory_space<vmem>>, vector<4x16x16xf32>
    %176 = vector.broadcast %174 : vector<4x1x16xf32> to vector<4x16x16xf32>
    %177 = arith.mulf %176, %175 : vector<4x16x16xf32>
    %178 = arith.addf %167, %177 : vector<4x16x16xf32>
    %c3_220 = arith.constant 3 : index
    %c0_221 = arith.constant 0 : index
    %c0_222 = arith.constant 0 : index
    %c0_223 = arith.constant 0 : index
    %179 = vector.load %arg8[%c3_220, %c0_221, %c0_222, %c0_223] : memref<5x4x1x16xf32, #tpu.memory_space<vmem>>, vector<1x4x1x16xf32>
    %180 = vector.shape_cast %179 : vector<1x4x1x16xf32> to vector<4x1x16xf32>
    %c0_224 = arith.constant 0 : index
    %c17_225 = arith.constant 17 : index
    %c16_226 = arith.constant 16 : index
    %181 = vector.load %arg19[%c0_224, %c17_225, %c16_226] : memref<4x48x48xf32, #tpu.memory_space<vmem>>, vector<4x16x16xf32>
    %182 = vector.broadcast %180 : vector<4x1x16xf32> to vector<4x16x16xf32>
    %183 = arith.mulf %182, %181 : vector<4x16x16xf32>
    %184 = arith.addf %172, %183 : vector<4x16x16xf32>
    %c4_227 = arith.constant 4 : index
    %c0_228 = arith.constant 0 : index
    %c0_229 = arith.constant 0 : index
    %c0_230 = arith.constant 0 : index
    %185 = vector.load %arg8[%c4_227, %c0_228, %c0_229, %c0_230] : memref<5x4x1x16xf32, #tpu.memory_space<vmem>>, vector<1x4x1x16xf32>
    %186 = vector.shape_cast %185 : vector<1x4x1x16xf32> to vector<4x1x16xf32>
    %c0_231 = arith.constant 0 : index
    %c18_232 = arith.constant 18 : index
    %c16_233 = arith.constant 16 : index
    %187 = vector.load %arg19[%c0_231, %c18_232, %c16_233] : memref<4x48x48xf32, #tpu.memory_space<vmem>>, vector<4x16x16xf32>
    %188 = vector.broadcast %186 : vector<4x1x16xf32> to vector<4x16x16xf32>
    %189 = arith.mulf %188, %187 : vector<4x16x16xf32>
    %190 = arith.addf %178, %189 : vector<4x16x16xf32>
    %191 = arith.addf %190, %184 : vector<4x16x16xf32>
    %c1_234 = arith.constant 1 : index
    %c0_235 = arith.constant 0 : index
    %c0_236 = arith.constant 0 : index
    %c0_237 = arith.constant 0 : index
    %192 = vector.load %arg11[%c1_234, %c0_235, %c0_236, %c0_237] : memref<4x4x1x16xf32, #tpu.memory_space<vmem>>, vector<1x4x1x16xf32>
    %193 = vector.shape_cast %192 : vector<1x4x1x16xf32> to vector<4x1x16xf32>
    %194 = vector.broadcast %193 : vector<4x1x16xf32> to vector<4x16x16xf32>
    %195 = arith.addf %191, %194 : vector<4x16x16xf32>
    %c0_238 = arith.constant 0 : index
    %c16_239 = arith.constant 16 : index
    %c16_240 = arith.constant 16 : index
    %196 = vector.load %arg18[%c0_238, %c16_239, %c16_240] : memref<4x48x48xf32, #tpu.memory_space<vmem>>, vector<4x16x16xf32>
    tpu.vector_store %arg18[%c0_238, %c16_239, %c16_240], %195 {strides = array<i32>} : memref<4x48x48xf32, #tpu.memory_space<vmem>>, vector<4x16x16xf32>,
    %c0_241 = arith.constant 0 : index
    %c0_242 = arith.constant 0 : index
    %c0_243 = arith.constant 0 : index
    %c0_244 = arith.constant 0 : index
    %197 = vector.load %arg9[%c0_241, %c0_242, %c0_243, %c0_244] : memref<7x4x1x16xf32, #tpu.memory_space<vmem>>, vector<1x4x1x16xf32>
    %198 = vector.shape_cast %197 : vector<1x4x1x16xf32> to vector<4x1x16xf32>
    %c0_245 = arith.constant 0 : index
    %c16_246 = arith.constant 16 : index
    %c7 = arith.constant 7 : index
    %199 = vector.load %arg18[%c0_245, %c16_246, %c7] : memref<4x48x48xf32, #tpu.memory_space<vmem>>, vector<4x16x16xf32>
    %200 = vector.broadcast %198 : vector<4x1x16xf32> to vector<4x16x16xf32>
    %201 = arith.mulf %200, %199 : vector<4x16x16xf32>
    %c1_247 = arith.constant 1 : index
    %c0_248 = arith.constant 0 : index
    %c0_249 = arith.constant 0 : index
    %c0_250 = arith.constant 0 : index
    %202 = vector.load %arg9[%c1_247, %c0_248, %c0_249, %c0_250] : memref<7x4x1x16xf32, #tpu.memory_space<vmem>>, vector<1x4x1x16xf32>
    %203 = vector.shape_cast %202 : vector<1x4x1x16xf32> to vector<4x1x16xf32>
    %c0_251 = arith.constant 0 : index
    %c16_252 = arith.constant 16 : index
    %c10 = arith.constant 10 : index
    %204 = vector.load %arg18[%c0_251, %c16_252, %c10] : memref<4x48x48xf32, #tpu.memory_space<vmem>>, vector<4x16x16xf32>
    %205 = vector.broadcast %203 : vector<4x1x16xf32> to vector<4x16x16xf32>
    %206 = arith.mulf %205, %204 : vector<4x16x16xf32>
    %c2_253 = arith.constant 2 : index
    %c0_254 = arith.constant 0 : index
    %c0_255 = arith.constant 0 : index
    %c0_256 = arith.constant 0 : index
    %207 = vector.load %arg9[%c2_253, %c0_254, %c0_255, %c0_256] : memref<7x4x1x16xf32, #tpu.memory_space<vmem>>, vector<1x4x1x16xf32>
    %208 = vector.shape_cast %207 : vector<1x4x1x16xf32> to vector<4x1x16xf32>
    %c0_257 = arith.constant 0 : index
    %c16_258 = arith.constant 16 : index
    %c13 = arith.constant 13 : index
    %209 = vector.load %arg18[%c0_257, %c16_258, %c13] : memref<4x48x48xf32, #tpu.memory_space<vmem>>, vector<4x16x16xf32>
    %210 = vector.broadcast %208 : vector<4x1x16xf32> to vector<4x16x16xf32>
    %211 = arith.mulf %210, %209 : vector<4x16x16xf32>
    %c3_259 = arith.constant 3 : index
    %c0_260 = arith.constant 0 : index
    %c0_261 = arith.constant 0 : index
    %c0_262 = arith.constant 0 : index
    %212 = vector.load %arg9[%c3_259, %c0_260, %c0_261, %c0_262] : memref<7x4x1x16xf32, #tpu.memory_space<vmem>>, vector<1x4x1x16xf32>
    %213 = vector.shape_cast %212 : vector<1x4x1x16xf32> to vector<4x1x16xf32>
    %c0_263 = arith.constant 0 : index
    %c16_264 = arith.constant 16 : index
    %c16_265 = arith.constant 16 : index
    %214 = vector.load %arg18[%c0_263, %c16_264, %c16_265] : memref<4x48x48xf32, #tpu.memory_space<vmem>>, vector<4x16x16xf32>
    %215 = vector.broadcast %213 : vector<4x1x16xf32> to vector<4x16x16xf32>
    %216 = arith.mulf %215, %214 : vector<4x16x16xf32>
    %c4_266 = arith.constant 4 : index
    %c0_267 = arith.constant 0 : index
    %c0_268 = arith.constant 0 : index
    %c0_269 = arith.constant 0 : index
    %217 = vector.load %arg9[%c4_266, %c0_267, %c0_268, %c0_269] : memref<7x4x1x16xf32, #tpu.memory_space<vmem>>, vector<1x4x1x16xf32>
    %218 = vector.shape_cast %217 : vector<1x4x1x16xf32> to vector<4x1x16xf32>
    %c0_270 = arith.constant 0 : index
    %c16_271 = arith.constant 16 : index
    %c19 = arith.constant 19 : index
    %219 = vector.load %arg18[%c0_270, %c16_271, %c19] : memref<4x48x48xf32, #tpu.memory_space<vmem>>, vector<4x16x16xf32>
    %220 = vector.broadcast %218 : vector<4x1x16xf32> to vector<4x16x16xf32>
    %221 = arith.mulf %220, %219 : vector<4x16x16xf32>
    %222 = arith.addf %201, %221 : vector<4x16x16xf32>
    %c5 = arith.constant 5 : index
    %c0_272 = arith.constant 0 : index
    %c0_273 = arith.constant 0 : index
    %c0_274 = arith.constant 0 : index
    %223 = vector.load %arg9[%c5, %c0_272, %c0_273, %c0_274] : memref<7x4x1x16xf32, #tpu.memory_space<vmem>>, vector<1x4x1x16xf32>
    %224 = vector.shape_cast %223 : vector<1x4x1x16xf32> to vector<4x1x16xf32>
    %c0_275 = arith.constant 0 : index
    %c16_276 = arith.constant 16 : index
    %c22 = arith.constant 22 : index
    %225 = vector.load %arg18[%c0_275, %c16_276, %c22] : memref<4x48x48xf32, #tpu.memory_space<vmem>>, vector<4x16x16xf32>
    %226 = vector.broadcast %224 : vector<4x1x16xf32> to vector<4x16x16xf32>
    %227 = arith.mulf %226, %225 : vector<4x16x16xf32>
    %228 = arith.addf %206, %227 : vector<4x16x16xf32>
    %c6 = arith.constant 6 : index
    %c0_277 = arith.constant 0 : index
    %c0_278 = arith.constant 0 : index
    %c0_279 = arith.constant 0 : index
    %229 = vector.load %arg9[%c6, %c0_277, %c0_278, %c0_279] : memref<7x4x1x16xf32, #tpu.memory_space<vmem>>, vector<1x4x1x16xf32>
    %230 = vector.shape_cast %229 : vector<1x4x1x16xf32> to vector<4x1x16xf32>
    %c0_280 = arith.constant 0 : index
    %c16_281 = arith.constant 16 : index
    %c25 = arith.constant 25 : index
    %231 = vector.load %arg18[%c0_280, %c16_281, %c25] : memref<4x48x48xf32, #tpu.memory_space<vmem>>, vector<4x16x16xf32>
    %232 = vector.broadcast %230 : vector<4x1x16xf32> to vector<4x16x16xf32>
    %233 = arith.mulf %232, %231 : vector<4x16x16xf32>
    %234 = arith.addf %211, %233 : vector<4x16x16xf32>
    %235 = arith.addf %222, %228 : vector<4x16x16xf32>
    %236 = arith.addf %234, %216 : vector<4x16x16xf32>
    %237 = arith.addf %235, %236 : vector<4x16x16xf32>
    %c2_282 = arith.constant 2 : index
    %c0_283 = arith.constant 0 : index
    %c0_284 = arith.constant 0 : index
    %c0_285 = arith.constant 0 : index
    %238 = vector.load %arg11[%c2_282, %c0_283, %c0_284, %c0_285] : memref<4x4x1x16xf32, #tpu.memory_space<vmem>>, vector<1x4x1x16xf32>
    %239 = vector.shape_cast %238 : vector<1x4x1x16xf32> to vector<4x1x16xf32>
    %240 = vector.broadcast %239 : vector<4x1x16xf32> to vector<4x16x16xf32>
    %241 = arith.addf %237, %240 : vector<4x16x16xf32>
    %c0_286 = arith.constant 0 : index
    %c16_287 = arith.constant 16 : index
    %c16_288 = arith.constant 16 : index
    %242 = vector.load %arg19[%c0_286, %c16_287, %c16_288] : memref<4x48x48xf32, #tpu.memory_space<vmem>>, vector<4x16x16xf32>
    tpu.vector_store %arg19[%c0_286, %c16_287, %c16_288], %241 {strides = array<i32>} : memref<4x48x48xf32, #tpu.memory_space<vmem>>, vector<4x16x16xf32>,
    %c0_289 = arith.constant 0 : index
    %c0_290 = arith.constant 0 : index
    %c0_291 = arith.constant 0 : index
    %c0_292 = arith.constant 0 : index
    %243 = vector.load %arg10[%c0_289, %c0_290, %c0_291, %c0_292] : memref<7x4x1x16xf32, #tpu.memory_space<vmem>>, vector<1x4x1x16xf32>
    %244 = vector.shape_cast %243 : vector<1x4x1x16xf32> to vector<4x1x16xf32>
    %c0_293 = arith.constant 0 : index
    %c7_294 = arith.constant 7 : index
    %c16_295 = arith.constant 16 : index
    %245 = vector.load %arg19[%c0_293, %c7_294, %c16_295] : memref<4x48x48xf32, #tpu.memory_space<vmem>>, vector<4x16x16xf32>
    %246 = vector.broadcast %244 : vector<4x1x16xf32> to vector<4x16x16xf32>
    %247 = arith.mulf %246, %245 : vector<4x16x16xf32>
    %c1_296 = arith.constant 1 : index
    %c0_297 = arith.constant 0 : index
    %c0_298 = arith.constant 0 : index
    %c0_299 = arith.constant 0 : index
    %248 = vector.load %arg10[%c1_296, %c0_297, %c0_298, %c0_299] : memref<7x4x1x16xf32, #tpu.memory_space<vmem>>, vector<1x4x1x16xf32>
    %249 = vector.shape_cast %248 : vector<1x4x1x16xf32> to vector<4x1x16xf32>
    %c0_300 = arith.constant 0 : index
    %c10_301 = arith.constant 10 : index
    %c16_302 = arith.constant 16 : index
    %250 = vector.load %arg19[%c0_300, %c10_301, %c16_302] : memref<4x48x48xf32, #tpu.memory_space<vmem>>, vector<4x16x16xf32>
    %251 = vector.broadcast %249 : vector<4x1x16xf32> to vector<4x16x16xf32>
    %252 = arith.mulf %251, %250 : vector<4x16x16xf32>
    %c2_303 = arith.constant 2 : index
    %c0_304 = arith.constant 0 : index
    %c0_305 = arith.constant 0 : index
    %c0_306 = arith.constant 0 : index
    %253 = vector.load %arg10[%c2_303, %c0_304, %c0_305, %c0_306] : memref<7x4x1x16xf32, #tpu.memory_space<vmem>>, vector<1x4x1x16xf32>
    %254 = vector.shape_cast %253 : vector<1x4x1x16xf32> to vector<4x1x16xf32>
    %c0_307 = arith.constant 0 : index
    %c13_308 = arith.constant 13 : index
    %c16_309 = arith.constant 16 : index
    %255 = vector.load %arg19[%c0_307, %c13_308, %c16_309] : memref<4x48x48xf32, #tpu.memory_space<vmem>>, vector<4x16x16xf32>
    %256 = vector.broadcast %254 : vector<4x1x16xf32> to vector<4x16x16xf32>
    %257 = arith.mulf %256, %255 : vector<4x16x16xf32>
    %c3_310 = arith.constant 3 : index
    %c0_311 = arith.constant 0 : index
    %c0_312 = arith.constant 0 : index
    %c0_313 = arith.constant 0 : index
    %258 = vector.load %arg10[%c3_310, %c0_311, %c0_312, %c0_313] : memref<7x4x1x16xf32, #tpu.memory_space<vmem>>, vector<1x4x1x16xf32>
    %259 = vector.shape_cast %258 : vector<1x4x1x16xf32> to vector<4x1x16xf32>
    %c0_314 = arith.constant 0 : index
    %c16_315 = arith.constant 16 : index
    %c16_316 = arith.constant 16 : index
    %260 = vector.load %arg19[%c0_314, %c16_315, %c16_316] : memref<4x48x48xf32, #tpu.memory_space<vmem>>, vector<4x16x16xf32>
    %261 = vector.broadcast %259 : vector<4x1x16xf32> to vector<4x16x16xf32>
    %262 = arith.mulf %261, %260 : vector<4x16x16xf32>
    %c4_317 = arith.constant 4 : index
    %c0_318 = arith.constant 0 : index
    %c0_319 = arith.constant 0 : index
    %c0_320 = arith.constant 0 : index
    %263 = vector.load %arg10[%c4_317, %c0_318, %c0_319, %c0_320] : memref<7x4x1x16xf32, #tpu.memory_space<vmem>>, vector<1x4x1x16xf32>
    %264 = vector.shape_cast %263 : vector<1x4x1x16xf32> to vector<4x1x16xf32>
    %c0_321 = arith.constant 0 : index
    %c19_322 = arith.constant 19 : index
    %c16_323 = arith.constant 16 : index
    %265 = vector.load %arg19[%c0_321, %c19_322, %c16_323] : memref<4x48x48xf32, #tpu.memory_space<vmem>>, vector<4x16x16xf32>
    %266 = vector.broadcast %264 : vector<4x1x16xf32> to vector<4x16x16xf32>
    %267 = arith.mulf %266, %265 : vector<4x16x16xf32>
    %268 = arith.addf %247, %267 : vector<4x16x16xf32>
    %c5_324 = arith.constant 5 : index
    %c0_325 = arith.constant 0 : index
    %c0_326 = arith.constant 0 : index
    %c0_327 = arith.constant 0 : index
    %269 = vector.load %arg10[%c5_324, %c0_325, %c0_326, %c0_327] : memref<7x4x1x16xf32, #tpu.memory_space<vmem>>, vector<1x4x1x16xf32>
    %270 = vector.shape_cast %269 : vector<1x4x1x16xf32> to vector<4x1x16xf32>
    %c0_328 = arith.constant 0 : index
    %c22_329 = arith.constant 22 : index
    %c16_330 = arith.constant 16 : index
    %271 = vector.load %arg19[%c0_328, %c22_329, %c16_330] : memref<4x48x48xf32, #tpu.memory_space<vmem>>, vector<4x16x16xf32>
    %272 = vector.broadcast %270 : vector<4x1x16xf32> to vector<4x16x16xf32>
    %273 = arith.mulf %272, %271 : vector<4x16x16xf32>
    %274 = arith.addf %252, %273 : vector<4x16x16xf32>
    %c6_331 = arith.constant 6 : index
    %c0_332 = arith.constant 0 : index
    %c0_333 = arith.constant 0 : index
    %c0_334 = arith.constant 0 : index
    %275 = vector.load %arg10[%c6_331, %c0_332, %c0_333, %c0_334] : memref<7x4x1x16xf32, #tpu.memory_space<vmem>>, vector<1x4x1x16xf32>
    %276 = vector.shape_cast %275 : vector<1x4x1x16xf32> to vector<4x1x16xf32>
    %c0_335 = arith.constant 0 : index
    %c25_336 = arith.constant 25 : index
    %c16_337 = arith.constant 16 : index
    %277 = vector.load %arg19[%c0_335, %c25_336, %c16_337] : memref<4x48x48xf32, #tpu.memory_space<vmem>>, vector<4x16x16xf32>
    %278 = vector.broadcast %276 : vector<4x1x16xf32> to vector<4x16x16xf32>
    %279 = arith.mulf %278, %277 : vector<4x16x16xf32>
    %280 = arith.addf %257, %279 : vector<4x16x16xf32>
    %281 = arith.addf %268, %274 : vector<4x16x16xf32>
    %282 = arith.addf %280, %262 : vector<4x16x16xf32>
    %283 = arith.addf %281, %282 : vector<4x16x16xf32>
    %c3_338 = arith.constant 3 : index
    %c0_339 = arith.constant 0 : index
    %c0_340 = arith.constant 0 : index
    %c0_341 = arith.constant 0 : index
    %284 = vector.load %arg11[%c3_338, %c0_339, %c0_340, %c0_341] : memref<4x4x1x16xf32, #tpu.memory_space<vmem>>, vector<1x4x1x16xf32>
    %285 = vector.shape_cast %284 : vector<1x4x1x16xf32> to vector<4x1x16xf32>
    %286 = vector.broadcast %285 : vector<4x1x16xf32> to vector<4x16x16xf32>
    %287 = arith.addf %283, %286 : vector<4x16x16xf32>
    %c0_342 = arith.constant 0 : index
    %c8_343 = arith.constant 8 : index
    %c0_344 = arith.constant 0 : index
    %c0_345 = arith.constant 0 : index
    %288 = vector.load %arg17[%c0_342, %c8_343, %c0_344, %c0_345] : memref<1x16x16x16xf32, #tpu.memory_space<vmem>>, vector<1x4x16x16xf32>
    %289 = vector.shape_cast %288 : vector<1x4x16x16xf32> to vector<4x16x16xf32>
    %290 = vector.shape_cast %287 : vector<4x16x16xf32> to vector<1x4x16x16xf32>
    tpu.vector_store %arg17[%c0_342, %c8_343, %c0_344, %c0_345], %290 {strides = array<i32>} : memref<1x16x16x16xf32, #tpu.memory_space<vmem>>, vector<1x4x16x16xf32>,
    %c0_346 = arith.constant 0 : index
    %c12_347 = arith.constant 12 : index
    %c0_348 = arith.constant 0 : index
    %c0_349 = arith.constant 0 : index
    %291 = vector.load %arg1[%c0_346, %c12_347, %c0_348, %c0_349] : memref<1x16x16x16xf32, #tpu.memory_space<vmem>>, vector<1x4x16x16xf32>
    %292 = vector.shape_cast %291 : vector<1x4x16x16xf32> to vector<4x16x16xf32>
    %c0_350 = arith.constant 0 : index
    %c16_351 = arith.constant 16 : index
    %c16_352 = arith.constant 16 : index
    %293 = vector.load %arg18[%c0_350, %c16_351, %c16_352] : memref<4x48x48xf32, #tpu.memory_space<vmem>>, vector<4x16x16xf32>
    tpu.vector_store %arg18[%c0_350, %c16_351, %c16_352], %292 {strides = array<i32>} : memref<4x48x48xf32, #tpu.memory_space<vmem>>, vector<4x16x16xf32>,
    %c0_353 = arith.constant 0 : index
    %c0_354 = arith.constant 0 : index
    %c0_355 = arith.constant 0 : index
    %c0_356 = arith.constant 0 : index
    %294 = vector.load %arg12[%c0_353, %c0_354, %c0_355, %c0_356] : memref<5x4x1x16xf32, #tpu.memory_space<vmem>>, vector<1x4x1x16xf32>
    %295 = vector.shape_cast %294 : vector<1x4x1x16xf32> to vector<4x1x16xf32>
    %c0_357 = arith.constant 0 : index
    %c16_358 = arith.constant 16 : index
    %c14_359 = arith.constant 14 : index
    %296 = vector.load %arg18[%c0_357, %c16_358, %c14_359] : memref<4x48x48xf32, #tpu.memory_space<vmem>>, vector<4x16x16xf32>
    %297 = vector.broadcast %295 : vector<4x1x16xf32> to vector<4x16x16xf32>
    %298 = arith.mulf %297, %296 : vector<4x16x16xf32>
    %c1_360 = arith.constant 1 : index
    %c0_361 = arith.constant 0 : index
    %c0_362 = arith.constant 0 : index
    %c0_363 = arith.constant 0 : index
    %299 = vector.load %arg12[%c1_360, %c0_361, %c0_362, %c0_363] : memref<5x4x1x16xf32, #tpu.memory_space<vmem>>, vector<1x4x1x16xf32>
    %300 = vector.shape_cast %299 : vector<1x4x1x16xf32> to vector<4x1x16xf32>
    %c0_364 = arith.constant 0 : index
    %c16_365 = arith.constant 16 : index
    %c15_366 = arith.constant 15 : index
    %301 = vector.load %arg18[%c0_364, %c16_365, %c15_366] : memref<4x48x48xf32, #tpu.memory_space<vmem>>, vector<4x16x16xf32>
    %302 = vector.broadcast %300 : vector<4x1x16xf32> to vector<4x16x16xf32>
    %303 = arith.mulf %302, %301 : vector<4x16x16xf32>
    %c2_367 = arith.constant 2 : index
    %c0_368 = arith.constant 0 : index
    %c0_369 = arith.constant 0 : index
    %c0_370 = arith.constant 0 : index
    %304 = vector.load %arg12[%c2_367, %c0_368, %c0_369, %c0_370] : memref<5x4x1x16xf32, #tpu.memory_space<vmem>>, vector<1x4x1x16xf32>
    %305 = vector.shape_cast %304 : vector<1x4x1x16xf32> to vector<4x1x16xf32>
    %c0_371 = arith.constant 0 : index
    %c16_372 = arith.constant 16 : index
    %c16_373 = arith.constant 16 : index
    %306 = vector.load %arg18[%c0_371, %c16_372, %c16_373] : memref<4x48x48xf32, #tpu.memory_space<vmem>>, vector<4x16x16xf32>
    %307 = vector.broadcast %305 : vector<4x1x16xf32> to vector<4x16x16xf32>
    %308 = arith.mulf %307, %306 : vector<4x16x16xf32>
    %309 = arith.addf %298, %308 : vector<4x16x16xf32>
    %c3_374 = arith.constant 3 : index
    %c0_375 = arith.constant 0 : index
    %c0_376 = arith.constant 0 : index
    %c0_377 = arith.constant 0 : index
    %310 = vector.load %arg12[%c3_374, %c0_375, %c0_376, %c0_377] : memref<5x4x1x16xf32, #tpu.memory_space<vmem>>, vector<1x4x1x16xf32>
    %311 = vector.shape_cast %310 : vector<1x4x1x16xf32> to vector<4x1x16xf32>
    %c0_378 = arith.constant 0 : index
    %c16_379 = arith.constant 16 : index
    %c17_380 = arith.constant 17 : index
    %312 = vector.load %arg18[%c0_378, %c16_379, %c17_380] : memref<4x48x48xf32, #tpu.memory_space<vmem>>, vector<4x16x16xf32>
    %313 = vector.broadcast %311 : vector<4x1x16xf32> to vector<4x16x16xf32>
    %314 = arith.mulf %313, %312 : vector<4x16x16xf32>
    %315 = arith.addf %303, %314 : vector<4x16x16xf32>
    %c4_381 = arith.constant 4 : index
    %c0_382 = arith.constant 0 : index
    %c0_383 = arith.constant 0 : index
    %c0_384 = arith.constant 0 : index
    %316 = vector.load %arg12[%c4_381, %c0_382, %c0_383, %c0_384] : memref<5x4x1x16xf32, #tpu.memory_space<vmem>>, vector<1x4x1x16xf32>
    %317 = vector.shape_cast %316 : vector<1x4x1x16xf32> to vector<4x1x16xf32>
    %c0_385 = arith.constant 0 : index
    %c16_386 = arith.constant 16 : index
    %c18_387 = arith.constant 18 : index
    %318 = vector.load %arg18[%c0_385, %c16_386, %c18_387] : memref<4x48x48xf32, #tpu.memory_space<vmem>>, vector<4x16x16xf32>
    %319 = vector.broadcast %317 : vector<4x1x16xf32> to vector<4x16x16xf32>
    %320 = arith.mulf %319, %318 : vector<4x16x16xf32>
    %321 = arith.addf %309, %320 : vector<4x16x16xf32>
    %322 = arith.addf %321, %315 : vector<4x16x16xf32>
    %c0_388 = arith.constant 0 : index
    %c0_389 = arith.constant 0 : index
    %c0_390 = arith.constant 0 : index
    %c0_391 = arith.constant 0 : index
    %323 = vector.load %arg16[%c0_388, %c0_389, %c0_390, %c0_391] : memref<4x4x1x16xf32, #tpu.memory_space<vmem>>, vector<1x4x1x16xf32>
    %324 = vector.shape_cast %323 : vector<1x4x1x16xf32> to vector<4x1x16xf32>
    %325 = vector.broadcast %324 : vector<4x1x16xf32> to vector<4x16x16xf32>
    %326 = arith.addf %322, %325 : vector<4x16x16xf32>
    %c0_392 = arith.constant 0 : index
    %c16_393 = arith.constant 16 : index
    %c16_394 = arith.constant 16 : index
    %327 = vector.load %arg19[%c0_392, %c16_393, %c16_394] : memref<4x48x48xf32, #tpu.memory_space<vmem>>, vector<4x16x16xf32>
    tpu.vector_store %arg19[%c0_392, %c16_393, %c16_394], %326 {strides = array<i32>} : memref<4x48x48xf32, #tpu.memory_space<vmem>>, vector<4x16x16xf32>,
    %c0_395 = arith.constant 0 : index
    %c0_396 = arith.constant 0 : index
    %c0_397 = arith.constant 0 : index
    %c0_398 = arith.constant 0 : index
    %328 = vector.load %arg13[%c0_395, %c0_396, %c0_397, %c0_398] : memref<5x4x1x16xf32, #tpu.memory_space<vmem>>, vector<1x4x1x16xf32>
    %329 = vector.shape_cast %328 : vector<1x4x1x16xf32> to vector<4x1x16xf32>
    %c0_399 = arith.constant 0 : index
    %c14_400 = arith.constant 14 : index
    %c16_401 = arith.constant 16 : index
    %330 = vector.load %arg19[%c0_399, %c14_400, %c16_401] : memref<4x48x48xf32, #tpu.memory_space<vmem>>, vector<4x16x16xf32>
    %331 = vector.broadcast %329 : vector<4x1x16xf32> to vector<4x16x16xf32>
    %332 = arith.mulf %331, %330 : vector<4x16x16xf32>
    %c1_402 = arith.constant 1 : index
    %c0_403 = arith.constant 0 : index
    %c0_404 = arith.constant 0 : index
    %c0_405 = arith.constant 0 : index
    %333 = vector.load %arg13[%c1_402, %c0_403, %c0_404, %c0_405] : memref<5x4x1x16xf32, #tpu.memory_space<vmem>>, vector<1x4x1x16xf32>
    %334 = vector.shape_cast %333 : vector<1x4x1x16xf32> to vector<4x1x16xf32>
    %c0_406 = arith.constant 0 : index
    %c15_407 = arith.constant 15 : index
    %c16_408 = arith.constant 16 : index
    %335 = vector.load %arg19[%c0_406, %c15_407, %c16_408] : memref<4x48x48xf32, #tpu.memory_space<vmem>>, vector<4x16x16xf32>
    %336 = vector.broadcast %334 : vector<4x1x16xf32> to vector<4x16x16xf32>
    %337 = arith.mulf %336, %335 : vector<4x16x16xf32>
    %c2_409 = arith.constant 2 : index
    %c0_410 = arith.constant 0 : index
    %c0_411 = arith.constant 0 : index
    %c0_412 = arith.constant 0 : index
    %338 = vector.load %arg13[%c2_409, %c0_410, %c0_411, %c0_412] : memref<5x4x1x16xf32, #tpu.memory_space<vmem>>, vector<1x4x1x16xf32>
    %339 = vector.shape_cast %338 : vector<1x4x1x16xf32> to vector<4x1x16xf32>
    %c0_413 = arith.constant 0 : index
    %c16_414 = arith.constant 16 : index
    %c16_415 = arith.constant 16 : index
    %340 = vector.load %arg19[%c0_413, %c16_414, %c16_415] : memref<4x48x48xf32, #tpu.memory_space<vmem>>, vector<4x16x16xf32>
    %341 = vector.broadcast %339 : vector<4x1x16xf32> to vector<4x16x16xf32>
    %342 = arith.mulf %341, %340 : vector<4x16x16xf32>
    %343 = arith.addf %332, %342 : vector<4x16x16xf32>
    %c3_416 = arith.constant 3 : index
    %c0_417 = arith.constant 0 : index
    %c0_418 = arith.constant 0 : index
    %c0_419 = arith.constant 0 : index
    %344 = vector.load %arg13[%c3_416, %c0_417, %c0_418, %c0_419] : memref<5x4x1x16xf32, #tpu.memory_space<vmem>>, vector<1x4x1x16xf32>
    %345 = vector.shape_cast %344 : vector<1x4x1x16xf32> to vector<4x1x16xf32>
    %c0_420 = arith.constant 0 : index
    %c17_421 = arith.constant 17 : index
    %c16_422 = arith.constant 16 : index
    %346 = vector.load %arg19[%c0_420, %c17_421, %c16_422] : memref<4x48x48xf32, #tpu.memory_space<vmem>>, vector<4x16x16xf32>
    %347 = vector.broadcast %345 : vector<4x1x16xf32> to vector<4x16x16xf32>
    %348 = arith.mulf %347, %346 : vector<4x16x16xf32>
    %349 = arith.addf %337, %348 : vector<4x16x16xf32>
    %c4_423 = arith.constant 4 : index
    %c0_424 = arith.constant 0 : index
    %c0_425 = arith.constant 0 : index
    %c0_426 = arith.constant 0 : index
    %350 = vector.load %arg13[%c4_423, %c0_424, %c0_425, %c0_426] : memref<5x4x1x16xf32, #tpu.memory_space<vmem>>, vector<1x4x1x16xf32>
    %351 = vector.shape_cast %350 : vector<1x4x1x16xf32> to vector<4x1x16xf32>
    %c0_427 = arith.constant 0 : index
    %c18_428 = arith.constant 18 : index
    %c16_429 = arith.constant 16 : index
    %352 = vector.load %arg19[%c0_427, %c18_428, %c16_429] : memref<4x48x48xf32, #tpu.memory_space<vmem>>, vector<4x16x16xf32>
    %353 = vector.broadcast %351 : vector<4x1x16xf32> to vector<4x16x16xf32>
    %354 = arith.mulf %353, %352 : vector<4x16x16xf32>
    %355 = arith.addf %343, %354 : vector<4x16x16xf32>
    %356 = arith.addf %355, %349 : vector<4x16x16xf32>
    %c1_430 = arith.constant 1 : index
    %c0_431 = arith.constant 0 : index
    %c0_432 = arith.constant 0 : index
    %c0_433 = arith.constant 0 : index
    %357 = vector.load %arg16[%c1_430, %c0_431, %c0_432, %c0_433] : memref<4x4x1x16xf32, #tpu.memory_space<vmem>>, vector<1x4x1x16xf32>
    %358 = vector.shape_cast %357 : vector<1x4x1x16xf32> to vector<4x1x16xf32>
    %359 = vector.broadcast %358 : vector<4x1x16xf32> to vector<4x16x16xf32>
    %360 = arith.addf %356, %359 : vector<4x16x16xf32>
    %c0_434 = arith.constant 0 : index
    %c16_435 = arith.constant 16 : index
    %c16_436 = arith.constant 16 : index
    %361 = vector.load %arg18[%c0_434, %c16_435, %c16_436] : memref<4x48x48xf32, #tpu.memory_space<vmem>>, vector<4x16x16xf32>
    tpu.vector_store %arg18[%c0_434, %c16_435, %c16_436], %360 {strides = array<i32>} : memref<4x48x48xf32, #tpu.memory_space<vmem>>, vector<4x16x16xf32>,
    %c0_437 = arith.constant 0 : index
    %c0_438 = arith.constant 0 : index
    %c0_439 = arith.constant 0 : index
    %c0_440 = arith.constant 0 : index
    %362 = vector.load %arg14[%c0_437, %c0_438, %c0_439, %c0_440] : memref<11x4x1x16xf32, #tpu.memory_space<vmem>>, vector<1x4x1x16xf32>
    %363 = vector.shape_cast %362 : vector<1x4x1x16xf32> to vector<4x1x16xf32>
    %c0_441 = arith.constant 0 : index
    %c16_442 = arith.constant 16 : index
    %c1_443 = arith.constant 1 : index
    %364 = vector.load %arg18[%c0_441, %c16_442, %c1_443] : memref<4x48x48xf32, #tpu.memory_space<vmem>>, vector<4x16x16xf32>
    %365 = vector.broadcast %363 : vector<4x1x16xf32> to vector<4x16x16xf32>
    %366 = arith.mulf %365, %364 : vector<4x16x16xf32>
    %c1_444 = arith.constant 1 : index
    %c0_445 = arith.constant 0 : index
    %c0_446 = arith.constant 0 : index
    %c0_447 = arith.constant 0 : index
    %367 = vector.load %arg14[%c1_444, %c0_445, %c0_446, %c0_447] : memref<11x4x1x16xf32, #tpu.memory_space<vmem>>, vector<1x4x1x16xf32>
    %368 = vector.shape_cast %367 : vector<1x4x1x16xf32> to vector<4x1x16xf32>
    %c0_448 = arith.constant 0 : index
    %c16_449 = arith.constant 16 : index
    %c4_450 = arith.constant 4 : index
    %369 = vector.load %arg18[%c0_448, %c16_449, %c4_450] : memref<4x48x48xf32, #tpu.memory_space<vmem>>, vector<4x16x16xf32>
    %370 = vector.broadcast %368 : vector<4x1x16xf32> to vector<4x16x16xf32>
    %371 = arith.mulf %370, %369 : vector<4x16x16xf32>
    %c2_451 = arith.constant 2 : index
    %c0_452 = arith.constant 0 : index
    %c0_453 = arith.constant 0 : index
    %c0_454 = arith.constant 0 : index
    %372 = vector.load %arg14[%c2_451, %c0_452, %c0_453, %c0_454] : memref<11x4x1x16xf32, #tpu.memory_space<vmem>>, vector<1x4x1x16xf32>
    %373 = vector.shape_cast %372 : vector<1x4x1x16xf32> to vector<4x1x16xf32>
    %c0_455 = arith.constant 0 : index
    %c16_456 = arith.constant 16 : index
    %c7_457 = arith.constant 7 : index
    %374 = vector.load %arg18[%c0_455, %c16_456, %c7_457] : memref<4x48x48xf32, #tpu.memory_space<vmem>>, vector<4x16x16xf32>
    %375 = vector.broadcast %373 : vector<4x1x16xf32> to vector<4x16x16xf32>
    %376 = arith.mulf %375, %374 : vector<4x16x16xf32>
    %c3_458 = arith.constant 3 : index
    %c0_459 = arith.constant 0 : index
    %c0_460 = arith.constant 0 : index
    %c0_461 = arith.constant 0 : index
    %377 = vector.load %arg14[%c3_458, %c0_459, %c0_460, %c0_461] : memref<11x4x1x16xf32, #tpu.memory_space<vmem>>, vector<1x4x1x16xf32>
    %378 = vector.shape_cast %377 : vector<1x4x1x16xf32> to vector<4x1x16xf32>
    %c0_462 = arith.constant 0 : index
    %c16_463 = arith.constant 16 : index
    %c10_464 = arith.constant 10 : index
    %379 = vector.load %arg18[%c0_462, %c16_463, %c10_464] : memref<4x48x48xf32, #tpu.memory_space<vmem>>, vector<4x16x16xf32>
    %380 = vector.broadcast %378 : vector<4x1x16xf32> to vector<4x16x16xf32>
    %381 = arith.mulf %380, %379 : vector<4x16x16xf32>
    %c4_465 = arith.constant 4 : index
    %c0_466 = arith.constant 0 : index
    %c0_467 = arith.constant 0 : index
    %c0_468 = arith.constant 0 : index
    %382 = vector.load %arg14[%c4_465, %c0_466, %c0_467, %c0_468] : memref<11x4x1x16xf32, #tpu.memory_space<vmem>>, vector<1x4x1x16xf32>
    %383 = vector.shape_cast %382 : vector<1x4x1x16xf32> to vector<4x1x16xf32>
    %c0_469 = arith.constant 0 : index
    %c16_470 = arith.constant 16 : index
    %c13_471 = arith.constant 13 : index
    %384 = vector.load %arg18[%c0_469, %c16_470, %c13_471] : memref<4x48x48xf32, #tpu.memory_space<vmem>>, vector<4x16x16xf32>
    %385 = vector.broadcast %383 : vector<4x1x16xf32> to vector<4x16x16xf32>
    %386 = arith.mulf %385, %384 : vector<4x16x16xf32>
    %387 = arith.addf %366, %386 : vector<4x16x16xf32>
    %c5_472 = arith.constant 5 : index
    %c0_473 = arith.constant 0 : index
    %c0_474 = arith.constant 0 : index
    %c0_475 = arith.constant 0 : index
    %388 = vector.load %arg14[%c5_472, %c0_473, %c0_474, %c0_475] : memref<11x4x1x16xf32, #tpu.memory_space<vmem>>, vector<1x4x1x16xf32>
    %389 = vector.shape_cast %388 : vector<1x4x1x16xf32> to vector<4x1x16xf32>
    %c0_476 = arith.constant 0 : index
    %c16_477 = arith.constant 16 : index
    %c16_478 = arith.constant 16 : index
    %390 = vector.load %arg18[%c0_476, %c16_477, %c16_478] : memref<4x48x48xf32, #tpu.memory_space<vmem>>, vector<4x16x16xf32>
    %391 = vector.broadcast %389 : vector<4x1x16xf32> to vector<4x16x16xf32>
    %392 = arith.mulf %391, %390 : vector<4x16x16xf32>
    %393 = arith.addf %371, %392 : vector<4x16x16xf32>
    %c6_479 = arith.constant 6 : index
    %c0_480 = arith.constant 0 : index
    %c0_481 = arith.constant 0 : index
    %c0_482 = arith.constant 0 : index
    %394 = vector.load %arg14[%c6_479, %c0_480, %c0_481, %c0_482] : memref<11x4x1x16xf32, #tpu.memory_space<vmem>>, vector<1x4x1x16xf32>
    %395 = vector.shape_cast %394 : vector<1x4x1x16xf32> to vector<4x1x16xf32>
    %c0_483 = arith.constant 0 : index
    %c16_484 = arith.constant 16 : index
    %c19_485 = arith.constant 19 : index
    %396 = vector.load %arg18[%c0_483, %c16_484, %c19_485] : memref<4x48x48xf32, #tpu.memory_space<vmem>>, vector<4x16x16xf32>
    %397 = vector.broadcast %395 : vector<4x1x16xf32> to vector<4x16x16xf32>
    %398 = arith.mulf %397, %396 : vector<4x16x16xf32>
    %399 = arith.addf %376, %398 : vector<4x16x16xf32>
    %c7_486 = arith.constant 7 : index
    %c0_487 = arith.constant 0 : index
    %c0_488 = arith.constant 0 : index
    %c0_489 = arith.constant 0 : index
    %400 = vector.load %arg14[%c7_486, %c0_487, %c0_488, %c0_489] : memref<11x4x1x16xf32, #tpu.memory_space<vmem>>, vector<1x4x1x16xf32>
    %401 = vector.shape_cast %400 : vector<1x4x1x16xf32> to vector<4x1x16xf32>
    %c0_490 = arith.constant 0 : index
    %c16_491 = arith.constant 16 : index
    %c22_492 = arith.constant 22 : index
    %402 = vector.load %arg18[%c0_490, %c16_491, %c22_492] : memref<4x48x48xf32, #tpu.memory_space<vmem>>, vector<4x16x16xf32>
    %403 = vector.broadcast %401 : vector<4x1x16xf32> to vector<4x16x16xf32>
    %404 = arith.mulf %403, %402 : vector<4x16x16xf32>
    %405 = arith.addf %381, %404 : vector<4x16x16xf32>
    %c8_493 = arith.constant 8 : index
    %c0_494 = arith.constant 0 : index
    %c0_495 = arith.constant 0 : index
    %c0_496 = arith.constant 0 : index
    %406 = vector.load %arg14[%c8_493, %c0_494, %c0_495, %c0_496] : memref<11x4x1x16xf32, #tpu.memory_space<vmem>>, vector<1x4x1x16xf32>
    %407 = vector.shape_cast %406 : vector<1x4x1x16xf32> to vector<4x1x16xf32>
    %c0_497 = arith.constant 0 : index
    %c16_498 = arith.constant 16 : index
    %c25_499 = arith.constant 25 : index
    %408 = vector.load %arg18[%c0_497, %c16_498, %c25_499] : memref<4x48x48xf32, #tpu.memory_space<vmem>>, vector<4x16x16xf32>
    %409 = vector.broadcast %407 : vector<4x1x16xf32> to vector<4x16x16xf32>
    %410 = arith.mulf %409, %408 : vector<4x16x16xf32>
    %411 = arith.addf %387, %410 : vector<4x16x16xf32>
    %c9 = arith.constant 9 : index
    %c0_500 = arith.constant 0 : index
    %c0_501 = arith.constant 0 : index
    %c0_502 = arith.constant 0 : index
    %412 = vector.load %arg14[%c9, %c0_500, %c0_501, %c0_502] : memref<11x4x1x16xf32, #tpu.memory_space<vmem>>, vector<1x4x1x16xf32>
    %413 = vector.shape_cast %412 : vector<1x4x1x16xf32> to vector<4x1x16xf32>
    %c0_503 = arith.constant 0 : index
    %c16_504 = arith.constant 16 : index
    %c28 = arith.constant 28 : index
    %414 = vector.load %arg18[%c0_503, %c16_504, %c28] : memref<4x48x48xf32, #tpu.memory_space<vmem>>, vector<4x16x16xf32>
    %415 = vector.broadcast %413 : vector<4x1x16xf32> to vector<4x16x16xf32>
    %416 = arith.mulf %415, %414 : vector<4x16x16xf32>
    %417 = arith.addf %393, %416 : vector<4x16x16xf32>
    %c10_505 = arith.constant 10 : index
    %c0_506 = arith.constant 0 : index
    %c0_507 = arith.constant 0 : index
    %c0_508 = arith.constant 0 : index
    %418 = vector.load %arg14[%c10_505, %c0_506, %c0_507, %c0_508] : memref<11x4x1x16xf32, #tpu.memory_space<vmem>>, vector<1x4x1x16xf32>
    %419 = vector.shape_cast %418 : vector<1x4x1x16xf32> to vector<4x1x16xf32>
    %c0_509 = arith.constant 0 : index
    %c16_510 = arith.constant 16 : index
    %c31 = arith.constant 31 : index
    %420 = vector.load %arg18[%c0_509, %c16_510, %c31] : memref<4x48x48xf32, #tpu.memory_space<vmem>>, vector<4x16x16xf32>
    %421 = vector.broadcast %419 : vector<4x1x16xf32> to vector<4x16x16xf32>
    %422 = arith.mulf %421, %420 : vector<4x16x16xf32>
    %423 = arith.addf %399, %422 : vector<4x16x16xf32>
    %424 = arith.addf %411, %417 : vector<4x16x16xf32>
    %425 = arith.addf %423, %405 : vector<4x16x16xf32>
    %426 = arith.addf %424, %425 : vector<4x16x16xf32>
    %c2_511 = arith.constant 2 : index
    %c0_512 = arith.constant 0 : index
    %c0_513 = arith.constant 0 : index
    %c0_514 = arith.constant 0 : index
    %427 = vector.load %arg16[%c2_511, %c0_512, %c0_513, %c0_514] : memref<4x4x1x16xf32, #tpu.memory_space<vmem>>, vector<1x4x1x16xf32>
    %428 = vector.shape_cast %427 : vector<1x4x1x16xf32> to vector<4x1x16xf32>
    %429 = vector.broadcast %428 : vector<4x1x16xf32> to vector<4x16x16xf32>
    %430 = arith.addf %426, %429 : vector<4x16x16xf32>
    %c0_515 = arith.constant 0 : index
    %c16_516 = arith.constant 16 : index
    %c16_517 = arith.constant 16 : index
    %431 = vector.load %arg19[%c0_515, %c16_516, %c16_517] : memref<4x48x48xf32, #tpu.memory_space<vmem>>, vector<4x16x16xf32>
    tpu.vector_store %arg19[%c0_515, %c16_516, %c16_517], %430 {strides = array<i32>} : memref<4x48x48xf32, #tpu.memory_space<vmem>>, vector<4x16x16xf32>,
    %c0_518 = arith.constant 0 : index
    %c0_519 = arith.constant 0 : index
    %c0_520 = arith.constant 0 : index
    %c0_521 = arith.constant 0 : index
    %432 = vector.load %arg15[%c0_518, %c0_519, %c0_520, %c0_521] : memref<11x4x1x16xf32, #tpu.memory_space<vmem>>, vector<1x4x1x16xf32>
    %433 = vector.shape_cast %432 : vector<1x4x1x16xf32> to vector<4x1x16xf32>
    %c0_522 = arith.constant 0 : index
    %c1_523 = arith.constant 1 : index
    %c16_524 = arith.constant 16 : index
    %434 = vector.load %arg19[%c0_522, %c1_523, %c16_524] : memref<4x48x48xf32, #tpu.memory_space<vmem>>, vector<4x16x16xf32>
    %435 = vector.broadcast %433 : vector<4x1x16xf32> to vector<4x16x16xf32>
    %436 = arith.mulf %435, %434 : vector<4x16x16xf32>
    %c1_525 = arith.constant 1 : index
    %c0_526 = arith.constant 0 : index
    %c0_527 = arith.constant 0 : index
    %c0_528 = arith.constant 0 : index
    %437 = vector.load %arg15[%c1_525, %c0_526, %c0_527, %c0_528] : memref<11x4x1x16xf32, #tpu.memory_space<vmem>>, vector<1x4x1x16xf32>
    %438 = vector.shape_cast %437 : vector<1x4x1x16xf32> to vector<4x1x16xf32>
    %c0_529 = arith.constant 0 : index
    %c4_530 = arith.constant 4 : index
    %c16_531 = arith.constant 16 : index
    %439 = vector.load %arg19[%c0_529, %c4_530, %c16_531] : memref<4x48x48xf32, #tpu.memory_space<vmem>>, vector<4x16x16xf32>
    %440 = vector.broadcast %438 : vector<4x1x16xf32> to vector<4x16x16xf32>
    %441 = arith.mulf %440, %439 : vector<4x16x16xf32>
    %c2_532 = arith.constant 2 : index
    %c0_533 = arith.constant 0 : index
    %c0_534 = arith.constant 0 : index
    %c0_535 = arith.constant 0 : index
    %442 = vector.load %arg15[%c2_532, %c0_533, %c0_534, %c0_535] : memref<11x4x1x16xf32, #tpu.memory_space<vmem>>, vector<1x4x1x16xf32>
    %443 = vector.shape_cast %442 : vector<1x4x1x16xf32> to vector<4x1x16xf32>
    %c0_536 = arith.constant 0 : index
    %c7_537 = arith.constant 7 : index
    %c16_538 = arith.constant 16 : index
    %444 = vector.load %arg19[%c0_536, %c7_537, %c16_538] : memref<4x48x48xf32, #tpu.memory_space<vmem>>, vector<4x16x16xf32>
    %445 = vector.broadcast %443 : vector<4x1x16xf32> to vector<4x16x16xf32>
    %446 = arith.mulf %445, %444 : vector<4x16x16xf32>
    %c3_539 = arith.constant 3 : index
    %c0_540 = arith.constant 0 : index
    %c0_541 = arith.constant 0 : index
    %c0_542 = arith.constant 0 : index
    %447 = vector.load %arg15[%c3_539, %c0_540, %c0_541, %c0_542] : memref<11x4x1x16xf32, #tpu.memory_space<vmem>>, vector<1x4x1x16xf32>
    %448 = vector.shape_cast %447 : vector<1x4x1x16xf32> to vector<4x1x16xf32>
    %c0_543 = arith.constant 0 : index
    %c10_544 = arith.constant 10 : index
    %c16_545 = arith.constant 16 : index
    %449 = vector.load %arg19[%c0_543, %c10_544, %c16_545] : memref<4x48x48xf32, #tpu.memory_space<vmem>>, vector<4x16x16xf32>
    %450 = vector.broadcast %448 : vector<4x1x16xf32> to vector<4x16x16xf32>
    %451 = arith.mulf %450, %449 : vector<4x16x16xf32>
    %c4_546 = arith.constant 4 : index
    %c0_547 = arith.constant 0 : index
    %c0_548 = arith.constant 0 : index
    %c0_549 = arith.constant 0 : index
    %452 = vector.load %arg15[%c4_546, %c0_547, %c0_548, %c0_549] : memref<11x4x1x16xf32, #tpu.memory_space<vmem>>, vector<1x4x1x16xf32>
    %453 = vector.shape_cast %452 : vector<1x4x1x16xf32> to vector<4x1x16xf32>
    %c0_550 = arith.constant 0 : index
    %c13_551 = arith.constant 13 : index
    %c16_552 = arith.constant 16 : index
    %454 = vector.load %arg19[%c0_550, %c13_551, %c16_552] : memref<4x48x48xf32, #tpu.memory_space<vmem>>, vector<4x16x16xf32>
    %455 = vector.broadcast %453 : vector<4x1x16xf32> to vector<4x16x16xf32>
    %456 = arith.mulf %455, %454 : vector<4x16x16xf32>
    %457 = arith.addf %436, %456 : vector<4x16x16xf32>
    %c5_553 = arith.constant 5 : index
    %c0_554 = arith.constant 0 : index
    %c0_555 = arith.constant 0 : index
    %c0_556 = arith.constant 0 : index
    %458 = vector.load %arg15[%c5_553, %c0_554, %c0_555, %c0_556] : memref<11x4x1x16xf32, #tpu.memory_space<vmem>>, vector<1x4x1x16xf32>
    %459 = vector.shape_cast %458 : vector<1x4x1x16xf32> to vector<4x1x16xf32>
    %c0_557 = arith.constant 0 : index
    %c16_558 = arith.constant 16 : index
    %c16_559 = arith.constant 16 : index
    %460 = vector.load %arg19[%c0_557, %c16_558, %c16_559] : memref<4x48x48xf32, #tpu.memory_space<vmem>>, vector<4x16x16xf32>
    %461 = vector.broadcast %459 : vector<4x1x16xf32> to vector<4x16x16xf32>
    %462 = arith.mulf %461, %460 : vector<4x16x16xf32>
    %463 = arith.addf %441, %462 : vector<4x16x16xf32>
    %c6_560 = arith.constant 6 : index
    %c0_561 = arith.constant 0 : index
    %c0_562 = arith.constant 0 : index
    %c0_563 = arith.constant 0 : index
    %464 = vector.load %arg15[%c6_560, %c0_561, %c0_562, %c0_563] : memref<11x4x1x16xf32, #tpu.memory_space<vmem>>, vector<1x4x1x16xf32>
    %465 = vector.shape_cast %464 : vector<1x4x1x16xf32> to vector<4x1x16xf32>
    %c0_564 = arith.constant 0 : index
    %c19_565 = arith.constant 19 : index
    %c16_566 = arith.constant 16 : index
    %466 = vector.load %arg19[%c0_564, %c19_565, %c16_566] : memref<4x48x48xf32, #tpu.memory_space<vmem>>, vector<4x16x16xf32>
    %467 = vector.broadcast %465 : vector<4x1x16xf32> to vector<4x16x16xf32>
    %468 = arith.mulf %467, %466 : vector<4x16x16xf32>
    %469 = arith.addf %446, %468 : vector<4x16x16xf32>
    %c7_567 = arith.constant 7 : index
    %c0_568 = arith.constant 0 : index
    %c0_569 = arith.constant 0 : index
    %c0_570 = arith.constant 0 : index
    %470 = vector.load %arg15[%c7_567, %c0_568, %c0_569, %c0_570] : memref<11x4x1x16xf32, #tpu.memory_space<vmem>>, vector<1x4x1x16xf32>
    %471 = vector.shape_cast %470 : vector<1x4x1x16xf32> to vector<4x1x16xf32>
    %c0_571 = arith.constant 0 : index
    %c22_572 = arith.constant 22 : index
    %c16_573 = arith.constant 16 : index
    %472 = vector.load %arg19[%c0_571, %c22_572, %c16_573] : memref<4x48x48xf32, #tpu.memory_space<vmem>>, vector<4x16x16xf32>
    %473 = vector.broadcast %471 : vector<4x1x16xf32> to vector<4x16x16xf32>
    %474 = arith.mulf %473, %472 : vector<4x16x16xf32>
    %475 = arith.addf %451, %474 : vector<4x16x16xf32>
    %c8_574 = arith.constant 8 : index
    %c0_575 = arith.constant 0 : index
    %c0_576 = arith.constant 0 : index
    %c0_577 = arith.constant 0 : index
    %476 = vector.load %arg15[%c8_574, %c0_575, %c0_576, %c0_577] : memref<11x4x1x16xf32, #tpu.memory_space<vmem>>, vector<1x4x1x16xf32>
    %477 = vector.shape_cast %476 : vector<1x4x1x16xf32> to vector<4x1x16xf32>
    %c0_578 = arith.constant 0 : index
    %c25_579 = arith.constant 25 : index
    %c16_580 = arith.constant 16 : index
    %478 = vector.load %arg19[%c0_578, %c25_579, %c16_580] : memref<4x48x48xf32, #tpu.memory_space<vmem>>, vector<4x16x16xf32>
    %479 = vector.broadcast %477 : vector<4x1x16xf32> to vector<4x16x16xf32>
    %480 = arith.mulf %479, %478 : vector<4x16x16xf32>
    %481 = arith.addf %457, %480 : vector<4x16x16xf32>
    %c9_581 = arith.constant 9 : index
    %c0_582 = arith.constant 0 : index
    %c0_583 = arith.constant 0 : index
    %c0_584 = arith.constant 0 : index
    %482 = vector.load %arg15[%c9_581, %c0_582, %c0_583, %c0_584] : memref<11x4x1x16xf32, #tpu.memory_space<vmem>>, vector<1x4x1x16xf32>
    %483 = vector.shape_cast %482 : vector<1x4x1x16xf32> to vector<4x1x16xf32>
    %c0_585 = arith.constant 0 : index
    %c28_586 = arith.constant 28 : index
    %c16_587 = arith.constant 16 : index
    %484 = vector.load %arg19[%c0_585, %c28_586, %c16_587] : memref<4x48x48xf32, #tpu.memory_space<vmem>>, vector<4x16x16xf32>
    %485 = vector.broadcast %483 : vector<4x1x16xf32> to vector<4x16x16xf32>
    %486 = arith.mulf %485, %484 : vector<4x16x16xf32>
    %487 = arith.addf %463, %486 : vector<4x16x16xf32>
    %c10_588 = arith.constant 10 : index
    %c0_589 = arith.constant 0 : index
    %c0_590 = arith.constant 0 : index
    %c0_591 = arith.constant 0 : index
    %488 = vector.load %arg15[%c10_588, %c0_589, %c0_590, %c0_591] : memref<11x4x1x16xf32, #tpu.memory_space<vmem>>, vector<1x4x1x16xf32>
    %489 = vector.shape_cast %488 : vector<1x4x1x16xf32> to vector<4x1x16xf32>
    %c0_592 = arith.constant 0 : index
    %c31_593 = arith.constant 31 : index
    %c16_594 = arith.constant 16 : index
    %490 = vector.load %arg19[%c0_592, %c31_593, %c16_594] : memref<4x48x48xf32, #tpu.memory_space<vmem>>, vector<4x16x16xf32>
    %491 = vector.broadcast %489 : vector<4x1x16xf32> to vector<4x16x16xf32>
    %492 = arith.mulf %491, %490 : vector<4x16x16xf32>
    %493 = arith.addf %469, %492 : vector<4x16x16xf32>
    %494 = arith.addf %481, %487 : vector<4x16x16xf32>
    %495 = arith.addf %493, %475 : vector<4x16x16xf32>
    %496 = arith.addf %494, %495 : vector<4x16x16xf32>
    %c3_595 = arith.constant 3 : index
    %c0_596 = arith.constant 0 : index
    %c0_597 = arith.constant 0 : index
    %c0_598 = arith.constant 0 : index
    %497 = vector.load %arg16[%c3_595, %c0_596, %c0_597, %c0_598] : memref<4x4x1x16xf32, #tpu.memory_space<vmem>>, vector<1x4x1x16xf32>
    %498 = vector.shape_cast %497 : vector<1x4x1x16xf32> to vector<4x1x16xf32>
    %499 = vector.broadcast %498 : vector<4x1x16xf32> to vector<4x16x16xf32>
    %500 = arith.addf %496, %499 : vector<4x16x16xf32>
    %c0_599 = arith.constant 0 : index
    %c12_600 = arith.constant 12 : index
    %c0_601 = arith.constant 0 : index
    %c0_602 = arith.constant 0 : index
    %501 = vector.load %arg17[%c0_599, %c12_600, %c0_601, %c0_602] : memref<1x16x16x16xf32, #tpu.memory_space<vmem>>, vector<1x4x16x16xf32>
    %502 = vector.shape_cast %501 : vector<1x4x16x16xf32> to vector<4x16x16xf32>
    %503 = vector.shape_cast %500 : vector<4x16x16xf32> to vector<1x4x16x16xf32>
    tpu.vector_store %arg17[%c0_599, %c12_600, %c0_601, %c0_602], %503 {strides = array<i32>} : memref<1x16x16x16xf32, #tpu.memory_space<vmem>>, vector<1x4x16x16xf32>,
    return
  }
  func.func @transform_0(%arg0: i32) -> (i32, i32, i32, i32) {
    %c0_i32 = arith.constant 0 : i32
    %c0_i32_0 = arith.constant 0 : i32
    %c0_i32_1 = arith.constant 0 : i32
    %c0_i32_2 = arith.constant 0 : i32
    return %arg0, %c0_i32, %c0_i32_0, %c0_i32_1 : i32, i32, i32, i32
  }
  func.func @transform_1(%arg0: i32) -> (i32, i32, i32, i32) {
    %c0_i32 = arith.constant 0 : i32
    %c0_i32_0 = arith.constant 0 : i32
    %c0_i32_1 = arith.constant 0 : i32
    %c0_i32_2 = arith.constant 0 : i32
    %c0_i32_3 = arith.constant 0 : i32
    return %c0_i32, %c0_i32_0, %c0_i32_1, %c0_i32_2 : i32, i32, i32, i32
  }
  func.func @transform_2(%arg0: i32) -> (i32, i32, i32, i32) {
    %c0_i32 = arith.constant 0 : i32
    %c0_i32_0 = arith.constant 0 : i32
    %c0_i32_1 = arith.constant 0 : i32
    %c0_i32_2 = arith.constant 0 : i32
    %c0_i32_3 = arith.constant 0 : i32
    return %c0_i32, %c0_i32_0, %c0_i32_1, %c0_i32_2 : i32, i32, i32, i32
  }
  func.func @transform_3(%arg0: i32) -> (i32, i32, i32, i32) {
    %c0_i32 = arith.constant 0 : i32
    %c0_i32_0 = arith.constant 0 : i32
    %c0_i32_1 = arith.constant 0 : i32
    %c0_i32_2 = arith.constant 0 : i32
    %c0_i32_3 = arith.constant 0 : i32
    return %c0_i32, %c0_i32_0, %c0_i32_1, %c0_i32_2 : i32, i32, i32, i32
  }
  func.func @transform_4(%arg0: i32) -> (i32, i32, i32, i32) {
    %c0_i32 = arith.constant 0 : i32
    %c0_i32_0 = arith.constant 0 : i32
    %c0_i32_1 = arith.constant 0 : i32
    %c0_i32_2 = arith.constant 0 : i32
    %c0_i32_3 = arith.constant 0 : i32
    return %c0_i32, %c0_i32_0, %c0_i32_1, %c0_i32_2 : i32, i32, i32, i32
  }
  func.func @transform_5(%arg0: i32) -> (i32, i32, i32, i32) {
    %c0_i32 = arith.constant 0 : i32
    %c0_i32_0 = arith.constant 0 : i32
    %c0_i32_1 = arith.constant 0 : i32
    %c0_i32_2 = arith.constant 0 : i32
    %c0_i32_3 = arith.constant 0 : i32
    return %c0_i32, %c0_i32_0, %c0_i32_1, %c0_i32_2 : i32, i32, i32, i32
  }
  func.func @transform_6(%arg0: i32) -> (i32, i32, i32, i32) {
    %c0_i32 = arith.constant 0 : i32
    %c0_i32_0 = arith.constant 0 : i32
    %c0_i32_1 = arith.constant 0 : i32
    %c0_i32_2 = arith.constant 0 : i32
    %c0_i32_3 = arith.constant 0 : i32
    return %c0_i32, %c0_i32_0, %c0_i32_1, %c0_i32_2 : i32, i32, i32, i32
  }
  func.func @transform_7(%arg0: i32) -> (i32, i32, i32, i32) {
    %c0_i32 = arith.constant 0 : i32
    %c0_i32_0 = arith.constant 0 : i32
    %c0_i32_1 = arith.constant 0 : i32
    %c0_i32_2 = arith.constant 0 : i32
    %c0_i32_3 = arith.constant 0 : i32
    return %c0_i32, %c0_i32_0, %c0_i32_1, %c0_i32_2 : i32, i32, i32, i32
  }
  func.func @transform_8(%arg0: i32) -> (i32, i32, i32, i32) {
    %c0_i32 = arith.constant 0 : i32
    %c0_i32_0 = arith.constant 0 : i32
    %c0_i32_1 = arith.constant 0 : i32
    %c0_i32_2 = arith.constant 0 : i32
    %c0_i32_3 = arith.constant 0 : i32
    return %c0_i32, %c0_i32_0, %c0_i32_1, %c0_i32_2 : i32, i32, i32, i32
  }
  func.func @transform_9(%arg0: i32) -> (i32, i32, i32, i32) {
    %c0_i32 = arith.constant 0 : i32
    %c0_i32_0 = arith.constant 0 : i32
    %c0_i32_1 = arith.constant 0 : i32
    %c0_i32_2 = arith.constant 0 : i32
    %c0_i32_3 = arith.constant 0 : i32
    return %c0_i32, %c0_i32_0, %c0_i32_1, %c0_i32_2 : i32, i32, i32, i32
  }
  func.func @transform_10(%arg0: i32) -> (i32, i32, i32, i32) {
    %c0_i32 = arith.constant 0 : i32
    %c0_i32_0 = arith.constant 0 : i32
    %c0_i32_1 = arith.constant 0 : i32
    %c0_i32_2 = arith.constant 0 : i32
    %c0_i32_3 = arith.constant 0 : i32
    return %c0_i32, %c0_i32_0, %c0_i32_1, %c0_i32_2 : i32, i32, i32, i32
  }
  func.func @transform_11(%arg0: i32) -> (i32, i32, i32, i32) {
    %c0_i32 = arith.constant 0 : i32
    %c0_i32_0 = arith.constant 0 : i32
    %c0_i32_1 = arith.constant 0 : i32
    %c0_i32_2 = arith.constant 0 : i32
    %c0_i32_3 = arith.constant 0 : i32
    return %c0_i32, %c0_i32_0, %c0_i32_1, %c0_i32_2 : i32, i32, i32, i32
  }
  func.func @transform_12(%arg0: i32) -> (i32, i32, i32, i32) {
    %c0_i32 = arith.constant 0 : i32
    %c0_i32_0 = arith.constant 0 : i32
    %c0_i32_1 = arith.constant 0 : i32
    %c0_i32_2 = arith.constant 0 : i32
    %c0_i32_3 = arith.constant 0 : i32
    return %c0_i32, %c0_i32_0, %c0_i32_1, %c0_i32_2 : i32, i32, i32, i32
  }
  func.func @transform_13(%arg0: i32) -> (i32, i32, i32, i32) {
    %c0_i32 = arith.constant 0 : i32
    %c0_i32_0 = arith.constant 0 : i32
    %c0_i32_1 = arith.constant 0 : i32
    %c0_i32_2 = arith.constant 0 : i32
    %c0_i32_3 = arith.constant 0 : i32
    return %c0_i32, %c0_i32_0, %c0_i32_1, %c0_i32_2 : i32, i32, i32, i32
  }
  func.func @transform_14(%arg0: i32) -> (i32, i32, i32, i32) {
    %c0_i32 = arith.constant 0 : i32
    %c0_i32_0 = arith.constant 0 : i32
    %c0_i32_1 = arith.constant 0 : i32
    %c0_i32_2 = arith.constant 0 : i32
    %c0_i32_3 = arith.constant 0 : i32
    return %c0_i32, %c0_i32_0, %c0_i32_1, %c0_i32_2 : i32, i32, i32, i32
  }
  func.func @transform_15(%arg0: i32) -> (i32, i32, i32, i32) {
    %c0_i32 = arith.constant 0 : i32
    %c0_i32_0 = arith.constant 0 : i32
    %c0_i32_1 = arith.constant 0 : i32
    %c0_i32_2 = arith.constant 0 : i32
    %c0_i32_3 = arith.constant 0 : i32
    return %c0_i32, %c0_i32_0, %c0_i32_1, %c0_i32_2 : i32, i32, i32, i32
  }
  func.func @transform_16(%arg0: i32) -> (i32, i32, i32, i32) {
    %c0_i32 = arith.constant 0 : i32
    %c0_i32_0 = arith.constant 0 : i32
    %c0_i32_1 = arith.constant 0 : i32
    %c0_i32_2 = arith.constant 0 : i32
    return %arg0, %c0_i32, %c0_i32_0, %c0_i32_1 : i32, i32, i32, i32
  }
}

</mosaic_0001>

<llo_original>
// kernel: tpu_custom_call.1
$region0: #{tpu_custom_call.1}
  #allocation0 [shape = 'u32[]', space=smem, size = 0x4, offset = 0x4, fixed_abs, tag = 'smem constant byte address 0x4 - core index']
  #allocation1 [shape = 'u32[144,128]{1,0:T(1,128)}', space=vmem, size = 0x12000, scoped, tag = 'internal scratch']
  #allocation2 [shape = 'f32[4,48,48]{2,1,0:T(8,128)}', space=vmem, size = 0x18000, scoped, tag = 'scratch operand']
  #allocation3 [shape = 'f32[4,48,48]{2,1,0:T(8,128)}', space=vmem, size = 0x18000, scoped, tag = 'scratch operand']
  %s0 = inlined_call_operand.hbm [shape: f32[2,16,16,16], index: 0, kind: input, shape index: {}]
  %s1 = inlined_call_operand.hbm [shape: f32[3,4,1,16], index: 1, kind: input, shape index: {}]
  %s2 = inlined_call_operand.hbm [shape: f32[3,4,1,16], index: 2, kind: input, shape index: {}]
  %s3 = inlined_call_operand.hbm [shape: f32[5,4,1,16], index: 3, kind: input, shape index: {}]
  %s4 = inlined_call_operand.hbm [shape: f32[5,4,1,16], index: 4, kind: input, shape index: {}]
  %s5 = inlined_call_operand.hbm [shape: f32[4,4,1,16], index: 5, kind: input, shape index: {}]
  %s6 = inlined_call_operand.hbm [shape: f32[5,4,1,16], index: 6, kind: input, shape index: {}]
  %s7 = inlined_call_operand.hbm [shape: f32[5,4,1,16], index: 7, kind: input, shape index: {}]
  %s8 = inlined_call_operand.hbm [shape: f32[7,4,1,16], index: 8, kind: input, shape index: {}]
  %s9 = inlined_call_operand.hbm [shape: f32[7,4,1,16], index: 9, kind: input, shape index: {}]
  %s10 = inlined_call_operand.hbm [shape: f32[4,4,1,16], index: 10, kind: input, shape index: {}]
  %s11 = inlined_call_operand.hbm [shape: f32[5,4,1,16], index: 11, kind: input, shape index: {}]
  %s12 = inlined_call_operand.hbm [shape: f32[5,4,1,16], index: 12, kind: input, shape index: {}]
  %s13 = inlined_call_operand.vmem [shape: f32[11,4,1,16], index: 13, kind: input, shape index: {}]
  %s14 = inlined_call_operand.hbm [shape: f32[11,4,1,16], index: 14, kind: input, shape index: {}]
  %s15 = inlined_call_operand.hbm [shape: f32[4,4,1,16], index: 15, kind: input, shape index: {}]
  %s16 = inlined_call_operand.hbm [shape: f32[2,16,16,16], index: 16, kind: output, shape index: {}]
  %s17 = sld [smem:[#allocation0]]
  $region157: #{tpu_custom_call.1} parent=0
    _
  %s19 = ssub.s32 1, %s17
  %s20 = scalar_select 0, %s19, %s17
  $region1: #{tpu_custom_call.1} parent=0
    #allocation4 [shape = 'u8[262144]{0}', space=vmem, size = 0x40000, scoped, tag = 'input window, operand 0']
    #allocation5 [shape = 's32[2]{0}', space=sflag, size = 0x8, scoped, tag = 'scoped memory for tpu_custom_call.1']
    #allocation6 [shape = 's32[2]{0}', space=sflag, size = 0x8, scoped, tag = 'scoped memory for tpu_custom_call.1']
    #allocation7 [shape = 'u8[6144]{0}', space=vmem, size = 0x1800, scoped, tag = 'input window, operand 1, single buffered']
    #allocation8 [shape = 's32[1]{0}', space=sflag, size = 0x4, scoped, tag = 'scoped memory for tpu_custom_call.1']
    #allocation9 [shape = 'u8[6144]{0}', space=vmem, size = 0x1800, scoped, tag = 'input window, operand 2, single buffered']
    #allocation10 [shape = 'u8[10240]{0}', space=vmem, size = 0x2800, scoped, tag = 'input window, operand 3, single buffered']
    #allocation11 [shape = 's32[1]{0}', space=sflag, size = 0x4, scoped, tag = 'scoped memory for tpu_custom_call.1']
    #allocation12 [shape = 'u8[10240]{0}', space=vmem, size = 0x2800, scoped, tag = 'input window, operand 4, single buffered']
    #allocation13 [shape = 'u8[8192]{0}', space=vmem, size = 0x2000, scoped, tag = 'input window, operand 5, single buffered']
    #allocation14 [shape = 's32[1]{0}', space=sflag, size = 0x4, scoped, tag = 'scoped memory for tpu_custom_call.1']
    #allocation15 [shape = 'u8[10240]{0}', space=vmem, size = 0x2800, scoped, tag = 'input window, operand 6, single buffered']
    #allocation16 [shape = 'u8[10240]{0}', space=vmem, size = 0x2800, scoped, tag = 'input window, operand 7, single buffered']
    #allocation17 [shape = 's32[1]{0}', space=sflag, size = 0x4, scoped, tag = 'scoped memory for tpu_custom_call.1']
    #allocation18 [shape = 'u8[14336]{0}', space=vmem, size = 0x3800, scoped, tag = 'input window, operand 8, single buffered']
    #allocation19 [shape = 'u8[14336]{0}', space=vmem, size = 0x3800, scoped, tag = 'input window, operand 9, single buffered']
    #allocation20 [shape = 's32[1]{0}', space=sflag, size = 0x4, scoped, tag = 'scoped memory for tpu_custom_call.1']
    #allocation21 [shape = 'u8[8192]{0}', space=vmem, size = 0x2000, scoped, tag = 'input window, operand 10, single buffered']
    #allocation22 [shape = 'u8[10240]{0}', space=vmem, size = 0x2800, scoped, tag = 'input window, operand 11, single buffered']
    #allocation23 [shape = 's32[1]{0}', space=sflag, size = 0x4, scoped, tag = 'scoped memory for tpu_custom_call.1']
    #allocation24 [shape = 'u8[10240]{0}', space=vmem, size = 0x2800, scoped, tag = 'input window, operand 12, single buffered']
    #allocation25 [shape = 'u8[22528]{0}', space=vmem, size = 0x5800, scoped, tag = 'input window, operand 14, single buffered']
    #allocation26 [shape = 's32[1]{0}', space=sflag, size = 0x4, scoped, tag = 'scoped memory for tpu_custom_call.1']
    #allocation27 [shape = 'u8[8192]{0}', space=vmem, size = 0x2000, scoped, tag = 'input window, operand 15, single buffered']
    #allocation28 [shape = 'u8[262144]{0}', space=vmem, size = 0x40000, scoped, tag = 'output window, operand 0']
    %21 = vsyncpa [#allocation5], 0
    %s22 = scalar_lea.sflag [#allocation5], 1
    %23 = vsyncpa %s22, 0
    %24 = vsyncpa [#allocation8], 0
    %25 = vsyncpa [#allocation11], 0
    %26 = vsyncpa [#allocation14], 0
    %27 = vsyncpa [#allocation17], 0
    %28 = vsyncpa [#allocation20], 0
    %29 = vsyncpa [#allocation23], 0
    %30 = vsyncpa [#allocation26], 0
    %31 = vsyncpa [#allocation6], 0
    %s32 = scalar_lea.sflag [#allocation6], 1
    %33 = vsyncpa %s32, 0
    loop: start=0, step=1, limit=4
    $region2: #{tpu_custom_call.1} parent=1 // loop_pre_header
      _
    $region3: #{tpu_custom_call.1} parent=1 // loop_header
      %s35 = sphi 0, %s39
      %p36 = scmp.ge.s32.totalorder %s35, 4
      %s45 = sphi 0, %s47
      %s48 = sphi 0, %s45
      %s49 = sphi 0, %s48
      %s65 = sphi 0, %s49
      %s69 = sphi 0, %s69
      %s71 = sphi 0, %s69
      %s72 = sphi 0, %s71
      %s86 = sphi 0, %s72
      %s90 = sphi 0, %s90
      %s92 = sphi 0, %s90
      %s93 = sphi 0, %s92
      %s107 = sphi 0, %s93
      %s111 = sphi 0, %s111
      %s113 = sphi 0, %s111
      %s114 = sphi 0, %s113
      %s128 = sphi 0, %s114
      %s132 = sphi 0, %s132
      %s134 = sphi 0, %s132
      %s135 = sphi 0, %s134
      %s149 = sphi 0, %s135
      %s153 = sphi 0, %s153
      %s155 = sphi 0, %s153
      %s156 = sphi 0, %s155
      %s170 = sphi 0, %s156
      %s174 = sphi 0, %s174
      %s176 = sphi 0, %s174
      %s177 = sphi 0, %s176
      %s191 = sphi 0, %s177
      %s195 = sphi 0, %s195
      %s197 = sphi 0, %s195
      %s198 = sphi 0, %s197
      %s212 = sphi 0, %s198
      %s216 = sphi 0, %s216
      %s218 = sphi 0, %s216
      %s219 = sphi 0, %s218
      %s233 = sphi 0, %s219
      %s237 = sphi 0, %s237
      %s239 = sphi 0, %s237
      %s240 = sphi 0, %s239
      %s254 = sphi 0, %s240
      %s258 = sphi 0, %s258
      %s260 = sphi 0, %s258
      %s261 = sphi 0, %s260
      %s275 = sphi 0, %s261
      %s279 = sphi 0, %s279
      %s281 = sphi 0, %s279
      %s282 = sphi 0, %s281
      %s296 = sphi 0, %s282
      %s300 = sphi 0, %s300
      %s302 = sphi 0, %s300
      %s303 = sphi 0, %s302
      %s317 = sphi 0, %s303
      %s321 = sphi 0, %s321
      %s323 = sphi 0, %s321
      %s324 = sphi 0, %s323
      %s338 = sphi 0, %s324
      %s342 = sphi 0, %s342
      %s344 = sphi 0, %s342
      %s345 = sphi 0, %s344
      %s359 = sphi 0, %s345
      %s363 = sphi 0, %s363
      %s365 = sphi 0, %s363
      %s366 = sphi 0, %s365
      %s380 = sphi 0, %s366
      %s386 = sphi 0, %s388
      %s389 = sphi 0, %s386
      %s390 = sphi 0, %s389
      %s406 = sphi 0, %s390
    $region4: #{tpu_custom_call.1} parent=1 // loop_header_branch
      %38 = sbr.rel (%p36) target = $region8
    $region5: #{tpu_custom_call.1} parent=1 // loop_body
      %s40 = ssub.s32 %s35, 1
      %s41 = ssub.s32 %s35, 2
      %s42 = sadd.s32 %s35, 1
      %s43 = ssub.s32 %s35, %s42
      %p44 = scmp.eq.s32.totalorder %s43, 0
      %s46 = sadd.s32 %s45, 1
      %s47 = scalar_select %p44, %s45, %s46
      %p50 = pneg %p44
      %p51 = scmp.eq.s32.totalorder %s35, 1
      %p52 = por %p50, %p51
      %p53 = scmp.ne.s32.totalorder %s45, %s48
      %p54 = scmp.eq.s32.totalorder %s35, 0
      %p55 = por %p53, %p54
      %p56 = scmp.ne.s32.totalorder %s45, %s48
      %p57 = scmp.eq.s32.totalorder %s40, 1
      %p58 = por %p56, %p57
      %p59 = scmp.ne.s32.totalorder %s48, %s49
      %p60 = scmp.eq.s32.totalorder %s40, 0
      %p61 = por %p59, %p60
      %p62 = scmp.ne.s32.totalorder %s48, %s49
      %p63 = scmp.eq.s32.totalorder %s41, 1
      %p64 = por %p62, %p63
      %p66 = scmp.ne.s32.totalorder %s49, %s65
      %p67 = scmp.eq.s32.totalorder %s41, 0
      %p68 = por %p66, %p67
      %s70 = sadd.s32 %s69, 1
      %p73 = scmp.eq.s32.totalorder %s35, 1
      %p74 = scmp.ne.s32.totalorder %s69, %s71
      %p75 = scmp.eq.s32.totalorder %s35, 0
      %p76 = por %p74, %p75
      %p77 = scmp.ne.s32.totalorder %s69, %s71
      %p78 = scmp.eq.s32.totalorder %s40, 1
      %p79 = por %p77, %p78
      %p80 = scmp.ne.s32.totalorder %s71, %s72
      %p81 = scmp.eq.s32.totalorder %s40, 0
      %p82 = por %p80, %p81
      %p83 = scmp.ne.s32.totalorder %s71, %s72
      %p84 = scmp.eq.s32.totalorder %s41, 1
      %p85 = por %p83, %p84
      %p87 = scmp.ne.s32.totalorder %s72, %s86
      %p88 = scmp.eq.s32.totalorder %s41, 0
      %p89 = por %p87, %p88
      %s91 = sadd.s32 %s90, 1
      %p94 = scmp.eq.s32.totalorder %s35, 1
      %p95 = scmp.ne.s32.totalorder %s90, %s92
      %p96 = scmp.eq.s32.totalorder %s35, 0
      %p97 = por %p95, %p96
      %p98 = scmp.ne.s32.totalorder %s90, %s92
      %p99 = scmp.eq.s32.totalorder %s40, 1
      %p100 = por %p98, %p99
      %p101 = scmp.ne.s32.totalorder %s92, %s93
      %p102 = scmp.eq.s32.totalorder %s40, 0
      %p103 = por %p101, %p102
      %p104 = scmp.ne.s32.totalorder %s92, %s93
      %p105 = scmp.eq.s32.totalorder %s41, 1
      %p106 = por %p104, %p105
      %p108 = scmp.ne.s32.totalorder %s93, %s107
      %p109 = scmp.eq.s32.totalorder %s41, 0
      %p110 = por %p108, %p109
      %s112 = sadd.s32 %s111, 1
      %p115 = scmp.eq.s32.totalorder %s35, 1
      %p116 = scmp.ne.s32.totalorder %s111, %s113
      %p117 = scmp.eq.s32.totalorder %s35, 0
      %p118 = por %p116, %p117
      %p119 = scmp.ne.s32.totalorder %s111, %s113
      %p120 = scmp.eq.s32.totalorder %s40, 1
      %p121 = por %p119, %p120
      %p122 = scmp.ne.s32.totalorder %s113, %s114
      %p123 = scmp.eq.s32.totalorder %s40, 0
      %p124 = por %p122, %p123
      %p125 = scmp.ne.s32.totalorder %s113, %s114
      %p126 = scmp.eq.s32.totalorder %s41, 1
      %p127 = por %p125, %p126
      %p129 = scmp.ne.s32.totalorder %s114, %s128
      %p130 = scmp.eq.s32.totalorder %s41, 0
      %p131 = por %p129, %p130
      %s133 = sadd.s32 %s132, 1
      %p136 = scmp.eq.s32.totalorder %s35, 1
      %p137 = scmp.ne.s32.totalorder %s132, %s134
      %p138 = scmp.eq.s32.totalorder %s35, 0
      %p139 = por %p137, %p138
      %p140 = scmp.ne.s32.totalorder %s132, %s134
      %p141 = scmp.eq.s32.totalorder %s40, 1
      %p142 = por %p140, %p141
      %p143 = scmp.ne.s32.totalorder %s134, %s135
      %p144 = scmp.eq.s32.totalorder %s40, 0
      %p145 = por %p143, %p144
      %p146 = scmp.ne.s32.totalorder %s134, %s135
      %p147 = scmp.eq.s32.totalorder %s41, 1
      %p148 = por %p146, %p147
      %p150 = scmp.ne.s32.totalorder %s135, %s149
      %p151 = scmp.eq.s32.totalorder %s41, 0
      %p152 = por %p150, %p151
      %s154 = sadd.s32 %s153, 1
      %p157 = scmp.eq.s32.totalorder %s35, 1
      %p158 = scmp.ne.s32.totalorder %s153, %s155
      %p159 = scmp.eq.s32.totalorder %s35, 0
      %p160 = por %p158, %p159
      %p161 = scmp.ne.s32.totalorder %s153, %s155
      %p162 = scmp.eq.s32.totalorder %s40, 1
      %p163 = por %p161, %p162
      %p164 = scmp.ne.s32.totalorder %s155, %s156
      %p165 = scmp.eq.s32.totalorder %s40, 0
      %p166 = por %p164, %p165
      %p167 = scmp.ne.s32.totalorder %s155, %s156
      %p168 = scmp.eq.s32.totalorder %s41, 1
      %p169 = por %p167, %p168
      %p171 = scmp.ne.s32.totalorder %s156, %s170
      %p172 = scmp.eq.s32.totalorder %s41, 0
      %p173 = por %p171, %p172
      %s175 = sadd.s32 %s174, 1
      %p178 = scmp.eq.s32.totalorder %s35, 1
      %p179 = scmp.ne.s32.totalorder %s174, %s176
      %p180 = scmp.eq.s32.totalorder %s35, 0
      %p181 = por %p179, %p180
      %p182 = scmp.ne.s32.totalorder %s174, %s176
      %p183 = scmp.eq.s32.totalorder %s40, 1
      %p184 = por %p182, %p183
      %p185 = scmp.ne.s32.totalorder %s176, %s177
      %p186 = scmp.eq.s32.totalorder %s40, 0
      %p187 = por %p185, %p186
      %p188 = scmp.ne.s32.totalorder %s176, %s177
      %p189 = scmp.eq.s32.totalorder %s41, 1
      %p190 = por %p188, %p189
      %p192 = scmp.ne.s32.totalorder %s177, %s191
      %p193 = scmp.eq.s32.totalorder %s41, 0
      %p194 = por %p192, %p193
      %s196 = sadd.s32 %s195, 1
      %p199 = scmp.eq.s32.totalorder %s35, 1
      %p200 = scmp.ne.s32.totalorder %s195, %s197
      %p201 = scmp.eq.s32.totalorder %s35, 0
      %p202 = por %p200, %p201
      %p203 = scmp.ne.s32.totalorder %s195, %s197
      %p204 = scmp.eq.s32.totalorder %s40, 1
      %p205 = por %p203, %p204
      %p206 = scmp.ne.s32.totalorder %s197, %s198
      %p207 = scmp.eq.s32.totalorder %s40, 0
      %p208 = por %p206, %p207
      %p209 = scmp.ne.s32.totalorder %s197, %s198
      %p210 = scmp.eq.s32.totalorder %s41, 1
      %p211 = por %p209, %p210
      %p213 = scmp.ne.s32.totalorder %s198, %s212
      %p214 = scmp.eq.s32.totalorder %s41, 0
      %p215 = por %p213, %p214
      %s217 = sadd.s32 %s216, 1
      %p220 = scmp.eq.s32.totalorder %s35, 1
      %p221 = scmp.ne.s32.totalorder %s216, %s218
      %p222 = scmp.eq.s32.totalorder %s35, 0
      %p223 = por %p221, %p222
      %p224 = scmp.ne.s32.totalorder %s216, %s218
      %p225 = scmp.eq.s32.totalorder %s40, 1
      %p226 = por %p224, %p225
      %p227 = scmp.ne.s32.totalorder %s218, %s219
      %p228 = scmp.eq.s32.totalorder %s40, 0
      %p229 = por %p227, %p228
      %p230 = scmp.ne.s32.totalorder %s218, %s219
      %p231 = scmp.eq.s32.totalorder %s41, 1
      %p232 = por %p230, %p231
      %p234 = scmp.ne.s32.totalorder %s219, %s233
      %p235 = scmp.eq.s32.totalorder %s41, 0
      %p236 = por %p234, %p235
      %s238 = sadd.s32 %s237, 1
      %p241 = scmp.eq.s32.totalorder %s35, 1
      %p242 = scmp.ne.s32.totalorder %s237, %s239
      %p243 = scmp.eq.s32.totalorder %s35, 0
      %p244 = por %p242, %p243
      %p245 = scmp.ne.s32.totalorder %s237, %s239
      %p246 = scmp.eq.s32.totalorder %s40, 1
      %p247 = por %p245, %p246
      %p248 = scmp.ne.s32.totalorder %s239, %s240
      %p249 = scmp.eq.s32.totalorder %s40, 0
      %p250 = por %p248, %p249
      %p251 = scmp.ne.s32.totalorder %s239, %s240
      %p252 = scmp.eq.s32.totalorder %s41, 1
      %p253 = por %p251, %p252
      %p255 = scmp.ne.s32.totalorder %s240, %s254
      %p256 = scmp.eq.s32.totalorder %s41, 0
      %p257 = por %p255, %p256
      %s259 = sadd.s32 %s258, 1
      %p262 = scmp.eq.s32.totalorder %s35, 1
      %p263 = scmp.ne.s32.totalorder %s258, %s260
      %p264 = scmp.eq.s32.totalorder %s35, 0
      %p265 = por %p263, %p264
      %p266 = scmp.ne.s32.totalorder %s258, %s260
      %p267 = scmp.eq.s32.totalorder %s40, 1
      %p268 = por %p266, %p267
      %p269 = scmp.ne.s32.totalorder %s260, %s261
      %p270 = scmp.eq.s32.totalorder %s40, 0
      %p271 = por %p269, %p270
      %p272 = scmp.ne.s32.totalorder %s260, %s261
      %p273 = scmp.eq.s32.totalorder %s41, 1
      %p274 = por %p272, %p273
      %p276 = scmp.ne.s32.totalorder %s261, %s275
      %p277 = scmp.eq.s32.totalorder %s41, 0
      %p278 = por %p276, %p277
      %s280 = sadd.s32 %s279, 1
      %p283 = scmp.eq.s32.totalorder %s35, 1
      %p284 = scmp.ne.s32.totalorder %s279, %s281
      %p285 = scmp.eq.s32.totalorder %s35, 0
      %p286 = por %p284, %p285
      %p287 = scmp.ne.s32.totalorder %s279, %s281
      %p288 = scmp.eq.s32.totalorder %s40, 1
      %p289 = por %p287, %p288
      %p290 = scmp.ne.s32.totalorder %s281, %s282
      %p291 = scmp.eq.s32.totalorder %s40, 0
      %p292 = por %p290, %p291
      %p293 = scmp.ne.s32.totalorder %s281, %s282
      %p294 = scmp.eq.s32.totalorder %s41, 1
      %p295 = por %p293, %p294
      %p297 = scmp.ne.s32.totalorder %s282, %s296
      %p298 = scmp.eq.s32.totalorder %s41, 0
      %p299 = por %p297, %p298
      %s301 = sadd.s32 %s300, 1
      %p304 = scmp.eq.s32.totalorder %s35, 1
      %p305 = scmp.ne.s32.totalorder %s300, %s302
      %p306 = scmp.eq.s32.totalorder %s35, 0
      %p307 = por %p305, %p306
      %p308 = scmp.ne.s32.totalorder %s300, %s302
      %p309 = scmp.eq.s32.totalorder %s40, 1
      %p310 = por %p308, %p309
      %p311 = scmp.ne.s32.totalorder %s302, %s303
      %p312 = scmp.eq.s32.totalorder %s40, 0
      %p313 = por %p311, %p312
      %p314 = scmp.ne.s32.totalorder %s302, %s303
      %p315 = scmp.eq.s32.totalorder %s41, 1
      %p316 = por %p314, %p315
      %p318 = scmp.ne.s32.totalorder %s303, %s317
      %p319 = scmp.eq.s32.totalorder %s41, 0
      %p320 = por %p318, %p319
      %s322 = sadd.s32 %s321, 1
      %p325 = scmp.eq.s32.totalorder %s35, 1
      %p326 = scmp.ne.s32.totalorder %s321, %s323
      %p327 = scmp.eq.s32.totalorder %s35, 0
      %p328 = por %p326, %p327
      %p329 = scmp.ne.s32.totalorder %s321, %s323
      %p330 = scmp.eq.s32.totalorder %s40, 1
      %p331 = por %p329, %p330
      %p332 = scmp.ne.s32.totalorder %s323, %s324
      %p333 = scmp.eq.s32.totalorder %s40, 0
      %p334 = por %p332, %p333
      %p335 = scmp.ne.s32.totalorder %s323, %s324
      %p336 = scmp.eq.s32.totalorder %s41, 1
      %p337 = por %p335, %p336
      %p339 = scmp.ne.s32.totalorder %s324, %s338
      %p340 = scmp.eq.s32.totalorder %s41, 0
      %p341 = por %p339, %p340
      %s343 = sadd.s32 %s342, 1
      %p346 = scmp.eq.s32.totalorder %s35, 1
      %p347 = scmp.ne.s32.totalorder %s342, %s344
      %p348 = scmp.eq.s32.totalorder %s35, 0
      %p349 = por %p347, %p348
      %p350 = scmp.ne.s32.totalorder %s342, %s344
      %p351 = scmp.eq.s32.totalorder %s40, 1
      %p352 = por %p350, %p351
      %p353 = scmp.ne.s32.totalorder %s344, %s345
      %p354 = scmp.eq.s32.totalorder %s40, 0
      %p355 = por %p353, %p354
      %p356 = scmp.ne.s32.totalorder %s344, %s345
      %p357 = scmp.eq.s32.totalorder %s41, 1
      %p358 = por %p356, %p357
      %p360 = scmp.ne.s32.totalorder %s345, %s359
      %p361 = scmp.eq.s32.totalorder %s41, 0
      %p362 = por %p360, %p361
      %s364 = sadd.s32 %s363, 1
      %p367 = scmp.eq.s32.totalorder %s35, 1
      %p368 = scmp.ne.s32.totalorder %s363, %s365
      %p369 = scmp.eq.s32.totalorder %s35, 0
      %p370 = por %p368, %p369
      %p371 = scmp.ne.s32.totalorder %s363, %s365
      %p372 = scmp.eq.s32.totalorder %s40, 1
      %p373 = por %p371, %p372
      %p374 = scmp.ne.s32.totalorder %s365, %s366
      %p375 = scmp.eq.s32.totalorder %s40, 0
      %p376 = por %p374, %p375
      %p377 = scmp.ne.s32.totalorder %s365, %s366
      %p378 = scmp.eq.s32.totalorder %s41, 1
      %p379 = por %p377, %p378
      %p381 = scmp.ne.s32.totalorder %s366, %s380
      %p382 = scmp.eq.s32.totalorder %s41, 0
      %p383 = por %p381, %p382
      %s384 = ssub.s32 %s35, %s42
      %p385 = scmp.eq.s32.totalorder %s384, 0
      %s387 = sadd.s32 %s386, 1
      %s388 = scalar_select %p385, %s386, %s387
      %p391 = pneg %p385
      %p392 = scmp.eq.s32.totalorder %s35, 1
      %p393 = por %p391, %p392
      %p394 = scmp.ne.s32.totalorder %s386, %s389
      %p395 = scmp.eq.s32.totalorder %s35, 0
      %p396 = por %p394, %p395
      %p397 = scmp.ne.s32.totalorder %s386, %s389
      %p398 = scmp.eq.s32.totalorder %s40, 1
      %p399 = por %p397, %p398
      %p400 = scmp.ne.s32.totalorder %s389, %s390
      %p401 = scmp.eq.s32.totalorder %s40, 0
      %p402 = por %p400, %p401
      %p403 = scmp.ne.s32.totalorder %s389, %s390
      %p404 = scmp.eq.s32.totalorder %s41, 1
      %p405 = por %p403, %p404
      %p407 = scmp.ne.s32.totalorder %s390, %s406
      %p408 = scmp.eq.s32.totalorder %s41, 0
      %p409 = por %p407, %p408
      %p410 = scmp.le.s32.totalorder 1, %s35
      %p411 = scmp.lt.s32.totalorder %s35, 3
      %p412 = pnand %p410, %p411
      %p413 = pneg %p412
      // Predicated region
      $region9: #{tpu_custom_call.1} parent=5 // pred_check
        _
      $region10: #{tpu_custom_call.1} parent=5 // pred_check_branch
        %415 = sbr.rel (%p412) target = $region12
      $region11: #{tpu_custom_call.1} parent=5 // pred_region
        %s416 = ssub.s32 %s35, 1
        // Predicated region
        $region13: #{tpu_custom_call.1} parent=11 // pred_check
          %p417 = pneg %p82
        $region14: #{tpu_custom_call.1} parent=11 // pred_check_branch
          %419 = sbr.rel (%p417) target = $region16
        $region15: #{tpu_custom_call.1} parent=11 // pred_region
          %s421 = ssub.s32 192, 192
          %422 = vsyncadd [#allocation8], %s421
          %s423 = sshll.u32 [#allocation7], 4
          %s424 = int_to_ptr.vmem [resolvable:$true] %s423
          %429 = dma.hbm_to_vmem [thread:$0]  %s1, 192, %s424, [#allocation8], 16, 16, 1
        $region16: #{tpu_custom_call.1} parent=11 // pred_fallthru
          _
        // Predicated region
        $region17: #{tpu_custom_call.1} parent=11 // pred_check
          %p430 = pneg %p103
        $region18: #{tpu_custom_call.1} parent=11 // pred_check_branch
          %432 = sbr.rel (%p430) target = $region20
        $region19: #{tpu_custom_call.1} parent=11 // pred_region
          %s434 = ssub.s32 192, 192
          %435 = vsyncadd [#allocation8], %s434
          %s436 = sshll.u32 [#allocation9], 4
          %s437 = int_to_ptr.vmem [resolvable:$true] %s436
          %442 = dma.hbm_to_vmem [thread:$0]  %s2, 192, %s437, [#allocation8], 16, 16, 1
        $region20: #{tpu_custom_call.1} parent=11 // pred_fallthru
          _
        // Predicated region
        $region21: #{tpu_custom_call.1} parent=11 // pred_check
          %p443 = pneg %p124
        $region22: #{tpu_custom_call.1} parent=11 // pred_check_branch
          %445 = sbr.rel (%p443) target = $region24
        $region23: #{tpu_custom_call.1} parent=11 // pred_region
          %s447 = ssub.s32 320, 320
          %448 = vsyncadd [#allocation11], %s447
          %s449 = sshll.u32 [#allocation10], 4
          %s450 = int_to_ptr.vmem [resolvable:$true] %s449
          %455 = dma.hbm_to_vmem [thread:$0]  %s3, 320, %s450, [#allocation11], 16, 16, 1
        $region24: #{tpu_custom_call.1} parent=11 // pred_fallthru
          _
        // Predicated region
        $region25: #{tpu_custom_call.1} parent=11 // pred_check
          %p456 = pneg %p145
        $region26: #{tpu_custom_call.1} parent=11 // pred_check_branch
          %458 = sbr.rel (%p456) target = $region28
        $region27: #{tpu_custom_call.1} parent=11 // pred_region
          %s460 = ssub.s32 320, 320
          %461 = vsyncadd [#allocation11], %s460
          %s462 = sshll.u32 [#allocation12], 4
          %s463 = int_to_ptr.vmem [resolvable:$true] %s462
          %468 = dma.hbm_to_vmem [thread:$0]  %s4, 320, %s463, [#allocation11], 16, 16, 1
        $region28: #{tpu_custom_call.1} parent=11 // pred_fallthru
          _
        // Predicated region
        $region29: #{tpu_custom_call.1} parent=11 // pred_check
          %p469 = pneg %p166
        $region30: #{tpu_custom_call.1} parent=11 // pred_check_branch
          %471 = sbr.rel (%p469) target = $region32
        $region31: #{tpu_custom_call.1} parent=11 // pred_region
          %s473 = ssub.s32 256, 256
          %474 = vsyncadd [#allocation14], %s473
          %s475 = sshll.u32 [#allocation13], 4
          %s476 = int_to_ptr.vmem [resolvable:$true] %s475
          %481 = dma.hbm_to_vmem [thread:$0]  %s5, 256, %s476, [#allocation14], 16, 16, 1
        $region32: #{tpu_custom_call.1} parent=11 // pred_fallthru
          _
        // Predicated region
        $region33: #{tpu_custom_call.1} parent=11 // pred_check
          %p482 = pneg %p187
        $region34: #{tpu_custom_call.1} parent=11 // pred_check_branch
          %484 = sbr.rel (%p482) target = $region36
        $region35: #{tpu_custom_call.1} parent=11 // pred_region
          %s486 = ssub.s32 320, 320
          %487 = vsyncadd [#allocation14], %s486
          %s488 = sshll.u32 [#allocation15], 4
          %s489 = int_to_ptr.vmem [resolvable:$true] %s488
          %494 = dma.hbm_to_vmem [thread:$0]  %s6, 320, %s489, [#allocation14], 16, 16, 1
        $region36: #{tpu_custom_call.1} parent=11 // pred_fallthru
          _
        // Predicated region
        $region37: #{tpu_custom_call.1} parent=11 // pred_check
          %p495 = pneg %p208
        $region38: #{tpu_custom_call.1} parent=11 // pred_check_branch
          %497 = sbr.rel (%p495) target = $region40
        $region39: #{tpu_custom_call.1} parent=11 // pred_region
          %s499 = ssub.s32 320, 320
          %500 = vsyncadd [#allocation17], %s499
          %s501 = sshll.u32 [#allocation16], 4
          %s502 = int_to_ptr.vmem [resolvable:$true] %s501
          %507 = dma.hbm_to_vmem [thread:$0]  %s7, 320, %s502, [#allocation17], 16, 16, 1
        $region40: #{tpu_custom_call.1} parent=11 // pred_fallthru
          _
        // Predicated region
        $region41: #{tpu_custom_call.1} parent=11 // pred_check
          %p508 = pneg %p229
        $region42: #{tpu_custom_call.1} parent=11 // pred_check_branch
          %510 = sbr.rel (%p508) target = $region44
        $region43: #{tpu_custom_call.1} parent=11 // pred_region
          %s512 = ssub.s32 448, 448
          %513 = vsyncadd [#allocation17], %s512
          %s514 = sshll.u32 [#allocation18], 4
          %s515 = int_to_ptr.vmem [resolvable:$true] %s514
          %520 = dma.hbm_to_vmem [thread:$0]  %s8, 448, %s515, [#allocation17], 16, 16, 1
        $region44: #{tpu_custom_call.1} parent=11 // pred_fallthru
          _
        // Predicated region
        $region45: #{tpu_custom_call.1} parent=11 // pred_check
          %p521 = pneg %p250
        $region46: #{tpu_custom_call.1} parent=11 // pred_check_branch
          %523 = sbr.rel (%p521) target = $region48
        $region47: #{tpu_custom_call.1} parent=11 // pred_region
          %s525 = ssub.s32 448, 448
          %526 = vsyncadd [#allocation20], %s525
          %s527 = sshll.u32 [#allocation19], 4
          %s528 = int_to_ptr.vmem [resolvable:$true] %s527
          %533 = dma.hbm_to_vmem [thread:$0]  %s9, 448, %s528, [#allocation20], 16, 16, 1
        $region48: #{tpu_custom_call.1} parent=11 // pred_fallthru
          _
        // Predicated region
        $region49: #{tpu_custom_call.1} parent=11 // pred_check
          %p534 = pneg %p271
        $region50: #{tpu_custom_call.1} parent=11 // pred_check_branch
          %536 = sbr.rel (%p534) target = $region52
        $region51: #{tpu_custom_call.1} parent=11 // pred_region
          %s538 = ssub.s32 256, 256
          %539 = vsyncadd [#allocation20], %s538
          %s540 = sshll.u32 [#allocation21], 4
          %s541 = int_to_ptr.vmem [resolvable:$true] %s540
          %546 = dma.hbm_to_vmem [thread:$0]  %s10, 256, %s541, [#allocation20], 16, 16, 1
        $region52: #{tpu_custom_call.1} parent=11 // pred_fallthru
          _
        // Predicated region
        $region53: #{tpu_custom_call.1} parent=11 // pred_check
          %p547 = pneg %p292
        $region54: #{tpu_custom_call.1} parent=11 // pred_check_branch
          %549 = sbr.rel (%p547) target = $region56
        $region55: #{tpu_custom_call.1} parent=11 // pred_region
          %s551 = ssub.s32 320, 320
          %552 = vsyncadd [#allocation23], %s551
          %s553 = sshll.u32 [#allocation22], 4
          %s554 = int_to_ptr.vmem [resolvable:$true] %s553
          %559 = dma.hbm_to_vmem [thread:$0]  %s11, 320, %s554, [#allocation23], 16, 16, 1
        $region56: #{tpu_custom_call.1} parent=11 // pred_fallthru
          _
        // Predicated region
        $region57: #{tpu_custom_call.1} parent=11 // pred_check
          %p560 = pneg %p313
        $region58: #{tpu_custom_call.1} parent=11 // pred_check_branch
          %562 = sbr.rel (%p560) target = $region60
        $region59: #{tpu_custom_call.1} parent=11 // pred_region
          %s564 = ssub.s32 320, 320
          %565 = vsyncadd [#allocation23], %s564
          %s566 = sshll.u32 [#allocation24], 4
          %s567 = int_to_ptr.vmem [resolvable:$true] %s566
          %572 = dma.hbm_to_vmem [thread:$0]  %s12, 320, %s567, [#allocation23], 16, 16, 1
        $region60: #{tpu_custom_call.1} parent=11 // pred_fallthru
          _
        // Predicated region
        $region61: #{tpu_custom_call.1} parent=11 // pred_check
          %p573 = pneg %p334
        $region62: #{tpu_custom_call.1} parent=11 // pred_check_branch
          %575 = sbr.rel (%p573) target = $region64
        $region63: #{tpu_custom_call.1} parent=11 // pred_region
          _
        $region64: #{tpu_custom_call.1} parent=11 // pred_fallthru
          _
        // Predicated region
        $region65: #{tpu_custom_call.1} parent=11 // pred_check
          %p576 = pneg %p355
        $region66: #{tpu_custom_call.1} parent=11 // pred_check_branch
          %578 = sbr.rel (%p576) target = $region68
        $region67: #{tpu_custom_call.1} parent=11 // pred_region
          %s580 = ssub.s32 704, 704
          %581 = vsyncadd [#allocation26], %s580
          %s582 = sshll.u32 [#allocation25], 4
          %s583 = int_to_ptr.vmem [resolvable:$true] %s582
          %588 = dma.hbm_to_vmem [thread:$0]  %s14, 704, %s583, [#allocation26], 16, 16, 1
        $region68: #{tpu_custom_call.1} parent=11 // pred_fallthru
          _
        // Predicated region
        $region69: #{tpu_custom_call.1} parent=11 // pred_check
          %p589 = pneg %p376
        $region70: #{tpu_custom_call.1} parent=11 // pred_check_branch
          %591 = sbr.rel (%p589) target = $region72
        $region71: #{tpu_custom_call.1} parent=11 // pred_region
          %s593 = ssub.s32 256, 256
          %594 = vsyncadd [#allocation26], %s593
          %s595 = sshll.u32 [#allocation27], 4
          %s596 = int_to_ptr.vmem [resolvable:$true] %s595
          %601 = dma.hbm_to_vmem [thread:$0]  %s15, 256, %s596, [#allocation26], 16, 16, 1
        $region72: #{tpu_custom_call.1} parent=11 // pred_fallthru
          _
      $region12: #{tpu_custom_call.1} parent=5 // pred_fallthru
        _
      %p602 = scmp.lt.s32.totalorder %s35, 2
      // Predicated region
      $region73: #{tpu_custom_call.1} parent=5 // pred_check
        %p603 = pneg %p602
      $region74: #{tpu_custom_call.1} parent=5 // pred_check_branch
        %605 = sbr.rel (%p603) target = $region76
      $region75: #{tpu_custom_call.1} parent=5 // pred_region
        // Predicated region
        $region77: #{tpu_custom_call.1} parent=75 // pred_check
          %p606 = pneg %p55
        $region78: #{tpu_custom_call.1} parent=75 // pred_check_branch
          %608 = sbr.rel (%p606) target = $region80
        $region79: #{tpu_custom_call.1} parent=75 // pred_region
          %s609 = sand.u32 %s45, 1
          %s610 = scalar_lea.sflag [#allocation5], %s609
          %s611 = sand.u32 %s45, 1
          %s612 = smul.addr %s611, 256
          %s613 = scalar_lea.vmem [#allocation4], %s612
          %s615 = ssub.s32 4096, 4096
          %616 = vsyncadd %s610, %s615
          %s617 = smul.addr %s35, 32
          %s618 = smul.addr %s617, 128
          %s619 = scalar_lea.hbm %s0, %s618
          %s620 = sshll.u32 %s613, 4
          %s621 = int_to_ptr.vmem [resolvable:$true] %s620
          %626 = dma.hbm_to_vmem [thread:$0]  %s619, 4096, %s621, %s610, 128, 128, 8
        $region80: #{tpu_custom_call.1} parent=75 // pred_fallthru
          _
      $region76: #{tpu_custom_call.1} parent=5 // pred_fallthru
        _
      %p627 = scmp.le.s32.totalorder 1, %s35
      %p628 = scmp.lt.s32.totalorder %s35, 3
      %p629 = pnand %p627, %p628
      %p630 = pneg %p629
      // Predicated region
      $region81: #{tpu_custom_call.1} parent=5 // pred_check
        _
      $region82: #{tpu_custom_call.1} parent=5 // pred_check_branch
        %632 = sbr.rel (%p629) target = $region84
      $region83: #{tpu_custom_call.1} parent=5 // pred_region
        %s633 = ssub.s32 %s35, 1
        %s634 = sand.u32 %s48, 1
        %s635 = scalar_lea.sflag [#allocation5], %s634
        %s636 = sand.u32 %s48, 1
        %s637 = smul.addr %s636, 256
        %s638 = scalar_lea.vmem [#allocation4], %s637
        // Predicated region
        $region85: #{tpu_custom_call.1} parent=83 // pred_check
          %p639 = pneg %p61
        $region86: #{tpu_custom_call.1} parent=83 // pred_check_branch
          %641 = sbr.rel (%p639) target = $region88
        $region87: #{tpu_custom_call.1} parent=83 // pred_region
          %642 = dma.done %s635, 4096
        $region88: #{tpu_custom_call.1} parent=83 // pred_fallthru
          _
        // Predicated region
        $region89: #{tpu_custom_call.1} parent=83 // pred_check
          %p643 = pneg %p82
        $region90: #{tpu_custom_call.1} parent=83 // pred_check_branch
          %645 = sbr.rel (%p643) target = $region92
        $region91: #{tpu_custom_call.1} parent=83 // pred_region
          %646 = dma.done [#allocation8], 192
        $region92: #{tpu_custom_call.1} parent=83 // pred_fallthru
          _
        // Predicated region
        $region93: #{tpu_custom_call.1} parent=83 // pred_check
          %p647 = pneg %p103
        $region94: #{tpu_custom_call.1} parent=83 // pred_check_branch
          %649 = sbr.rel (%p647) target = $region96
        $region95: #{tpu_custom_call.1} parent=83 // pred_region
          %650 = dma.done [#allocation8], 192
        $region96: #{tpu_custom_call.1} parent=83 // pred_fallthru
          _
        // Predicated region
        $region97: #{tpu_custom_call.1} parent=83 // pred_check
          %p651 = pneg %p124
        $region98: #{tpu_custom_call.1} parent=83 // pred_check_branch
          %653 = sbr.rel (%p651) target = $region100
        $region99: #{tpu_custom_call.1} parent=83 // pred_region
          %654 = dma.done [#allocation11], 320
        $region100: #{tpu_custom_call.1} parent=83 // pred_fallthru
          _
        // Predicated region
        $region101: #{tpu_custom_call.1} parent=83 // pred_check
          %p655 = pneg %p145
        $region102: #{tpu_custom_call.1} parent=83 // pred_check_branch
          %657 = sbr.rel (%p655) target = $region104
        $region103: #{tpu_custom_call.1} parent=83 // pred_region
          %658 = dma.done [#allocation11], 320
        $region104: #{tpu_custom_call.1} parent=83 // pred_fallthru
          _
        // Predicated region
        $region105: #{tpu_custom_call.1} parent=83 // pred_check
          %p659 = pneg %p166
        $region106: #{tpu_custom_call.1} parent=83 // pred_check_branch
          %661 = sbr.rel (%p659) target = $region108
        $region107: #{tpu_custom_call.1} parent=83 // pred_region
          %662 = dma.done [#allocation14], 256
        $region108: #{tpu_custom_call.1} parent=83 // pred_fallthru
          _
        // Predicated region
        $region109: #{tpu_custom_call.1} parent=83 // pred_check
          %p663 = pneg %p187
        $region110: #{tpu_custom_call.1} parent=83 // pred_check_branch
          %665 = sbr.rel (%p663) target = $region112
        $region111: #{tpu_custom_call.1} parent=83 // pred_region
          %666 = dma.done [#allocation14], 320
        $region112: #{tpu_custom_call.1} parent=83 // pred_fallthru
          _
        // Predicated region
        $region113: #{tpu_custom_call.1} parent=83 // pred_check
          %p667 = pneg %p208
        $region114: #{tpu_custom_call.1} parent=83 // pred_check_branch
          %669 = sbr.rel (%p667) target = $region116
        $region115: #{tpu_custom_call.1} parent=83 // pred_region
          %670 = dma.done [#allocation17], 320
        $region116: #{tpu_custom_call.1} parent=83 // pred_fallthru
          _
        // Predicated region
        $region117: #{tpu_custom_call.1} parent=83 // pred_check
          %p671 = pneg %p229
        $region118: #{tpu_custom_call.1} parent=83 // pred_check_branch
          %673 = sbr.rel (%p671) target = $region120
        $region119: #{tpu_custom_call.1} parent=83 // pred_region
          %674 = dma.done [#allocation17], 448
        $region120: #{tpu_custom_call.1} parent=83 // pred_fallthru
          _
        // Predicated region
        $region121: #{tpu_custom_call.1} parent=83 // pred_check
          %p675 = pneg %p250
        $region122: #{tpu_custom_call.1} parent=83 // pred_check_branch
          %677 = sbr.rel (%p675) target = $region124
        $region123: #{tpu_custom_call.1} parent=83 // pred_region
          %678 = dma.done [#allocation20], 448
        $region124: #{tpu_custom_call.1} parent=83 // pred_fallthru
          _
        // Predicated region
        $region125: #{tpu_custom_call.1} parent=83 // pred_check
          %p679 = pneg %p271
        $region126: #{tpu_custom_call.1} parent=83 // pred_check_branch
          %681 = sbr.rel (%p679) target = $region128
        $region127: #{tpu_custom_call.1} parent=83 // pred_region
          %682 = dma.done [#allocation20], 256
        $region128: #{tpu_custom_call.1} parent=83 // pred_fallthru
          _
        // Predicated region
        $region129: #{tpu_custom_call.1} parent=83 // pred_check
          %p683 = pneg %p292
        $region130: #{tpu_custom_call.1} parent=83 // pred_check_branch
          %685 = sbr.rel (%p683) target = $region132
        $region131: #{tpu_custom_call.1} parent=83 // pred_region
          %686 = dma.done [#allocation23], 320
        $region132: #{tpu_custom_call.1} parent=83 // pred_fallthru
          _
        // Predicated region
        $region133: #{tpu_custom_call.1} parent=83 // pred_check
          %p687 = pneg %p313
        $region134: #{tpu_custom_call.1} parent=83 // pred_check_branch
          %689 = sbr.rel (%p687) target = $region136
        $region135: #{tpu_custom_call.1} parent=83 // pred_region
          %690 = dma.done [#allocation23], 320
        $region136: #{tpu_custom_call.1} parent=83 // pred_fallthru
          _
        // Predicated region
        $region137: #{tpu_custom_call.1} parent=83 // pred_check
          %p691 = pneg %p355
        $region138: #{tpu_custom_call.1} parent=83 // pred_check_branch
          %693 = sbr.rel (%p691) target = $region140
        $region139: #{tpu_custom_call.1} parent=83 // pred_region
          %694 = dma.done [#allocation26], 704
        $region140: #{tpu_custom_call.1} parent=83 // pred_fallthru
          _
        // Predicated region
        $region141: #{tpu_custom_call.1} parent=83 // pred_check
          %p695 = pneg %p376
        $region142: #{tpu_custom_call.1} parent=83 // pred_check_branch
          %697 = sbr.rel (%p695) target = $region144
        $region143: #{tpu_custom_call.1} parent=83 // pred_region
          %698 = dma.done [#allocation26], 256
        $region144: #{tpu_custom_call.1} parent=83 // pred_fallthru
          _
        %s699 = sand.u32 %s48, 1
        %s700 = scalar_lea.sflag [#allocation5], %s699
        %s701 = sand.u32 %s48, 1
        %s702 = smul.addr %s701, 256
        %s703 = scalar_lea.vmem [#allocation4], %s702
        %p704 = pneg %p61
        %p705 = pneg %p58
        %p706 = pneg %p82
        %p707 = pneg %p79
        %p708 = pneg %p103
        %p709 = pneg %p100
        %p710 = pneg %p124
        %p711 = pneg %p121
        %p712 = pneg %p145
        %p713 = pneg %p142
        %p714 = pneg %p166
        %p715 = pneg %p163
        %p716 = pneg %p187
        %p717 = pneg %p184
        %p718 = pneg %p208
        %p719 = pneg %p205
        %p720 = pneg %p229
        %p721 = pneg %p226
        %p722 = pneg %p250
        %p723 = pneg %p247
        %p724 = pneg %p271
        %p725 = pneg %p268
        %p726 = pneg %p292
        %p727 = pneg %p289
        %p728 = pneg %p313
        %p729 = pneg %p310
        %p730 = pneg %p334
        %p731 = pneg %p331
        %p732 = pneg %p355
        %p733 = pneg %p352
        %p734 = pneg %p376
        %p735 = pneg %p373
        %p736 = pneg %p402
        %p737 = pneg %p399
        %s738 = sand.u32 %s389, 1
        %s739 = scalar_lea.sflag [#allocation6], %s738
        %s740 = sand.u32 %s389, 1
        %s741 = smul.addr %s740, 256
        %s742 = scalar_lea.vmem [#allocation28], %s741
        %vm743 = vcmask 392192
        %744 = vst.msk [vmem:[#allocation2] sm:$0xff] %vm743, 0.0
        %745 = vst.msk [vmem:[#allocation2 + $0x8] sm:$0xff] %vm743, 0.0
        %746 = vst.msk [vmem:[#allocation2 + $0x10] sm:$0xff] %vm743, 0.0
        %747 = vst.msk [vmem:[#allocation2 + $0x18] sm:$0xff] %vm743, 0.0
        %748 = vst.msk [vmem:[#allocation2 + $0x20] sm:$0xff] %vm743, 0.0
        %749 = vst.msk [vmem:[#allocation2 + $0x28] sm:$0xff] %vm743, 0.0
        %750 = vst.msk [vmem:[#allocation2 + $0x30] sm:$0xff] %vm743, 0.0
        %751 = vst.msk [vmem:[#allocation2 + $0x38] sm:$0xff] %vm743, 0.0
        %752 = vst.msk [vmem:[#allocation2 + $0x40] sm:$0xff] %vm743, 0.0
        %753 = vst.msk [vmem:[#allocation2 + $0x48] sm:$0xff] %vm743, 0.0
        %754 = vst.msk [vmem:[#allocation2 + $0x50] sm:$0xff] %vm743, 0.0
        %755 = vst.msk [vmem:[#allocation2 + $0x58] sm:$0xff] %vm743, 0.0
        %756 = vst.msk [vmem:[#allocation2 + $0x60] sm:$0xff] %vm743, 0.0
        %757 = vst.msk [vmem:[#allocation2 + $0x68] sm:$0xff] %vm743, 0.0
        %758 = vst.msk [vmem:[#allocation2 + $0x70] sm:$0xff] %vm743, 0.0
        %759 = vst.msk [vmem:[#allocation2 + $0x78] sm:$0xff] %vm743, 0.0
        %760 = vst.msk [vmem:[#allocation2 + $0x80] sm:$0xff] %vm743, 0.0
        %761 = vst.msk [vmem:[#allocation2 + $0x88] sm:$0xff] %vm743, 0.0
        %762 = vst.msk [vmem:[#allocation2 + $0x90] sm:$0xff] %vm743, 0.0
        %763 = vst.msk [vmem:[#allocation2 + $0x98] sm:$0xff] %vm743, 0.0
        %764 = vst.msk [vmem:[#allocation2 + $0xa0] sm:$0xff] %vm743, 0.0
        %765 = vst.msk [vmem:[#allocation2 + $0xa8] sm:$0xff] %vm743, 0.0
        %766 = vst.msk [vmem:[#allocation2 + $0xb0] sm:$0xff] %vm743, 0.0
        %767 = vst.msk [vmem:[#allocation2 + $0xb8] sm:$0xff] %vm743, 0.0
        %768 = vst.msk [vmem:[#allocation3] sm:$0xff] %vm743, 0.0
        %769 = vst.msk [vmem:[#allocation3 + $0x8] sm:$0xff] %vm743, 0.0
        %770 = vst.msk [vmem:[#allocation3 + $0x10] sm:$0xff] %vm743, 0.0
        %771 = vst.msk [vmem:[#allocation3 + $0x18] sm:$0xff] %vm743, 0.0
        %772 = vst.msk [vmem:[#allocation3 + $0x20] sm:$0xff] %vm743, 0.0
        %773 = vst.msk [vmem:[#allocation3 + $0x28] sm:$0xff] %vm743, 0.0
        %774 = vst.msk [vmem:[#allocation3 + $0x30] sm:$0xff] %vm743, 0.0
        %775 = vst.msk [vmem:[#allocation3 + $0x38] sm:$0xff] %vm743, 0.0
        %776 = vst.msk [vmem:[#allocation3 + $0x40] sm:$0xff] %vm743, 0.0
        %777 = vst.msk [vmem:[#allocation3 + $0x48] sm:$0xff] %vm743, 0.0
        %778 = vst.msk [vmem:[#allocation3 + $0x50] sm:$0xff] %vm743, 0.0
        %779 = vst.msk [vmem:[#allocation3 + $0x58] sm:$0xff] %vm743, 0.0
        %780 = vst.msk [vmem:[#allocation3 + $0x60] sm:$0xff] %vm743, 0.0
        %781 = vst.msk [vmem:[#allocation3 + $0x68] sm:$0xff] %vm743, 0.0
        %782 = vst.msk [vmem:[#allocation3 + $0x70] sm:$0xff] %vm743, 0.0
        %783 = vst.msk [vmem:[#allocation3 + $0x78] sm:$0xff] %vm743, 0.0
        %784 = vst.msk [vmem:[#allocation3 + $0x80] sm:$0xff] %vm743, 0.0
        %785 = vst.msk [vmem:[#allocation3 + $0x88] sm:$0xff] %vm743, 0.0
        %786 = vst.msk [vmem:[#allocation3 + $0x90] sm:$0xff] %vm743, 0.0
        %787 = vst.msk [vmem:[#allocation3 + $0x98] sm:$0xff] %vm743, 0.0
        %788 = vst.msk [vmem:[#allocation3 + $0xa0] sm:$0xff] %vm743, 0.0
        %789 = vst.msk [vmem:[#allocation3 + $0xa8] sm:$0xff] %vm743, 0.0
        %790 = vst.msk [vmem:[#allocation3 + $0xb0] sm:$0xff] %vm743, 0.0
        %791 = vst.msk [vmem:[#allocation3 + $0xb8] sm:$0xff] %vm743, 0.0
        %v792 = vld [vmem:[%s638] sm:$0xff]
        %v793 = vld [vmem:[%s638 + $0x8] sm:$0xff]
        %v794 = vld [vmem:[%s638 + $0x10] sm:$0xff]
        %v795 = vld [vmem:[%s638 + $0x18] sm:$0xff]
        %v796 = vld [vmem:[%s638 + $0x20] sm:$0xff]
        %v797 = vld [vmem:[%s638 + $0x28] sm:$0xff]
        %v798 = vld [vmem:[%s638 + $0x30] sm:$0xff]
        %v799 = vld [vmem:[%s638 + $0x38] sm:$0xff]
        %vm800 = vcmask 130048
        %801 = vst.msk [vmem:[%s742] sm:$0xff] %vm800, %v792
        %802 = vst.msk [vmem:[%s742 + $0x8] sm:$0xff] %vm800, %v793
        %803 = vst.msk [vmem:[%s742 + $0x10] sm:$0xff] %vm800, %v794
        %804 = vst.msk [vmem:[%s742 + $0x18] sm:$0xff] %vm800, %v795
        %805 = vst.msk [vmem:[%s742 + $0x20] sm:$0xff] %vm800, %v796
        %806 = vst.msk [vmem:[%s742 + $0x28] sm:$0xff] %vm800, %v797
        %807 = vst.msk [vmem:[%s742 + $0x30] sm:$0xff] %vm800, %v798
        %808 = vst.msk [vmem:[%s742 + $0x38] sm:$0xff] %vm800, %v799
        %s809 = scalar_lea.vmem %s638, 64 [#allocation4]
        %v810 = vld [vmem:[%s809] sm:$0xff]
        %v811 = vld [vmem:[%s809 + $0x8] sm:$0xff]
        %v812 = vld [vmem:[%s809 + $0x10] sm:$0xff]
        %v813 = vld [vmem:[%s809 + $0x18] sm:$0xff]
        %v814 = vld [vmem:[%s809 + $0x20] sm:$0xff]
        %v815 = vld [vmem:[%s809 + $0x28] sm:$0xff]
        %v816 = vld [vmem:[%s809 + $0x30] sm:$0xff]
        %v817 = vld [vmem:[%s809 + $0x38] sm:$0xff]
        %826 = vrot.lane.b32.xlu0 %v810, 16
        %v827 = vpop.permute.xlu0 %826
        %828 = vrot.lane.b32.xlu0 %v811, 16
        %v829 = vpop.permute.xlu0 %828
        %830 = vrot.lane.b32.xlu0 %v812, 16
        %v831 = vpop.permute.xlu0 %830
        %832 = vrot.lane.b32.xlu0 %v813, 16
        %v833 = vpop.permute.xlu0 %832
        %834 = vrot.lane.b32.xlu0 %v814, 16
        %v835 = vpop.permute.xlu0 %834
        %836 = vrot.lane.b32.xlu0 %v815, 16
        %v837 = vpop.permute.xlu0 %836
        %838 = vrot.lane.b32.xlu0 %v816, 16
        %v839 = vpop.permute.xlu0 %838
        %840 = vrot.lane.b32.xlu0 %v817, 16
        %v841 = vpop.permute.xlu0 %840
        %vm850 = vcmask 261248
        %851 = vst.msk [vmem:[#allocation2 + $0x10] sm:$0xff] %vm850, %v827
        %852 = vst.msk [vmem:[#allocation2 + $0x18] sm:$0xff] %vm850, %v829
        %853 = vst.msk [vmem:[#allocation2 + $0x40] sm:$0xff] %vm850, %v831
        %854 = vst.msk [vmem:[#allocation2 + $0x48] sm:$0xff] %vm850, %v833
        %855 = vst.msk [vmem:[#allocation2 + $0x70] sm:$0xff] %vm850, %v835
        %856 = vst.msk [vmem:[#allocation2 + $0x78] sm:$0xff] %vm850, %v837
        %857 = vst.msk [vmem:[#allocation2 + $0xa0] sm:$0xff] %vm850, %v839
        %858 = vst.msk [vmem:[#allocation2 + $0xa8] sm:$0xff] %vm850, %v841
        %v859 = vld [vmem:[#allocation7] sm:$0x1]
        %v860 = vld [vmem:[#allocation7 + $0x1] sm:$0x1]
        %v861 = vld [vmem:[#allocation7 + $0x2] sm:$0x1]
        %v862 = vld [vmem:[#allocation7 + $0x3] sm:$0x1]
        %v863 = vld [vmem:[#allocation2 + $0x10] sm:$0xff]
        %v864 = vld [vmem:[#allocation2 + $0x18] sm:$0xff]
        %v865 = vld [vmem:[#allocation2 + $0x40] sm:$0xff]
        %v866 = vld [vmem:[#allocation2 + $0x48] sm:$0xff]
        %v867 = vld [vmem:[#allocation2 + $0x70] sm:$0xff]
        %v868 = vld [vmem:[#allocation2 + $0x78] sm:$0xff]
        %v869 = vld [vmem:[#allocation2 + $0xa0] sm:$0xff]
        %v870 = vld [vmem:[#allocation2 + $0xa8] sm:$0xff]
        %v875 = vlaneseq
        %v876 = vshrl.u32 %v875, 7
        %v877 = vsub.s32 0, %v876
        %v878 = vrot.slane %v859, %v877
        %v879 = vlaneseq
        %v880 = vshrl.u32 %v879, 7
        %v881 = vsub.s32 0, %v880
        %v882 = vrot.slane %v860, %v881
        %v883 = vlaneseq
        %v884 = vshrl.u32 %v883, 7
        %v885 = vsub.s32 0, %v884
        %v886 = vrot.slane %v861, %v885
        %v887 = vlaneseq
        %v888 = vshrl.u32 %v887, 7
        %v889 = vsub.s32 0, %v888
        %v890 = vrot.slane %v862, %v889
        %903 = vrot.lane.b32.xlu0 %v863, 113
        %v904 = vpop.permute.xlu0 %903
        %905 = vrot.lane.b32.xlu0 %v864, 113
        %v906 = vpop.permute.xlu0 %905
        %907 = vrot.lane.b32.xlu0 %v865, 113
        %v908 = vpop.permute.xlu0 %907
        %909 = vrot.lane.b32.xlu0 %v866, 113
        %v910 = vpop.permute.xlu0 %909
        %911 = vrot.lane.b32.xlu0 %v867, 113
        %v912 = vpop.permute.xlu0 %911
        %913 = vrot.lane.b32.xlu0 %v868, 113
        %v914 = vpop.permute.xlu0 %913
        %915 = vrot.lane.b32.xlu0 %v869, 113
        %v916 = vpop.permute.xlu0 %915
        %917 = vrot.lane.b32.xlu0 %v870, 113
        %v918 = vpop.permute.xlu0 %917
        %v927 = vmul.f32 %v878, %v904
        %v928 = vmul.f32 %v878, %v906
        %v929 = vmul.f32 %v882, %v908
        %v930 = vmul.f32 %v882, %v910
        %v931 = vmul.f32 %v886, %v912
        %v932 = vmul.f32 %v886, %v914
        %v933 = vmul.f32 %v890, %v916
        %v934 = vmul.f32 %v890, %v918
        %s935 = scalar_lea.vmem [#allocation7], 4
        %v936 = vld [vmem:[%s935] sm:$0x1]
        %v937 = vld [vmem:[%s935 + $0x1] sm:$0x1]
        %v938 = vld [vmem:[%s935 + $0x2] sm:$0x1]
        %v939 = vld [vmem:[%s935 + $0x3] sm:$0x1]
        %v944 = vlaneseq
        %v945 = vshrl.u32 %v944, 7
        %v946 = vsub.s32 0, %v945
        %v947 = vrot.slane %v936, %v946
        %v948 = vlaneseq
        %v949 = vshrl.u32 %v948, 7
        %v950 = vsub.s32 0, %v949
        %v951 = vrot.slane %v937, %v950
        %v952 = vlaneseq
        %v953 = vshrl.u32 %v952, 7
        %v954 = vsub.s32 0, %v953
        %v955 = vrot.slane %v938, %v954
        %v956 = vlaneseq
        %v957 = vshrl.u32 %v956, 7
        %v958 = vsub.s32 0, %v957
        %v959 = vrot.slane %v939, %v958
        %964 = vrot.lane.b32.xlu0 %v863, 112
        %v965 = vpop.permute.xlu0 %964
        %966 = vrot.lane.b32.xlu0 %v864, 112
        %v967 = vpop.permute.xlu0 %966
        %968 = vrot.lane.b32.xlu0 %v865, 112
        %v969 = vpop.permute.xlu0 %968
        %970 = vrot.lane.b32.xlu0 %v866, 112
        %v971 = vpop.permute.xlu0 %970
        %972 = vrot.lane.b32.xlu0 %v867, 112
        %v973 = vpop.permute.xlu0 %972
        %974 = vrot.lane.b32.xlu0 %v868, 112
        %v975 = vpop.permute.xlu0 %974
        %976 = vrot.lane.b32.xlu0 %v869, 112
        %v977 = vpop.permute.xlu0 %976
        %978 = vrot.lane.b32.xlu0 %v870, 112
        %v979 = vpop.permute.xlu0 %978
        %v988 = vmul.f32 %v947, %v965
        %v989 = vmul.f32 %v947, %v967
        %v990 = vmul.f32 %v951, %v969
        %v991 = vmul.f32 %v951, %v971
        %v992 = vmul.f32 %v955, %v973
        %v993 = vmul.f32 %v955, %v975
        %v994 = vmul.f32 %v959, %v977
        %v995 = vmul.f32 %v959, %v979
        %s996 = scalar_lea.vmem [#allocation7], 8
        %v997 = vld [vmem:[%s996] sm:$0x1]
        %v998 = vld [vmem:[%s996 + $0x1] sm:$0x1]
        %v999 = vld [vmem:[%s996 + $0x2] sm:$0x1]
        %v1000 = vld [vmem:[%s996 + $0x3] sm:$0x1]
        %v1005 = vlaneseq
        %v1006 = vshrl.u32 %v1005, 7
        %v1007 = vsub.s32 0, %v1006
        %v1008 = vrot.slane %v997, %v1007
        %v1009 = vlaneseq
        %v1010 = vshrl.u32 %v1009, 7
        %v1011 = vsub.s32 0, %v1010
        %v1012 = vrot.slane %v998, %v1011
        %v1013 = vlaneseq
        %v1014 = vshrl.u32 %v1013, 7
        %v1015 = vsub.s32 0, %v1014
        %v1016 = vrot.slane %v999, %v1015
        %v1017 = vlaneseq
        %v1018 = vshrl.u32 %v1017, 7
        %v1019 = vsub.s32 0, %v1018
        %v1020 = vrot.slane %v1000, %v1019
        %1025 = vrot.lane.b32.xlu0 %v863, 111
        %v1026 = vpop.permute.xlu0 %1025
        %1027 = vrot.lane.b32.xlu0 %v864, 111
        %v1028 = vpop.permute.xlu0 %1027
        %1029 = vrot.lane.b32.xlu0 %v865, 111
        %v1030 = vpop.permute.xlu0 %1029
        %1031 = vrot.lane.b32.xlu0 %v866, 111
        %v1032 = vpop.permute.xlu0 %1031
        %1033 = vrot.lane.b32.xlu0 %v867, 111
        %v1034 = vpop.permute.xlu0 %1033
        %1035 = vrot.lane.b32.xlu0 %v868, 111
        %v1036 = vpop.permute.xlu0 %1035
        %1037 = vrot.lane.b32.xlu0 %v869, 111
        %v1038 = vpop.permute.xlu0 %1037
        %1039 = vrot.lane.b32.xlu0 %v870, 111
        %v1040 = vpop.permute.xlu0 %1039
        %v1049 = vmul.f32 %v1008, %v1026
        %v1050 = vmul.f32 %v1008, %v1028
        %v1051 = vmul.f32 %v1012, %v1030
        %v1052 = vmul.f32 %v1012, %v1032
        %v1053 = vmul.f32 %v1016, %v1034
        %v1054 = vmul.f32 %v1016, %v1036
        %v1055 = vmul.f32 %v1020, %v1038
        %v1056 = vmul.f32 %v1020, %v1040
        %v1057 = vadd.f32 %v927, %v1049
        %v1058 = vadd.f32 %v928, %v1050
        %v1059 = vadd.f32 %v929, %v1051
        %v1060 = vadd.f32 %v930, %v1052
        %v1061 = vadd.f32 %v931, %v1053
        %v1062 = vadd.f32 %v932, %v1054
        %v1063 = vadd.f32 %v933, %v1055
        %v1064 = vadd.f32 %v934, %v1056
        %v1065 = vadd.f32 %v1057, %v988
        %v1066 = vadd.f32 %v1058, %v989
        %v1067 = vadd.f32 %v1059, %v990
        %v1068 = vadd.f32 %v1060, %v991
        %v1069 = vadd.f32 %v1061, %v992
        %v1070 = vadd.f32 %v1062, %v993
        %v1071 = vadd.f32 %v1063, %v994
        %v1072 = vadd.f32 %v1064, %v995
        %v1073 = vld [vmem:[#allocation13] sm:$0x1]
        %v1074 = vld [vmem:[#allocation13 + $0x1] sm:$0x1]
        %v1075 = vld [vmem:[#allocation13 + $0x2] sm:$0x1]
        %v1076 = vld [vmem:[#allocation13 + $0x3] sm:$0x1]
        %v1081 = vlaneseq
        %v1082 = vshrl.u32 %v1081, 7
        %v1083 = vsub.s32 0, %v1082
        %v1084 = vrot.slane %v1073, %v1083
        %v1085 = vlaneseq
        %v1086 = vshrl.u32 %v1085, 7
        %v1087 = vsub.s32 0, %v1086
        %v1088 = vrot.slane %v1074, %v1087
        %v1089 = vlaneseq
        %v1090 = vshrl.u32 %v1089, 7
        %v1091 = vsub.s32 0, %v1090
        %v1092 = vrot.slane %v1075, %v1091
        %v1093 = vlaneseq
        %v1094 = vshrl.u32 %v1093, 7
        %v1095 = vsub.s32 0, %v1094
        %v1096 = vrot.slane %v1076, %v1095
        %v1101 = vadd.f32 %v1065, %v1084
        %v1102 = vadd.f32 %v1066, %v1084
        %v1103 = vadd.f32 %v1067, %v1088
        %v1104 = vadd.f32 %v1068, %v1088
        %v1105 = vadd.f32 %v1069, %v1092
        %v1106 = vadd.f32 %v1070, %v1092
        %v1107 = vadd.f32 %v1071, %v1096
        %v1108 = vadd.f32 %v1072, %v1096
        %1117 = vrot.lane.b32.xlu0 %v1101, 16
        %v1118 = vpop.permute.xlu0 %1117
        %1119 = vrot.lane.b32.xlu0 %v1102, 16
        %v1120 = vpop.permute.xlu0 %1119
        %1121 = vrot.lane.b32.xlu0 %v1103, 16
        %v1122 = vpop.permute.xlu0 %1121
        %1123 = vrot.lane.b32.xlu0 %v1104, 16
        %v1124 = vpop.permute.xlu0 %1123
        %1125 = vrot.lane.b32.xlu0 %v1105, 16
        %v1126 = vpop.permute.xlu0 %1125
        %1127 = vrot.lane.b32.xlu0 %v1106, 16
        %v1128 = vpop.permute.xlu0 %1127
        %1129 = vrot.lane.b32.xlu0 %v1107, 16
        %v1130 = vpop.permute.xlu0 %1129
        %1131 = vrot.lane.b32.xlu0 %v1108, 16
        %v1132 = vpop.permute.xlu0 %1131
        %1141 = vst.msk [vmem:[#allocation3 + $0x10] sm:$0xff] %vm850, %v1118
        %1142 = vst.msk [vmem:[#allocation3 + $0x18] sm:$0xff] %vm850, %v1120
        %1143 = vst.msk [vmem:[#allocation3 + $0x40] sm:$0xff] %vm850, %v1122
        %1144 = vst.msk [vmem:[#allocation3 + $0x48] sm:$0xff] %vm850, %v1124
        %1145 = vst.msk [vmem:[#allocation3 + $0x70] sm:$0xff] %vm850, %v1126
        %1146 = vst.msk [vmem:[#allocation3 + $0x78] sm:$0xff] %vm850, %v1128
        %1147 = vst.msk [vmem:[#allocation3 + $0xa0] sm:$0xff] %vm850, %v1130
        %1148 = vst.msk [vmem:[#allocation3 + $0xa8] sm:$0xff] %vm850, %v1132
        %v1149 = vld [vmem:[#allocation9] sm:$0x1]
        %v1150 = vld [vmem:[#allocation9 + $0x1] sm:$0x1]
        %v1151 = vld [vmem:[#allocation9 + $0x2] sm:$0x1]
        %v1152 = vld [vmem:[#allocation9 + $0x3] sm:$0x1]
        %v1153 = vld [vmem:[#allocation3 + $0xf] sm:$0xff]
        %v1154 = vld [vmem:[#allocation3 + $0x17] sm:$0xff]
        %v1155 = vld [vmem:[#allocation3 + $0x3f] sm:$0xff]
        %v1156 = vld [vmem:[#allocation3 + $0x47] sm:$0xff]
        %v1157 = vld [vmem:[#allocation3 + $0x6f] sm:$0xff]
        %v1158 = vld [vmem:[#allocation3 + $0x77] sm:$0xff]
        %v1159 = vld [vmem:[#allocation3 + $0x9f] sm:$0xff]
        %v1160 = vld [vmem:[#allocation3 + $0xa7] sm:$0xff]
        %v1165 = vlaneseq
        %v1166 = vshrl.u32 %v1165, 7
        %v1167 = vsub.s32 0, %v1166
        %v1168 = vrot.slane %v1149, %v1167
        %v1169 = vlaneseq
        %v1170 = vshrl.u32 %v1169, 7
        %v1171 = vsub.s32 0, %v1170
        %v1172 = vrot.slane %v1150, %v1171
        %v1173 = vlaneseq
        %v1174 = vshrl.u32 %v1173, 7
        %v1175 = vsub.s32 0, %v1174
        %v1176 = vrot.slane %v1151, %v1175
        %v1177 = vlaneseq
        %v1178 = vshrl.u32 %v1177, 7
        %v1179 = vsub.s32 0, %v1178
        %v1180 = vrot.slane %v1152, %v1179
        %1193 = vrot.lane.b32.xlu0 %v1153, 112
        %v1194 = vpop.permute.xlu0 %1193
        %1195 = vrot.lane.b32.xlu0 %v1154, 112
        %v1196 = vpop.permute.xlu0 %1195
        %1197 = vrot.lane.b32.xlu0 %v1155, 112
        %v1198 = vpop.permute.xlu0 %1197
        %1199 = vrot.lane.b32.xlu0 %v1156, 112
        %v1200 = vpop.permute.xlu0 %1199
        %1201 = vrot.lane.b32.xlu0 %v1157, 112
        %v1202 = vpop.permute.xlu0 %1201
        %1203 = vrot.lane.b32.xlu0 %v1158, 112
        %v1204 = vpop.permute.xlu0 %1203
        %1205 = vrot.lane.b32.xlu0 %v1159, 112
        %v1206 = vpop.permute.xlu0 %1205
        %1207 = vrot.lane.b32.xlu0 %v1160, 112
        %v1208 = vpop.permute.xlu0 %1207
        %v1217 = vmul.f32 %v1168, %v1194
        %v1218 = vmul.f32 %v1168, %v1196
        %v1219 = vmul.f32 %v1172, %v1198
        %v1220 = vmul.f32 %v1172, %v1200
        %v1221 = vmul.f32 %v1176, %v1202
        %v1222 = vmul.f32 %v1176, %v1204
        %v1223 = vmul.f32 %v1180, %v1206
        %v1224 = vmul.f32 %v1180, %v1208
        %s1225 = scalar_lea.vmem [#allocation9], 4
        %v1226 = vld [vmem:[%s1225] sm:$0x1]
        %v1227 = vld [vmem:[%s1225 + $0x1] sm:$0x1]
        %v1228 = vld [vmem:[%s1225 + $0x2] sm:$0x1]
        %v1229 = vld [vmem:[%s1225 + $0x3] sm:$0x1]
        %v1230 = vld [vmem:[#allocation3 + $0x10] sm:$0xff]
        %v1231 = vld [vmem:[#allocation3 + $0x18] sm:$0xff]
        %v1232 = vld [vmem:[#allocation3 + $0x40] sm:$0xff]
        %v1233 = vld [vmem:[#allocation3 + $0x48] sm:$0xff]
        %v1234 = vld [vmem:[#allocation3 + $0x70] sm:$0xff]
        %v1235 = vld [vmem:[#allocation3 + $0x78] sm:$0xff]
        %v1236 = vld [vmem:[#allocation3 + $0xa0] sm:$0xff]
        %v1237 = vld [vmem:[#allocation3 + $0xa8] sm:$0xff]
        %v1242 = vlaneseq
        %v1243 = vshrl.u32 %v1242, 7
        %v1244 = vsub.s32 0, %v1243
        %v1245 = vrot.slane %v1226, %v1244
        %v1246 = vlaneseq
        %v1247 = vshrl.u32 %v1246, 7
        %v1248 = vsub.s32 0, %v1247
        %v1249 = vrot.slane %v1227, %v1248
        %v1250 = vlaneseq
        %v1251 = vshrl.u32 %v1250, 7
        %v1252 = vsub.s32 0, %v1251
        %v1253 = vrot.slane %v1228, %v1252
        %v1254 = vlaneseq
        %v1255 = vshrl.u32 %v1254, 7
        %v1256 = vsub.s32 0, %v1255
        %v1257 = vrot.slane %v1229, %v1256
        %1270 = vrot.lane.b32.xlu0 %v1230, 112
        %v1271 = vpop.permute.xlu0 %1270
        %1272 = vrot.lane.b32.xlu0 %v1231, 112
        %v1273 = vpop.permute.xlu0 %1272
        %1274 = vrot.lane.b32.xlu0 %v1232, 112
        %v1275 = vpop.permute.xlu0 %1274
        %1276 = vrot.lane.b32.xlu0 %v1233, 112
        %v1277 = vpop.permute.xlu0 %1276
        %1278 = vrot.lane.b32.xlu0 %v1234, 112
        %v1279 = vpop.permute.xlu0 %1278
        %1280 = vrot.lane.b32.xlu0 %v1235, 112
        %v1281 = vpop.permute.xlu0 %1280
        %1282 = vrot.lane.b32.xlu0 %v1236, 112
        %v1283 = vpop.permute.xlu0 %1282
        %1284 = vrot.lane.b32.xlu0 %v1237, 112
        %v1285 = vpop.permute.xlu0 %1284
        %v1294 = vmul.f32 %v1245, %v1271
        %v1295 = vmul.f32 %v1245, %v1273
        %v1296 = vmul.f32 %v1249, %v1275
        %v1297 = vmul.f32 %v1249, %v1277
        %v1298 = vmul.f32 %v1253, %v1279
        %v1299 = vmul.f32 %v1253, %v1281
        %v1300 = vmul.f32 %v1257, %v1283
        %v1301 = vmul.f32 %v1257, %v1285
        %s1302 = scalar_lea.vmem [#allocation9], 8
        %v1303 = vld [vmem:[%s1302] sm:$0x1]
        %v1304 = vld [vmem:[%s1302 + $0x1] sm:$0x1]
        %v1305 = vld [vmem:[%s1302 + $0x2] sm:$0x1]
        %v1306 = vld [vmem:[%s1302 + $0x3] sm:$0x1]
        %v1307 = vld [vmem:[#allocation3 + $0x11] sm:$0xff]
        %v1308 = vld [vmem:[#allocation3 + $0x19] sm:$0xff]
        %v1309 = vld [vmem:[#allocation3 + $0x41] sm:$0xff]
        %v1310 = vld [vmem:[#allocation3 + $0x49] sm:$0xff]
        %v1311 = vld [vmem:[#allocation3 + $0x71] sm:$0xff]
        %v1312 = vld [vmem:[#allocation3 + $0x79] sm:$0xff]
        %v1313 = vld [vmem:[#allocation3 + $0xa1] sm:$0xff]
        %v1314 = vld [vmem:[#allocation3 + $0xa9] sm:$0xff]
        %v1319 = vlaneseq
        %v1320 = vshrl.u32 %v1319, 7
        %v1321 = vsub.s32 0, %v1320
        %v1322 = vrot.slane %v1303, %v1321
        %v1323 = vlaneseq
        %v1324 = vshrl.u32 %v1323, 7
        %v1325 = vsub.s32 0, %v1324
        %v1326 = vrot.slane %v1304, %v1325
        %v1327 = vlaneseq
        %v1328 = vshrl.u32 %v1327, 7
        %v1329 = vsub.s32 0, %v1328
        %v1330 = vrot.slane %v1305, %v1329
        %v1331 = vlaneseq
        %v1332 = vshrl.u32 %v1331, 7
        %v1333 = vsub.s32 0, %v1332
        %v1334 = vrot.slane %v1306, %v1333
        %1347 = vrot.lane.b32.xlu0 %v1307, 112
        %v1348 = vpop.permute.xlu0 %1347
        %1349 = vrot.lane.b32.xlu0 %v1308, 112
        %v1350 = vpop.permute.xlu0 %1349
        %1351 = vrot.lane.b32.xlu0 %v1309, 112
        %v1352 = vpop.permute.xlu0 %1351
        %1353 = vrot.lane.b32.xlu0 %v1310, 112
        %v1354 = vpop.permute.xlu0 %1353
        %1355 = vrot.lane.b32.xlu0 %v1311, 112
        %v1356 = vpop.permute.xlu0 %1355
        %1357 = vrot.lane.b32.xlu0 %v1312, 112
        %v1358 = vpop.permute.xlu0 %1357
        %1359 = vrot.lane.b32.xlu0 %v1313, 112
        %v1360 = vpop.permute.xlu0 %1359
        %1361 = vrot.lane.b32.xlu0 %v1314, 112
        %v1362 = vpop.permute.xlu0 %1361
        %v1371 = vmul.f32 %v1322, %v1348
        %v1372 = vmul.f32 %v1322, %v1350
        %v1373 = vmul.f32 %v1326, %v1352
        %v1374 = vmul.f32 %v1326, %v1354
        %v1375 = vmul.f32 %v1330, %v1356
        %v1376 = vmul.f32 %v1330, %v1358
        %v1377 = vmul.f32 %v1334, %v1360
        %v1378 = vmul.f32 %v1334, %v1362
        %v1379 = vadd.f32 %v1217, %v1371
        %v1380 = vadd.f32 %v1218, %v1372
        %v1381 = vadd.f32 %v1219, %v1373
        %v1382 = vadd.f32 %v1220, %v1374
        %v1383 = vadd.f32 %v1221, %v1375
        %v1384 = vadd.f32 %v1222, %v1376
        %v1385 = vadd.f32 %v1223, %v1377
        %v1386 = vadd.f32 %v1224, %v1378
        %v1387 = vadd.f32 %v1379, %v1294
        %v1388 = vadd.f32 %v1380, %v1295
        %v1389 = vadd.f32 %v1381, %v1296
        %v1390 = vadd.f32 %v1382, %v1297
        %v1391 = vadd.f32 %v1383, %v1298
        %v1392 = vadd.f32 %v1384, %v1299
        %v1393 = vadd.f32 %v1385, %v1300
        %v1394 = vadd.f32 %v1386, %v1301
        %s1395 = scalar_lea.vmem [#allocation13], 4
        %v1396 = vld [vmem:[%s1395] sm:$0x1]
        %v1397 = vld [vmem:[%s1395 + $0x1] sm:$0x1]
        %v1398 = vld [vmem:[%s1395 + $0x2] sm:$0x1]
        %v1399 = vld [vmem:[%s1395 + $0x3] sm:$0x1]
        %v1404 = vlaneseq
        %v1405 = vshrl.u32 %v1404, 7
        %v1406 = vsub.s32 0, %v1405
        %v1407 = vrot.slane %v1396, %v1406
        %v1408 = vlaneseq
        %v1409 = vshrl.u32 %v1408, 7
        %v1410 = vsub.s32 0, %v1409
        %v1411 = vrot.slane %v1397, %v1410
        %v1412 = vlaneseq
        %v1413 = vshrl.u32 %v1412, 7
        %v1414 = vsub.s32 0, %v1413
        %v1415 = vrot.slane %v1398, %v1414
        %v1416 = vlaneseq
        %v1417 = vshrl.u32 %v1416, 7
        %v1418 = vsub.s32 0, %v1417
        %v1419 = vrot.slane %v1399, %v1418
        %v1424 = vadd.f32 %v1387, %v1407
        %v1425 = vadd.f32 %v1388, %v1407
        %v1426 = vadd.f32 %v1389, %v1411
        %v1427 = vadd.f32 %v1390, %v1411
        %v1428 = vadd.f32 %v1391, %v1415
        %v1429 = vadd.f32 %v1392, %v1415
        %v1430 = vadd.f32 %v1393, %v1419
        %v1431 = vadd.f32 %v1394, %v1419
        %1440 = vrot.lane.b32.xlu0 %v1424, 16
        %v1441 = vpop.permute.xlu0 %1440
        %1442 = vrot.lane.b32.xlu0 %v1425, 16
        %v1443 = vpop.permute.xlu0 %1442
        %1444 = vrot.lane.b32.xlu0 %v1426, 16
        %v1445 = vpop.permute.xlu0 %1444
        %1446 = vrot.lane.b32.xlu0 %v1427, 16
        %v1447 = vpop.permute.xlu0 %1446
        %1448 = vrot.lane.b32.xlu0 %v1428, 16
        %v1449 = vpop.permute.xlu0 %1448
        %1450 = vrot.lane.b32.xlu0 %v1429, 16
        %v1451 = vpop.permute.xlu0 %1450
        %1452 = vrot.lane.b32.xlu0 %v1430, 16
        %v1453 = vpop.permute.xlu0 %1452
        %1454 = vrot.lane.b32.xlu0 %v1431, 16
        %v1455 = vpop.permute.xlu0 %1454
        %1464 = vst.msk [vmem:[#allocation2 + $0x10] sm:$0xff] %vm850, %v1441
        %1465 = vst.msk [vmem:[#allocation2 + $0x18] sm:$0xff] %vm850, %v1443
        %1466 = vst.msk [vmem:[#allocation2 + $0x40] sm:$0xff] %vm850, %v1445
        %1467 = vst.msk [vmem:[#allocation2 + $0x48] sm:$0xff] %vm850, %v1447
        %1468 = vst.msk [vmem:[#allocation2 + $0x70] sm:$0xff] %vm850, %v1449
        %1469 = vst.msk [vmem:[#allocation2 + $0x78] sm:$0xff] %vm850, %v1451
        %1470 = vst.msk [vmem:[#allocation2 + $0xa0] sm:$0xff] %vm850, %v1453
        %1471 = vst.msk [vmem:[#allocation2 + $0xa8] sm:$0xff] %vm850, %v1455
        %v1472 = vld [vmem:[#allocation10] sm:$0x1]
        %v1473 = vld [vmem:[#allocation10 + $0x1] sm:$0x1]
        %v1474 = vld [vmem:[#allocation10 + $0x2] sm:$0x1]
        %v1475 = vld [vmem:[#allocation10 + $0x3] sm:$0x1]
        %v1476 = vld [vmem:[#allocation2 + $0x10] sm:$0xff]
        %v1477 = vld [vmem:[#allocation2 + $0x18] sm:$0xff]
        %v1478 = vld [vmem:[#allocation2 + $0x40] sm:$0xff]
        %v1479 = vld [vmem:[#allocation2 + $0x48] sm:$0xff]
        %v1480 = vld [vmem:[#allocation2 + $0x70] sm:$0xff]
        %v1481 = vld [vmem:[#allocation2 + $0x78] sm:$0xff]
        %v1482 = vld [vmem:[#allocation2 + $0xa0] sm:$0xff]
        %v1483 = vld [vmem:[#allocation2 + $0xa8] sm:$0xff]
        %v1488 = vlaneseq
        %v1489 = vshrl.u32 %v1488, 7
        %v1490 = vsub.s32 0, %v1489
        %v1491 = vrot.slane %v1472, %v1490
        %v1492 = vlaneseq
        %v1493 = vshrl.u32 %v1492, 7
        %v1494 = vsub.s32 0, %v1493
        %v1495 = vrot.slane %v1473, %v1494
        %v1496 = vlaneseq
        %v1497 = vshrl.u32 %v1496, 7
        %v1498 = vsub.s32 0, %v1497
        %v1499 = vrot.slane %v1474, %v1498
        %v1500 = vlaneseq
        %v1501 = vshrl.u32 %v1500, 7
        %v1502 = vsub.s32 0, %v1501
        %v1503 = vrot.slane %v1475, %v1502
        %1516 = vrot.lane.b32.xlu0 %v1476, 116
        %v1517 = vpop.permute.xlu0 %1516
        %1518 = vrot.lane.b32.xlu0 %v1477, 116
        %v1519 = vpop.permute.xlu0 %1518
        %1520 = vrot.lane.b32.xlu0 %v1478, 116
        %v1521 = vpop.permute.xlu0 %1520
        %1522 = vrot.lane.b32.xlu0 %v1479, 116
        %v1523 = vpop.permute.xlu0 %1522
        %1524 = vrot.lane.b32.xlu0 %v1480, 116
        %v1525 = vpop.permute.xlu0 %1524
        %1526 = vrot.lane.b32.xlu0 %v1481, 116
        %v1527 = vpop.permute.xlu0 %1526
        %1528 = vrot.lane.b32.xlu0 %v1482, 116
        %v1529 = vpop.permute.xlu0 %1528
        %1530 = vrot.lane.b32.xlu0 %v1483, 116
        %v1531 = vpop.permute.xlu0 %1530
        %v1540 = vmul.f32 %v1491, %v1517
        %v1541 = vmul.f32 %v1491, %v1519
        %v1542 = vmul.f32 %v1495, %v1521
        %v1543 = vmul.f32 %v1495, %v1523
        %v1544 = vmul.f32 %v1499, %v1525
        %v1545 = vmul.f32 %v1499, %v1527
        %v1546 = vmul.f32 %v1503, %v1529
        %v1547 = vmul.f32 %v1503, %v1531
        %s1548 = scalar_lea.vmem [#allocation10], 4
        %v1549 = vld [vmem:[%s1548] sm:$0x1]
        %v1550 = vld [vmem:[%s1548 + $0x1] sm:$0x1]
        %v1551 = vld [vmem:[%s1548 + $0x2] sm:$0x1]
        %v1552 = vld [vmem:[%s1548 + $0x3] sm:$0x1]
        %v1557 = vlaneseq
        %v1558 = vshrl.u32 %v1557, 7
        %v1559 = vsub.s32 0, %v1558
        %v1560 = vrot.slane %v1549, %v1559
        %v1561 = vlaneseq
        %v1562 = vshrl.u32 %v1561, 7
        %v1563 = vsub.s32 0, %v1562
        %v1564 = vrot.slane %v1550, %v1563
        %v1565 = vlaneseq
        %v1566 = vshrl.u32 %v1565, 7
        %v1567 = vsub.s32 0, %v1566
        %v1568 = vrot.slane %v1551, %v1567
        %v1569 = vlaneseq
        %v1570 = vshrl.u32 %v1569, 7
        %v1571 = vsub.s32 0, %v1570
        %v1572 = vrot.slane %v1552, %v1571
        %1577 = vrot.lane.b32.xlu0 %v1476, 114
        %v1578 = vpop.permute.xlu0 %1577
        %1579 = vrot.lane.b32.xlu0 %v1477, 114
        %v1580 = vpop.permute.xlu0 %1579
        %1581 = vrot.lane.b32.xlu0 %v1478, 114
        %v1582 = vpop.permute.xlu0 %1581
        %1583 = vrot.lane.b32.xlu0 %v1479, 114
        %v1584 = vpop.permute.xlu0 %1583
        %1585 = vrot.lane.b32.xlu0 %v1480, 114
        %v1586 = vpop.permute.xlu0 %1585
        %1587 = vrot.lane.b32.xlu0 %v1481, 114
        %v1588 = vpop.permute.xlu0 %1587
        %1589 = vrot.lane.b32.xlu0 %v1482, 114
        %v1590 = vpop.permute.xlu0 %1589
        %1591 = vrot.lane.b32.xlu0 %v1483, 114
        %v1592 = vpop.permute.xlu0 %1591
        %v1601 = vmul.f32 %v1560, %v1578
        %v1602 = vmul.f32 %v1560, %v1580
        %v1603 = vmul.f32 %v1564, %v1582
        %v1604 = vmul.f32 %v1564, %v1584
        %v1605 = vmul.f32 %v1568, %v1586
        %v1606 = vmul.f32 %v1568, %v1588
        %v1607 = vmul.f32 %v1572, %v1590
        %v1608 = vmul.f32 %v1572, %v1592
        %s1609 = scalar_lea.vmem [#allocation10], 8
        %v1610 = vld [vmem:[%s1609] sm:$0x1]
        %v1611 = vld [vmem:[%s1609 + $0x1] sm:$0x1]
        %v1612 = vld [vmem:[%s1609 + $0x2] sm:$0x1]
        %v1613 = vld [vmem:[%s1609 + $0x3] sm:$0x1]
        %v1618 = vlaneseq
        %v1619 = vshrl.u32 %v1618, 7
        %v1620 = vsub.s32 0, %v1619
        %v1621 = vrot.slane %v1610, %v1620
        %v1622 = vlaneseq
        %v1623 = vshrl.u32 %v1622, 7
        %v1624 = vsub.s32 0, %v1623
        %v1625 = vrot.slane %v1611, %v1624
        %v1626 = vlaneseq
        %v1627 = vshrl.u32 %v1626, 7
        %v1628 = vsub.s32 0, %v1627
        %v1629 = vrot.slane %v1612, %v1628
        %v1630 = vlaneseq
        %v1631 = vshrl.u32 %v1630, 7
        %v1632 = vsub.s32 0, %v1631
        %v1633 = vrot.slane %v1613, %v1632
        %1638 = vrot.lane.b32.xlu0 %v1476, 112
        %v1639 = vpop.permute.xlu0 %1638
        %1640 = vrot.lane.b32.xlu0 %v1477, 112
        %v1641 = vpop.permute.xlu0 %1640
        %1642 = vrot.lane.b32.xlu0 %v1478, 112
        %v1643 = vpop.permute.xlu0 %1642
        %1644 = vrot.lane.b32.xlu0 %v1479, 112
        %v1645 = vpop.permute.xlu0 %1644
        %1646 = vrot.lane.b32.xlu0 %v1480, 112
        %v1647 = vpop.permute.xlu0 %1646
        %1648 = vrot.lane.b32.xlu0 %v1481, 112
        %v1649 = vpop.permute.xlu0 %1648
        %1650 = vrot.lane.b32.xlu0 %v1482, 112
        %v1651 = vpop.permute.xlu0 %1650
        %1652 = vrot.lane.b32.xlu0 %v1483, 112
        %v1653 = vpop.permute.xlu0 %1652
        %v1662 = vmul.f32 %v1621, %v1639
        %v1663 = vmul.f32 %v1621, %v1641
        %v1664 = vmul.f32 %v1625, %v1643
        %v1665 = vmul.f32 %v1625, %v1645
        %v1666 = vmul.f32 %v1629, %v1647
        %v1667 = vmul.f32 %v1629, %v1649
        %v1668 = vmul.f32 %v1633, %v1651
        %v1669 = vmul.f32 %v1633, %v1653
        %v1670 = vadd.f32 %v1540, %v1662
        %v1671 = vadd.f32 %v1541, %v1663
        %v1672 = vadd.f32 %v1542, %v1664
        %v1673 = vadd.f32 %v1543, %v1665
        %v1674 = vadd.f32 %v1544, %v1666
        %v1675 = vadd.f32 %v1545, %v1667
        %v1676 = vadd.f32 %v1546, %v1668
        %v1677 = vadd.f32 %v1547, %v1669
        %s1678 = scalar_lea.vmem [#allocation10], 12
        %v1679 = vld [vmem:[%s1678] sm:$0x1]
        %v1680 = vld [vmem:[%s1678 + $0x1] sm:$0x1]
        %v1681 = vld [vmem:[%s1678 + $0x2] sm:$0x1]
        %v1682 = vld [vmem:[%s1678 + $0x3] sm:$0x1]
        %v1687 = vlaneseq
        %v1688 = vshrl.u32 %v1687, 7
        %v1689 = vsub.s32 0, %v1688
        %v1690 = vrot.slane %v1679, %v1689
        %v1691 = vlaneseq
        %v1692 = vshrl.u32 %v1691, 7
        %v1693 = vsub.s32 0, %v1692
        %v1694 = vrot.slane %v1680, %v1693
        %v1695 = vlaneseq
        %v1696 = vshrl.u32 %v1695, 7
        %v1697 = vsub.s32 0, %v1696
        %v1698 = vrot.slane %v1681, %v1697
        %v1699 = vlaneseq
        %v1700 = vshrl.u32 %v1699, 7
        %v1701 = vsub.s32 0, %v1700
        %v1702 = vrot.slane %v1682, %v1701
        %1707 = vrot.lane.b32.xlu0 %v1476, 110
        %v1708 = vpop.permute.xlu0 %1707
        %1709 = vrot.lane.b32.xlu0 %v1477, 110
        %v1710 = vpop.permute.xlu0 %1709
        %1711 = vrot.lane.b32.xlu0 %v1478, 110
        %v1712 = vpop.permute.xlu0 %1711
        %1713 = vrot.lane.b32.xlu0 %v1479, 110
        %v1714 = vpop.permute.xlu0 %1713
        %1715 = vrot.lane.b32.xlu0 %v1480, 110
        %v1716 = vpop.permute.xlu0 %1715
        %1717 = vrot.lane.b32.xlu0 %v1481, 110
        %v1718 = vpop.permute.xlu0 %1717
        %1719 = vrot.lane.b32.xlu0 %v1482, 110
        %v1720 = vpop.permute.xlu0 %1719
        %1721 = vrot.lane.b32.xlu0 %v1483, 110
        %v1722 = vpop.permute.xlu0 %1721
        %v1731 = vmul.f32 %v1690, %v1708
        %v1732 = vmul.f32 %v1690, %v1710
        %v1733 = vmul.f32 %v1694, %v1712
        %v1734 = vmul.f32 %v1694, %v1714
        %v1735 = vmul.f32 %v1698, %v1716
        %v1736 = vmul.f32 %v1698, %v1718
        %v1737 = vmul.f32 %v1702, %v1720
        %v1738 = vmul.f32 %v1702, %v1722
        %v1739 = vadd.f32 %v1601, %v1731
        %v1740 = vadd.f32 %v1602, %v1732
        %v1741 = vadd.f32 %v1603, %v1733
        %v1742 = vadd.f32 %v1604, %v1734
        %v1743 = vadd.f32 %v1605, %v1735
        %v1744 = vadd.f32 %v1606, %v1736
        %v1745 = vadd.f32 %v1607, %v1737
        %v1746 = vadd.f32 %v1608, %v1738
        %s1747 = scalar_lea.vmem [#allocation10], 16
        %v1748 = vld [vmem:[%s1747] sm:$0x1]
        %v1749 = vld [vmem:[%s1747 + $0x1] sm:$0x1]
        %v1750 = vld [vmem:[%s1747 + $0x2] sm:$0x1]
        %v1751 = vld [vmem:[%s1747 + $0x3] sm:$0x1]
        %v1756 = vlaneseq
        %v1757 = vshrl.u32 %v1756, 7
        %v1758 = vsub.s32 0, %v1757
        %v1759 = vrot.slane %v1748, %v1758
        %v1760 = vlaneseq
        %v1761 = vshrl.u32 %v1760, 7
        %v1762 = vsub.s32 0, %v1761
        %v1763 = vrot.slane %v1749, %v1762
        %v1764 = vlaneseq
        %v1765 = vshrl.u32 %v1764, 7
        %v1766 = vsub.s32 0, %v1765
        %v1767 = vrot.slane %v1750, %v1766
        %v1768 = vlaneseq
        %v1769 = vshrl.u32 %v1768, 7
        %v1770 = vsub.s32 0, %v1769
        %v1771 = vrot.slane %v1751, %v1770
        %1776 = vrot.lane.b32.xlu0 %v1476, 108
        %v1777 = vpop.permute.xlu0 %1776
        %1778 = vrot.lane.b32.xlu0 %v1477, 108
        %v1779 = vpop.permute.xlu0 %1778
        %1780 = vrot.lane.b32.xlu0 %v1478, 108
        %v1781 = vpop.permute.xlu0 %1780
        %1782 = vrot.lane.b32.xlu0 %v1479, 108
        %v1783 = vpop.permute.xlu0 %1782
        %1784 = vrot.lane.b32.xlu0 %v1480, 108
        %v1785 = vpop.permute.xlu0 %1784
        %1786 = vrot.lane.b32.xlu0 %v1481, 108
        %v1787 = vpop.permute.xlu0 %1786
        %1788 = vrot.lane.b32.xlu0 %v1482, 108
        %v1789 = vpop.permute.xlu0 %1788
        %1790 = vrot.lane.b32.xlu0 %v1483, 108
        %v1791 = vpop.permute.xlu0 %1790
        %v1800 = vmul.f32 %v1759, %v1777
        %v1801 = vmul.f32 %v1759, %v1779
        %v1802 = vmul.f32 %v1763, %v1781
        %v1803 = vmul.f32 %v1763, %v1783
        %v1804 = vmul.f32 %v1767, %v1785
        %v1805 = vmul.f32 %v1767, %v1787
        %v1806 = vmul.f32 %v1771, %v1789
        %v1807 = vmul.f32 %v1771, %v1791
        %v1808 = vadd.f32 %v1670, %v1800
        %v1809 = vadd.f32 %v1671, %v1801
        %v1810 = vadd.f32 %v1672, %v1802
        %v1811 = vadd.f32 %v1673, %v1803
        %v1812 = vadd.f32 %v1674, %v1804
        %v1813 = vadd.f32 %v1675, %v1805
        %v1814 = vadd.f32 %v1676, %v1806
        %v1815 = vadd.f32 %v1677, %v1807
        %v1816 = vadd.f32 %v1808, %v1739
        %v1817 = vadd.f32 %v1809, %v1740
        %v1818 = vadd.f32 %v1810, %v1741
        %v1819 = vadd.f32 %v1811, %v1742
        %v1820 = vadd.f32 %v1812, %v1743
        %v1821 = vadd.f32 %v1813, %v1744
        %v1822 = vadd.f32 %v1814, %v1745
        %v1823 = vadd.f32 %v1815, %v1746
        %s1824 = scalar_lea.vmem [#allocation13], 8
        %v1825 = vld [vmem:[%s1824] sm:$0x1]
        %v1826 = vld [vmem:[%s1824 + $0x1] sm:$0x1]
        %v1827 = vld [vmem:[%s1824 + $0x2] sm:$0x1]
        %v1828 = vld [vmem:[%s1824 + $0x3] sm:$0x1]
        %v1833 = vlaneseq
        %v1834 = vshrl.u32 %v1833, 7
        %v1835 = vsub.s32 0, %v1834
        %v1836 = vrot.slane %v1825, %v1835
        %v1837 = vlaneseq
        %v1838 = vshrl.u32 %v1837, 7
        %v1839 = vsub.s32 0, %v1838
        %v1840 = vrot.slane %v1826, %v1839
        %v1841 = vlaneseq
        %v1842 = vshrl.u32 %v1841, 7
        %v1843 = vsub.s32 0, %v1842
        %v1844 = vrot.slane %v1827, %v1843
        %v1845 = vlaneseq
        %v1846 = vshrl.u32 %v1845, 7
        %v1847 = vsub.s32 0, %v1846
        %v1848 = vrot.slane %v1828, %v1847
        %v1853 = vadd.f32 %v1816, %v1836
        %v1854 = vadd.f32 %v1817, %v1836
        %v1855 = vadd.f32 %v1818, %v1840
        %v1856 = vadd.f32 %v1819, %v1840
        %v1857 = vadd.f32 %v1820, %v1844
        %v1858 = vadd.f32 %v1821, %v1844
        %v1859 = vadd.f32 %v1822, %v1848
        %v1860 = vadd.f32 %v1823, %v1848
        %1869 = vrot.lane.b32.xlu0 %v1853, 16
        %v1870 = vpop.permute.xlu0 %1869
        %1871 = vrot.lane.b32.xlu0 %v1854, 16
        %v1872 = vpop.permute.xlu0 %1871
        %1873 = vrot.lane.b32.xlu0 %v1855, 16
        %v1874 = vpop.permute.xlu0 %1873
        %1875 = vrot.lane.b32.xlu0 %v1856, 16
        %v1876 = vpop.permute.xlu0 %1875
        %1877 = vrot.lane.b32.xlu0 %v1857, 16
        %v1878 = vpop.permute.xlu0 %1877
        %1879 = vrot.lane.b32.xlu0 %v1858, 16
        %v1880 = vpop.permute.xlu0 %1879
        %1881 = vrot.lane.b32.xlu0 %v1859, 16
        %v1882 = vpop.permute.xlu0 %1881
        %1883 = vrot.lane.b32.xlu0 %v1860, 16
        %v1884 = vpop.permute.xlu0 %1883
        %1893 = vst.msk [vmem:[#allocation3 + $0x10] sm:$0xff] %vm850, %v1870
        %1894 = vst.msk [vmem:[#allocation3 + $0x18] sm:$0xff] %vm850, %v1872
        %1895 = vst.msk [vmem:[#allocation3 + $0x40] sm:$0xff] %vm850, %v1874
        %1896 = vst.msk [vmem:[#allocation3 + $0x48] sm:$0xff] %vm850, %v1876
        %1897 = vst.msk [vmem:[#allocation3 + $0x70] sm:$0xff] %vm850, %v1878
        %1898 = vst.msk [vmem:[#allocation3 + $0x78] sm:$0xff] %vm850, %v1880
        %1899 = vst.msk [vmem:[#allocation3 + $0xa0] sm:$0xff] %vm850, %v1882
        %1900 = vst.msk [vmem:[#allocation3 + $0xa8] sm:$0xff] %vm850, %v1884
        %v1901 = vld [vmem:[#allocation12] sm:$0x1]
        %v1902 = vld [vmem:[#allocation12 + $0x1] sm:$0x1]
        %v1903 = vld [vmem:[#allocation12 + $0x2] sm:$0x1]
        %v1904 = vld [vmem:[#allocation12 + $0x3] sm:$0x1]
        %v1905 = vld [vmem:[#allocation3 + $0xc] sm:$0xff]
        %v1906 = vld [vmem:[#allocation3 + $0x14] sm:$0xff]
        %v1907 = vld [vmem:[#allocation3 + $0x3c] sm:$0xff]
        %v1908 = vld [vmem:[#allocation3 + $0x44] sm:$0xff]
        %v1909 = vld [vmem:[#allocation3 + $0x6c] sm:$0xff]
        %v1910 = vld [vmem:[#allocation3 + $0x74] sm:$0xff]
        %v1911 = vld [vmem:[#allocation3 + $0x9c] sm:$0xff]
        %v1912 = vld [vmem:[#allocation3 + $0xa4] sm:$0xff]
        %v1917 = vlaneseq
        %v1918 = vshrl.u32 %v1917, 7
        %v1919 = vsub.s32 0, %v1918
        %v1920 = vrot.slane %v1901, %v1919
        %v1921 = vlaneseq
        %v1922 = vshrl.u32 %v1921, 7
        %v1923 = vsub.s32 0, %v1922
        %v1924 = vrot.slane %v1902, %v1923
        %v1925 = vlaneseq
        %v1926 = vshrl.u32 %v1925, 7
        %v1927 = vsub.s32 0, %v1926
        %v1928 = vrot.slane %v1903, %v1927
        %v1929 = vlaneseq
        %v1930 = vshrl.u32 %v1929, 7
        %v1931 = vsub.s32 0, %v1930
        %v1932 = vrot.slane %v1904, %v1931
        %1945 = vrot.lane.b32.xlu0 %v1905, 112
        %v1946 = vpop.permute.xlu0 %1945
        %1947 = vrot.lane.b32.xlu0 %v1906, 112
        %v1948 = vpop.permute.xlu0 %1947
        %1949 = vrot.lane.b32.xlu0 %v1907, 112
        %v1950 = vpop.permute.xlu0 %1949
        %1951 = vrot.lane.b32.xlu0 %v1908, 112
        %v1952 = vpop.permute.xlu0 %1951
        %1953 = vrot.lane.b32.xlu0 %v1909, 112
        %v1954 = vpop.permute.xlu0 %1953
        %1955 = vrot.lane.b32.xlu0 %v1910, 112
        %v1956 = vpop.permute.xlu0 %1955
        %1957 = vrot.lane.b32.xlu0 %v1911, 112
        %v1958 = vpop.permute.xlu0 %1957
        %1959 = vrot.lane.b32.xlu0 %v1912, 112
        %v1960 = vpop.permute.xlu0 %1959
        %v1969 = vmul.f32 %v1920, %v1946
        %v1970 = vmul.f32 %v1920, %v1948
        %v1971 = vmul.f32 %v1924, %v1950
        %v1972 = vmul.f32 %v1924, %v1952
        %v1973 = vmul.f32 %v1928, %v1954
        %v1974 = vmul.f32 %v1928, %v1956
        %v1975 = vmul.f32 %v1932, %v1958
        %v1976 = vmul.f32 %v1932, %v1960
        %s1977 = scalar_lea.vmem [#allocation12], 4
        %v1978 = vld [vmem:[%s1977] sm:$0x1]
        %v1979 = vld [vmem:[%s1977 + $0x1] sm:$0x1]
        %v1980 = vld [vmem:[%s1977 + $0x2] sm:$0x1]
        %v1981 = vld [vmem:[%s1977 + $0x3] sm:$0x1]
        %v1982 = vld [vmem:[#allocation3 + $0xe] sm:$0xff]
        %v1983 = vld [vmem:[#allocation3 + $0x16] sm:$0xff]
        %v1984 = vld [vmem:[#allocation3 + $0x3e] sm:$0xff]
        %v1985 = vld [vmem:[#allocation3 + $0x46] sm:$0xff]
        %v1986 = vld [vmem:[#allocation3 + $0x6e] sm:$0xff]
        %v1987 = vld [vmem:[#allocation3 + $0x76] sm:$0xff]
        %v1988 = vld [vmem:[#allocation3 + $0x9e] sm:$0xff]
        %v1989 = vld [vmem:[#allocation3 + $0xa6] sm:$0xff]
        %v1994 = vlaneseq
        %v1995 = vshrl.u32 %v1994, 7
        %v1996 = vsub.s32 0, %v1995
        %v1997 = vrot.slane %v1978, %v1996
        %v1998 = vlaneseq
        %v1999 = vshrl.u32 %v1998, 7
        %v2000 = vsub.s32 0, %v1999
        %v2001 = vrot.slane %v1979, %v2000
        %v2002 = vlaneseq
        %v2003 = vshrl.u32 %v2002, 7
        %v2004 = vsub.s32 0, %v2003
        %v2005 = vrot.slane %v1980, %v2004
        %v2006 = vlaneseq
        %v2007 = vshrl.u32 %v2006, 7
        %v2008 = vsub.s32 0, %v2007
        %v2009 = vrot.slane %v1981, %v2008
        %2022 = vrot.lane.b32.xlu0 %v1982, 112
        %v2023 = vpop.permute.xlu0 %2022
        %2024 = vrot.lane.b32.xlu0 %v1983, 112
        %v2025 = vpop.permute.xlu0 %2024
        %2026 = vrot.lane.b32.xlu0 %v1984, 112
        %v2027 = vpop.permute.xlu0 %2026
        %2028 = vrot.lane.b32.xlu0 %v1985, 112
        %v2029 = vpop.permute.xlu0 %2028
        %2030 = vrot.lane.b32.xlu0 %v1986, 112
        %v2031 = vpop.permute.xlu0 %2030
        %2032 = vrot.lane.b32.xlu0 %v1987, 112
        %v2033 = vpop.permute.xlu0 %2032
        %2034 = vrot.lane.b32.xlu0 %v1988, 112
        %v2035 = vpop.permute.xlu0 %2034
        %2036 = vrot.lane.b32.xlu0 %v1989, 112
        %v2037 = vpop.permute.xlu0 %2036
        %v2046 = vmul.f32 %v1997, %v2023
        %v2047 = vmul.f32 %v1997, %v2025
        %v2048 = vmul.f32 %v2001, %v2027
        %v2049 = vmul.f32 %v2001, %v2029
        %v2050 = vmul.f32 %v2005, %v2031
        %v2051 = vmul.f32 %v2005, %v2033
        %v2052 = vmul.f32 %v2009, %v2035
        %v2053 = vmul.f32 %v2009, %v2037
        %s2054 = scalar_lea.vmem [#allocation12], 8
        %v2055 = vld [vmem:[%s2054] sm:$0x1]
        %v2056 = vld [vmem:[%s2054 + $0x1] sm:$0x1]
        %v2057 = vld [vmem:[%s2054 + $0x2] sm:$0x1]
        %v2058 = vld [vmem:[%s2054 + $0x3] sm:$0x1]
        %v2059 = vld [vmem:[#allocation3 + $0x10] sm:$0xff]
        %v2060 = vld [vmem:[#allocation3 + $0x18] sm:$0xff]
        %v2061 = vld [vmem:[#allocation3 + $0x40] sm:$0xff]
        %v2062 = vld [vmem:[#allocation3 + $0x48] sm:$0xff]
        %v2063 = vld [vmem:[#allocation3 + $0x70] sm:$0xff]
        %v2064 = vld [vmem:[#allocation3 + $0x78] sm:$0xff]
        %v2065 = vld [vmem:[#allocation3 + $0xa0] sm:$0xff]
        %v2066 = vld [vmem:[#allocation3 + $0xa8] sm:$0xff]
        %v2071 = vlaneseq
        %v2072 = vshrl.u32 %v2071, 7
        %v2073 = vsub.s32 0, %v2072
        %v2074 = vrot.slane %v2055, %v2073
        %v2075 = vlaneseq
        %v2076 = vshrl.u32 %v2075, 7
        %v2077 = vsub.s32 0, %v2076
        %v2078 = vrot.slane %v2056, %v2077
        %v2079 = vlaneseq
        %v2080 = vshrl.u32 %v2079, 7
        %v2081 = vsub.s32 0, %v2080
        %v2082 = vrot.slane %v2057, %v2081
        %v2083 = vlaneseq
        %v2084 = vshrl.u32 %v2083, 7
        %v2085 = vsub.s32 0, %v2084
        %v2086 = vrot.slane %v2058, %v2085
        %2099 = vrot.lane.b32.xlu0 %v2059, 112
        %v2100 = vpop.permute.xlu0 %2099
        %2101 = vrot.lane.b32.xlu0 %v2060, 112
        %v2102 = vpop.permute.xlu0 %2101
        %2103 = vrot.lane.b32.xlu0 %v2061, 112
        %v2104 = vpop.permute.xlu0 %2103
        %2105 = vrot.lane.b32.xlu0 %v2062, 112
        %v2106 = vpop.permute.xlu0 %2105
        %2107 = vrot.lane.b32.xlu0 %v2063, 112
        %v2108 = vpop.permute.xlu0 %2107
        %2109 = vrot.lane.b32.xlu0 %v2064, 112
        %v2110 = vpop.permute.xlu0 %2109
        %2111 = vrot.lane.b32.xlu0 %v2065, 112
        %v2112 = vpop.permute.xlu0 %2111
        %2113 = vrot.lane.b32.xlu0 %v2066, 112
        %v2114 = vpop.permute.xlu0 %2113
        %v2123 = vmul.f32 %v2074, %v2100
        %v2124 = vmul.f32 %v2074, %v2102
        %v2125 = vmul.f32 %v2078, %v2104
        %v2126 = vmul.f32 %v2078, %v2106
        %v2127 = vmul.f32 %v2082, %v2108
        %v2128 = vmul.f32 %v2082, %v2110
        %v2129 = vmul.f32 %v2086, %v2112
        %v2130 = vmul.f32 %v2086, %v2114
        %v2131 = vadd.f32 %v1969, %v2123
        %v2132 = vadd.f32 %v1970, %v2124
        %v2133 = vadd.f32 %v1971, %v2125
        %v2134 = vadd.f32 %v1972, %v2126
        %v2135 = vadd.f32 %v1973, %v2127
        %v2136 = vadd.f32 %v1974, %v2128
        %v2137 = vadd.f32 %v1975, %v2129
        %v2138 = vadd.f32 %v1976, %v2130
        %s2139 = scalar_lea.vmem [#allocation12], 12
        %v2140 = vld [vmem:[%s2139] sm:$0x1]
        %v2141 = vld [vmem:[%s2139 + $0x1] sm:$0x1]
        %v2142 = vld [vmem:[%s2139 + $0x2] sm:$0x1]
        %v2143 = vld [vmem:[%s2139 + $0x3] sm:$0x1]
        %v2144 = vld [vmem:[#allocation3 + $0x12] sm:$0xff]
        %v2145 = vld [vmem:[#allocation3 + $0x1a] sm:$0xff]
        %v2146 = vld [vmem:[#allocation3 + $0x42] sm:$0xff]
        %v2147 = vld [vmem:[#allocation3 + $0x4a] sm:$0xff]
        %v2148 = vld [vmem:[#allocation3 + $0x72] sm:$0xff]
        %v2149 = vld [vmem:[#allocation3 + $0x7a] sm:$0xff]
        %v2150 = vld [vmem:[#allocation3 + $0xa2] sm:$0xff]
        %v2151 = vld [vmem:[#allocation3 + $0xaa] sm:$0xff]
        %v2156 = vlaneseq
        %v2157 = vshrl.u32 %v2156, 7
        %v2158 = vsub.s32 0, %v2157
        %v2159 = vrot.slane %v2140, %v2158
        %v2160 = vlaneseq
        %v2161 = vshrl.u32 %v2160, 7
        %v2162 = vsub.s32 0, %v2161
        %v2163 = vrot.slane %v2141, %v2162
        %v2164 = vlaneseq
        %v2165 = vshrl.u32 %v2164, 7
        %v2166 = vsub.s32 0, %v2165
        %v2167 = vrot.slane %v2142, %v2166
        %v2168 = vlaneseq
        %v2169 = vshrl.u32 %v2168, 7
        %v2170 = vsub.s32 0, %v2169
        %v2171 = vrot.slane %v2143, %v2170
        %2184 = vrot.lane.b32.xlu0 %v2144, 112
        %v2185 = vpop.permute.xlu0 %2184
        %2186 = vrot.lane.b32.xlu0 %v2145, 112
        %v2187 = vpop.permute.xlu0 %2186
        %2188 = vrot.lane.b32.xlu0 %v2146, 112
        %v2189 = vpop.permute.xlu0 %2188
        %2190 = vrot.lane.b32.xlu0 %v2147, 112
        %v2191 = vpop.permute.xlu0 %2190
        %2192 = vrot.lane.b32.xlu0 %v2148, 112
        %v2193 = vpop.permute.xlu0 %2192
        %2194 = vrot.lane.b32.xlu0 %v2149, 112
        %v2195 = vpop.permute.xlu0 %2194
        %2196 = vrot.lane.b32.xlu0 %v2150, 112
        %v2197 = vpop.permute.xlu0 %2196
        %2198 = vrot.lane.b32.xlu0 %v2151, 112
        %v2199 = vpop.permute.xlu0 %2198
        %v2208 = vmul.f32 %v2159, %v2185
        %v2209 = vmul.f32 %v2159, %v2187
        %v2210 = vmul.f32 %v2163, %v2189
        %v2211 = vmul.f32 %v2163, %v2191
        %v2212 = vmul.f32 %v2167, %v2193
        %v2213 = vmul.f32 %v2167, %v2195
        %v2214 = vmul.f32 %v2171, %v2197
        %v2215 = vmul.f32 %v2171, %v2199
        %v2216 = vadd.f32 %v2046, %v2208
        %v2217 = vadd.f32 %v2047, %v2209
        %v2218 = vadd.f32 %v2048, %v2210
        %v2219 = vadd.f32 %v2049, %v2211
        %v2220 = vadd.f32 %v2050, %v2212
        %v2221 = vadd.f32 %v2051, %v2213
        %v2222 = vadd.f32 %v2052, %v2214
        %v2223 = vadd.f32 %v2053, %v2215
        %s2224 = scalar_lea.vmem [#allocation12], 16
        %v2225 = vld [vmem:[%s2224] sm:$0x1]
        %v2226 = vld [vmem:[%s2224 + $0x1] sm:$0x1]
        %v2227 = vld [vmem:[%s2224 + $0x2] sm:$0x1]
        %v2228 = vld [vmem:[%s2224 + $0x3] sm:$0x1]
        %v2229 = vld [vmem:[#allocation3 + $0x1c] sm:$0xff]
        %v2230 = vld [vmem:[#allocation3 + $0x4c] sm:$0xff]
        %v2231 = vld [vmem:[#allocation3 + $0x7c] sm:$0xff]
        %v2232 = vld [vmem:[#allocation3 + $0xac] sm:$0xff]
        %v2237 = vlaneseq
        %v2238 = vshrl.u32 %v2237, 7
        %v2239 = vsub.s32 0, %v2238
        %v2240 = vrot.slane %v2225, %v2239
        %v2241 = vlaneseq
        %v2242 = vshrl.u32 %v2241, 7
        %v2243 = vsub.s32 0, %v2242
        %v2244 = vrot.slane %v2226, %v2243
        %v2245 = vlaneseq
        %v2246 = vshrl.u32 %v2245, 7
        %v2247 = vsub.s32 0, %v2246
        %v2248 = vrot.slane %v2227, %v2247
        %v2249 = vlaneseq
        %v2250 = vshrl.u32 %v2249, 7
        %v2251 = vsub.s32 0, %v2250
        %v2252 = vrot.slane %v2228, %v2251
        %2261 = vrot.lane.b32.xlu0 %v2229, 112
        %v2262 = vpop.permute.xlu0 %2261
        %2263 = vrot.lane.b32.xlu0 %v2230, 112
        %v2264 = vpop.permute.xlu0 %2263
        %2265 = vrot.lane.b32.xlu0 %v2231, 112
        %v2266 = vpop.permute.xlu0 %2265
        %2267 = vrot.lane.b32.xlu0 %v2232, 112
        %v2268 = vpop.permute.xlu0 %2267
        %v2273 = vmul.f32 %v2240, %v1948
        %v2274 = vmul.f32 %v2240, %v2262
        %v2275 = vmul.f32 %v2244, %v1952
        %v2276 = vmul.f32 %v2244, %v2264
        %v2277 = vmul.f32 %v2248, %v1956
        %v2278 = vmul.f32 %v2248, %v2266
        %v2279 = vmul.f32 %v2252, %v1960
        %v2280 = vmul.f32 %v2252, %v2268
        %v2281 = vadd.f32 %v2131, %v2273
        %v2282 = vadd.f32 %v2132, %v2274
        %v2283 = vadd.f32 %v2133, %v2275
        %v2284 = vadd.f32 %v2134, %v2276
        %v2285 = vadd.f32 %v2135, %v2277
        %v2286 = vadd.f32 %v2136, %v2278
        %v2287 = vadd.f32 %v2137, %v2279
        %v2288 = vadd.f32 %v2138, %v2280
        %v2289 = vadd.f32 %v2281, %v2216
        %v2290 = vadd.f32 %v2282, %v2217
        %v2291 = vadd.f32 %v2283, %v2218
        %v2292 = vadd.f32 %v2284, %v2219
        %v2293 = vadd.f32 %v2285, %v2220
        %v2294 = vadd.f32 %v2286, %v2221
        %v2295 = vadd.f32 %v2287, %v2222
        %v2296 = vadd.f32 %v2288, %v2223
        %s2297 = scalar_lea.vmem [#allocation13], 12
        %v2298 = vld [vmem:[%s2297] sm:$0x1]
        %v2299 = vld [vmem:[%s2297 + $0x1] sm:$0x1]
        %v2300 = vld [vmem:[%s2297 + $0x2] sm:$0x1]
        %v2301 = vld [vmem:[%s2297 + $0x3] sm:$0x1]
        %v2306 = vlaneseq
        %v2307 = vshrl.u32 %v2306, 7
        %v2308 = vsub.s32 0, %v2307
        %v2309 = vrot.slane %v2298, %v2308
        %v2310 = vlaneseq
        %v2311 = vshrl.u32 %v2310, 7
        %v2312 = vsub.s32 0, %v2311
        %v2313 = vrot.slane %v2299, %v2312
        %v2314 = vlaneseq
        %v2315 = vshrl.u32 %v2314, 7
        %v2316 = vsub.s32 0, %v2315
        %v2317 = vrot.slane %v2300, %v2316
        %v2318 = vlaneseq
        %v2319 = vshrl.u32 %v2318, 7
        %v2320 = vsub.s32 0, %v2319
        %v2321 = vrot.slane %v2301, %v2320
        %v2326 = vadd.f32 %v2289, %v2309
        %v2327 = vadd.f32 %v2290, %v2309
        %v2328 = vadd.f32 %v2291, %v2313
        %v2329 = vadd.f32 %v2292, %v2313
        %v2330 = vadd.f32 %v2293, %v2317
        %v2331 = vadd.f32 %v2294, %v2317
        %v2332 = vadd.f32 %v2295, %v2321
        %v2333 = vadd.f32 %v2296, %v2321
        %s2334 = scalar_lea.vmem %s742, 64 [#allocation28]
        %2335 = vst.msk [vmem:[%s2334] sm:$0xff] %vm800, %v2326
        %2336 = vst.msk [vmem:[%s2334 + $0x8] sm:$0xff] %vm800, %v2327
        %2337 = vst.msk [vmem:[%s2334 + $0x10] sm:$0xff] %vm800, %v2328
        %2338 = vst.msk [vmem:[%s2334 + $0x18] sm:$0xff] %vm800, %v2329
        %2339 = vst.msk [vmem:[%s2334 + $0x20] sm:$0xff] %vm800, %v2330
        %2340 = vst.msk [vmem:[%s2334 + $0x28] sm:$0xff] %vm800, %v2331
        %2341 = vst.msk [vmem:[%s2334 + $0x30] sm:$0xff] %vm800, %v2332
        %2342 = vst.msk [vmem:[%s2334 + $0x38] sm:$0xff] %vm800, %v2333
        %s2343 = scalar_lea.vmem %s638, 128 [#allocation4]
        %v2344 = vld [vmem:[%s2343] sm:$0xff]
        %v2345 = vld [vmem:[%s2343 + $0x8] sm:$0xff]
        %v2346 = vld [vmem:[%s2343 + $0x10] sm:$0xff]
        %v2347 = vld [vmem:[%s2343 + $0x18] sm:$0xff]
        %v2348 = vld [vmem:[%s2343 + $0x20] sm:$0xff]
        %v2349 = vld [vmem:[%s2343 + $0x28] sm:$0xff]
        %v2350 = vld [vmem:[%s2343 + $0x30] sm:$0xff]
        %v2351 = vld [vmem:[%s2343 + $0x38] sm:$0xff]
        %2360 = vrot.lane.b32.xlu0 %v2344, 16
        %v2361 = vpop.permute.xlu0 %2360
        %2362 = vrot.lane.b32.xlu0 %v2345, 16
        %v2363 = vpop.permute.xlu0 %2362
        %2364 = vrot.lane.b32.xlu0 %v2346, 16
        %v2365 = vpop.permute.xlu0 %2364
        %2366 = vrot.lane.b32.xlu0 %v2347, 16
        %v2367 = vpop.permute.xlu0 %2366
        %2368 = vrot.lane.b32.xlu0 %v2348, 16
        %v2369 = vpop.permute.xlu0 %2368
        %2370 = vrot.lane.b32.xlu0 %v2349, 16
        %v2371 = vpop.permute.xlu0 %2370
        %2372 = vrot.lane.b32.xlu0 %v2350, 16
        %v2373 = vpop.permute.xlu0 %2372
        %2374 = vrot.lane.b32.xlu0 %v2351, 16
        %v2375 = vpop.permute.xlu0 %2374
        %2384 = vst.msk [vmem:[#allocation2 + $0x10] sm:$0xff] %vm850, %v2361
        %2385 = vst.msk [vmem:[#allocation2 + $0x18] sm:$0xff] %vm850, %v2363
        %2386 = vst.msk [vmem:[#allocation2 + $0x40] sm:$0xff] %vm850, %v2365
        %2387 = vst.msk [vmem:[#allocation2 + $0x48] sm:$0xff] %vm850, %v2367
        %2388 = vst.msk [vmem:[#allocation2 + $0x70] sm:$0xff] %vm850, %v2369
        %2389 = vst.msk [vmem:[#allocation2 + $0x78] sm:$0xff] %vm850, %v2371
        %2390 = vst.msk [vmem:[#allocation2 + $0xa0] sm:$0xff] %vm850, %v2373
        %2391 = vst.msk [vmem:[#allocation2 + $0xa8] sm:$0xff] %vm850, %v2375
        %v2392 = vld [vmem:[#allocation15] sm:$0x1]
        %v2393 = vld [vmem:[#allocation15 + $0x1] sm:$0x1]
        %v2394 = vld [vmem:[#allocation15 + $0x2] sm:$0x1]
        %v2395 = vld [vmem:[#allocation15 + $0x3] sm:$0x1]
        %v2396 = vld [vmem:[#allocation2 + $0x10] sm:$0xff]
        %v2397 = vld [vmem:[#allocation2 + $0x18] sm:$0xff]
        %v2398 = vld [vmem:[#allocation2 + $0x40] sm:$0xff]
        %v2399 = vld [vmem:[#allocation2 + $0x48] sm:$0xff]
        %v2400 = vld [vmem:[#allocation2 + $0x70] sm:$0xff]
        %v2401 = vld [vmem:[#allocation2 + $0x78] sm:$0xff]
        %v2402 = vld [vmem:[#allocation2 + $0xa0] sm:$0xff]
        %v2403 = vld [vmem:[#allocation2 + $0xa8] sm:$0xff]
        %v2408 = vlaneseq
        %v2409 = vshrl.u32 %v2408, 7
        %v2410 = vsub.s32 0, %v2409
        %v2411 = vrot.slane %v2392, %v2410
        %v2412 = vlaneseq
        %v2413 = vshrl.u32 %v2412, 7
        %v2414 = vsub.s32 0, %v2413
        %v2415 = vrot.slane %v2393, %v2414
        %v2416 = vlaneseq
        %v2417 = vshrl.u32 %v2416, 7
        %v2418 = vsub.s32 0, %v2417
        %v2419 = vrot.slane %v2394, %v2418
        %v2420 = vlaneseq
        %v2421 = vshrl.u32 %v2420, 7
        %v2422 = vsub.s32 0, %v2421
        %v2423 = vrot.slane %v2395, %v2422
        %2436 = vrot.lane.b32.xlu0 %v2396, 114
        %v2437 = vpop.permute.xlu0 %2436
        %2438 = vrot.lane.b32.xlu0 %v2397, 114
        %v2439 = vpop.permute.xlu0 %2438
        %2440 = vrot.lane.b32.xlu0 %v2398, 114
        %v2441 = vpop.permute.xlu0 %2440
        %2442 = vrot.lane.b32.xlu0 %v2399, 114
        %v2443 = vpop.permute.xlu0 %2442
        %2444 = vrot.lane.b32.xlu0 %v2400, 114
        %v2445 = vpop.permute.xlu0 %2444
        %2446 = vrot.lane.b32.xlu0 %v2401, 114
        %v2447 = vpop.permute.xlu0 %2446
        %2448 = vrot.lane.b32.xlu0 %v2402, 114
        %v2449 = vpop.permute.xlu0 %2448
        %2450 = vrot.lane.b32.xlu0 %v2403, 114
        %v2451 = vpop.permute.xlu0 %2450
        %v2460 = vmul.f32 %v2411, %v2437
        %v2461 = vmul.f32 %v2411, %v2439
        %v2462 = vmul.f32 %v2415, %v2441
        %v2463 = vmul.f32 %v2415, %v2443
        %v2464 = vmul.f32 %v2419, %v2445
        %v2465 = vmul.f32 %v2419, %v2447
        %v2466 = vmul.f32 %v2423, %v2449
        %v2467 = vmul.f32 %v2423, %v2451
        %s2468 = scalar_lea.vmem [#allocation15], 4
        %v2469 = vld [vmem:[%s2468] sm:$0x1]
        %v2470 = vld [vmem:[%s2468 + $0x1] sm:$0x1]
        %v2471 = vld [vmem:[%s2468 + $0x2] sm:$0x1]
        %v2472 = vld [vmem:[%s2468 + $0x3] sm:$0x1]
        %v2477 = vlaneseq
        %v2478 = vshrl.u32 %v2477, 7
        %v2479 = vsub.s32 0, %v2478
        %v2480 = vrot.slane %v2469, %v2479
        %v2481 = vlaneseq
        %v2482 = vshrl.u32 %v2481, 7
        %v2483 = vsub.s32 0, %v2482
        %v2484 = vrot.slane %v2470, %v2483
        %v2485 = vlaneseq
        %v2486 = vshrl.u32 %v2485, 7
        %v2487 = vsub.s32 0, %v2486
        %v2488 = vrot.slane %v2471, %v2487
        %v2489 = vlaneseq
        %v2490 = vshrl.u32 %v2489, 7
        %v2491 = vsub.s32 0, %v2490
        %v2492 = vrot.slane %v2472, %v2491
        %2497 = vrot.lane.b32.xlu0 %v2396, 113
        %v2498 = vpop.permute.xlu0 %2497
        %2499 = vrot.lane.b32.xlu0 %v2397, 113
        %v2500 = vpop.permute.xlu0 %2499
        %2501 = vrot.lane.b32.xlu0 %v2398, 113
        %v2502 = vpop.permute.xlu0 %2501
        %2503 = vrot.lane.b32.xlu0 %v2399, 113
        %v2504 = vpop.permute.xlu0 %2503
        %2505 = vrot.lane.b32.xlu0 %v2400, 113
        %v2506 = vpop.permute.xlu0 %2505
        %2507 = vrot.lane.b32.xlu0 %v2401, 113
        %v2508 = vpop.permute.xlu0 %2507
        %2509 = vrot.lane.b32.xlu0 %v2402, 113
        %v2510 = vpop.permute.xlu0 %2509
        %2511 = vrot.lane.b32.xlu0 %v2403, 113
        %v2512 = vpop.permute.xlu0 %2511
        %v2521 = vmul.f32 %v2480, %v2498
        %v2522 = vmul.f32 %v2480, %v2500
        %v2523 = vmul.f32 %v2484, %v2502
        %v2524 = vmul.f32 %v2484, %v2504
        %v2525 = vmul.f32 %v2488, %v2506
        %v2526 = vmul.f32 %v2488, %v2508
        %v2527 = vmul.f32 %v2492, %v2510
        %v2528 = vmul.f32 %v2492, %v2512
        %s2529 = scalar_lea.vmem [#allocation15], 8
        %v2530 = vld [vmem:[%s2529] sm:$0x1]
        %v2531 = vld [vmem:[%s2529 + $0x1] sm:$0x1]
        %v2532 = vld [vmem:[%s2529 + $0x2] sm:$0x1]
        %v2533 = vld [vmem:[%s2529 + $0x3] sm:$0x1]
        %v2538 = vlaneseq
        %v2539 = vshrl.u32 %v2538, 7
        %v2540 = vsub.s32 0, %v2539
        %v2541 = vrot.slane %v2530, %v2540
        %v2542 = vlaneseq
        %v2543 = vshrl.u32 %v2542, 7
        %v2544 = vsub.s32 0, %v2543
        %v2545 = vrot.slane %v2531, %v2544
        %v2546 = vlaneseq
        %v2547 = vshrl.u32 %v2546, 7
        %v2548 = vsub.s32 0, %v2547
        %v2549 = vrot.slane %v2532, %v2548
        %v2550 = vlaneseq
        %v2551 = vshrl.u32 %v2550, 7
        %v2552 = vsub.s32 0, %v2551
        %v2553 = vrot.slane %v2533, %v2552
        %2558 = vrot.lane.b32.xlu0 %v2396, 112
        %v2559 = vpop.permute.xlu0 %2558
        %2560 = vrot.lane.b32.xlu0 %v2397, 112
        %v2561 = vpop.permute.xlu0 %2560
        %2562 = vrot.lane.b32.xlu0 %v2398, 112
        %v2563 = vpop.permute.xlu0 %2562
        %2564 = vrot.lane.b32.xlu0 %v2399, 112
        %v2565 = vpop.permute.xlu0 %2564
        %2566 = vrot.lane.b32.xlu0 %v2400, 112
        %v2567 = vpop.permute.xlu0 %2566
        %2568 = vrot.lane.b32.xlu0 %v2401, 112
        %v2569 = vpop.permute.xlu0 %2568
        %2570 = vrot.lane.b32.xlu0 %v2402, 112
        %v2571 = vpop.permute.xlu0 %2570
        %2572 = vrot.lane.b32.xlu0 %v2403, 112
        %v2573 = vpop.permute.xlu0 %2572
        %v2582 = vmul.f32 %v2541, %v2559
        %v2583 = vmul.f32 %v2541, %v2561
        %v2584 = vmul.f32 %v2545, %v2563
        %v2585 = vmul.f32 %v2545, %v2565
        %v2586 = vmul.f32 %v2549, %v2567
        %v2587 = vmul.f32 %v2549, %v2569
        %v2588 = vmul.f32 %v2553, %v2571
        %v2589 = vmul.f32 %v2553, %v2573
        %v2590 = vadd.f32 %v2460, %v2582
        %v2591 = vadd.f32 %v2461, %v2583
        %v2592 = vadd.f32 %v2462, %v2584
        %v2593 = vadd.f32 %v2463, %v2585
        %v2594 = vadd.f32 %v2464, %v2586
        %v2595 = vadd.f32 %v2465, %v2587
        %v2596 = vadd.f32 %v2466, %v2588
        %v2597 = vadd.f32 %v2467, %v2589
        %s2598 = scalar_lea.vmem [#allocation15], 12
        %v2599 = vld [vmem:[%s2598] sm:$0x1]
        %v2600 = vld [vmem:[%s2598 + $0x1] sm:$0x1]
        %v2601 = vld [vmem:[%s2598 + $0x2] sm:$0x1]
        %v2602 = vld [vmem:[%s2598 + $0x3] sm:$0x1]
        %v2607 = vlaneseq
        %v2608 = vshrl.u32 %v2607, 7
        %v2609 = vsub.s32 0, %v2608
        %v2610 = vrot.slane %v2599, %v2609
        %v2611 = vlaneseq
        %v2612 = vshrl.u32 %v2611, 7
        %v2613 = vsub.s32 0, %v2612
        %v2614 = vrot.slane %v2600, %v2613
        %v2615 = vlaneseq
        %v2616 = vshrl.u32 %v2615, 7
        %v2617 = vsub.s32 0, %v2616
        %v2618 = vrot.slane %v2601, %v2617
        %v2619 = vlaneseq
        %v2620 = vshrl.u32 %v2619, 7
        %v2621 = vsub.s32 0, %v2620
        %v2622 = vrot.slane %v2602, %v2621
        %2627 = vrot.lane.b32.xlu0 %v2396, 111
        %v2628 = vpop.permute.xlu0 %2627
        %2629 = vrot.lane.b32.xlu0 %v2397, 111
        %v2630 = vpop.permute.xlu0 %2629
        %2631 = vrot.lane.b32.xlu0 %v2398, 111
        %v2632 = vpop.permute.xlu0 %2631
        %2633 = vrot.lane.b32.xlu0 %v2399, 111
        %v2634 = vpop.permute.xlu0 %2633
        %2635 = vrot.lane.b32.xlu0 %v2400, 111
        %v2636 = vpop.permute.xlu0 %2635
        %2637 = vrot.lane.b32.xlu0 %v2401, 111
        %v2638 = vpop.permute.xlu0 %2637
        %2639 = vrot.lane.b32.xlu0 %v2402, 111
        %v2640 = vpop.permute.xlu0 %2639
        %2641 = vrot.lane.b32.xlu0 %v2403, 111
        %v2642 = vpop.permute.xlu0 %2641
        %v2651 = vmul.f32 %v2610, %v2628
        %v2652 = vmul.f32 %v2610, %v2630
        %v2653 = vmul.f32 %v2614, %v2632
        %v2654 = vmul.f32 %v2614, %v2634
        %v2655 = vmul.f32 %v2618, %v2636
        %v2656 = vmul.f32 %v2618, %v2638
        %v2657 = vmul.f32 %v2622, %v2640
        %v2658 = vmul.f32 %v2622, %v2642
        %v2659 = vadd.f32 %v2521, %v2651
        %v2660 = vadd.f32 %v2522, %v2652
        %v2661 = vadd.f32 %v2523, %v2653
        %v2662 = vadd.f32 %v2524, %v2654
        %v2663 = vadd.f32 %v2525, %v2655
        %v2664 = vadd.f32 %v2526, %v2656
        %v2665 = vadd.f32 %v2527, %v2657
        %v2666 = vadd.f32 %v2528, %v2658
        %s2667 = scalar_lea.vmem [#allocation15], 16
        %v2668 = vld [vmem:[%s2667] sm:$0x1]
        %v2669 = vld [vmem:[%s2667 + $0x1] sm:$0x1]
        %v2670 = vld [vmem:[%s2667 + $0x2] sm:$0x1]
        %v2671 = vld [vmem:[%s2667 + $0x3] sm:$0x1]
        %v2676 = vlaneseq
        %v2677 = vshrl.u32 %v2676, 7
        %v2678 = vsub.s32 0, %v2677
        %v2679 = vrot.slane %v2668, %v2678
        %v2680 = vlaneseq
        %v2681 = vshrl.u32 %v2680, 7
        %v2682 = vsub.s32 0, %v2681
        %v2683 = vrot.slane %v2669, %v2682
        %v2684 = vlaneseq
        %v2685 = vshrl.u32 %v2684, 7
        %v2686 = vsub.s32 0, %v2685
        %v2687 = vrot.slane %v2670, %v2686
        %v2688 = vlaneseq
        %v2689 = vshrl.u32 %v2688, 7
        %v2690 = vsub.s32 0, %v2689
        %v2691 = vrot.slane %v2671, %v2690
        %2696 = vrot.lane.b32.xlu0 %v2396, 110
        %v2697 = vpop.permute.xlu0 %2696
        %2698 = vrot.lane.b32.xlu0 %v2397, 110
        %v2699 = vpop.permute.xlu0 %2698
        %2700 = vrot.lane.b32.xlu0 %v2398, 110
        %v2701 = vpop.permute.xlu0 %2700
        %2702 = vrot.lane.b32.xlu0 %v2399, 110
        %v2703 = vpop.permute.xlu0 %2702
        %2704 = vrot.lane.b32.xlu0 %v2400, 110
        %v2705 = vpop.permute.xlu0 %2704
        %2706 = vrot.lane.b32.xlu0 %v2401, 110
        %v2707 = vpop.permute.xlu0 %2706
        %2708 = vrot.lane.b32.xlu0 %v2402, 110
        %v2709 = vpop.permute.xlu0 %2708
        %2710 = vrot.lane.b32.xlu0 %v2403, 110
        %v2711 = vpop.permute.xlu0 %2710
        %v2720 = vmul.f32 %v2679, %v2697
        %v2721 = vmul.f32 %v2679, %v2699
        %v2722 = vmul.f32 %v2683, %v2701
        %v2723 = vmul.f32 %v2683, %v2703
        %v2724 = vmul.f32 %v2687, %v2705
        %v2725 = vmul.f32 %v2687, %v2707
        %v2726 = vmul.f32 %v2691, %v2709
        %v2727 = vmul.f32 %v2691, %v2711
        %v2728 = vadd.f32 %v2590, %v2720
        %v2729 = vadd.f32 %v2591, %v2721
        %v2730 = vadd.f32 %v2592, %v2722
        %v2731 = vadd.f32 %v2593, %v2723
        %v2732 = vadd.f32 %v2594, %v2724
        %v2733 = vadd.f32 %v2595, %v2725
        %v2734 = vadd.f32 %v2596, %v2726
        %v2735 = vadd.f32 %v2597, %v2727
        %v2736 = vadd.f32 %v2728, %v2659
        %v2737 = vadd.f32 %v2729, %v2660
        %v2738 = vadd.f32 %v2730, %v2661
        %v2739 = vadd.f32 %v2731, %v2662
        %v2740 = vadd.f32 %v2732, %v2663
        %v2741 = vadd.f32 %v2733, %v2664
        %v2742 = vadd.f32 %v2734, %v2665
        %v2743 = vadd.f32 %v2735, %v2666
        %v2744 = vld [vmem:[#allocation21] sm:$0x1]
        %v2745 = vld [vmem:[#allocation21 + $0x1] sm:$0x1]
        %v2746 = vld [vmem:[#allocation21 + $0x2] sm:$0x1]
        %v2747 = vld [vmem:[#allocation21 + $0x3] sm:$0x1]
        %v2752 = vlaneseq
        %v2753 = vshrl.u32 %v2752, 7
        %v2754 = vsub.s32 0, %v2753
        %v2755 = vrot.slane %v2744, %v2754
        %v2756 = vlaneseq
        %v2757 = vshrl.u32 %v2756, 7
        %v2758 = vsub.s32 0, %v2757
        %v2759 = vrot.slane %v2745, %v2758
        %v2760 = vlaneseq
        %v2761 = vshrl.u32 %v2760, 7
        %v2762 = vsub.s32 0, %v2761
        %v2763 = vrot.slane %v2746, %v2762
        %v2764 = vlaneseq
        %v2765 = vshrl.u32 %v2764, 7
        %v2766 = vsub.s32 0, %v2765
        %v2767 = vrot.slane %v2747, %v2766
        %v2772 = vadd.f32 %v2736, %v2755
        %v2773 = vadd.f32 %v2737, %v2755
        %v2774 = vadd.f32 %v2738, %v2759
        %v2775 = vadd.f32 %v2739, %v2759
        %v2776 = vadd.f32 %v2740, %v2763
        %v2777 = vadd.f32 %v2741, %v2763
        %v2778 = vadd.f32 %v2742, %v2767
        %v2779 = vadd.f32 %v2743, %v2767
        %2788 = vrot.lane.b32.xlu0 %v2772, 16
        %v2789 = vpop.permute.xlu0 %2788
        %2790 = vrot.lane.b32.xlu0 %v2773, 16
        %v2791 = vpop.permute.xlu0 %2790
        %2792 = vrot.lane.b32.xlu0 %v2774, 16
        %v2793 = vpop.permute.xlu0 %2792
        %2794 = vrot.lane.b32.xlu0 %v2775, 16
        %v2795 = vpop.permute.xlu0 %2794
        %2796 = vrot.lane.b32.xlu0 %v2776, 16
        %v2797 = vpop.permute.xlu0 %2796
        %2798 = vrot.lane.b32.xlu0 %v2777, 16
        %v2799 = vpop.permute.xlu0 %2798
        %2800 = vrot.lane.b32.xlu0 %v2778, 16
        %v2801 = vpop.permute.xlu0 %2800
        %2802 = vrot.lane.b32.xlu0 %v2779, 16
        %v2803 = vpop.permute.xlu0 %2802
        %2812 = vst.msk [vmem:[#allocation3 + $0x10] sm:$0xff] %vm850, %v2789
        %2813 = vst.msk [vmem:[#allocation3 + $0x18] sm:$0xff] %vm850, %v2791
        %2814 = vst.msk [vmem:[#allocation3 + $0x40] sm:$0xff] %vm850, %v2793
        %2815 = vst.msk [vmem:[#allocation3 + $0x48] sm:$0xff] %vm850, %v2795
        %2816 = vst.msk [vmem:[#allocation3 + $0x70] sm:$0xff] %vm850, %v2797
        %2817 = vst.msk [vmem:[#allocation3 + $0x78] sm:$0xff] %vm850, %v2799
        %2818 = vst.msk [vmem:[#allocation3 + $0xa0] sm:$0xff] %vm850, %v2801
        %2819 = vst.msk [vmem:[#allocation3 + $0xa8] sm:$0xff] %vm850, %v2803
        %v2820 = vld [vmem:[#allocation16] sm:$0x1]
        %v2821 = vld [vmem:[#allocation16 + $0x1] sm:$0x1]
        %v2822 = vld [vmem:[#allocation16 + $0x2] sm:$0x1]
        %v2823 = vld [vmem:[#allocation16 + $0x3] sm:$0x1]
        %v2824 = vld [vmem:[#allocation3 + $0xe] sm:$0xff]
        %v2825 = vld [vmem:[#allocation3 + $0x16] sm:$0xff]
        %v2826 = vld [vmem:[#allocation3 + $0x3e] sm:$0xff]
        %v2827 = vld [vmem:[#allocation3 + $0x46] sm:$0xff]
        %v2828 = vld [vmem:[#allocation3 + $0x6e] sm:$0xff]
        %v2829 = vld [vmem:[#allocation3 + $0x76] sm:$0xff]
        %v2830 = vld [vmem:[#allocation3 + $0x9e] sm:$0xff]
        %v2831 = vld [vmem:[#allocation3 + $0xa6] sm:$0xff]
        %v2836 = vlaneseq
        %v2837 = vshrl.u32 %v2836, 7
        %v2838 = vsub.s32 0, %v2837
        %v2839 = vrot.slane %v2820, %v2838
        %v2840 = vlaneseq
        %v2841 = vshrl.u32 %v2840, 7
        %v2842 = vsub.s32 0, %v2841
        %v2843 = vrot.slane %v2821, %v2842
        %v2844 = vlaneseq
        %v2845 = vshrl.u32 %v2844, 7
        %v2846 = vsub.s32 0, %v2845
        %v2847 = vrot.slane %v2822, %v2846
        %v2848 = vlaneseq
        %v2849 = vshrl.u32 %v2848, 7
        %v2850 = vsub.s32 0, %v2849
        %v2851 = vrot.slane %v2823, %v2850
        %2864 = vrot.lane.b32.xlu0 %v2824, 112
        %v2865 = vpop.permute.xlu0 %2864
        %2866 = vrot.lane.b32.xlu0 %v2825, 112
        %v2867 = vpop.permute.xlu0 %2866
        %2868 = vrot.lane.b32.xlu0 %v2826, 112
        %v2869 = vpop.permute.xlu0 %2868
        %2870 = vrot.lane.b32.xlu0 %v2827, 112
        %v2871 = vpop.permute.xlu0 %2870
        %2872 = vrot.lane.b32.xlu0 %v2828, 112
        %v2873 = vpop.permute.xlu0 %2872
        %2874 = vrot.lane.b32.xlu0 %v2829, 112
        %v2875 = vpop.permute.xlu0 %2874
        %2876 = vrot.lane.b32.xlu0 %v2830, 112
        %v2877 = vpop.permute.xlu0 %2876
        %2878 = vrot.lane.b32.xlu0 %v2831, 112
        %v2879 = vpop.permute.xlu0 %2878
        %v2888 = vmul.f32 %v2839, %v2865
        %v2889 = vmul.f32 %v2839, %v2867
        %v2890 = vmul.f32 %v2843, %v2869
        %v2891 = vmul.f32 %v2843, %v2871
        %v2892 = vmul.f32 %v2847, %v2873
        %v2893 = vmul.f32 %v2847, %v2875
        %v2894 = vmul.f32 %v2851, %v2877
        %v2895 = vmul.f32 %v2851, %v2879
        %s2896 = scalar_lea.vmem [#allocation16], 4
        %v2897 = vld [vmem:[%s2896] sm:$0x1]
        %v2898 = vld [vmem:[%s2896 + $0x1] sm:$0x1]
        %v2899 = vld [vmem:[%s2896 + $0x2] sm:$0x1]
        %v2900 = vld [vmem:[%s2896 + $0x3] sm:$0x1]
        %v2901 = vld [vmem:[#allocation3 + $0xf] sm:$0xff]
        %v2902 = vld [vmem:[#allocation3 + $0x17] sm:$0xff]
        %v2903 = vld [vmem:[#allocation3 + $0x3f] sm:$0xff]
        %v2904 = vld [vmem:[#allocation3 + $0x47] sm:$0xff]
        %v2905 = vld [vmem:[#allocation3 + $0x6f] sm:$0xff]
        %v2906 = vld [vmem:[#allocation3 + $0x77] sm:$0xff]
        %v2907 = vld [vmem:[#allocation3 + $0x9f] sm:$0xff]
        %v2908 = vld [vmem:[#allocation3 + $0xa7] sm:$0xff]
        %v2913 = vlaneseq
        %v2914 = vshrl.u32 %v2913, 7
        %v2915 = vsub.s32 0, %v2914
        %v2916 = vrot.slane %v2897, %v2915
        %v2917 = vlaneseq
        %v2918 = vshrl.u32 %v2917, 7
        %v2919 = vsub.s32 0, %v2918
        %v2920 = vrot.slane %v2898, %v2919
        %v2921 = vlaneseq
        %v2922 = vshrl.u32 %v2921, 7
        %v2923 = vsub.s32 0, %v2922
        %v2924 = vrot.slane %v2899, %v2923
        %v2925 = vlaneseq
        %v2926 = vshrl.u32 %v2925, 7
        %v2927 = vsub.s32 0, %v2926
        %v2928 = vrot.slane %v2900, %v2927
        %2941 = vrot.lane.b32.xlu0 %v2901, 112
        %v2942 = vpop.permute.xlu0 %2941
        %2943 = vrot.lane.b32.xlu0 %v2902, 112
        %v2944 = vpop.permute.xlu0 %2943
        %2945 = vrot.lane.b32.xlu0 %v2903, 112
        %v2946 = vpop.permute.xlu0 %2945
        %2947 = vrot.lane.b32.xlu0 %v2904, 112
        %v2948 = vpop.permute.xlu0 %2947
        %2949 = vrot.lane.b32.xlu0 %v2905, 112
        %v2950 = vpop.permute.xlu0 %2949
        %2951 = vrot.lane.b32.xlu0 %v2906, 112
        %v2952 = vpop.permute.xlu0 %2951
        %2953 = vrot.lane.b32.xlu0 %v2907, 112
        %v2954 = vpop.permute.xlu0 %2953
        %2955 = vrot.lane.b32.xlu0 %v2908, 112
        %v2956 = vpop.permute.xlu0 %2955
        %v2965 = vmul.f32 %v2916, %v2942
        %v2966 = vmul.f32 %v2916, %v2944
        %v2967 = vmul.f32 %v2920, %v2946
        %v2968 = vmul.f32 %v2920, %v2948
        %v2969 = vmul.f32 %v2924, %v2950
        %v2970 = vmul.f32 %v2924, %v2952
        %v2971 = vmul.f32 %v2928, %v2954
        %v2972 = vmul.f32 %v2928, %v2956
        %s2973 = scalar_lea.vmem [#allocation16], 8
        %v2974 = vld [vmem:[%s2973] sm:$0x1]
        %v2975 = vld [vmem:[%s2973 + $0x1] sm:$0x1]
        %v2976 = vld [vmem:[%s2973 + $0x2] sm:$0x1]
        %v2977 = vld [vmem:[%s2973 + $0x3] sm:$0x1]
        %v2978 = vld [vmem:[#allocation3 + $0x10] sm:$0xff]
        %v2979 = vld [vmem:[#allocation3 + $0x18] sm:$0xff]
        %v2980 = vld [vmem:[#allocation3 + $0x40] sm:$0xff]
        %v2981 = vld [vmem:[#allocation3 + $0x48] sm:$0xff]
        %v2982 = vld [vmem:[#allocation3 + $0x70] sm:$0xff]
        %v2983 = vld [vmem:[#allocation3 + $0x78] sm:$0xff]
        %v2984 = vld [vmem:[#allocation3 + $0xa0] sm:$0xff]
        %v2985 = vld [vmem:[#allocation3 + $0xa8] sm:$0xff]
        %v2990 = vlaneseq
        %v2991 = vshrl.u32 %v2990, 7
        %v2992 = vsub.s32 0, %v2991
        %v2993 = vrot.slane %v2974, %v2992
        %v2994 = vlaneseq
        %v2995 = vshrl.u32 %v2994, 7
        %v2996 = vsub.s32 0, %v2995
        %v2997 = vrot.slane %v2975, %v2996
        %v2998 = vlaneseq
        %v2999 = vshrl.u32 %v2998, 7
        %v3000 = vsub.s32 0, %v2999
        %v3001 = vrot.slane %v2976, %v3000
        %v3002 = vlaneseq
        %v3003 = vshrl.u32 %v3002, 7
        %v3004 = vsub.s32 0, %v3003
        %v3005 = vrot.slane %v2977, %v3004
        %3018 = vrot.lane.b32.xlu0 %v2978, 112
        %v3019 = vpop.permute.xlu0 %3018
        %3020 = vrot.lane.b32.xlu0 %v2979, 112
        %v3021 = vpop.permute.xlu0 %3020
        %3022 = vrot.lane.b32.xlu0 %v2980, 112
        %v3023 = vpop.permute.xlu0 %3022
        %3024 = vrot.lane.b32.xlu0 %v2981, 112
        %v3025 = vpop.permute.xlu0 %3024
        %3026 = vrot.lane.b32.xlu0 %v2982, 112
        %v3027 = vpop.permute.xlu0 %3026
        %3028 = vrot.lane.b32.xlu0 %v2983, 112
        %v3029 = vpop.permute.xlu0 %3028
        %3030 = vrot.lane.b32.xlu0 %v2984, 112
        %v3031 = vpop.permute.xlu0 %3030
        %3032 = vrot.lane.b32.xlu0 %v2985, 112
        %v3033 = vpop.permute.xlu0 %3032
        %v3042 = vmul.f32 %v2993, %v3019
        %v3043 = vmul.f32 %v2993, %v3021
        %v3044 = vmul.f32 %v2997, %v3023
        %v3045 = vmul.f32 %v2997, %v3025
        %v3046 = vmul.f32 %v3001, %v3027
        %v3047 = vmul.f32 %v3001, %v3029
        %v3048 = vmul.f32 %v3005, %v3031
        %v3049 = vmul.f32 %v3005, %v3033
        %v3050 = vadd.f32 %v2888, %v3042
        %v3051 = vadd.f32 %v2889, %v3043
        %v3052 = vadd.f32 %v2890, %v3044
        %v3053 = vadd.f32 %v2891, %v3045
        %v3054 = vadd.f32 %v2892, %v3046
        %v3055 = vadd.f32 %v2893, %v3047
        %v3056 = vadd.f32 %v2894, %v3048
        %v3057 = vadd.f32 %v2895, %v3049
        %s3058 = scalar_lea.vmem [#allocation16], 12
        %v3059 = vld [vmem:[%s3058] sm:$0x1]
        %v3060 = vld [vmem:[%s3058 + $0x1] sm:$0x1]
        %v3061 = vld [vmem:[%s3058 + $0x2] sm:$0x1]
        %v3062 = vld [vmem:[%s3058 + $0x3] sm:$0x1]
        %v3063 = vld [vmem:[#allocation3 + $0x11] sm:$0xff]
        %v3064 = vld [vmem:[#allocation3 + $0x19] sm:$0xff]
        %v3065 = vld [vmem:[#allocation3 + $0x41] sm:$0xff]
        %v3066 = vld [vmem:[#allocation3 + $0x49] sm:$0xff]
        %v3067 = vld [vmem:[#allocation3 + $0x71] sm:$0xff]
        %v3068 = vld [vmem:[#allocation3 + $0x79] sm:$0xff]
        %v3069 = vld [vmem:[#allocation3 + $0xa1] sm:$0xff]
        %v3070 = vld [vmem:[#allocation3 + $0xa9] sm:$0xff]
        %v3075 = vlaneseq
        %v3076 = vshrl.u32 %v3075, 7
        %v3077 = vsub.s32 0, %v3076
        %v3078 = vrot.slane %v3059, %v3077
        %v3079 = vlaneseq
        %v3080 = vshrl.u32 %v3079, 7
        %v3081 = vsub.s32 0, %v3080
        %v3082 = vrot.slane %v3060, %v3081
        %v3083 = vlaneseq
        %v3084 = vshrl.u32 %v3083, 7
        %v3085 = vsub.s32 0, %v3084
        %v3086 = vrot.slane %v3061, %v3085
        %v3087 = vlaneseq
        %v3088 = vshrl.u32 %v3087, 7
        %v3089 = vsub.s32 0, %v3088
        %v3090 = vrot.slane %v3062, %v3089
        %3103 = vrot.lane.b32.xlu0 %v3063, 112
        %v3104 = vpop.permute.xlu0 %3103
        %3105 = vrot.lane.b32.xlu0 %v3064, 112
        %v3106 = vpop.permute.xlu0 %3105
        %3107 = vrot.lane.b32.xlu0 %v3065, 112
        %v3108 = vpop.permute.xlu0 %3107
        %3109 = vrot.lane.b32.xlu0 %v3066, 112
        %v3110 = vpop.permute.xlu0 %3109
        %3111 = vrot.lane.b32.xlu0 %v3067, 112
        %v3112 = vpop.permute.xlu0 %3111
        %3113 = vrot.lane.b32.xlu0 %v3068, 112
        %v3114 = vpop.permute.xlu0 %3113
        %3115 = vrot.lane.b32.xlu0 %v3069, 112
        %v3116 = vpop.permute.xlu0 %3115
        %3117 = vrot.lane.b32.xlu0 %v3070, 112
        %v3118 = vpop.permute.xlu0 %3117
        %v3127 = vmul.f32 %v3078, %v3104
        %v3128 = vmul.f32 %v3078, %v3106
        %v3129 = vmul.f32 %v3082, %v3108
        %v3130 = vmul.f32 %v3082, %v3110
        %v3131 = vmul.f32 %v3086, %v3112
        %v3132 = vmul.f32 %v3086, %v3114
        %v3133 = vmul.f32 %v3090, %v3116
        %v3134 = vmul.f32 %v3090, %v3118
        %v3135 = vadd.f32 %v2965, %v3127
        %v3136 = vadd.f32 %v2966, %v3128
        %v3137 = vadd.f32 %v2967, %v3129
        %v3138 = vadd.f32 %v2968, %v3130
        %v3139 = vadd.f32 %v2969, %v3131
        %v3140 = vadd.f32 %v2970, %v3132
        %v3141 = vadd.f32 %v2971, %v3133
        %v3142 = vadd.f32 %v2972, %v3134
        %s3143 = scalar_lea.vmem [#allocation16], 16
        %v3144 = vld [vmem:[%s3143] sm:$0x1]
        %v3145 = vld [vmem:[%s3143 + $0x1] sm:$0x1]
        %v3146 = vld [vmem:[%s3143 + $0x2] sm:$0x1]
        %v3147 = vld [vmem:[%s3143 + $0x3] sm:$0x1]
        %v3148 = vld [vmem:[#allocation3 + $0x12] sm:$0xff]
        %v3149 = vld [vmem:[#allocation3 + $0x1a] sm:$0xff]
        %v3150 = vld [vmem:[#allocation3 + $0x42] sm:$0xff]
        %v3151 = vld [vmem:[#allocation3 + $0x4a] sm:$0xff]
        %v3152 = vld [vmem:[#allocation3 + $0x72] sm:$0xff]
        %v3153 = vld [vmem:[#allocation3 + $0x7a] sm:$0xff]
        %v3154 = vld [vmem:[#allocation3 + $0xa2] sm:$0xff]
        %v3155 = vld [vmem:[#allocation3 + $0xaa] sm:$0xff]
        %v3160 = vlaneseq
        %v3161 = vshrl.u32 %v3160, 7
        %v3162 = vsub.s32 0, %v3161
        %v3163 = vrot.slane %v3144, %v3162
        %v3164 = vlaneseq
        %v3165 = vshrl.u32 %v3164, 7
        %v3166 = vsub.s32 0, %v3165
        %v3167 = vrot.slane %v3145, %v3166
        %v3168 = vlaneseq
        %v3169 = vshrl.u32 %v3168, 7
        %v3170 = vsub.s32 0, %v3169
        %v3171 = vrot.slane %v3146, %v3170
        %v3172 = vlaneseq
        %v3173 = vshrl.u32 %v3172, 7
        %v3174 = vsub.s32 0, %v3173
        %v3175 = vrot.slane %v3147, %v3174
        %3188 = vrot.lane.b32.xlu0 %v3148, 112
        %v3189 = vpop.permute.xlu0 %3188
        %3190 = vrot.lane.b32.xlu0 %v3149, 112
        %v3191 = vpop.permute.xlu0 %3190
        %3192 = vrot.lane.b32.xlu0 %v3150, 112
        %v3193 = vpop.permute.xlu0 %3192
        %3194 = vrot.lane.b32.xlu0 %v3151, 112
        %v3195 = vpop.permute.xlu0 %3194
        %3196 = vrot.lane.b32.xlu0 %v3152, 112
        %v3197 = vpop.permute.xlu0 %3196
        %3198 = vrot.lane.b32.xlu0 %v3153, 112
        %v3199 = vpop.permute.xlu0 %3198
        %3200 = vrot.lane.b32.xlu0 %v3154, 112
        %v3201 = vpop.permute.xlu0 %3200
        %3202 = vrot.lane.b32.xlu0 %v3155, 112
        %v3203 = vpop.permute.xlu0 %3202
        %v3212 = vmul.f32 %v3163, %v3189
        %v3213 = vmul.f32 %v3163, %v3191
        %v3214 = vmul.f32 %v3167, %v3193
        %v3215 = vmul.f32 %v3167, %v3195
        %v3216 = vmul.f32 %v3171, %v3197
        %v3217 = vmul.f32 %v3171, %v3199
        %v3218 = vmul.f32 %v3175, %v3201
        %v3219 = vmul.f32 %v3175, %v3203
        %v3220 = vadd.f32 %v3050, %v3212
        %v3221 = vadd.f32 %v3051, %v3213
        %v3222 = vadd.f32 %v3052, %v3214
        %v3223 = vadd.f32 %v3053, %v3215
        %v3224 = vadd.f32 %v3054, %v3216
        %v3225 = vadd.f32 %v3055, %v3217
        %v3226 = vadd.f32 %v3056, %v3218
        %v3227 = vadd.f32 %v3057, %v3219
        %v3228 = vadd.f32 %v3220, %v3135
        %v3229 = vadd.f32 %v3221, %v3136
        %v3230 = vadd.f32 %v3222, %v3137
        %v3231 = vadd.f32 %v3223, %v3138
        %v3232 = vadd.f32 %v3224, %v3139
        %v3233 = vadd.f32 %v3225, %v3140
        %v3234 = vadd.f32 %v3226, %v3141
        %v3235 = vadd.f32 %v3227, %v3142
        %s3236 = scalar_lea.vmem [#allocation21], 4
        %v3237 = vld [vmem:[%s3236] sm:$0x1]
        %v3238 = vld [vmem:[%s3236 + $0x1] sm:$0x1]
        %v3239 = vld [vmem:[%s3236 + $0x2] sm:$0x1]
        %v3240 = vld [vmem:[%s3236 + $0x3] sm:$0x1]
        %v3245 = vlaneseq
        %v3246 = vshrl.u32 %v3245, 7
        %v3247 = vsub.s32 0, %v3246
        %v3248 = vrot.slane %v3237, %v3247
        %v3249 = vlaneseq
        %v3250 = vshrl.u32 %v3249, 7
        %v3251 = vsub.s32 0, %v3250
        %v3252 = vrot.slane %v3238, %v3251
        %v3253 = vlaneseq
        %v3254 = vshrl.u32 %v3253, 7
        %v3255 = vsub.s32 0, %v3254
        %v3256 = vrot.slane %v3239, %v3255
        %v3257 = vlaneseq
        %v3258 = vshrl.u32 %v3257, 7
        %v3259 = vsub.s32 0, %v3258
        %v3260 = vrot.slane %v3240, %v3259
        %v3265 = vadd.f32 %v3228, %v3248
        %v3266 = vadd.f32 %v3229, %v3248
        %v3267 = vadd.f32 %v3230, %v3252
        %v3268 = vadd.f32 %v3231, %v3252
        %v3269 = vadd.f32 %v3232, %v3256
        %v3270 = vadd.f32 %v3233, %v3256
        %v3271 = vadd.f32 %v3234, %v3260
        %v3272 = vadd.f32 %v3235, %v3260
        %3281 = vrot.lane.b32.xlu0 %v3265, 16
        %v3282 = vpop.permute.xlu0 %3281
        %3283 = vrot.lane.b32.xlu0 %v3266, 16
        %v3284 = vpop.permute.xlu0 %3283
        %3285 = vrot.lane.b32.xlu0 %v3267, 16
        %v3286 = vpop.permute.xlu0 %3285
        %3287 = vrot.lane.b32.xlu0 %v3268, 16
        %v3288 = vpop.permute.xlu0 %3287
        %3289 = vrot.lane.b32.xlu0 %v3269, 16
        %v3290 = vpop.permute.xlu0 %3289
        %3291 = vrot.lane.b32.xlu0 %v3270, 16
        %v3292 = vpop.permute.xlu0 %3291
        %3293 = vrot.lane.b32.xlu0 %v3271, 16
        %v3294 = vpop.permute.xlu0 %3293
        %3295 = vrot.lane.b32.xlu0 %v3272, 16
        %v3296 = vpop.permute.xlu0 %3295
        %3305 = vst.msk [vmem:[#allocation2 + $0x10] sm:$0xff] %vm850, %v3282
        %3306 = vst.msk [vmem:[#allocation2 + $0x18] sm:$0xff] %vm850, %v3284
        %3307 = vst.msk [vmem:[#allocation2 + $0x40] sm:$0xff] %vm850, %v3286
        %3308 = vst.msk [vmem:[#allocation2 + $0x48] sm:$0xff] %vm850, %v3288
        %3309 = vst.msk [vmem:[#allocation2 + $0x70] sm:$0xff] %vm850, %v3290
        %3310 = vst.msk [vmem:[#allocation2 + $0x78] sm:$0xff] %vm850, %v3292
        %3311 = vst.msk [vmem:[#allocation2 + $0xa0] sm:$0xff] %vm850, %v3294
        %3312 = vst.msk [vmem:[#allocation2 + $0xa8] sm:$0xff] %vm850, %v3296
        %v3313 = vld [vmem:[#allocation18] sm:$0x1]
        %v3314 = vld [vmem:[#allocation18 + $0x1] sm:$0x1]
        %v3315 = vld [vmem:[#allocation18 + $0x2] sm:$0x1]
        %v3316 = vld [vmem:[#allocation18 + $0x3] sm:$0x1]
        %v3317 = vld [vmem:[#allocation2 + $0x10] sm:$0xff]
        %v3318 = vld [vmem:[#allocation2 + $0x18] sm:$0xff]
        %v3319 = vld [vmem:[#allocation2 + $0x40] sm:$0xff]
        %v3320 = vld [vmem:[#allocation2 + $0x48] sm:$0xff]
        %v3321 = vld [vmem:[#allocation2 + $0x70] sm:$0xff]
        %v3322 = vld [vmem:[#allocation2 + $0x78] sm:$0xff]
        %v3323 = vld [vmem:[#allocation2 + $0xa0] sm:$0xff]
        %v3324 = vld [vmem:[#allocation2 + $0xa8] sm:$0xff]
        %v3329 = vlaneseq
        %v3330 = vshrl.u32 %v3329, 7
        %v3331 = vsub.s32 0, %v3330
        %v3332 = vrot.slane %v3313, %v3331
        %v3333 = vlaneseq
        %v3334 = vshrl.u32 %v3333, 7
        %v3335 = vsub.s32 0, %v3334
        %v3336 = vrot.slane %v3314, %v3335
        %v3337 = vlaneseq
        %v3338 = vshrl.u32 %v3337, 7
        %v3339 = vsub.s32 0, %v3338
        %v3340 = vrot.slane %v3315, %v3339
        %v3341 = vlaneseq
        %v3342 = vshrl.u32 %v3341, 7
        %v3343 = vsub.s32 0, %v3342
        %v3344 = vrot.slane %v3316, %v3343
        %3357 = vrot.lane.b32.xlu0 %v3317, 121
        %v3358 = vpop.permute.xlu0 %3357
        %3359 = vrot.lane.b32.xlu0 %v3318, 121
        %v3360 = vpop.permute.xlu0 %3359
        %3361 = vrot.lane.b32.xlu0 %v3319, 121
        %v3362 = vpop.permute.xlu0 %3361
        %3363 = vrot.lane.b32.xlu0 %v3320, 121
        %v3364 = vpop.permute.xlu0 %3363
        %3365 = vrot.lane.b32.xlu0 %v3321, 121
        %v3366 = vpop.permute.xlu0 %3365
        %3367 = vrot.lane.b32.xlu0 %v3322, 121
        %v3368 = vpop.permute.xlu0 %3367
        %3369 = vrot.lane.b32.xlu0 %v3323, 121
        %v3370 = vpop.permute.xlu0 %3369
        %3371 = vrot.lane.b32.xlu0 %v3324, 121
        %v3372 = vpop.permute.xlu0 %3371
        %v3381 = vmul.f32 %v3332, %v3358
        %v3382 = vmul.f32 %v3332, %v3360
        %v3383 = vmul.f32 %v3336, %v3362
        %v3384 = vmul.f32 %v3336, %v3364
        %v3385 = vmul.f32 %v3340, %v3366
        %v3386 = vmul.f32 %v3340, %v3368
        %v3387 = vmul.f32 %v3344, %v3370
        %v3388 = vmul.f32 %v3344, %v3372
        %s3389 = scalar_lea.vmem [#allocation18], 4
        %v3390 = vld [vmem:[%s3389] sm:$0x1]
        %v3391 = vld [vmem:[%s3389 + $0x1] sm:$0x1]
        %v3392 = vld [vmem:[%s3389 + $0x2] sm:$0x1]
        %v3393 = vld [vmem:[%s3389 + $0x3] sm:$0x1]
        %v3398 = vlaneseq
        %v3399 = vshrl.u32 %v3398, 7
        %v3400 = vsub.s32 0, %v3399
        %v3401 = vrot.slane %v3390, %v3400
        %v3402 = vlaneseq
        %v3403 = vshrl.u32 %v3402, 7
        %v3404 = vsub.s32 0, %v3403
        %v3405 = vrot.slane %v3391, %v3404
        %v3406 = vlaneseq
        %v3407 = vshrl.u32 %v3406, 7
        %v3408 = vsub.s32 0, %v3407
        %v3409 = vrot.slane %v3392, %v3408
        %v3410 = vlaneseq
        %v3411 = vshrl.u32 %v3410, 7
        %v3412 = vsub.s32 0, %v3411
        %v3413 = vrot.slane %v3393, %v3412
        %3418 = vrot.lane.b32.xlu0 %v3317, 118
        %v3419 = vpop.permute.xlu0 %3418
        %3420 = vrot.lane.b32.xlu0 %v3318, 118
        %v3421 = vpop.permute.xlu0 %3420
        %3422 = vrot.lane.b32.xlu0 %v3319, 118
        %v3423 = vpop.permute.xlu0 %3422
        %3424 = vrot.lane.b32.xlu0 %v3320, 118
        %v3425 = vpop.permute.xlu0 %3424
        %3426 = vrot.lane.b32.xlu0 %v3321, 118
        %v3427 = vpop.permute.xlu0 %3426
        %3428 = vrot.lane.b32.xlu0 %v3322, 118
        %v3429 = vpop.permute.xlu0 %3428
        %3430 = vrot.lane.b32.xlu0 %v3323, 118
        %v3431 = vpop.permute.xlu0 %3430
        %3432 = vrot.lane.b32.xlu0 %v3324, 118
        %v3433 = vpop.permute.xlu0 %3432
        %v3442 = vmul.f32 %v3401, %v3419
        %v3443 = vmul.f32 %v3401, %v3421
        %v3444 = vmul.f32 %v3405, %v3423
        %v3445 = vmul.f32 %v3405, %v3425
        %v3446 = vmul.f32 %v3409, %v3427
        %v3447 = vmul.f32 %v3409, %v3429
        %v3448 = vmul.f32 %v3413, %v3431
        %v3449 = vmul.f32 %v3413, %v3433
        %s3450 = scalar_lea.vmem [#allocation18], 8
        %v3451 = vld [vmem:[%s3450] sm:$0x1]
        %v3452 = vld [vmem:[%s3450 + $0x1] sm:$0x1]
        %v3453 = vld [vmem:[%s3450 + $0x2] sm:$0x1]
        %v3454 = vld [vmem:[%s3450 + $0x3] sm:$0x1]
        %v3459 = vlaneseq
        %v3460 = vshrl.u32 %v3459, 7
        %v3461 = vsub.s32 0, %v3460
        %v3462 = vrot.slane %v3451, %v3461
        %v3463 = vlaneseq
        %v3464 = vshrl.u32 %v3463, 7
        %v3465 = vsub.s32 0, %v3464
        %v3466 = vrot.slane %v3452, %v3465
        %v3467 = vlaneseq
        %v3468 = vshrl.u32 %v3467, 7
        %v3469 = vsub.s32 0, %v3468
        %v3470 = vrot.slane %v3453, %v3469
        %v3471 = vlaneseq
        %v3472 = vshrl.u32 %v3471, 7
        %v3473 = vsub.s32 0, %v3472
        %v3474 = vrot.slane %v3454, %v3473
        %3479 = vrot.lane.b32.xlu0 %v3317, 115
        %v3480 = vpop.permute.xlu0 %3479
        %3481 = vrot.lane.b32.xlu0 %v3318, 115
        %v3482 = vpop.permute.xlu0 %3481
        %3483 = vrot.lane.b32.xlu0 %v3319, 115
        %v3484 = vpop.permute.xlu0 %3483
        %3485 = vrot.lane.b32.xlu0 %v3320, 115
        %v3486 = vpop.permute.xlu0 %3485
        %3487 = vrot.lane.b32.xlu0 %v3321, 115
        %v3488 = vpop.permute.xlu0 %3487
        %3489 = vrot.lane.b32.xlu0 %v3322, 115
        %v3490 = vpop.permute.xlu0 %3489
        %3491 = vrot.lane.b32.xlu0 %v3323, 115
        %v3492 = vpop.permute.xlu0 %3491
        %3493 = vrot.lane.b32.xlu0 %v3324, 115
        %v3494 = vpop.permute.xlu0 %3493
        %v3503 = vmul.f32 %v3462, %v3480
        %v3504 = vmul.f32 %v3462, %v3482
        %v3505 = vmul.f32 %v3466, %v3484
        %v3506 = vmul.f32 %v3466, %v3486
        %v3507 = vmul.f32 %v3470, %v3488
        %v3508 = vmul.f32 %v3470, %v3490
        %v3509 = vmul.f32 %v3474, %v3492
        %v3510 = vmul.f32 %v3474, %v3494
        %s3511 = scalar_lea.vmem [#allocation18], 12
        %v3512 = vld [vmem:[%s3511] sm:$0x1]
        %v3513 = vld [vmem:[%s3511 + $0x1] sm:$0x1]
        %v3514 = vld [vmem:[%s3511 + $0x2] sm:$0x1]
        %v3515 = vld [vmem:[%s3511 + $0x3] sm:$0x1]
        %v3520 = vlaneseq
        %v3521 = vshrl.u32 %v3520, 7
        %v3522 = vsub.s32 0, %v3521
        %v3523 = vrot.slane %v3512, %v3522
        %v3524 = vlaneseq
        %v3525 = vshrl.u32 %v3524, 7
        %v3526 = vsub.s32 0, %v3525
        %v3527 = vrot.slane %v3513, %v3526
        %v3528 = vlaneseq
        %v3529 = vshrl.u32 %v3528, 7
        %v3530 = vsub.s32 0, %v3529
        %v3531 = vrot.slane %v3514, %v3530
        %v3532 = vlaneseq
        %v3533 = vshrl.u32 %v3532, 7
        %v3534 = vsub.s32 0, %v3533
        %v3535 = vrot.slane %v3515, %v3534
        %3540 = vrot.lane.b32.xlu0 %v3317, 112
        %v3541 = vpop.permute.xlu0 %3540
        %3542 = vrot.lane.b32.xlu0 %v3318, 112
        %v3543 = vpop.permute.xlu0 %3542
        %3544 = vrot.lane.b32.xlu0 %v3319, 112
        %v3545 = vpop.permute.xlu0 %3544
        %3546 = vrot.lane.b32.xlu0 %v3320, 112
        %v3547 = vpop.permute.xlu0 %3546
        %3548 = vrot.lane.b32.xlu0 %v3321, 112
        %v3549 = vpop.permute.xlu0 %3548
        %3550 = vrot.lane.b32.xlu0 %v3322, 112
        %v3551 = vpop.permute.xlu0 %3550
        %3552 = vrot.lane.b32.xlu0 %v3323, 112
        %v3553 = vpop.permute.xlu0 %3552
        %3554 = vrot.lane.b32.xlu0 %v3324, 112
        %v3555 = vpop.permute.xlu0 %3554
        %v3564 = vmul.f32 %v3523, %v3541
        %v3565 = vmul.f32 %v3523, %v3543
        %v3566 = vmul.f32 %v3527, %v3545
        %v3567 = vmul.f32 %v3527, %v3547
        %v3568 = vmul.f32 %v3531, %v3549
        %v3569 = vmul.f32 %v3531, %v3551
        %v3570 = vmul.f32 %v3535, %v3553
        %v3571 = vmul.f32 %v3535, %v3555
        %s3572 = scalar_lea.vmem [#allocation18], 16
        %v3573 = vld [vmem:[%s3572] sm:$0x1]
        %v3574 = vld [vmem:[%s3572 + $0x1] sm:$0x1]
        %v3575 = vld [vmem:[%s3572 + $0x2] sm:$0x1]
        %v3576 = vld [vmem:[%s3572 + $0x3] sm:$0x1]
        %v3581 = vlaneseq
        %v3582 = vshrl.u32 %v3581, 7
        %v3583 = vsub.s32 0, %v3582
        %v3584 = vrot.slane %v3573, %v3583
        %v3585 = vlaneseq
        %v3586 = vshrl.u32 %v3585, 7
        %v3587 = vsub.s32 0, %v3586
        %v3588 = vrot.slane %v3574, %v3587
        %v3589 = vlaneseq
        %v3590 = vshrl.u32 %v3589, 7
        %v3591 = vsub.s32 0, %v3590
        %v3592 = vrot.slane %v3575, %v3591
        %v3593 = vlaneseq
        %v3594 = vshrl.u32 %v3593, 7
        %v3595 = vsub.s32 0, %v3594
        %v3596 = vrot.slane %v3576, %v3595
        %3601 = vrot.lane.b32.xlu0 %v3317, 109
        %v3602 = vpop.permute.xlu0 %3601
        %3603 = vrot.lane.b32.xlu0 %v3318, 109
        %v3604 = vpop.permute.xlu0 %3603
        %3605 = vrot.lane.b32.xlu0 %v3319, 109
        %v3606 = vpop.permute.xlu0 %3605
        %3607 = vrot.lane.b32.xlu0 %v3320, 109
        %v3608 = vpop.permute.xlu0 %3607
        %3609 = vrot.lane.b32.xlu0 %v3321, 109
        %v3610 = vpop.permute.xlu0 %3609
        %3611 = vrot.lane.b32.xlu0 %v3322, 109
        %v3612 = vpop.permute.xlu0 %3611
        %3613 = vrot.lane.b32.xlu0 %v3323, 109
        %v3614 = vpop.permute.xlu0 %3613
        %3615 = vrot.lane.b32.xlu0 %v3324, 109
        %v3616 = vpop.permute.xlu0 %3615
        %v3625 = vmul.f32 %v3584, %v3602
        %v3626 = vmul.f32 %v3584, %v3604
        %v3627 = vmul.f32 %v3588, %v3606
        %v3628 = vmul.f32 %v3588, %v3608
        %v3629 = vmul.f32 %v3592, %v3610
        %v3630 = vmul.f32 %v3592, %v3612
        %v3631 = vmul.f32 %v3596, %v3614
        %v3632 = vmul.f32 %v3596, %v3616
        %v3633 = vadd.f32 %v3381, %v3625
        %v3634 = vadd.f32 %v3382, %v3626
        %v3635 = vadd.f32 %v3383, %v3627
        %v3636 = vadd.f32 %v3384, %v3628
        %v3637 = vadd.f32 %v3385, %v3629
        %v3638 = vadd.f32 %v3386, %v3630
        %v3639 = vadd.f32 %v3387, %v3631
        %v3640 = vadd.f32 %v3388, %v3632
        %s3641 = scalar_lea.vmem [#allocation18], 20
        %v3642 = vld [vmem:[%s3641] sm:$0x1]
        %v3643 = vld [vmem:[%s3641 + $0x1] sm:$0x1]
        %v3644 = vld [vmem:[%s3641 + $0x2] sm:$0x1]
        %v3645 = vld [vmem:[%s3641 + $0x3] sm:$0x1]
        %v3650 = vlaneseq
        %v3651 = vshrl.u32 %v3650, 7
        %v3652 = vsub.s32 0, %v3651
        %v3653 = vrot.slane %v3642, %v3652
        %v3654 = vlaneseq
        %v3655 = vshrl.u32 %v3654, 7
        %v3656 = vsub.s32 0, %v3655
        %v3657 = vrot.slane %v3643, %v3656
        %v3658 = vlaneseq
        %v3659 = vshrl.u32 %v3658, 7
        %v3660 = vsub.s32 0, %v3659
        %v3661 = vrot.slane %v3644, %v3660
        %v3662 = vlaneseq
        %v3663 = vshrl.u32 %v3662, 7
        %v3664 = vsub.s32 0, %v3663
        %v3665 = vrot.slane %v3645, %v3664
        %3670 = vrot.lane.b32.xlu0 %v3317, 106
        %v3671 = vpop.permute.xlu0 %3670
        %3672 = vrot.lane.b32.xlu0 %v3318, 106
        %v3673 = vpop.permute.xlu0 %3672
        %3674 = vrot.lane.b32.xlu0 %v3319, 106
        %v3675 = vpop.permute.xlu0 %3674
        %3676 = vrot.lane.b32.xlu0 %v3320, 106
        %v3677 = vpop.permute.xlu0 %3676
        %3678 = vrot.lane.b32.xlu0 %v3321, 106
        %v3679 = vpop.permute.xlu0 %3678
        %3680 = vrot.lane.b32.xlu0 %v3322, 106
        %v3681 = vpop.permute.xlu0 %3680
        %3682 = vrot.lane.b32.xlu0 %v3323, 106
        %v3683 = vpop.permute.xlu0 %3682
        %3684 = vrot.lane.b32.xlu0 %v3324, 106
        %v3685 = vpop.permute.xlu0 %3684
        %v3694 = vmul.f32 %v3653, %v3671
        %v3695 = vmul.f32 %v3653, %v3673
        %v3696 = vmul.f32 %v3657, %v3675
        %v3697 = vmul.f32 %v3657, %v3677
        %v3698 = vmul.f32 %v3661, %v3679
        %v3699 = vmul.f32 %v3661, %v3681
        %v3700 = vmul.f32 %v3665, %v3683
        %v3701 = vmul.f32 %v3665, %v3685
        %v3702 = vadd.f32 %v3442, %v3694
        %v3703 = vadd.f32 %v3443, %v3695
        %v3704 = vadd.f32 %v3444, %v3696
        %v3705 = vadd.f32 %v3445, %v3697
        %v3706 = vadd.f32 %v3446, %v3698
        %v3707 = vadd.f32 %v3447, %v3699
        %v3708 = vadd.f32 %v3448, %v3700
        %v3709 = vadd.f32 %v3449, %v3701
        %s3710 = scalar_lea.vmem [#allocation18], 24
        %v3711 = vld [vmem:[%s3710] sm:$0x1]
        %v3712 = vld [vmem:[%s3710 + $0x1] sm:$0x1]
        %v3713 = vld [vmem:[%s3710 + $0x2] sm:$0x1]
        %v3714 = vld [vmem:[%s3710 + $0x3] sm:$0x1]
        %v3719 = vlaneseq
        %v3720 = vshrl.u32 %v3719, 7
        %v3721 = vsub.s32 0, %v3720
        %v3722 = vrot.slane %v3711, %v3721
        %v3723 = vlaneseq
        %v3724 = vshrl.u32 %v3723, 7
        %v3725 = vsub.s32 0, %v3724
        %v3726 = vrot.slane %v3712, %v3725
        %v3727 = vlaneseq
        %v3728 = vshrl.u32 %v3727, 7
        %v3729 = vsub.s32 0, %v3728
        %v3730 = vrot.slane %v3713, %v3729
        %v3731 = vlaneseq
        %v3732 = vshrl.u32 %v3731, 7
        %v3733 = vsub.s32 0, %v3732
        %v3734 = vrot.slane %v3714, %v3733
        %3739 = vrot.lane.b32.xlu0 %v3317, 103
        %v3740 = vpop.permute.xlu0 %3739
        %3741 = vrot.lane.b32.xlu0 %v3318, 103
        %v3742 = vpop.permute.xlu0 %3741
        %3743 = vrot.lane.b32.xlu0 %v3319, 103
        %v3744 = vpop.permute.xlu0 %3743
        %3745 = vrot.lane.b32.xlu0 %v3320, 103
        %v3746 = vpop.permute.xlu0 %3745
        %3747 = vrot.lane.b32.xlu0 %v3321, 103
        %v3748 = vpop.permute.xlu0 %3747
        %3749 = vrot.lane.b32.xlu0 %v3322, 103
        %v3750 = vpop.permute.xlu0 %3749
        %3751 = vrot.lane.b32.xlu0 %v3323, 103
        %v3752 = vpop.permute.xlu0 %3751
        %3753 = vrot.lane.b32.xlu0 %v3324, 103
        %v3754 = vpop.permute.xlu0 %3753
        %v3763 = vmul.f32 %v3722, %v3740
        %v3764 = vmul.f32 %v3722, %v3742
        %v3765 = vmul.f32 %v3726, %v3744
        %v3766 = vmul.f32 %v3726, %v3746
        %v3767 = vmul.f32 %v3730, %v3748
        %v3768 = vmul.f32 %v3730, %v3750
        %v3769 = vmul.f32 %v3734, %v3752
        %v3770 = vmul.f32 %v3734, %v3754
        %v3771 = vadd.f32 %v3503, %v3763
        %v3772 = vadd.f32 %v3504, %v3764
        %v3773 = vadd.f32 %v3505, %v3765
        %v3774 = vadd.f32 %v3506, %v3766
        %v3775 = vadd.f32 %v3507, %v3767
        %v3776 = vadd.f32 %v3508, %v3768
        %v3777 = vadd.f32 %v3509, %v3769
        %v3778 = vadd.f32 %v3510, %v3770
        %v3779 = vadd.f32 %v3633, %v3702
        %v3780 = vadd.f32 %v3634, %v3703
        %v3781 = vadd.f32 %v3635, %v3704
        %v3782 = vadd.f32 %v3636, %v3705
        %v3783 = vadd.f32 %v3637, %v3706
        %v3784 = vadd.f32 %v3638, %v3707
        %v3785 = vadd.f32 %v3639, %v3708
        %v3786 = vadd.f32 %v3640, %v3709
        %v3787 = vadd.f32 %v3771, %v3564
        %v3788 = vadd.f32 %v3772, %v3565
        %v3789 = vadd.f32 %v3773, %v3566
        %v3790 = vadd.f32 %v3774, %v3567
        %v3791 = vadd.f32 %v3775, %v3568
        %v3792 = vadd.f32 %v3776, %v3569
        %v3793 = vadd.f32 %v3777, %v3570
        %v3794 = vadd.f32 %v3778, %v3571
        %v3795 = vadd.f32 %v3779, %v3787
        %v3796 = vadd.f32 %v3780, %v3788
        %v3797 = vadd.f32 %v3781, %v3789
        %v3798 = vadd.f32 %v3782, %v3790
        %v3799 = vadd.f32 %v3783, %v3791
        %v3800 = vadd.f32 %v3784, %v3792
        %v3801 = vadd.f32 %v3785, %v3793
        %v3802 = vadd.f32 %v3786, %v3794
        %s3803 = scalar_lea.vmem [#allocation21], 8
        %v3804 = vld [vmem:[%s3803] sm:$0x1]
        %v3805 = vld [vmem:[%s3803 + $0x1] sm:$0x1]
        %v3806 = vld [vmem:[%s3803 + $0x2] sm:$0x1]
        %v3807 = vld [vmem:[%s3803 + $0x3] sm:$0x1]
        %v3812 = vlaneseq
        %v3813 = vshrl.u32 %v3812, 7
        %v3814 = vsub.s32 0, %v3813
        %v3815 = vrot.slane %v3804, %v3814
        %v3816 = vlaneseq
        %v3817 = vshrl.u32 %v3816, 7
        %v3818 = vsub.s32 0, %v3817
        %v3819 = vrot.slane %v3805, %v3818
        %v3820 = vlaneseq
        %v3821 = vshrl.u32 %v3820, 7
        %v3822 = vsub.s32 0, %v3821
        %v3823 = vrot.slane %v3806, %v3822
        %v3824 = vlaneseq
        %v3825 = vshrl.u32 %v3824, 7
        %v3826 = vsub.s32 0, %v3825
        %v3827 = vrot.slane %v3807, %v3826
        %v3832 = vadd.f32 %v3795, %v3815
        %v3833 = vadd.f32 %v3796, %v3815
        %v3834 = vadd.f32 %v3797, %v3819
        %v3835 = vadd.f32 %v3798, %v3819
        %v3836 = vadd.f32 %v3799, %v3823
        %v3837 = vadd.f32 %v3800, %v3823
        %v3838 = vadd.f32 %v3801, %v3827
        %v3839 = vadd.f32 %v3802, %v3827
        %3848 = vrot.lane.b32.xlu0 %v3832, 16
        %v3849 = vpop.permute.xlu0 %3848
        %3850 = vrot.lane.b32.xlu0 %v3833, 16
        %v3851 = vpop.permute.xlu0 %3850
        %3852 = vrot.lane.b32.xlu0 %v3834, 16
        %v3853 = vpop.permute.xlu0 %3852
        %3854 = vrot.lane.b32.xlu0 %v3835, 16
        %v3855 = vpop.permute.xlu0 %3854
        %3856 = vrot.lane.b32.xlu0 %v3836, 16
        %v3857 = vpop.permute.xlu0 %3856
        %3858 = vrot.lane.b32.xlu0 %v3837, 16
        %v3859 = vpop.permute.xlu0 %3858
        %3860 = vrot.lane.b32.xlu0 %v3838, 16
        %v3861 = vpop.permute.xlu0 %3860
        %3862 = vrot.lane.b32.xlu0 %v3839, 16
        %v3863 = vpop.permute.xlu0 %3862
        %3872 = vst.msk [vmem:[#allocation3 + $0x10] sm:$0xff] %vm850, %v3849
        %3873 = vst.msk [vmem:[#allocation3 + $0x18] sm:$0xff] %vm850, %v3851
        %3874 = vst.msk [vmem:[#allocation3 + $0x40] sm:$0xff] %vm850, %v3853
        %3875 = vst.msk [vmem:[#allocation3 + $0x48] sm:$0xff] %vm850, %v3855
        %3876 = vst.msk [vmem:[#allocation3 + $0x70] sm:$0xff] %vm850, %v3857
        %3877 = vst.msk [vmem:[#allocation3 + $0x78] sm:$0xff] %vm850, %v3859
        %3878 = vst.msk [vmem:[#allocation3 + $0xa0] sm:$0xff] %vm850, %v3861
        %3879 = vst.msk [vmem:[#allocation3 + $0xa8] sm:$0xff] %vm850, %v3863
        %v3880 = vld [vmem:[#allocation19] sm:$0x1]
        %v3881 = vld [vmem:[#allocation19 + $0x1] sm:$0x1]
        %v3882 = vld [vmem:[#allocation19 + $0x2] sm:$0x1]
        %v3883 = vld [vmem:[#allocation19 + $0x3] sm:$0x1]
        %v3884 = vld [vmem:[#allocation3 + $0x7] sm:$0xff]
        %v3885 = vld [vmem:[#allocation3 + $0xf] sm:$0xff]
        %v3886 = vld [vmem:[#allocation3 + $0x37] sm:$0xff]
        %v3887 = vld [vmem:[#allocation3 + $0x3f] sm:$0xff]
        %v3888 = vld [vmem:[#allocation3 + $0x67] sm:$0xff]
        %v3889 = vld [vmem:[#allocation3 + $0x6f] sm:$0xff]
        %v3890 = vld [vmem:[#allocation3 + $0x97] sm:$0xff]
        %v3891 = vld [vmem:[#allocation3 + $0x9f] sm:$0xff]
        %v3896 = vlaneseq
        %v3897 = vshrl.u32 %v3896, 7
        %v3898 = vsub.s32 0, %v3897
        %v3899 = vrot.slane %v3880, %v3898
        %v3900 = vlaneseq
        %v3901 = vshrl.u32 %v3900, 7
        %v3902 = vsub.s32 0, %v3901
        %v3903 = vrot.slane %v3881, %v3902
        %v3904 = vlaneseq
        %v3905 = vshrl.u32 %v3904, 7
        %v3906 = vsub.s32 0, %v3905
        %v3907 = vrot.slane %v3882, %v3906
        %v3908 = vlaneseq
        %v3909 = vshrl.u32 %v3908, 7
        %v3910 = vsub.s32 0, %v3909
        %v3911 = vrot.slane %v3883, %v3910
        %3924 = vrot.lane.b32.xlu0 %v3884, 112
        %v3925 = vpop.permute.xlu0 %3924
        %3926 = vrot.lane.b32.xlu0 %v3885, 112
        %v3927 = vpop.permute.xlu0 %3926
        %3928 = vrot.lane.b32.xlu0 %v3886, 112
        %v3929 = vpop.permute.xlu0 %3928
        %3930 = vrot.lane.b32.xlu0 %v3887, 112
        %v3931 = vpop.permute.xlu0 %3930
        %3932 = vrot.lane.b32.xlu0 %v3888, 112
        %v3933 = vpop.permute.xlu0 %3932
        %3934 = vrot.lane.b32.xlu0 %v3889, 112
        %v3935 = vpop.permute.xlu0 %3934
        %3936 = vrot.lane.b32.xlu0 %v3890, 112
        %v3937 = vpop.permute.xlu0 %3936
        %3938 = vrot.lane.b32.xlu0 %v3891, 112
        %v3939 = vpop.permute.xlu0 %3938
        %v3948 = vmul.f32 %v3899, %v3925
        %v3949 = vmul.f32 %v3899, %v3927
        %v3950 = vmul.f32 %v3903, %v3929
        %v3951 = vmul.f32 %v3903, %v3931
        %v3952 = vmul.f32 %v3907, %v3933
        %v3953 = vmul.f32 %v3907, %v3935
        %v3954 = vmul.f32 %v3911, %v3937
        %v3955 = vmul.f32 %v3911, %v3939
        %s3956 = scalar_lea.vmem [#allocation19], 4
        %v3957 = vld [vmem:[%s3956] sm:$0x1]
        %v3958 = vld [vmem:[%s3956 + $0x1] sm:$0x1]
        %v3959 = vld [vmem:[%s3956 + $0x2] sm:$0x1]
        %v3960 = vld [vmem:[%s3956 + $0x3] sm:$0x1]
        %v3961 = vld [vmem:[#allocation3 + $0xa] sm:$0xff]
        %v3962 = vld [vmem:[#allocation3 + $0x12] sm:$0xff]
        %v3963 = vld [vmem:[#allocation3 + $0x3a] sm:$0xff]
        %v3964 = vld [vmem:[#allocation3 + $0x42] sm:$0xff]
        %v3965 = vld [vmem:[#allocation3 + $0x6a] sm:$0xff]
        %v3966 = vld [vmem:[#allocation3 + $0x72] sm:$0xff]
        %v3967 = vld [vmem:[#allocation3 + $0x9a] sm:$0xff]
        %v3968 = vld [vmem:[#allocation3 + $0xa2] sm:$0xff]
        %v3973 = vlaneseq
        %v3974 = vshrl.u32 %v3973, 7
        %v3975 = vsub.s32 0, %v3974
        %v3976 = vrot.slane %v3957, %v3975
        %v3977 = vlaneseq
        %v3978 = vshrl.u32 %v3977, 7
        %v3979 = vsub.s32 0, %v3978
        %v3980 = vrot.slane %v3958, %v3979
        %v3981 = vlaneseq
        %v3982 = vshrl.u32 %v3981, 7
        %v3983 = vsub.s32 0, %v3982
        %v3984 = vrot.slane %v3959, %v3983
        %v3985 = vlaneseq
        %v3986 = vshrl.u32 %v3985, 7
        %v3987 = vsub.s32 0, %v3986
        %v3988 = vrot.slane %v3960, %v3987
        %4001 = vrot.lane.b32.xlu0 %v3961, 112
        %v4002 = vpop.permute.xlu0 %4001
        %4003 = vrot.lane.b32.xlu0 %v3962, 112
        %v4004 = vpop.permute.xlu0 %4003
        %4005 = vrot.lane.b32.xlu0 %v3963, 112
        %v4006 = vpop.permute.xlu0 %4005
        %4007 = vrot.lane.b32.xlu0 %v3964, 112
        %v4008 = vpop.permute.xlu0 %4007
        %4009 = vrot.lane.b32.xlu0 %v3965, 112
        %v4010 = vpop.permute.xlu0 %4009
        %4011 = vrot.lane.b32.xlu0 %v3966, 112
        %v4012 = vpop.permute.xlu0 %4011
        %4013 = vrot.lane.b32.xlu0 %v3967, 112
        %v4014 = vpop.permute.xlu0 %4013
        %4015 = vrot.lane.b32.xlu0 %v3968, 112
        %v4016 = vpop.permute.xlu0 %4015
        %v4025 = vmul.f32 %v3976, %v4002
        %v4026 = vmul.f32 %v3976, %v4004
        %v4027 = vmul.f32 %v3980, %v4006
        %v4028 = vmul.f32 %v3980, %v4008
        %v4029 = vmul.f32 %v3984, %v4010
        %v4030 = vmul.f32 %v3984, %v4012
        %v4031 = vmul.f32 %v3988, %v4014
        %v4032 = vmul.f32 %v3988, %v4016
        %s4033 = scalar_lea.vmem [#allocation19], 8
        %v4034 = vld [vmem:[%s4033] sm:$0x1]
        %v4035 = vld [vmem:[%s4033 + $0x1] sm:$0x1]
        %v4036 = vld [vmem:[%s4033 + $0x2] sm:$0x1]
        %v4037 = vld [vmem:[%s4033 + $0x3] sm:$0x1]
        %v4038 = vld [vmem:[#allocation3 + $0xd] sm:$0xff]
        %v4039 = vld [vmem:[#allocation3 + $0x15] sm:$0xff]
        %v4040 = vld [vmem:[#allocation3 + $0x3d] sm:$0xff]
        %v4041 = vld [vmem:[#allocation3 + $0x45] sm:$0xff]
        %v4042 = vld [vmem:[#allocation3 + $0x6d] sm:$0xff]
        %v4043 = vld [vmem:[#allocation3 + $0x75] sm:$0xff]
        %v4044 = vld [vmem:[#allocation3 + $0x9d] sm:$0xff]
        %v4045 = vld [vmem:[#allocation3 + $0xa5] sm:$0xff]
        %v4050 = vlaneseq
        %v4051 = vshrl.u32 %v4050, 7
        %v4052 = vsub.s32 0, %v4051
        %v4053 = vrot.slane %v4034, %v4052
        %v4054 = vlaneseq
        %v4055 = vshrl.u32 %v4054, 7
        %v4056 = vsub.s32 0, %v4055
        %v4057 = vrot.slane %v4035, %v4056
        %v4058 = vlaneseq
        %v4059 = vshrl.u32 %v4058, 7
        %v4060 = vsub.s32 0, %v4059
        %v4061 = vrot.slane %v4036, %v4060
        %v4062 = vlaneseq
        %v4063 = vshrl.u32 %v4062, 7
        %v4064 = vsub.s32 0, %v4063
        %v4065 = vrot.slane %v4037, %v4064
        %4078 = vrot.lane.b32.xlu0 %v4038, 112
        %v4079 = vpop.permute.xlu0 %4078
        %4080 = vrot.lane.b32.xlu0 %v4039, 112
        %v4081 = vpop.permute.xlu0 %4080
        %4082 = vrot.lane.b32.xlu0 %v4040, 112
        %v4083 = vpop.permute.xlu0 %4082
        %4084 = vrot.lane.b32.xlu0 %v4041, 112
        %v4085 = vpop.permute.xlu0 %4084
        %4086 = vrot.lane.b32.xlu0 %v4042, 112
        %v4087 = vpop.permute.xlu0 %4086
        %4088 = vrot.lane.b32.xlu0 %v4043, 112
        %v4089 = vpop.permute.xlu0 %4088
        %4090 = vrot.lane.b32.xlu0 %v4044, 112
        %v4091 = vpop.permute.xlu0 %4090
        %4092 = vrot.lane.b32.xlu0 %v4045, 112
        %v4093 = vpop.permute.xlu0 %4092
        %v4102 = vmul.f32 %v4053, %v4079
        %v4103 = vmul.f32 %v4053, %v4081
        %v4104 = vmul.f32 %v4057, %v4083
        %v4105 = vmul.f32 %v4057, %v4085
        %v4106 = vmul.f32 %v4061, %v4087
        %v4107 = vmul.f32 %v4061, %v4089
        %v4108 = vmul.f32 %v4065, %v4091
        %v4109 = vmul.f32 %v4065, %v4093
        %s4110 = scalar_lea.vmem [#allocation19], 12
        %v4111 = vld [vmem:[%s4110] sm:$0x1]
        %v4112 = vld [vmem:[%s4110 + $0x1] sm:$0x1]
        %v4113 = vld [vmem:[%s4110 + $0x2] sm:$0x1]
        %v4114 = vld [vmem:[%s4110 + $0x3] sm:$0x1]
        %v4115 = vld [vmem:[#allocation3 + $0x10] sm:$0xff]
        %v4116 = vld [vmem:[#allocation3 + $0x18] sm:$0xff]
        %v4117 = vld [vmem:[#allocation3 + $0x40] sm:$0xff]
        %v4118 = vld [vmem:[#allocation3 + $0x48] sm:$0xff]
        %v4119 = vld [vmem:[#allocation3 + $0x70] sm:$0xff]
        %v4120 = vld [vmem:[#allocation3 + $0x78] sm:$0xff]
        %v4121 = vld [vmem:[#allocation3 + $0xa0] sm:$0xff]
        %v4122 = vld [vmem:[#allocation3 + $0xa8] sm:$0xff]
        %v4127 = vlaneseq
        %v4128 = vshrl.u32 %v4127, 7
        %v4129 = vsub.s32 0, %v4128
        %v4130 = vrot.slane %v4111, %v4129
        %v4131 = vlaneseq
        %v4132 = vshrl.u32 %v4131, 7
        %v4133 = vsub.s32 0, %v4132
        %v4134 = vrot.slane %v4112, %v4133
        %v4135 = vlaneseq
        %v4136 = vshrl.u32 %v4135, 7
        %v4137 = vsub.s32 0, %v4136
        %v4138 = vrot.slane %v4113, %v4137
        %v4139 = vlaneseq
        %v4140 = vshrl.u32 %v4139, 7
        %v4141 = vsub.s32 0, %v4140
        %v4142 = vrot.slane %v4114, %v4141
        %4155 = vrot.lane.b32.xlu0 %v4115, 112
        %v4156 = vpop.permute.xlu0 %4155
        %4157 = vrot.lane.b32.xlu0 %v4116, 112
        %v4158 = vpop.permute.xlu0 %4157
        %4159 = vrot.lane.b32.xlu0 %v4117, 112
        %v4160 = vpop.permute.xlu0 %4159
        %4161 = vrot.lane.b32.xlu0 %v4118, 112
        %v4162 = vpop.permute.xlu0 %4161
        %4163 = vrot.lane.b32.xlu0 %v4119, 112
        %v4164 = vpop.permute.xlu0 %4163
        %4165 = vrot.lane.b32.xlu0 %v4120, 112
        %v4166 = vpop.permute.xlu0 %4165
        %4167 = vrot.lane.b32.xlu0 %v4121, 112
        %v4168 = vpop.permute.xlu0 %4167
        %4169 = vrot.lane.b32.xlu0 %v4122, 112
        %v4170 = vpop.permute.xlu0 %4169
        %v4179 = vmul.f32 %v4130, %v4156
        %v4180 = vmul.f32 %v4130, %v4158
        %v4181 = vmul.f32 %v4134, %v4160
        %v4182 = vmul.f32 %v4134, %v4162
        %v4183 = vmul.f32 %v4138, %v4164
        %v4184 = vmul.f32 %v4138, %v4166
        %v4185 = vmul.f32 %v4142, %v4168
        %v4186 = vmul.f32 %v4142, %v4170
        %s4187 = scalar_lea.vmem [#allocation19], 16
        %v4188 = vld [vmem:[%s4187] sm:$0x1]
        %v4189 = vld [vmem:[%s4187 + $0x1] sm:$0x1]
        %v4190 = vld [vmem:[%s4187 + $0x2] sm:$0x1]
        %v4191 = vld [vmem:[%s4187 + $0x3] sm:$0x1]
        %v4192 = vld [vmem:[#allocation3 + $0x13] sm:$0xff]
        %v4193 = vld [vmem:[#allocation3 + $0x1b] sm:$0xff]
        %v4194 = vld [vmem:[#allocation3 + $0x43] sm:$0xff]
        %v4195 = vld [vmem:[#allocation3 + $0x4b] sm:$0xff]
        %v4196 = vld [vmem:[#allocation3 + $0x73] sm:$0xff]
        %v4197 = vld [vmem:[#allocation3 + $0x7b] sm:$0xff]
        %v4198 = vld [vmem:[#allocation3 + $0xa3] sm:$0xff]
        %v4199 = vld [vmem:[#allocation3 + $0xab] sm:$0xff]
        %v4204 = vlaneseq
        %v4205 = vshrl.u32 %v4204, 7
        %v4206 = vsub.s32 0, %v4205
        %v4207 = vrot.slane %v4188, %v4206
        %v4208 = vlaneseq
        %v4209 = vshrl.u32 %v4208, 7
        %v4210 = vsub.s32 0, %v4209
        %v4211 = vrot.slane %v4189, %v4210
        %v4212 = vlaneseq
        %v4213 = vshrl.u32 %v4212, 7
        %v4214 = vsub.s32 0, %v4213
        %v4215 = vrot.slane %v4190, %v4214
        %v4216 = vlaneseq
        %v4217 = vshrl.u32 %v4216, 7
        %v4218 = vsub.s32 0, %v4217
        %v4219 = vrot.slane %v4191, %v4218
        %4232 = vrot.lane.b32.xlu0 %v4192, 112
        %v4233 = vpop.permute.xlu0 %4232
        %4234 = vrot.lane.b32.xlu0 %v4193, 112
        %v4235 = vpop.permute.xlu0 %4234
        %4236 = vrot.lane.b32.xlu0 %v4194, 112
        %v4237 = vpop.permute.xlu0 %4236
        %4238 = vrot.lane.b32.xlu0 %v4195, 112
        %v4239 = vpop.permute.xlu0 %4238
        %4240 = vrot.lane.b32.xlu0 %v4196, 112
        %v4241 = vpop.permute.xlu0 %4240
        %4242 = vrot.lane.b32.xlu0 %v4197, 112
        %v4243 = vpop.permute.xlu0 %4242
        %4244 = vrot.lane.b32.xlu0 %v4198, 112
        %v4245 = vpop.permute.xlu0 %4244
        %4246 = vrot.lane.b32.xlu0 %v4199, 112
        %v4247 = vpop.permute.xlu0 %4246
        %v4256 = vmul.f32 %v4207, %v4233
        %v4257 = vmul.f32 %v4207, %v4235
        %v4258 = vmul.f32 %v4211, %v4237
        %v4259 = vmul.f32 %v4211, %v4239
        %v4260 = vmul.f32 %v4215, %v4241
        %v4261 = vmul.f32 %v4215, %v4243
        %v4262 = vmul.f32 %v4219, %v4245
        %v4263 = vmul.f32 %v4219, %v4247
        %v4264 = vadd.f32 %v3948, %v4256
        %v4265 = vadd.f32 %v3949, %v4257
        %v4266 = vadd.f32 %v3950, %v4258
        %v4267 = vadd.f32 %v3951, %v4259
        %v4268 = vadd.f32 %v3952, %v4260
        %v4269 = vadd.f32 %v3953, %v4261
        %v4270 = vadd.f32 %v3954, %v4262
        %v4271 = vadd.f32 %v3955, %v4263
        %s4272 = scalar_lea.vmem [#allocation19], 20
        %v4273 = vld [vmem:[%s4272] sm:$0x1]
        %v4274 = vld [vmem:[%s4272 + $0x1] sm:$0x1]
        %v4275 = vld [vmem:[%s4272 + $0x2] sm:$0x1]
        %v4276 = vld [vmem:[%s4272 + $0x3] sm:$0x1]
        %v4277 = vld [vmem:[#allocation3 + $0x16] sm:$0xff]
        %v4278 = vld [vmem:[#allocation3 + $0x1e] sm:$0xff]
        %v4279 = vld [vmem:[#allocation3 + $0x46] sm:$0xff]
        %v4280 = vld [vmem:[#allocation3 + $0x4e] sm:$0xff]
        %v4281 = vld [vmem:[#allocation3 + $0x76] sm:$0xff]
        %v4282 = vld [vmem:[#allocation3 + $0x7e] sm:$0xff]
        %v4283 = vld [vmem:[#allocation3 + $0xa6] sm:$0xff]
        %v4284 = vld [vmem:[#allocation3 + $0xae] sm:$0xff]
        %v4289 = vlaneseq
        %v4290 = vshrl.u32 %v4289, 7
        %v4291 = vsub.s32 0, %v4290
        %v4292 = vrot.slane %v4273, %v4291
        %v4293 = vlaneseq
        %v4294 = vshrl.u32 %v4293, 7
        %v4295 = vsub.s32 0, %v4294
        %v4296 = vrot.slane %v4274, %v4295
        %v4297 = vlaneseq
        %v4298 = vshrl.u32 %v4297, 7
        %v4299 = vsub.s32 0, %v4298
        %v4300 = vrot.slane %v4275, %v4299
        %v4301 = vlaneseq
        %v4302 = vshrl.u32 %v4301, 7
        %v4303 = vsub.s32 0, %v4302
        %v4304 = vrot.slane %v4276, %v4303
        %4317 = vrot.lane.b32.xlu0 %v4277, 112
        %v4318 = vpop.permute.xlu0 %4317
        %4319 = vrot.lane.b32.xlu0 %v4278, 112
        %v4320 = vpop.permute.xlu0 %4319
        %4321 = vrot.lane.b32.xlu0 %v4279, 112
        %v4322 = vpop.permute.xlu0 %4321
        %4323 = vrot.lane.b32.xlu0 %v4280, 112
        %v4324 = vpop.permute.xlu0 %4323
        %4325 = vrot.lane.b32.xlu0 %v4281, 112
        %v4326 = vpop.permute.xlu0 %4325
        %4327 = vrot.lane.b32.xlu0 %v4282, 112
        %v4328 = vpop.permute.xlu0 %4327
        %4329 = vrot.lane.b32.xlu0 %v4283, 112
        %v4330 = vpop.permute.xlu0 %4329
        %4331 = vrot.lane.b32.xlu0 %v4284, 112
        %v4332 = vpop.permute.xlu0 %4331
        %v4341 = vmul.f32 %v4292, %v4318
        %v4342 = vmul.f32 %v4292, %v4320
        %v4343 = vmul.f32 %v4296, %v4322
        %v4344 = vmul.f32 %v4296, %v4324
        %v4345 = vmul.f32 %v4300, %v4326
        %v4346 = vmul.f32 %v4300, %v4328
        %v4347 = vmul.f32 %v4304, %v4330
        %v4348 = vmul.f32 %v4304, %v4332
        %v4349 = vadd.f32 %v4025, %v4341
        %v4350 = vadd.f32 %v4026, %v4342
        %v4351 = vadd.f32 %v4027, %v4343
        %v4352 = vadd.f32 %v4028, %v4344
        %v4353 = vadd.f32 %v4029, %v4345
        %v4354 = vadd.f32 %v4030, %v4346
        %v4355 = vadd.f32 %v4031, %v4347
        %v4356 = vadd.f32 %v4032, %v4348
        %s4357 = scalar_lea.vmem [#allocation19], 24
        %v4358 = vld [vmem:[%s4357] sm:$0x1]
        %v4359 = vld [vmem:[%s4357 + $0x1] sm:$0x1]
        %v4360 = vld [vmem:[%s4357 + $0x2] sm:$0x1]
        %v4361 = vld [vmem:[%s4357 + $0x3] sm:$0x1]
        %v4362 = vld [vmem:[#allocation3 + $0x19] sm:$0xff]
        %v4363 = vld [vmem:[#allocation3 + $0x21] sm:$0xff]
        %v4364 = vld [vmem:[#allocation3 + $0x49] sm:$0xff]
        %v4365 = vld [vmem:[#allocation3 + $0x51] sm:$0xff]
        %v4366 = vld [vmem:[#allocation3 + $0x79] sm:$0xff]
        %v4367 = vld [vmem:[#allocation3 + $0x81] sm:$0xff]
        %v4368 = vld [vmem:[#allocation3 + $0xa9] sm:$0xff]
        %v4369 = vld [vmem:[#allocation3 + $0xb1] sm:$0xff]
        %v4374 = vlaneseq
        %v4375 = vshrl.u32 %v4374, 7
        %v4376 = vsub.s32 0, %v4375
        %v4377 = vrot.slane %v4358, %v4376
        %v4378 = vlaneseq
        %v4379 = vshrl.u32 %v4378, 7
        %v4380 = vsub.s32 0, %v4379
        %v4381 = vrot.slane %v4359, %v4380
        %v4382 = vlaneseq
        %v4383 = vshrl.u32 %v4382, 7
        %v4384 = vsub.s32 0, %v4383
        %v4385 = vrot.slane %v4360, %v4384
        %v4386 = vlaneseq
        %v4387 = vshrl.u32 %v4386, 7
        %v4388 = vsub.s32 0, %v4387
        %v4389 = vrot.slane %v4361, %v4388
        %4402 = vrot.lane.b32.xlu0 %v4362, 112
        %v4403 = vpop.permute.xlu0 %4402
        %4404 = vrot.lane.b32.xlu0 %v4363, 112
        %v4405 = vpop.permute.xlu0 %4404
        %4406 = vrot.lane.b32.xlu0 %v4364, 112
        %v4407 = vpop.permute.xlu0 %4406
        %4408 = vrot.lane.b32.xlu0 %v4365, 112
        %v4409 = vpop.permute.xlu0 %4408
        %4410 = vrot.lane.b32.xlu0 %v4366, 112
        %v4411 = vpop.permute.xlu0 %4410
        %4412 = vrot.lane.b32.xlu0 %v4367, 112
        %v4413 = vpop.permute.xlu0 %4412
        %4414 = vrot.lane.b32.xlu0 %v4368, 112
        %v4415 = vpop.permute.xlu0 %4414
        %4416 = vrot.lane.b32.xlu0 %v4369, 112
        %v4417 = vpop.permute.xlu0 %4416
        %v4426 = vmul.f32 %v4377, %v4403
        %v4427 = vmul.f32 %v4377, %v4405
        %v4428 = vmul.f32 %v4381, %v4407
        %v4429 = vmul.f32 %v4381, %v4409
        %v4430 = vmul.f32 %v4385, %v4411
        %v4431 = vmul.f32 %v4385, %v4413
        %v4432 = vmul.f32 %v4389, %v4415
        %v4433 = vmul.f32 %v4389, %v4417
        %v4434 = vadd.f32 %v4102, %v4426
        %v4435 = vadd.f32 %v4103, %v4427
        %v4436 = vadd.f32 %v4104, %v4428
        %v4437 = vadd.f32 %v4105, %v4429
        %v4438 = vadd.f32 %v4106, %v4430
        %v4439 = vadd.f32 %v4107, %v4431
        %v4440 = vadd.f32 %v4108, %v4432
        %v4441 = vadd.f32 %v4109, %v4433
        %v4442 = vadd.f32 %v4264, %v4349
        %v4443 = vadd.f32 %v4265, %v4350
        %v4444 = vadd.f32 %v4266, %v4351
        %v4445 = vadd.f32 %v4267, %v4352
        %v4446 = vadd.f32 %v4268, %v4353
        %v4447 = vadd.f32 %v4269, %v4354
        %v4448 = vadd.f32 %v4270, %v4355
        %v4449 = vadd.f32 %v4271, %v4356
        %v4450 = vadd.f32 %v4434, %v4179
        %v4451 = vadd.f32 %v4435, %v4180
        %v4452 = vadd.f32 %v4436, %v4181
        %v4453 = vadd.f32 %v4437, %v4182
        %v4454 = vadd.f32 %v4438, %v4183
        %v4455 = vadd.f32 %v4439, %v4184
        %v4456 = vadd.f32 %v4440, %v4185
        %v4457 = vadd.f32 %v4441, %v4186
        %v4458 = vadd.f32 %v4442, %v4450
        %v4459 = vadd.f32 %v4443, %v4451
        %v4460 = vadd.f32 %v4444, %v4452
        %v4461 = vadd.f32 %v4445, %v4453
        %v4462 = vadd.f32 %v4446, %v4454
        %v4463 = vadd.f32 %v4447, %v4455
        %v4464 = vadd.f32 %v4448, %v4456
        %v4465 = vadd.f32 %v4449, %v4457
        %s4466 = scalar_lea.vmem [#allocation21], 12
        %v4467 = vld [vmem:[%s4466] sm:$0x1]
        %v4468 = vld [vmem:[%s4466 + $0x1] sm:$0x1]
        %v4469 = vld [vmem:[%s4466 + $0x2] sm:$0x1]
        %v4470 = vld [vmem:[%s4466 + $0x3] sm:$0x1]
        %v4475 = vlaneseq
        %v4476 = vshrl.u32 %v4475, 7
        %v4477 = vsub.s32 0, %v4476
        %v4478 = vrot.slane %v4467, %v4477
        %v4479 = vlaneseq
        %v4480 = vshrl.u32 %v4479, 7
        %v4481 = vsub.s32 0, %v4480
        %v4482 = vrot.slane %v4468, %v4481
        %v4483 = vlaneseq
        %v4484 = vshrl.u32 %v4483, 7
        %v4485 = vsub.s32 0, %v4484
        %v4486 = vrot.slane %v4469, %v4485
        %v4487 = vlaneseq
        %v4488 = vshrl.u32 %v4487, 7
        %v4489 = vsub.s32 0, %v4488
        %v4490 = vrot.slane %v4470, %v4489
        %v4495 = vadd.f32 %v4458, %v4478
        %v4496 = vadd.f32 %v4459, %v4478
        %v4497 = vadd.f32 %v4460, %v4482
        %v4498 = vadd.f32 %v4461, %v4482
        %v4499 = vadd.f32 %v4462, %v4486
        %v4500 = vadd.f32 %v4463, %v4486
        %v4501 = vadd.f32 %v4464, %v4490
        %v4502 = vadd.f32 %v4465, %v4490
        %s4503 = scalar_lea.vmem %s742, 128 [#allocation28]
        %4504 = vst.msk [vmem:[%s4503] sm:$0xff] %vm800, %v4495
        %4505 = vst.msk [vmem:[%s4503 + $0x8] sm:$0xff] %vm800, %v4496
        %4506 = vst.msk [vmem:[%s4503 + $0x10] sm:$0xff] %vm800, %v4497
        %4507 = vst.msk [vmem:[%s4503 + $0x18] sm:$0xff] %vm800, %v4498
        %4508 = vst.msk [vmem:[%s4503 + $0x20] sm:$0xff] %vm800, %v4499
        %4509 = vst.msk [vmem:[%s4503 + $0x28] sm:$0xff] %vm800, %v4500
        %4510 = vst.msk [vmem:[%s4503 + $0x30] sm:$0xff] %vm800, %v4501
        %4511 = vst.msk [vmem:[%s4503 + $0x38] sm:$0xff] %vm800, %v4502
        %s4512 = scalar_lea.vmem %s638, 192 [#allocation4]
        %v4513 = vld [vmem:[%s4512] sm:$0xff]
        %v4514 = vld [vmem:[%s4512 + $0x8] sm:$0xff]
        %v4515 = vld [vmem:[%s4512 + $0x10] sm:$0xff]
        %v4516 = vld [vmem:[%s4512 + $0x18] sm:$0xff]
        %v4517 = vld [vmem:[%s4512 + $0x20] sm:$0xff]
        %v4518 = vld [vmem:[%s4512 + $0x28] sm:$0xff]
        %v4519 = vld [vmem:[%s4512 + $0x30] sm:$0xff]
        %v4520 = vld [vmem:[%s4512 + $0x38] sm:$0xff]
        %4529 = vrot.lane.b32.xlu0 %v4513, 16
        %v4530 = vpop.permute.xlu0 %4529
        %4531 = vrot.lane.b32.xlu0 %v4514, 16
        %v4532 = vpop.permute.xlu0 %4531
        %4533 = vrot.lane.b32.xlu0 %v4515, 16
        %v4534 = vpop.permute.xlu0 %4533
        %4535 = vrot.lane.b32.xlu0 %v4516, 16
        %v4536 = vpop.permute.xlu0 %4535
        %4537 = vrot.lane.b32.xlu0 %v4517, 16
        %v4538 = vpop.permute.xlu0 %4537
        %4539 = vrot.lane.b32.xlu0 %v4518, 16
        %v4540 = vpop.permute.xlu0 %4539
        %4541 = vrot.lane.b32.xlu0 %v4519, 16
        %v4542 = vpop.permute.xlu0 %4541
        %4543 = vrot.lane.b32.xlu0 %v4520, 16
        %v4544 = vpop.permute.xlu0 %4543
        %4553 = vst.msk [vmem:[#allocation2 + $0x10] sm:$0xff] %vm850, %v4530
        %4554 = vst.msk [vmem:[#allocation2 + $0x18] sm:$0xff] %vm850, %v4532
        %4555 = vst.msk [vmem:[#allocation2 + $0x40] sm:$0xff] %vm850, %v4534
        %4556 = vst.msk [vmem:[#allocation2 + $0x48] sm:$0xff] %vm850, %v4536
        %4557 = vst.msk [vmem:[#allocation2 + $0x70] sm:$0xff] %vm850, %v4538
        %4558 = vst.msk [vmem:[#allocation2 + $0x78] sm:$0xff] %vm850, %v4540
        %4559 = vst.msk [vmem:[#allocation2 + $0xa0] sm:$0xff] %vm850, %v4542
        %4560 = vst.msk [vmem:[#allocation2 + $0xa8] sm:$0xff] %vm850, %v4544
        %v4561 = vld [vmem:[#allocation22] sm:$0x1]
        %v4562 = vld [vmem:[#allocation22 + $0x1] sm:$0x1]
        %v4563 = vld [vmem:[#allocation22 + $0x2] sm:$0x1]
        %v4564 = vld [vmem:[#allocation22 + $0x3] sm:$0x1]
        %v4565 = vld [vmem:[#allocation2 + $0x10] sm:$0xff]
        %v4566 = vld [vmem:[#allocation2 + $0x18] sm:$0xff]
        %v4567 = vld [vmem:[#allocation2 + $0x40] sm:$0xff]
        %v4568 = vld [vmem:[#allocation2 + $0x48] sm:$0xff]
        %v4569 = vld [vmem:[#allocation2 + $0x70] sm:$0xff]
        %v4570 = vld [vmem:[#allocation2 + $0x78] sm:$0xff]
        %v4571 = vld [vmem:[#allocation2 + $0xa0] sm:$0xff]
        %v4572 = vld [vmem:[#allocation2 + $0xa8] sm:$0xff]
        %v4577 = vlaneseq
        %v4578 = vshrl.u32 %v4577, 7
        %v4579 = vsub.s32 0, %v4578
        %v4580 = vrot.slane %v4561, %v4579
        %v4581 = vlaneseq
        %v4582 = vshrl.u32 %v4581, 7
        %v4583 = vsub.s32 0, %v4582
        %v4584 = vrot.slane %v4562, %v4583
        %v4585 = vlaneseq
        %v4586 = vshrl.u32 %v4585, 7
        %v4587 = vsub.s32 0, %v4586
        %v4588 = vrot.slane %v4563, %v4587
        %v4589 = vlaneseq
        %v4590 = vshrl.u32 %v4589, 7
        %v4591 = vsub.s32 0, %v4590
        %v4592 = vrot.slane %v4564, %v4591
        %4605 = vrot.lane.b32.xlu0 %v4565, 114
        %v4606 = vpop.permute.xlu0 %4605
        %4607 = vrot.lane.b32.xlu0 %v4566, 114
        %v4608 = vpop.permute.xlu0 %4607
        %4609 = vrot.lane.b32.xlu0 %v4567, 114
        %v4610 = vpop.permute.xlu0 %4609
        %4611 = vrot.lane.b32.xlu0 %v4568, 114
        %v4612 = vpop.permute.xlu0 %4611
        %4613 = vrot.lane.b32.xlu0 %v4569, 114
        %v4614 = vpop.permute.xlu0 %4613
        %4615 = vrot.lane.b32.xlu0 %v4570, 114
        %v4616 = vpop.permute.xlu0 %4615
        %4617 = vrot.lane.b32.xlu0 %v4571, 114
        %v4618 = vpop.permute.xlu0 %4617
        %4619 = vrot.lane.b32.xlu0 %v4572, 114
        %v4620 = vpop.permute.xlu0 %4619
        %v4629 = vmul.f32 %v4580, %v4606
        %v4630 = vmul.f32 %v4580, %v4608
        %v4631 = vmul.f32 %v4584, %v4610
        %v4632 = vmul.f32 %v4584, %v4612
        %v4633 = vmul.f32 %v4588, %v4614
        %v4634 = vmul.f32 %v4588, %v4616
        %v4635 = vmul.f32 %v4592, %v4618
        %v4636 = vmul.f32 %v4592, %v4620
        %s4637 = scalar_lea.vmem [#allocation22], 4
        %v4638 = vld [vmem:[%s4637] sm:$0x1]
        %v4639 = vld [vmem:[%s4637 + $0x1] sm:$0x1]
        %v4640 = vld [vmem:[%s4637 + $0x2] sm:$0x1]
        %v4641 = vld [vmem:[%s4637 + $0x3] sm:$0x1]
        %v4646 = vlaneseq
        %v4647 = vshrl.u32 %v4646, 7
        %v4648 = vsub.s32 0, %v4647
        %v4649 = vrot.slane %v4638, %v4648
        %v4650 = vlaneseq
        %v4651 = vshrl.u32 %v4650, 7
        %v4652 = vsub.s32 0, %v4651
        %v4653 = vrot.slane %v4639, %v4652
        %v4654 = vlaneseq
        %v4655 = vshrl.u32 %v4654, 7
        %v4656 = vsub.s32 0, %v4655
        %v4657 = vrot.slane %v4640, %v4656
        %v4658 = vlaneseq
        %v4659 = vshrl.u32 %v4658, 7
        %v4660 = vsub.s32 0, %v4659
        %v4661 = vrot.slane %v4641, %v4660
        %4666 = vrot.lane.b32.xlu0 %v4565, 113
        %v4667 = vpop.permute.xlu0 %4666
        %4668 = vrot.lane.b32.xlu0 %v4566, 113
        %v4669 = vpop.permute.xlu0 %4668
        %4670 = vrot.lane.b32.xlu0 %v4567, 113
        %v4671 = vpop.permute.xlu0 %4670
        %4672 = vrot.lane.b32.xlu0 %v4568, 113
        %v4673 = vpop.permute.xlu0 %4672
        %4674 = vrot.lane.b32.xlu0 %v4569, 113
        %v4675 = vpop.permute.xlu0 %4674
        %4676 = vrot.lane.b32.xlu0 %v4570, 113
        %v4677 = vpop.permute.xlu0 %4676
        %4678 = vrot.lane.b32.xlu0 %v4571, 113
        %v4679 = vpop.permute.xlu0 %4678
        %4680 = vrot.lane.b32.xlu0 %v4572, 113
        %v4681 = vpop.permute.xlu0 %4680
        %v4690 = vmul.f32 %v4649, %v4667
        %v4691 = vmul.f32 %v4649, %v4669
        %v4692 = vmul.f32 %v4653, %v4671
        %v4693 = vmul.f32 %v4653, %v4673
        %v4694 = vmul.f32 %v4657, %v4675
        %v4695 = vmul.f32 %v4657, %v4677
        %v4696 = vmul.f32 %v4661, %v4679
        %v4697 = vmul.f32 %v4661, %v4681
        %s4698 = scalar_lea.vmem [#allocation22], 8
        %v4699 = vld [vmem:[%s4698] sm:$0x1]
        %v4700 = vld [vmem:[%s4698 + $0x1] sm:$0x1]
        %v4701 = vld [vmem:[%s4698 + $0x2] sm:$0x1]
        %v4702 = vld [vmem:[%s4698 + $0x3] sm:$0x1]
        %v4707 = vlaneseq
        %v4708 = vshrl.u32 %v4707, 7
        %v4709 = vsub.s32 0, %v4708
        %v4710 = vrot.slane %v4699, %v4709
        %v4711 = vlaneseq
        %v4712 = vshrl.u32 %v4711, 7
        %v4713 = vsub.s32 0, %v4712
        %v4714 = vrot.slane %v4700, %v4713
        %v4715 = vlaneseq
        %v4716 = vshrl.u32 %v4715, 7
        %v4717 = vsub.s32 0, %v4716
        %v4718 = vrot.slane %v4701, %v4717
        %v4719 = vlaneseq
        %v4720 = vshrl.u32 %v4719, 7
        %v4721 = vsub.s32 0, %v4720
        %v4722 = vrot.slane %v4702, %v4721
        %4727 = vrot.lane.b32.xlu0 %v4565, 112
        %v4728 = vpop.permute.xlu0 %4727
        %4729 = vrot.lane.b32.xlu0 %v4566, 112
        %v4730 = vpop.permute.xlu0 %4729
        %4731 = vrot.lane.b32.xlu0 %v4567, 112
        %v4732 = vpop.permute.xlu0 %4731
        %4733 = vrot.lane.b32.xlu0 %v4568, 112
        %v4734 = vpop.permute.xlu0 %4733
        %4735 = vrot.lane.b32.xlu0 %v4569, 112
        %v4736 = vpop.permute.xlu0 %4735
        %4737 = vrot.lane.b32.xlu0 %v4570, 112
        %v4738 = vpop.permute.xlu0 %4737
        %4739 = vrot.lane.b32.xlu0 %v4571, 112
        %v4740 = vpop.permute.xlu0 %4739
        %4741 = vrot.lane.b32.xlu0 %v4572, 112
        %v4742 = vpop.permute.xlu0 %4741
        %v4751 = vmul.f32 %v4710, %v4728
        %v4752 = vmul.f32 %v4710, %v4730
        %v4753 = vmul.f32 %v4714, %v4732
        %v4754 = vmul.f32 %v4714, %v4734
        %v4755 = vmul.f32 %v4718, %v4736
        %v4756 = vmul.f32 %v4718, %v4738
        %v4757 = vmul.f32 %v4722, %v4740
        %v4758 = vmul.f32 %v4722, %v4742
        %v4759 = vadd.f32 %v4629, %v4751
        %v4760 = vadd.f32 %v4630, %v4752
        %v4761 = vadd.f32 %v4631, %v4753
        %v4762 = vadd.f32 %v4632, %v4754
        %v4763 = vadd.f32 %v4633, %v4755
        %v4764 = vadd.f32 %v4634, %v4756
        %v4765 = vadd.f32 %v4635, %v4757
        %v4766 = vadd.f32 %v4636, %v4758
        %s4767 = scalar_lea.vmem [#allocation22], 12
        %v4768 = vld [vmem:[%s4767] sm:$0x1]
        %v4769 = vld [vmem:[%s4767 + $0x1] sm:$0x1]
        %v4770 = vld [vmem:[%s4767 + $0x2] sm:$0x1]
        %v4771 = vld [vmem:[%s4767 + $0x3] sm:$0x1]
        %v4776 = vlaneseq
        %v4777 = vshrl.u32 %v4776, 7
        %v4778 = vsub.s32 0, %v4777
        %v4779 = vrot.slane %v4768, %v4778
        %v4780 = vlaneseq
        %v4781 = vshrl.u32 %v4780, 7
        %v4782 = vsub.s32 0, %v4781
        %v4783 = vrot.slane %v4769, %v4782
        %v4784 = vlaneseq
        %v4785 = vshrl.u32 %v4784, 7
        %v4786 = vsub.s32 0, %v4785
        %v4787 = vrot.slane %v4770, %v4786
        %v4788 = vlaneseq
        %v4789 = vshrl.u32 %v4788, 7
        %v4790 = vsub.s32 0, %v4789
        %v4791 = vrot.slane %v4771, %v4790
        %4796 = vrot.lane.b32.xlu0 %v4565, 111
        %v4797 = vpop.permute.xlu0 %4796
        %4798 = vrot.lane.b32.xlu0 %v4566, 111
        %v4799 = vpop.permute.xlu0 %4798
        %4800 = vrot.lane.b32.xlu0 %v4567, 111
        %v4801 = vpop.permute.xlu0 %4800
        %4802 = vrot.lane.b32.xlu0 %v4568, 111
        %v4803 = vpop.permute.xlu0 %4802
        %4804 = vrot.lane.b32.xlu0 %v4569, 111
        %v4805 = vpop.permute.xlu0 %4804
        %4806 = vrot.lane.b32.xlu0 %v4570, 111
        %v4807 = vpop.permute.xlu0 %4806
        %4808 = vrot.lane.b32.xlu0 %v4571, 111
        %v4809 = vpop.permute.xlu0 %4808
        %4810 = vrot.lane.b32.xlu0 %v4572, 111
        %v4811 = vpop.permute.xlu0 %4810
        %v4820 = vmul.f32 %v4779, %v4797
        %v4821 = vmul.f32 %v4779, %v4799
        %v4822 = vmul.f32 %v4783, %v4801
        %v4823 = vmul.f32 %v4783, %v4803
        %v4824 = vmul.f32 %v4787, %v4805
        %v4825 = vmul.f32 %v4787, %v4807
        %v4826 = vmul.f32 %v4791, %v4809
        %v4827 = vmul.f32 %v4791, %v4811
        %v4828 = vadd.f32 %v4690, %v4820
        %v4829 = vadd.f32 %v4691, %v4821
        %v4830 = vadd.f32 %v4692, %v4822
        %v4831 = vadd.f32 %v4693, %v4823
        %v4832 = vadd.f32 %v4694, %v4824
        %v4833 = vadd.f32 %v4695, %v4825
        %v4834 = vadd.f32 %v4696, %v4826
        %v4835 = vadd.f32 %v4697, %v4827
        %s4836 = scalar_lea.vmem [#allocation22], 16
        %v4837 = vld [vmem:[%s4836] sm:$0x1]
        %v4838 = vld [vmem:[%s4836 + $0x1] sm:$0x1]
        %v4839 = vld [vmem:[%s4836 + $0x2] sm:$0x1]
        %v4840 = vld [vmem:[%s4836 + $0x3] sm:$0x1]
        %v4845 = vlaneseq
        %v4846 = vshrl.u32 %v4845, 7
        %v4847 = vsub.s32 0, %v4846
        %v4848 = vrot.slane %v4837, %v4847
        %v4849 = vlaneseq
        %v4850 = vshrl.u32 %v4849, 7
        %v4851 = vsub.s32 0, %v4850
        %v4852 = vrot.slane %v4838, %v4851
        %v4853 = vlaneseq
        %v4854 = vshrl.u32 %v4853, 7
        %v4855 = vsub.s32 0, %v4854
        %v4856 = vrot.slane %v4839, %v4855
        %v4857 = vlaneseq
        %v4858 = vshrl.u32 %v4857, 7
        %v4859 = vsub.s32 0, %v4858
        %v4860 = vrot.slane %v4840, %v4859
        %4865 = vrot.lane.b32.xlu0 %v4565, 110
        %v4866 = vpop.permute.xlu0 %4865
        %4867 = vrot.lane.b32.xlu0 %v4566, 110
        %v4868 = vpop.permute.xlu0 %4867
        %4869 = vrot.lane.b32.xlu0 %v4567, 110
        %v4870 = vpop.permute.xlu0 %4869
        %4871 = vrot.lane.b32.xlu0 %v4568, 110
        %v4872 = vpop.permute.xlu0 %4871
        %4873 = vrot.lane.b32.xlu0 %v4569, 110
        %v4874 = vpop.permute.xlu0 %4873
        %4875 = vrot.lane.b32.xlu0 %v4570, 110
        %v4876 = vpop.permute.xlu0 %4875
        %4877 = vrot.lane.b32.xlu0 %v4571, 110
        %v4878 = vpop.permute.xlu0 %4877
        %4879 = vrot.lane.b32.xlu0 %v4572, 110
        %v4880 = vpop.permute.xlu0 %4879
        %v4889 = vmul.f32 %v4848, %v4866
        %v4890 = vmul.f32 %v4848, %v4868
        %v4891 = vmul.f32 %v4852, %v4870
        %v4892 = vmul.f32 %v4852, %v4872
        %v4893 = vmul.f32 %v4856, %v4874
        %v4894 = vmul.f32 %v4856, %v4876
        %v4895 = vmul.f32 %v4860, %v4878
        %v4896 = vmul.f32 %v4860, %v4880
        %v4897 = vadd.f32 %v4759, %v4889
        %v4898 = vadd.f32 %v4760, %v4890
        %v4899 = vadd.f32 %v4761, %v4891
        %v4900 = vadd.f32 %v4762, %v4892
        %v4901 = vadd.f32 %v4763, %v4893
        %v4902 = vadd.f32 %v4764, %v4894
        %v4903 = vadd.f32 %v4765, %v4895
        %v4904 = vadd.f32 %v4766, %v4896
        %v4905 = vadd.f32 %v4897, %v4828
        %v4906 = vadd.f32 %v4898, %v4829
        %v4907 = vadd.f32 %v4899, %v4830
        %v4908 = vadd.f32 %v4900, %v4831
        %v4909 = vadd.f32 %v4901, %v4832
        %v4910 = vadd.f32 %v4902, %v4833
        %v4911 = vadd.f32 %v4903, %v4834
        %v4912 = vadd.f32 %v4904, %v4835
        %v4913 = vld [vmem:[#allocation27] sm:$0x1]
        %v4914 = vld [vmem:[#allocation27 + $0x1] sm:$0x1]
        %v4915 = vld [vmem:[#allocation27 + $0x2] sm:$0x1]
        %v4916 = vld [vmem:[#allocation27 + $0x3] sm:$0x1]
        %v4921 = vlaneseq
        %v4922 = vshrl.u32 %v4921, 7
        %v4923 = vsub.s32 0, %v4922
        %v4924 = vrot.slane %v4913, %v4923
        %v4925 = vlaneseq
        %v4926 = vshrl.u32 %v4925, 7
        %v4927 = vsub.s32 0, %v4926
        %v4928 = vrot.slane %v4914, %v4927
        %v4929 = vlaneseq
        %v4930 = vshrl.u32 %v4929, 7
        %v4931 = vsub.s32 0, %v4930
        %v4932 = vrot.slane %v4915, %v4931
        %v4933 = vlaneseq
        %v4934 = vshrl.u32 %v4933, 7
        %v4935 = vsub.s32 0, %v4934
        %v4936 = vrot.slane %v4916, %v4935
        %v4941 = vadd.f32 %v4905, %v4924
        %v4942 = vadd.f32 %v4906, %v4924
        %v4943 = vadd.f32 %v4907, %v4928
        %v4944 = vadd.f32 %v4908, %v4928
        %v4945 = vadd.f32 %v4909, %v4932
        %v4946 = vadd.f32 %v4910, %v4932
        %v4947 = vadd.f32 %v4911, %v4936
        %v4948 = vadd.f32 %v4912, %v4936
        %4957 = vrot.lane.b32.xlu0 %v4941, 16
        %v4958 = vpop.permute.xlu0 %4957
        %4959 = vrot.lane.b32.xlu0 %v4942, 16
        %v4960 = vpop.permute.xlu0 %4959
        %4961 = vrot.lane.b32.xlu0 %v4943, 16
        %v4962 = vpop.permute.xlu0 %4961
        %4963 = vrot.lane.b32.xlu0 %v4944, 16
        %v4964 = vpop.permute.xlu0 %4963
        %4965 = vrot.lane.b32.xlu0 %v4945, 16
        %v4966 = vpop.permute.xlu0 %4965
        %4967 = vrot.lane.b32.xlu0 %v4946, 16
        %v4968 = vpop.permute.xlu0 %4967
        %4969 = vrot.lane.b32.xlu0 %v4947, 16
        %v4970 = vpop.permute.xlu0 %4969
        %4971 = vrot.lane.b32.xlu0 %v4948, 16
        %v4972 = vpop.permute.xlu0 %4971
        %4981 = vst.msk [vmem:[#allocation3 + $0x10] sm:$0xff] %vm850, %v4958
        %4982 = vst.msk [vmem:[#allocation3 + $0x18] sm:$0xff] %vm850, %v4960
        %4983 = vst.msk [vmem:[#allocation3 + $0x40] sm:$0xff] %vm850, %v4962
        %4984 = vst.msk [vmem:[#allocation3 + $0x48] sm:$0xff] %vm850, %v4964
        %4985 = vst.msk [vmem:[#allocation3 + $0x70] sm:$0xff] %vm850, %v4966
        %4986 = vst.msk [vmem:[#allocation3 + $0x78] sm:$0xff] %vm850, %v4968
        %4987 = vst.msk [vmem:[#allocation3 + $0xa0] sm:$0xff] %vm850, %v4970
        %4988 = vst.msk [vmem:[#allocation3 + $0xa8] sm:$0xff] %vm850, %v4972
        %v4989 = vld [vmem:[#allocation24] sm:$0x1]
        %v4990 = vld [vmem:[#allocation24 + $0x1] sm:$0x1]
        %v4991 = vld [vmem:[#allocation24 + $0x2] sm:$0x1]
        %v4992 = vld [vmem:[#allocation24 + $0x3] sm:$0x1]
        %v4993 = vld [vmem:[#allocation3 + $0xe] sm:$0xff]
        %v4994 = vld [vmem:[#allocation3 + $0x16] sm:$0xff]
        %v4995 = vld [vmem:[#allocation3 + $0x3e] sm:$0xff]
        %v4996 = vld [vmem:[#allocation3 + $0x46] sm:$0xff]
        %v4997 = vld [vmem:[#allocation3 + $0x6e] sm:$0xff]
        %v4998 = vld [vmem:[#allocation3 + $0x76] sm:$0xff]
        %v4999 = vld [vmem:[#allocation3 + $0x9e] sm:$0xff]
        %v5000 = vld [vmem:[#allocation3 + $0xa6] sm:$0xff]
        %v5005 = vlaneseq
        %v5006 = vshrl.u32 %v5005, 7
        %v5007 = vsub.s32 0, %v5006
        %v5008 = vrot.slane %v4989, %v5007
        %v5009 = vlaneseq
        %v5010 = vshrl.u32 %v5009, 7
        %v5011 = vsub.s32 0, %v5010
        %v5012 = vrot.slane %v4990, %v5011
        %v5013 = vlaneseq
        %v5014 = vshrl.u32 %v5013, 7
        %v5015 = vsub.s32 0, %v5014
        %v5016 = vrot.slane %v4991, %v5015
        %v5017 = vlaneseq
        %v5018 = vshrl.u32 %v5017, 7
        %v5019 = vsub.s32 0, %v5018
        %v5020 = vrot.slane %v4992, %v5019
        %5033 = vrot.lane.b32.xlu0 %v4993, 112
        %v5034 = vpop.permute.xlu0 %5033
        %5035 = vrot.lane.b32.xlu0 %v4994, 112
        %v5036 = vpop.permute.xlu0 %5035
        %5037 = vrot.lane.b32.xlu0 %v4995, 112
        %v5038 = vpop.permute.xlu0 %5037
        %5039 = vrot.lane.b32.xlu0 %v4996, 112
        %v5040 = vpop.permute.xlu0 %5039
        %5041 = vrot.lane.b32.xlu0 %v4997, 112
        %v5042 = vpop.permute.xlu0 %5041
        %5043 = vrot.lane.b32.xlu0 %v4998, 112
        %v5044 = vpop.permute.xlu0 %5043
        %5045 = vrot.lane.b32.xlu0 %v4999, 112
        %v5046 = vpop.permute.xlu0 %5045
        %5047 = vrot.lane.b32.xlu0 %v5000, 112
        %v5048 = vpop.permute.xlu0 %5047
        %v5057 = vmul.f32 %v5008, %v5034
        %v5058 = vmul.f32 %v5008, %v5036
        %v5059 = vmul.f32 %v5012, %v5038
        %v5060 = vmul.f32 %v5012, %v5040
        %v5061 = vmul.f32 %v5016, %v5042
        %v5062 = vmul.f32 %v5016, %v5044
        %v5063 = vmul.f32 %v5020, %v5046
        %v5064 = vmul.f32 %v5020, %v5048
        %s5065 = scalar_lea.vmem [#allocation24], 4
        %v5066 = vld [vmem:[%s5065] sm:$0x1]
        %v5067 = vld [vmem:[%s5065 + $0x1] sm:$0x1]
        %v5068 = vld [vmem:[%s5065 + $0x2] sm:$0x1]
        %v5069 = vld [vmem:[%s5065 + $0x3] sm:$0x1]
        %v5070 = vld [vmem:[#allocation3 + $0xf] sm:$0xff]
        %v5071 = vld [vmem:[#allocation3 + $0x17] sm:$0xff]
        %v5072 = vld [vmem:[#allocation3 + $0x3f] sm:$0xff]
        %v5073 = vld [vmem:[#allocation3 + $0x47] sm:$0xff]
        %v5074 = vld [vmem:[#allocation3 + $0x6f] sm:$0xff]
        %v5075 = vld [vmem:[#allocation3 + $0x77] sm:$0xff]
        %v5076 = vld [vmem:[#allocation3 + $0x9f] sm:$0xff]
        %v5077 = vld [vmem:[#allocation3 + $0xa7] sm:$0xff]
        %v5082 = vlaneseq
        %v5083 = vshrl.u32 %v5082, 7
        %v5084 = vsub.s32 0, %v5083
        %v5085 = vrot.slane %v5066, %v5084
        %v5086 = vlaneseq
        %v5087 = vshrl.u32 %v5086, 7
        %v5088 = vsub.s32 0, %v5087
        %v5089 = vrot.slane %v5067, %v5088
        %v5090 = vlaneseq
        %v5091 = vshrl.u32 %v5090, 7
        %v5092 = vsub.s32 0, %v5091
        %v5093 = vrot.slane %v5068, %v5092
        %v5094 = vlaneseq
        %v5095 = vshrl.u32 %v5094, 7
        %v5096 = vsub.s32 0, %v5095
        %v5097 = vrot.slane %v5069, %v5096
        %5110 = vrot.lane.b32.xlu0 %v5070, 112
        %v5111 = vpop.permute.xlu0 %5110
        %5112 = vrot.lane.b32.xlu0 %v5071, 112
        %v5113 = vpop.permute.xlu0 %5112
        %5114 = vrot.lane.b32.xlu0 %v5072, 112
        %v5115 = vpop.permute.xlu0 %5114
        %5116 = vrot.lane.b32.xlu0 %v5073, 112
        %v5117 = vpop.permute.xlu0 %5116
        %5118 = vrot.lane.b32.xlu0 %v5074, 112
        %v5119 = vpop.permute.xlu0 %5118
        %5120 = vrot.lane.b32.xlu0 %v5075, 112
        %v5121 = vpop.permute.xlu0 %5120
        %5122 = vrot.lane.b32.xlu0 %v5076, 112
        %v5123 = vpop.permute.xlu0 %5122
        %5124 = vrot.lane.b32.xlu0 %v5077, 112
        %v5125 = vpop.permute.xlu0 %5124
        %v5134 = vmul.f32 %v5085, %v5111
        %v5135 = vmul.f32 %v5085, %v5113
        %v5136 = vmul.f32 %v5089, %v5115
        %v5137 = vmul.f32 %v5089, %v5117
        %v5138 = vmul.f32 %v5093, %v5119
        %v5139 = vmul.f32 %v5093, %v5121
        %v5140 = vmul.f32 %v5097, %v5123
        %v5141 = vmul.f32 %v5097, %v5125
        %s5142 = scalar_lea.vmem [#allocation24], 8
        %v5143 = vld [vmem:[%s5142] sm:$0x1]
        %v5144 = vld [vmem:[%s5142 + $0x1] sm:$0x1]
        %v5145 = vld [vmem:[%s5142 + $0x2] sm:$0x1]
        %v5146 = vld [vmem:[%s5142 + $0x3] sm:$0x1]
        %v5147 = vld [vmem:[#allocation3 + $0x10] sm:$0xff]
        %v5148 = vld [vmem:[#allocation3 + $0x18] sm:$0xff]
        %v5149 = vld [vmem:[#allocation3 + $0x40] sm:$0xff]
        %v5150 = vld [vmem:[#allocation3 + $0x48] sm:$0xff]
        %v5151 = vld [vmem:[#allocation3 + $0x70] sm:$0xff]
        %v5152 = vld [vmem:[#allocation3 + $0x78] sm:$0xff]
        %v5153 = vld [vmem:[#allocation3 + $0xa0] sm:$0xff]
        %v5154 = vld [vmem:[#allocation3 + $0xa8] sm:$0xff]
        %v5159 = vlaneseq
        %v5160 = vshrl.u32 %v5159, 7
        %v5161 = vsub.s32 0, %v5160
        %v5162 = vrot.slane %v5143, %v5161
        %v5163 = vlaneseq
        %v5164 = vshrl.u32 %v5163, 7
        %v5165 = vsub.s32 0, %v5164
        %v5166 = vrot.slane %v5144, %v5165
        %v5167 = vlaneseq
        %v5168 = vshrl.u32 %v5167, 7
        %v5169 = vsub.s32 0, %v5168
        %v5170 = vrot.slane %v5145, %v5169
        %v5171 = vlaneseq
        %v5172 = vshrl.u32 %v5171, 7
        %v5173 = vsub.s32 0, %v5172
        %v5174 = vrot.slane %v5146, %v5173
        %5187 = vrot.lane.b32.xlu0 %v5147, 112
        %v5188 = vpop.permute.xlu0 %5187
        %5189 = vrot.lane.b32.xlu0 %v5148, 112
        %v5190 = vpop.permute.xlu0 %5189
        %5191 = vrot.lane.b32.xlu0 %v5149, 112
        %v5192 = vpop.permute.xlu0 %5191
        %5193 = vrot.lane.b32.xlu0 %v5150, 112
        %v5194 = vpop.permute.xlu0 %5193
        %5195 = vrot.lane.b32.xlu0 %v5151, 112
        %v5196 = vpop.permute.xlu0 %5195
        %5197 = vrot.lane.b32.xlu0 %v5152, 112
        %v5198 = vpop.permute.xlu0 %5197
        %5199 = vrot.lane.b32.xlu0 %v5153, 112
        %v5200 = vpop.permute.xlu0 %5199
        %5201 = vrot.lane.b32.xlu0 %v5154, 112
        %v5202 = vpop.permute.xlu0 %5201
        %v5211 = vmul.f32 %v5162, %v5188
        %v5212 = vmul.f32 %v5162, %v5190
        %v5213 = vmul.f32 %v5166, %v5192
        %v5214 = vmul.f32 %v5166, %v5194
        %v5215 = vmul.f32 %v5170, %v5196
        %v5216 = vmul.f32 %v5170, %v5198
        %v5217 = vmul.f32 %v5174, %v5200
        %v5218 = vmul.f32 %v5174, %v5202
        %v5219 = vadd.f32 %v5057, %v5211
        %v5220 = vadd.f32 %v5058, %v5212
        %v5221 = vadd.f32 %v5059, %v5213
        %v5222 = vadd.f32 %v5060, %v5214
        %v5223 = vadd.f32 %v5061, %v5215
        %v5224 = vadd.f32 %v5062, %v5216
        %v5225 = vadd.f32 %v5063, %v5217
        %v5226 = vadd.f32 %v5064, %v5218
        %s5227 = scalar_lea.vmem [#allocation24], 12
        %v5228 = vld [vmem:[%s5227] sm:$0x1]
        %v5229 = vld [vmem:[%s5227 + $0x1] sm:$0x1]
        %v5230 = vld [vmem:[%s5227 + $0x2] sm:$0x1]
        %v5231 = vld [vmem:[%s5227 + $0x3] sm:$0x1]
        %v5232 = vld [vmem:[#allocation3 + $0x11] sm:$0xff]
        %v5233 = vld [vmem:[#allocation3 + $0x19] sm:$0xff]
        %v5234 = vld [vmem:[#allocation3 + $0x41] sm:$0xff]
        %v5235 = vld [vmem:[#allocation3 + $0x49] sm:$0xff]
        %v5236 = vld [vmem:[#allocation3 + $0x71] sm:$0xff]
        %v5237 = vld [vmem:[#allocation3 + $0x79] sm:$0xff]
        %v5238 = vld [vmem:[#allocation3 + $0xa1] sm:$0xff]
        %v5239 = vld [vmem:[#allocation3 + $0xa9] sm:$0xff]
        %v5244 = vlaneseq
        %v5245 = vshrl.u32 %v5244, 7
        %v5246 = vsub.s32 0, %v5245
        %v5247 = vrot.slane %v5228, %v5246
        %v5248 = vlaneseq
        %v5249 = vshrl.u32 %v5248, 7
        %v5250 = vsub.s32 0, %v5249
        %v5251 = vrot.slane %v5229, %v5250
        %v5252 = vlaneseq
        %v5253 = vshrl.u32 %v5252, 7
        %v5254 = vsub.s32 0, %v5253
        %v5255 = vrot.slane %v5230, %v5254
        %v5256 = vlaneseq
        %v5257 = vshrl.u32 %v5256, 7
        %v5258 = vsub.s32 0, %v5257
        %v5259 = vrot.slane %v5231, %v5258
        %5272 = vrot.lane.b32.xlu0 %v5232, 112
        %v5273 = vpop.permute.xlu0 %5272
        %5274 = vrot.lane.b32.xlu0 %v5233, 112
        %v5275 = vpop.permute.xlu0 %5274
        %5276 = vrot.lane.b32.xlu0 %v5234, 112
        %v5277 = vpop.permute.xlu0 %5276
        %5278 = vrot.lane.b32.xlu0 %v5235, 112
        %v5279 = vpop.permute.xlu0 %5278
        %5280 = vrot.lane.b32.xlu0 %v5236, 112
        %v5281 = vpop.permute.xlu0 %5280
        %5282 = vrot.lane.b32.xlu0 %v5237, 112
        %v5283 = vpop.permute.xlu0 %5282
        %5284 = vrot.lane.b32.xlu0 %v5238, 112
        %v5285 = vpop.permute.xlu0 %5284
        %5286 = vrot.lane.b32.xlu0 %v5239, 112
        %v5287 = vpop.permute.xlu0 %5286
        %v5296 = vmul.f32 %v5247, %v5273
        %v5297 = vmul.f32 %v5247, %v5275
        %v5298 = vmul.f32 %v5251, %v5277
        %v5299 = vmul.f32 %v5251, %v5279
        %v5300 = vmul.f32 %v5255, %v5281
        %v5301 = vmul.f32 %v5255, %v5283
        %v5302 = vmul.f32 %v5259, %v5285
        %v5303 = vmul.f32 %v5259, %v5287
        %v5304 = vadd.f32 %v5134, %v5296
        %v5305 = vadd.f32 %v5135, %v5297
        %v5306 = vadd.f32 %v5136, %v5298
        %v5307 = vadd.f32 %v5137, %v5299
        %v5308 = vadd.f32 %v5138, %v5300
        %v5309 = vadd.f32 %v5139, %v5301
        %v5310 = vadd.f32 %v5140, %v5302
        %v5311 = vadd.f32 %v5141, %v5303
        %s5312 = scalar_lea.vmem [#allocation24], 16
        %v5313 = vld [vmem:[%s5312] sm:$0x1]
        %v5314 = vld [vmem:[%s5312 + $0x1] sm:$0x1]
        %v5315 = vld [vmem:[%s5312 + $0x2] sm:$0x1]
        %v5316 = vld [vmem:[%s5312 + $0x3] sm:$0x1]
        %v5317 = vld [vmem:[#allocation3 + $0x12] sm:$0xff]
        %v5318 = vld [vmem:[#allocation3 + $0x1a] sm:$0xff]
        %v5319 = vld [vmem:[#allocation3 + $0x42] sm:$0xff]
        %v5320 = vld [vmem:[#allocation3 + $0x4a] sm:$0xff]
        %v5321 = vld [vmem:[#allocation3 + $0x72] sm:$0xff]
        %v5322 = vld [vmem:[#allocation3 + $0x7a] sm:$0xff]
        %v5323 = vld [vmem:[#allocation3 + $0xa2] sm:$0xff]
        %v5324 = vld [vmem:[#allocation3 + $0xaa] sm:$0xff]
        %v5329 = vlaneseq
        %v5330 = vshrl.u32 %v5329, 7
        %v5331 = vsub.s32 0, %v5330
        %v5332 = vrot.slane %v5313, %v5331
        %v5333 = vlaneseq
        %v5334 = vshrl.u32 %v5333, 7
        %v5335 = vsub.s32 0, %v5334
        %v5336 = vrot.slane %v5314, %v5335
        %v5337 = vlaneseq
        %v5338 = vshrl.u32 %v5337, 7
        %v5339 = vsub.s32 0, %v5338
        %v5340 = vrot.slane %v5315, %v5339
        %v5341 = vlaneseq
        %v5342 = vshrl.u32 %v5341, 7
        %v5343 = vsub.s32 0, %v5342
        %v5344 = vrot.slane %v5316, %v5343
        %5357 = vrot.lane.b32.xlu0 %v5317, 112
        %v5358 = vpop.permute.xlu0 %5357
        %5359 = vrot.lane.b32.xlu0 %v5318, 112
        %v5360 = vpop.permute.xlu0 %5359
        %5361 = vrot.lane.b32.xlu0 %v5319, 112
        %v5362 = vpop.permute.xlu0 %5361
        %5363 = vrot.lane.b32.xlu0 %v5320, 112
        %v5364 = vpop.permute.xlu0 %5363
        %5365 = vrot.lane.b32.xlu0 %v5321, 112
        %v5366 = vpop.permute.xlu0 %5365
        %5367 = vrot.lane.b32.xlu0 %v5322, 112
        %v5368 = vpop.permute.xlu0 %5367
        %5369 = vrot.lane.b32.xlu0 %v5323, 112
        %v5370 = vpop.permute.xlu0 %5369
        %5371 = vrot.lane.b32.xlu0 %v5324, 112
        %v5372 = vpop.permute.xlu0 %5371
        %v5381 = vmul.f32 %v5332, %v5358
        %v5382 = vmul.f32 %v5332, %v5360
        %v5383 = vmul.f32 %v5336, %v5362
        %v5384 = vmul.f32 %v5336, %v5364
        %v5385 = vmul.f32 %v5340, %v5366
        %v5386 = vmul.f32 %v5340, %v5368
        %v5387 = vmul.f32 %v5344, %v5370
        %v5388 = vmul.f32 %v5344, %v5372
        %v5389 = vadd.f32 %v5219, %v5381
        %v5390 = vadd.f32 %v5220, %v5382
        %v5391 = vadd.f32 %v5221, %v5383
        %v5392 = vadd.f32 %v5222, %v5384
        %v5393 = vadd.f32 %v5223, %v5385
        %v5394 = vadd.f32 %v5224, %v5386
        %v5395 = vadd.f32 %v5225, %v5387
        %v5396 = vadd.f32 %v5226, %v5388
        %v5397 = vadd.f32 %v5389, %v5304
        %v5398 = vadd.f32 %v5390, %v5305
        %v5399 = vadd.f32 %v5391, %v5306
        %v5400 = vadd.f32 %v5392, %v5307
        %v5401 = vadd.f32 %v5393, %v5308
        %v5402 = vadd.f32 %v5394, %v5309
        %v5403 = vadd.f32 %v5395, %v5310
        %v5404 = vadd.f32 %v5396, %v5311
        %s5405 = scalar_lea.vmem [#allocation27], 4
        %v5406 = vld [vmem:[%s5405] sm:$0x1]
        %v5407 = vld [vmem:[%s5405 + $0x1] sm:$0x1]
        %v5408 = vld [vmem:[%s5405 + $0x2] sm:$0x1]
        %v5409 = vld [vmem:[%s5405 + $0x3] sm:$0x1]
        %v5414 = vlaneseq
        %v5415 = vshrl.u32 %v5414, 7
        %v5416 = vsub.s32 0, %v5415
        %v5417 = vrot.slane %v5406, %v5416
        %v5418 = vlaneseq
        %v5419 = vshrl.u32 %v5418, 7
        %v5420 = vsub.s32 0, %v5419
        %v5421 = vrot.slane %v5407, %v5420
        %v5422 = vlaneseq
        %v5423 = vshrl.u32 %v5422, 7
        %v5424 = vsub.s32 0, %v5423
        %v5425 = vrot.slane %v5408, %v5424
        %v5426 = vlaneseq
        %v5427 = vshrl.u32 %v5426, 7
        %v5428 = vsub.s32 0, %v5427
        %v5429 = vrot.slane %v5409, %v5428
        %v5434 = vadd.f32 %v5397, %v5417
        %v5435 = vadd.f32 %v5398, %v5417
        %v5436 = vadd.f32 %v5399, %v5421
        %v5437 = vadd.f32 %v5400, %v5421
        %v5438 = vadd.f32 %v5401, %v5425
        %v5439 = vadd.f32 %v5402, %v5425
        %v5440 = vadd.f32 %v5403, %v5429
        %v5441 = vadd.f32 %v5404, %v5429
        %5450 = vrot.lane.b32.xlu0 %v5434, 16
        %v5451 = vpop.permute.xlu0 %5450
        %5452 = vrot.lane.b32.xlu0 %v5435, 16
        %v5453 = vpop.permute.xlu0 %5452
        %5454 = vrot.lane.b32.xlu0 %v5436, 16
        %v5455 = vpop.permute.xlu0 %5454
        %5456 = vrot.lane.b32.xlu0 %v5437, 16
        %v5457 = vpop.permute.xlu0 %5456
        %5458 = vrot.lane.b32.xlu0 %v5438, 16
        %v5459 = vpop.permute.xlu0 %5458
        %5460 = vrot.lane.b32.xlu0 %v5439, 16
        %v5461 = vpop.permute.xlu0 %5460
        %5462 = vrot.lane.b32.xlu0 %v5440, 16
        %v5463 = vpop.permute.xlu0 %5462
        %5464 = vrot.lane.b32.xlu0 %v5441, 16
        %v5465 = vpop.permute.xlu0 %5464
        %5474 = vst.msk [vmem:[#allocation2 + $0x10] sm:$0xff] %vm850, %v5451
        %5475 = vst.msk [vmem:[#allocation2 + $0x18] sm:$0xff] %vm850, %v5453
        %5476 = vst.msk [vmem:[#allocation2 + $0x40] sm:$0xff] %vm850, %v5455
        %5477 = vst.msk [vmem:[#allocation2 + $0x48] sm:$0xff] %vm850, %v5457
        %5478 = vst.msk [vmem:[#allocation2 + $0x70] sm:$0xff] %vm850, %v5459
        %5479 = vst.msk [vmem:[#allocation2 + $0x78] sm:$0xff] %vm850, %v5461
        %5480 = vst.msk [vmem:[#allocation2 + $0xa0] sm:$0xff] %vm850, %v5463
        %5481 = vst.msk [vmem:[#allocation2 + $0xa8] sm:$0xff] %vm850, %v5465
        %v5482 = vld [vmem:[%s13] sm:$0x1]
        %v5483 = vld [vmem:[%s13 + $0x1] sm:$0x1]
        %v5484 = vld [vmem:[%s13 + $0x2] sm:$0x1]
        %v5485 = vld [vmem:[%s13 + $0x3] sm:$0x1]
        %v5486 = vld [vmem:[#allocation2 + $0x10] sm:$0xff]
        %v5487 = vld [vmem:[#allocation2 + $0x18] sm:$0xff]
        %v5488 = vld [vmem:[#allocation2 + $0x40] sm:$0xff]
        %v5489 = vld [vmem:[#allocation2 + $0x48] sm:$0xff]
        %v5490 = vld [vmem:[#allocation2 + $0x70] sm:$0xff]
        %v5491 = vld [vmem:[#allocation2 + $0x78] sm:$0xff]
        %v5492 = vld [vmem:[#allocation2 + $0xa0] sm:$0xff]
        %v5493 = vld [vmem:[#allocation2 + $0xa8] sm:$0xff]
        %v5498 = vlaneseq
        %v5499 = vshrl.u32 %v5498, 7
        %v5500 = vsub.s32 0, %v5499
        %v5501 = vrot.slane %v5482, %v5500
        %v5502 = vlaneseq
        %v5503 = vshrl.u32 %v5502, 7
        %v5504 = vsub.s32 0, %v5503
        %v5505 = vrot.slane %v5483, %v5504
        %v5506 = vlaneseq
        %v5507 = vshrl.u32 %v5506, 7
        %v5508 = vsub.s32 0, %v5507
        %v5509 = vrot.slane %v5484, %v5508
        %v5510 = vlaneseq
        %v5511 = vshrl.u32 %v5510, 7
        %v5512 = vsub.s32 0, %v5511
        %v5513 = vrot.slane %v5485, %v5512
        %5526 = vrot.lane.b32.xlu0 %v5486, 127
        %v5527 = vpop.permute.xlu0 %5526
        %5528 = vrot.lane.b32.xlu0 %v5487, 127
        %v5529 = vpop.permute.xlu0 %5528
        %5530 = vrot.lane.b32.xlu0 %v5488, 127
        %v5531 = vpop.permute.xlu0 %5530
        %5532 = vrot.lane.b32.xlu0 %v5489, 127
        %v5533 = vpop.permute.xlu0 %5532
        %5534 = vrot.lane.b32.xlu0 %v5490, 127
        %v5535 = vpop.permute.xlu0 %5534
        %5536 = vrot.lane.b32.xlu0 %v5491, 127
        %v5537 = vpop.permute.xlu0 %5536
        %5538 = vrot.lane.b32.xlu0 %v5492, 127
        %v5539 = vpop.permute.xlu0 %5538
        %5540 = vrot.lane.b32.xlu0 %v5493, 127
        %v5541 = vpop.permute.xlu0 %5540
        %v5550 = vmul.f32 %v5501, %v5527
        %v5551 = vmul.f32 %v5501, %v5529
        %v5552 = vmul.f32 %v5505, %v5531
        %v5553 = vmul.f32 %v5505, %v5533
        %v5554 = vmul.f32 %v5509, %v5535
        %v5555 = vmul.f32 %v5509, %v5537
        %v5556 = vmul.f32 %v5513, %v5539
        %v5557 = vmul.f32 %v5513, %v5541
        %s5558 = scalar_lea.vmem %s13, 4
        %v5559 = vld [vmem:[%s5558] sm:$0x1]
        %v5560 = vld [vmem:[%s5558 + $0x1] sm:$0x1]
        %v5561 = vld [vmem:[%s5558 + $0x2] sm:$0x1]
        %v5562 = vld [vmem:[%s5558 + $0x3] sm:$0x1]
        %v5567 = vlaneseq
        %v5568 = vshrl.u32 %v5567, 7
        %v5569 = vsub.s32 0, %v5568
        %v5570 = vrot.slane %v5559, %v5569
        %v5571 = vlaneseq
        %v5572 = vshrl.u32 %v5571, 7
        %v5573 = vsub.s32 0, %v5572
        %v5574 = vrot.slane %v5560, %v5573
        %v5575 = vlaneseq
        %v5576 = vshrl.u32 %v5575, 7
        %v5577 = vsub.s32 0, %v5576
        %v5578 = vrot.slane %v5561, %v5577
        %v5579 = vlaneseq
        %v5580 = vshrl.u32 %v5579, 7
        %v5581 = vsub.s32 0, %v5580
        %v5582 = vrot.slane %v5562, %v5581
        %5587 = vrot.lane.b32.xlu0 %v5486, 124
        %v5588 = vpop.permute.xlu0 %5587
        %5589 = vrot.lane.b32.xlu0 %v5487, 124
        %v5590 = vpop.permute.xlu0 %5589
        %5591 = vrot.lane.b32.xlu0 %v5488, 124
        %v5592 = vpop.permute.xlu0 %5591
        %5593 = vrot.lane.b32.xlu0 %v5489, 124
        %v5594 = vpop.permute.xlu0 %5593
        %5595 = vrot.lane.b32.xlu0 %v5490, 124
        %v5596 = vpop.permute.xlu0 %5595
        %5597 = vrot.lane.b32.xlu0 %v5491, 124
        %v5598 = vpop.permute.xlu0 %5597
        %5599 = vrot.lane.b32.xlu0 %v5492, 124
        %v5600 = vpop.permute.xlu0 %5599
        %5601 = vrot.lane.b32.xlu0 %v5493, 124
        %v5602 = vpop.permute.xlu0 %5601
        %v5611 = vmul.f32 %v5570, %v5588
        %v5612 = vmul.f32 %v5570, %v5590
        %v5613 = vmul.f32 %v5574, %v5592
        %v5614 = vmul.f32 %v5574, %v5594
        %v5615 = vmul.f32 %v5578, %v5596
        %v5616 = vmul.f32 %v5578, %v5598
        %v5617 = vmul.f32 %v5582, %v5600
        %v5618 = vmul.f32 %v5582, %v5602
        %s5619 = scalar_lea.vmem %s13, 8
        %v5620 = vld [vmem:[%s5619] sm:$0x1]
        %v5621 = vld [vmem:[%s5619 + $0x1] sm:$0x1]
        %v5622 = vld [vmem:[%s5619 + $0x2] sm:$0x1]
        %v5623 = vld [vmem:[%s5619 + $0x3] sm:$0x1]
        %v5628 = vlaneseq
        %v5629 = vshrl.u32 %v5628, 7
        %v5630 = vsub.s32 0, %v5629
        %v5631 = vrot.slane %v5620, %v5630
        %v5632 = vlaneseq
        %v5633 = vshrl.u32 %v5632, 7
        %v5634 = vsub.s32 0, %v5633
        %v5635 = vrot.slane %v5621, %v5634
        %v5636 = vlaneseq
        %v5637 = vshrl.u32 %v5636, 7
        %v5638 = vsub.s32 0, %v5637
        %v5639 = vrot.slane %v5622, %v5638
        %v5640 = vlaneseq
        %v5641 = vshrl.u32 %v5640, 7
        %v5642 = vsub.s32 0, %v5641
        %v5643 = vrot.slane %v5623, %v5642
        %5648 = vrot.lane.b32.xlu0 %v5486, 121
        %v5649 = vpop.permute.xlu0 %5648
        %5650 = vrot.lane.b32.xlu0 %v5487, 121
        %v5651 = vpop.permute.xlu0 %5650
        %5652 = vrot.lane.b32.xlu0 %v5488, 121
        %v5653 = vpop.permute.xlu0 %5652
        %5654 = vrot.lane.b32.xlu0 %v5489, 121
        %v5655 = vpop.permute.xlu0 %5654
        %5656 = vrot.lane.b32.xlu0 %v5490, 121
        %v5657 = vpop.permute.xlu0 %5656
        %5658 = vrot.lane.b32.xlu0 %v5491, 121
        %v5659 = vpop.permute.xlu0 %5658
        %5660 = vrot.lane.b32.xlu0 %v5492, 121
        %v5661 = vpop.permute.xlu0 %5660
        %5662 = vrot.lane.b32.xlu0 %v5493, 121
        %v5663 = vpop.permute.xlu0 %5662
        %v5672 = vmul.f32 %v5631, %v5649
        %v5673 = vmul.f32 %v5631, %v5651
        %v5674 = vmul.f32 %v5635, %v5653
        %v5675 = vmul.f32 %v5635, %v5655
        %v5676 = vmul.f32 %v5639, %v5657
        %v5677 = vmul.f32 %v5639, %v5659
        %v5678 = vmul.f32 %v5643, %v5661
        %v5679 = vmul.f32 %v5643, %v5663
        %s5680 = scalar_lea.vmem %s13, 12
        %v5681 = vld [vmem:[%s5680] sm:$0x1]
        %v5682 = vld [vmem:[%s5680 + $0x1] sm:$0x1]
        %v5683 = vld [vmem:[%s5680 + $0x2] sm:$0x1]
        %v5684 = vld [vmem:[%s5680 + $0x3] sm:$0x1]
        %v5689 = vlaneseq
        %v5690 = vshrl.u32 %v5689, 7
        %v5691 = vsub.s32 0, %v5690
        %v5692 = vrot.slane %v5681, %v5691
        %v5693 = vlaneseq
        %v5694 = vshrl.u32 %v5693, 7
        %v5695 = vsub.s32 0, %v5694
        %v5696 = vrot.slane %v5682, %v5695
        %v5697 = vlaneseq
        %v5698 = vshrl.u32 %v5697, 7
        %v5699 = vsub.s32 0, %v5698
        %v5700 = vrot.slane %v5683, %v5699
        %v5701 = vlaneseq
        %v5702 = vshrl.u32 %v5701, 7
        %v5703 = vsub.s32 0, %v5702
        %v5704 = vrot.slane %v5684, %v5703
        %5709 = vrot.lane.b32.xlu0 %v5486, 118
        %v5710 = vpop.permute.xlu0 %5709
        %5711 = vrot.lane.b32.xlu0 %v5487, 118
        %v5712 = vpop.permute.xlu0 %5711
        %5713 = vrot.lane.b32.xlu0 %v5488, 118
        %v5714 = vpop.permute.xlu0 %5713
        %5715 = vrot.lane.b32.xlu0 %v5489, 118
        %v5716 = vpop.permute.xlu0 %5715
        %5717 = vrot.lane.b32.xlu0 %v5490, 118
        %v5718 = vpop.permute.xlu0 %5717
        %5719 = vrot.lane.b32.xlu0 %v5491, 118
        %v5720 = vpop.permute.xlu0 %5719
        %5721 = vrot.lane.b32.xlu0 %v5492, 118
        %v5722 = vpop.permute.xlu0 %5721
        %5723 = vrot.lane.b32.xlu0 %v5493, 118
        %v5724 = vpop.permute.xlu0 %5723
        %v5733 = vmul.f32 %v5692, %v5710
        %v5734 = vmul.f32 %v5692, %v5712
        %v5735 = vmul.f32 %v5696, %v5714
        %v5736 = vmul.f32 %v5696, %v5716
        %v5737 = vmul.f32 %v5700, %v5718
        %v5738 = vmul.f32 %v5700, %v5720
        %v5739 = vmul.f32 %v5704, %v5722
        %v5740 = vmul.f32 %v5704, %v5724
        %s5741 = scalar_lea.vmem %s13, 16
        %v5742 = vld [vmem:[%s5741] sm:$0x1]
        %v5743 = vld [vmem:[%s5741 + $0x1] sm:$0x1]
        %v5744 = vld [vmem:[%s5741 + $0x2] sm:$0x1]
        %v5745 = vld [vmem:[%s5741 + $0x3] sm:$0x1]
        %v5750 = vlaneseq
        %v5751 = vshrl.u32 %v5750, 7
        %v5752 = vsub.s32 0, %v5751
        %v5753 = vrot.slane %v5742, %v5752
        %v5754 = vlaneseq
        %v5755 = vshrl.u32 %v5754, 7
        %v5756 = vsub.s32 0, %v5755
        %v5757 = vrot.slane %v5743, %v5756
        %v5758 = vlaneseq
        %v5759 = vshrl.u32 %v5758, 7
        %v5760 = vsub.s32 0, %v5759
        %v5761 = vrot.slane %v5744, %v5760
        %v5762 = vlaneseq
        %v5763 = vshrl.u32 %v5762, 7
        %v5764 = vsub.s32 0, %v5763
        %v5765 = vrot.slane %v5745, %v5764
        %5770 = vrot.lane.b32.xlu0 %v5486, 115
        %v5771 = vpop.permute.xlu0 %5770
        %5772 = vrot.lane.b32.xlu0 %v5487, 115
        %v5773 = vpop.permute.xlu0 %5772
        %5774 = vrot.lane.b32.xlu0 %v5488, 115
        %v5775 = vpop.permute.xlu0 %5774
        %5776 = vrot.lane.b32.xlu0 %v5489, 115
        %v5777 = vpop.permute.xlu0 %5776
        %5778 = vrot.lane.b32.xlu0 %v5490, 115
        %v5779 = vpop.permute.xlu0 %5778
        %5780 = vrot.lane.b32.xlu0 %v5491, 115
        %v5781 = vpop.permute.xlu0 %5780
        %5782 = vrot.lane.b32.xlu0 %v5492, 115
        %v5783 = vpop.permute.xlu0 %5782
        %5784 = vrot.lane.b32.xlu0 %v5493, 115
        %v5785 = vpop.permute.xlu0 %5784
        %v5794 = vmul.f32 %v5753, %v5771
        %v5795 = vmul.f32 %v5753, %v5773
        %v5796 = vmul.f32 %v5757, %v5775
        %v5797 = vmul.f32 %v5757, %v5777
        %v5798 = vmul.f32 %v5761, %v5779
        %v5799 = vmul.f32 %v5761, %v5781
        %v5800 = vmul.f32 %v5765, %v5783
        %v5801 = vmul.f32 %v5765, %v5785
        %v5802 = vadd.f32 %v5550, %v5794
        %v5803 = vadd.f32 %v5551, %v5795
        %v5804 = vadd.f32 %v5552, %v5796
        %v5805 = vadd.f32 %v5553, %v5797
        %v5806 = vadd.f32 %v5554, %v5798
        %v5807 = vadd.f32 %v5555, %v5799
        %v5808 = vadd.f32 %v5556, %v5800
        %v5809 = vadd.f32 %v5557, %v5801
        %s5810 = scalar_lea.vmem %s13, 20
        %v5811 = vld [vmem:[%s5810] sm:$0x1]
        %v5812 = vld [vmem:[%s5810 + $0x1] sm:$0x1]
        %v5813 = vld [vmem:[%s5810 + $0x2] sm:$0x1]
        %v5814 = vld [vmem:[%s5810 + $0x3] sm:$0x1]
        %v5819 = vlaneseq
        %v5820 = vshrl.u32 %v5819, 7
        %v5821 = vsub.s32 0, %v5820
        %v5822 = vrot.slane %v5811, %v5821
        %v5823 = vlaneseq
        %v5824 = vshrl.u32 %v5823, 7
        %v5825 = vsub.s32 0, %v5824
        %v5826 = vrot.slane %v5812, %v5825
        %v5827 = vlaneseq
        %v5828 = vshrl.u32 %v5827, 7
        %v5829 = vsub.s32 0, %v5828
        %v5830 = vrot.slane %v5813, %v5829
        %v5831 = vlaneseq
        %v5832 = vshrl.u32 %v5831, 7
        %v5833 = vsub.s32 0, %v5832
        %v5834 = vrot.slane %v5814, %v5833
        %5839 = vrot.lane.b32.xlu0 %v5486, 112
        %v5840 = vpop.permute.xlu0 %5839
        %5841 = vrot.lane.b32.xlu0 %v5487, 112
        %v5842 = vpop.permute.xlu0 %5841
        %5843 = vrot.lane.b32.xlu0 %v5488, 112
        %v5844 = vpop.permute.xlu0 %5843
        %5845 = vrot.lane.b32.xlu0 %v5489, 112
        %v5846 = vpop.permute.xlu0 %5845
        %5847 = vrot.lane.b32.xlu0 %v5490, 112
        %v5848 = vpop.permute.xlu0 %5847
        %5849 = vrot.lane.b32.xlu0 %v5491, 112
        %v5850 = vpop.permute.xlu0 %5849
        %5851 = vrot.lane.b32.xlu0 %v5492, 112
        %v5852 = vpop.permute.xlu0 %5851
        %5853 = vrot.lane.b32.xlu0 %v5493, 112
        %v5854 = vpop.permute.xlu0 %5853
        %v5863 = vmul.f32 %v5822, %v5840
        %v5864 = vmul.f32 %v5822, %v5842
        %v5865 = vmul.f32 %v5826, %v5844
        %v5866 = vmul.f32 %v5826, %v5846
        %v5867 = vmul.f32 %v5830, %v5848
        %v5868 = vmul.f32 %v5830, %v5850
        %v5869 = vmul.f32 %v5834, %v5852
        %v5870 = vmul.f32 %v5834, %v5854
        %v5871 = vadd.f32 %v5611, %v5863
        %v5872 = vadd.f32 %v5612, %v5864
        %v5873 = vadd.f32 %v5613, %v5865
        %v5874 = vadd.f32 %v5614, %v5866
        %v5875 = vadd.f32 %v5615, %v5867
        %v5876 = vadd.f32 %v5616, %v5868
        %v5877 = vadd.f32 %v5617, %v5869
        %v5878 = vadd.f32 %v5618, %v5870
        %s5879 = scalar_lea.vmem %s13, 24
        %v5880 = vld [vmem:[%s5879] sm:$0x1]
        %v5881 = vld [vmem:[%s5879 + $0x1] sm:$0x1]
        %v5882 = vld [vmem:[%s5879 + $0x2] sm:$0x1]
        %v5883 = vld [vmem:[%s5879 + $0x3] sm:$0x1]
        %v5888 = vlaneseq
        %v5889 = vshrl.u32 %v5888, 7
        %v5890 = vsub.s32 0, %v5889
        %v5891 = vrot.slane %v5880, %v5890
        %v5892 = vlaneseq
        %v5893 = vshrl.u32 %v5892, 7
        %v5894 = vsub.s32 0, %v5893
        %v5895 = vrot.slane %v5881, %v5894
        %v5896 = vlaneseq
        %v5897 = vshrl.u32 %v5896, 7
        %v5898 = vsub.s32 0, %v5897
        %v5899 = vrot.slane %v5882, %v5898
        %v5900 = vlaneseq
        %v5901 = vshrl.u32 %v5900, 7
        %v5902 = vsub.s32 0, %v5901
        %v5903 = vrot.slane %v5883, %v5902
        %5908 = vrot.lane.b32.xlu0 %v5486, 109
        %v5909 = vpop.permute.xlu0 %5908
        %5910 = vrot.lane.b32.xlu0 %v5487, 109
        %v5911 = vpop.permute.xlu0 %5910
        %5912 = vrot.lane.b32.xlu0 %v5488, 109
        %v5913 = vpop.permute.xlu0 %5912
        %5914 = vrot.lane.b32.xlu0 %v5489, 109
        %v5915 = vpop.permute.xlu0 %5914
        %5916 = vrot.lane.b32.xlu0 %v5490, 109
        %v5917 = vpop.permute.xlu0 %5916
        %5918 = vrot.lane.b32.xlu0 %v5491, 109
        %v5919 = vpop.permute.xlu0 %5918
        %5920 = vrot.lane.b32.xlu0 %v5492, 109
        %v5921 = vpop.permute.xlu0 %5920
        %5922 = vrot.lane.b32.xlu0 %v5493, 109
        %v5923 = vpop.permute.xlu0 %5922
        %v5932 = vmul.f32 %v5891, %v5909
        %v5933 = vmul.f32 %v5891, %v5911
        %v5934 = vmul.f32 %v5895, %v5913
        %v5935 = vmul.f32 %v5895, %v5915
        %v5936 = vmul.f32 %v5899, %v5917
        %v5937 = vmul.f32 %v5899, %v5919
        %v5938 = vmul.f32 %v5903, %v5921
        %v5939 = vmul.f32 %v5903, %v5923
        %v5940 = vadd.f32 %v5672, %v5932
        %v5941 = vadd.f32 %v5673, %v5933
        %v5942 = vadd.f32 %v5674, %v5934
        %v5943 = vadd.f32 %v5675, %v5935
        %v5944 = vadd.f32 %v5676, %v5936
        %v5945 = vadd.f32 %v5677, %v5937
        %v5946 = vadd.f32 %v5678, %v5938
        %v5947 = vadd.f32 %v5679, %v5939
        %s5948 = scalar_lea.vmem %s13, 28
        %v5949 = vld [vmem:[%s5948] sm:$0x1]
        %v5950 = vld [vmem:[%s5948 + $0x1] sm:$0x1]
        %v5951 = vld [vmem:[%s5948 + $0x2] sm:$0x1]
        %v5952 = vld [vmem:[%s5948 + $0x3] sm:$0x1]
        %v5957 = vlaneseq
        %v5958 = vshrl.u32 %v5957, 7
        %v5959 = vsub.s32 0, %v5958
        %v5960 = vrot.slane %v5949, %v5959
        %v5961 = vlaneseq
        %v5962 = vshrl.u32 %v5961, 7
        %v5963 = vsub.s32 0, %v5962
        %v5964 = vrot.slane %v5950, %v5963
        %v5965 = vlaneseq
        %v5966 = vshrl.u32 %v5965, 7
        %v5967 = vsub.s32 0, %v5966
        %v5968 = vrot.slane %v5951, %v5967
        %v5969 = vlaneseq
        %v5970 = vshrl.u32 %v5969, 7
        %v5971 = vsub.s32 0, %v5970
        %v5972 = vrot.slane %v5952, %v5971
        %5977 = vrot.lane.b32.xlu0 %v5486, 106
        %v5978 = vpop.permute.xlu0 %5977
        %5979 = vrot.lane.b32.xlu0 %v5487, 106
        %v5980 = vpop.permute.xlu0 %5979
        %5981 = vrot.lane.b32.xlu0 %v5488, 106
        %v5982 = vpop.permute.xlu0 %5981
        %5983 = vrot.lane.b32.xlu0 %v5489, 106
        %v5984 = vpop.permute.xlu0 %5983
        %5985 = vrot.lane.b32.xlu0 %v5490, 106
        %v5986 = vpop.permute.xlu0 %5985
        %5987 = vrot.lane.b32.xlu0 %v5491, 106
        %v5988 = vpop.permute.xlu0 %5987
        %5989 = vrot.lane.b32.xlu0 %v5492, 106
        %v5990 = vpop.permute.xlu0 %5989
        %5991 = vrot.lane.b32.xlu0 %v5493, 106
        %v5992 = vpop.permute.xlu0 %5991
        %v6001 = vmul.f32 %v5960, %v5978
        %v6002 = vmul.f32 %v5960, %v5980
        %v6003 = vmul.f32 %v5964, %v5982
        %v6004 = vmul.f32 %v5964, %v5984
        %v6005 = vmul.f32 %v5968, %v5986
        %v6006 = vmul.f32 %v5968, %v5988
        %v6007 = vmul.f32 %v5972, %v5990
        %v6008 = vmul.f32 %v5972, %v5992
        %v6009 = vadd.f32 %v5733, %v6001
        %v6010 = vadd.f32 %v5734, %v6002
        %v6011 = vadd.f32 %v5735, %v6003
        %v6012 = vadd.f32 %v5736, %v6004
        %v6013 = vadd.f32 %v5737, %v6005
        %v6014 = vadd.f32 %v5738, %v6006
        %v6015 = vadd.f32 %v5739, %v6007
        %v6016 = vadd.f32 %v5740, %v6008
        %s6017 = scalar_lea.vmem %s13, 32
        %v6018 = vld [vmem:[%s6017] sm:$0x1]
        %v6019 = vld [vmem:[%s6017 + $0x1] sm:$0x1]
        %v6020 = vld [vmem:[%s6017 + $0x2] sm:$0x1]
        %v6021 = vld [vmem:[%s6017 + $0x3] sm:$0x1]
        %v6026 = vlaneseq
        %v6027 = vshrl.u32 %v6026, 7
        %v6028 = vsub.s32 0, %v6027
        %v6029 = vrot.slane %v6018, %v6028
        %v6030 = vlaneseq
        %v6031 = vshrl.u32 %v6030, 7
        %v6032 = vsub.s32 0, %v6031
        %v6033 = vrot.slane %v6019, %v6032
        %v6034 = vlaneseq
        %v6035 = vshrl.u32 %v6034, 7
        %v6036 = vsub.s32 0, %v6035
        %v6037 = vrot.slane %v6020, %v6036
        %v6038 = vlaneseq
        %v6039 = vshrl.u32 %v6038, 7
        %v6040 = vsub.s32 0, %v6039
        %v6041 = vrot.slane %v6021, %v6040
        %6046 = vrot.lane.b32.xlu0 %v5486, 103
        %v6047 = vpop.permute.xlu0 %6046
        %6048 = vrot.lane.b32.xlu0 %v5487, 103
        %v6049 = vpop.permute.xlu0 %6048
        %6050 = vrot.lane.b32.xlu0 %v5488, 103
        %v6051 = vpop.permute.xlu0 %6050
        %6052 = vrot.lane.b32.xlu0 %v5489, 103
        %v6053 = vpop.permute.xlu0 %6052
        %6054 = vrot.lane.b32.xlu0 %v5490, 103
        %v6055 = vpop.permute.xlu0 %6054
        %6056 = vrot.lane.b32.xlu0 %v5491, 103
        %v6057 = vpop.permute.xlu0 %6056
        %6058 = vrot.lane.b32.xlu0 %v5492, 103
        %v6059 = vpop.permute.xlu0 %6058
        %6060 = vrot.lane.b32.xlu0 %v5493, 103
        %v6061 = vpop.permute.xlu0 %6060
        %v6070 = vmul.f32 %v6029, %v6047
        %v6071 = vmul.f32 %v6029, %v6049
        %v6072 = vmul.f32 %v6033, %v6051
        %v6073 = vmul.f32 %v6033, %v6053
        %v6074 = vmul.f32 %v6037, %v6055
        %v6075 = vmul.f32 %v6037, %v6057
        %v6076 = vmul.f32 %v6041, %v6059
        %v6077 = vmul.f32 %v6041, %v6061
        %v6078 = vadd.f32 %v5802, %v6070
        %v6079 = vadd.f32 %v5803, %v6071
        %v6080 = vadd.f32 %v5804, %v6072
        %v6081 = vadd.f32 %v5805, %v6073
        %v6082 = vadd.f32 %v5806, %v6074
        %v6083 = vadd.f32 %v5807, %v6075
        %v6084 = vadd.f32 %v5808, %v6076
        %v6085 = vadd.f32 %v5809, %v6077
        %s6086 = scalar_lea.vmem %s13, 36
        %v6087 = vld [vmem:[%s6086] sm:$0x1]
        %v6088 = vld [vmem:[%s6086 + $0x1] sm:$0x1]
        %v6089 = vld [vmem:[%s6086 + $0x2] sm:$0x1]
        %v6090 = vld [vmem:[%s6086 + $0x3] sm:$0x1]
        %v6095 = vlaneseq
        %v6096 = vshrl.u32 %v6095, 7
        %v6097 = vsub.s32 0, %v6096
        %v6098 = vrot.slane %v6087, %v6097
        %v6099 = vlaneseq
        %v6100 = vshrl.u32 %v6099, 7
        %v6101 = vsub.s32 0, %v6100
        %v6102 = vrot.slane %v6088, %v6101
        %v6103 = vlaneseq
        %v6104 = vshrl.u32 %v6103, 7
        %v6105 = vsub.s32 0, %v6104
        %v6106 = vrot.slane %v6089, %v6105
        %v6107 = vlaneseq
        %v6108 = vshrl.u32 %v6107, 7
        %v6109 = vsub.s32 0, %v6108
        %v6110 = vrot.slane %v6090, %v6109
        %6115 = vrot.lane.b32.xlu0 %v5486, 100
        %v6116 = vpop.permute.xlu0 %6115
        %6117 = vrot.lane.b32.xlu0 %v5487, 100
        %v6118 = vpop.permute.xlu0 %6117
        %6119 = vrot.lane.b32.xlu0 %v5488, 100
        %v6120 = vpop.permute.xlu0 %6119
        %6121 = vrot.lane.b32.xlu0 %v5489, 100
        %v6122 = vpop.permute.xlu0 %6121
        %6123 = vrot.lane.b32.xlu0 %v5490, 100
        %v6124 = vpop.permute.xlu0 %6123
        %6125 = vrot.lane.b32.xlu0 %v5491, 100
        %v6126 = vpop.permute.xlu0 %6125
        %6127 = vrot.lane.b32.xlu0 %v5492, 100
        %v6128 = vpop.permute.xlu0 %6127
        %6129 = vrot.lane.b32.xlu0 %v5493, 100
        %v6130 = vpop.permute.xlu0 %6129
        %v6139 = vmul.f32 %v6098, %v6116
        %v6140 = vmul.f32 %v6098, %v6118
        %v6141 = vmul.f32 %v6102, %v6120
        %v6142 = vmul.f32 %v6102, %v6122
        %v6143 = vmul.f32 %v6106, %v6124
        %v6144 = vmul.f32 %v6106, %v6126
        %v6145 = vmul.f32 %v6110, %v6128
        %v6146 = vmul.f32 %v6110, %v6130
        %v6147 = vadd.f32 %v5871, %v6139
        %v6148 = vadd.f32 %v5872, %v6140
        %v6149 = vadd.f32 %v5873, %v6141
        %v6150 = vadd.f32 %v5874, %v6142
        %v6151 = vadd.f32 %v5875, %v6143
        %v6152 = vadd.f32 %v5876, %v6144
        %v6153 = vadd.f32 %v5877, %v6145
        %v6154 = vadd.f32 %v5878, %v6146
        %s6155 = scalar_lea.vmem %s13, 40
        %v6156 = vld [vmem:[%s6155] sm:$0x1]
        %v6157 = vld [vmem:[%s6155 + $0x1] sm:$0x1]
        %v6158 = vld [vmem:[%s6155 + $0x2] sm:$0x1]
        %v6159 = vld [vmem:[%s6155 + $0x3] sm:$0x1]
        %v6164 = vlaneseq
        %v6165 = vshrl.u32 %v6164, 7
        %v6166 = vsub.s32 0, %v6165
        %v6167 = vrot.slane %v6156, %v6166
        %v6168 = vlaneseq
        %v6169 = vshrl.u32 %v6168, 7
        %v6170 = vsub.s32 0, %v6169
        %v6171 = vrot.slane %v6157, %v6170
        %v6172 = vlaneseq
        %v6173 = vshrl.u32 %v6172, 7
        %v6174 = vsub.s32 0, %v6173
        %v6175 = vrot.slane %v6158, %v6174
        %v6176 = vlaneseq
        %v6177 = vshrl.u32 %v6176, 7
        %v6178 = vsub.s32 0, %v6177
        %v6179 = vrot.slane %v6159, %v6178
        %6184 = vrot.lane.b32.xlu0 %v5486, 97
        %v6185 = vpop.permute.xlu0 %6184
        %6186 = vrot.lane.b32.xlu0 %v5487, 97
        %v6187 = vpop.permute.xlu0 %6186
        %6188 = vrot.lane.b32.xlu0 %v5488, 97
        %v6189 = vpop.permute.xlu0 %6188
        %6190 = vrot.lane.b32.xlu0 %v5489, 97
        %v6191 = vpop.permute.xlu0 %6190
        %6192 = vrot.lane.b32.xlu0 %v5490, 97
        %v6193 = vpop.permute.xlu0 %6192
        %6194 = vrot.lane.b32.xlu0 %v5491, 97
        %v6195 = vpop.permute.xlu0 %6194
        %6196 = vrot.lane.b32.xlu0 %v5492, 97
        %v6197 = vpop.permute.xlu0 %6196
        %6198 = vrot.lane.b32.xlu0 %v5493, 97
        %v6199 = vpop.permute.xlu0 %6198
        %v6208 = vmul.f32 %v6167, %v6185
        %v6209 = vmul.f32 %v6167, %v6187
        %v6210 = vmul.f32 %v6171, %v6189
        %v6211 = vmul.f32 %v6171, %v6191
        %v6212 = vmul.f32 %v6175, %v6193
        %v6213 = vmul.f32 %v6175, %v6195
        %v6214 = vmul.f32 %v6179, %v6197
        %v6215 = vmul.f32 %v6179, %v6199
        %v6216 = vadd.f32 %v5940, %v6208
        %v6217 = vadd.f32 %v5941, %v6209
        %v6218 = vadd.f32 %v5942, %v6210
        %v6219 = vadd.f32 %v5943, %v6211
        %v6220 = vadd.f32 %v5944, %v6212
        %v6221 = vadd.f32 %v5945, %v6213
        %v6222 = vadd.f32 %v5946, %v6214
        %v6223 = vadd.f32 %v5947, %v6215
        %v6224 = vadd.f32 %v6078, %v6147
        %v6225 = vadd.f32 %v6079, %v6148
        %v6226 = vadd.f32 %v6080, %v6149
        %v6227 = vadd.f32 %v6081, %v6150
        %v6228 = vadd.f32 %v6082, %v6151
        %v6229 = vadd.f32 %v6083, %v6152
        %v6230 = vadd.f32 %v6084, %v6153
        %v6231 = vadd.f32 %v6085, %v6154
        %v6232 = vadd.f32 %v6216, %v6009
        %v6233 = vadd.f32 %v6217, %v6010
        %v6234 = vadd.f32 %v6218, %v6011
        %v6235 = vadd.f32 %v6219, %v6012
        %v6236 = vadd.f32 %v6220, %v6013
        %v6237 = vadd.f32 %v6221, %v6014
        %v6238 = vadd.f32 %v6222, %v6015
        %v6239 = vadd.f32 %v6223, %v6016
        %v6240 = vadd.f32 %v6224, %v6232
        %v6241 = vadd.f32 %v6225, %v6233
        %v6242 = vadd.f32 %v6226, %v6234
        %v6243 = vadd.f32 %v6227, %v6235
        %v6244 = vadd.f32 %v6228, %v6236
        %v6245 = vadd.f32 %v6229, %v6237
        %v6246 = vadd.f32 %v6230, %v6238
        %v6247 = vadd.f32 %v6231, %v6239
        %s6248 = scalar_lea.vmem [#allocation27], 8
        %v6249 = vld [vmem:[%s6248] sm:$0x1]
        %v6250 = vld [vmem:[%s6248 + $0x1] sm:$0x1]
        %v6251 = vld [vmem:[%s6248 + $0x2] sm:$0x1]
        %v6252 = vld [vmem:[%s6248 + $0x3] sm:$0x1]
        %v6257 = vlaneseq
        %v6258 = vshrl.u32 %v6257, 7
        %v6259 = vsub.s32 0, %v6258
        %v6260 = vrot.slane %v6249, %v6259
        %v6261 = vlaneseq
        %v6262 = vshrl.u32 %v6261, 7
        %v6263 = vsub.s32 0, %v6262
        %v6264 = vrot.slane %v6250, %v6263
        %v6265 = vlaneseq
        %v6266 = vshrl.u32 %v6265, 7
        %v6267 = vsub.s32 0, %v6266
        %v6268 = vrot.slane %v6251, %v6267
        %v6269 = vlaneseq
        %v6270 = vshrl.u32 %v6269, 7
        %v6271 = vsub.s32 0, %v6270
        %v6272 = vrot.slane %v6252, %v6271
        %v6277 = vadd.f32 %v6240, %v6260
        %v6278 = vadd.f32 %v6241, %v6260
        %v6279 = vadd.f32 %v6242, %v6264
        %v6280 = vadd.f32 %v6243, %v6264
        %v6281 = vadd.f32 %v6244, %v6268
        %v6282 = vadd.f32 %v6245, %v6268
        %v6283 = vadd.f32 %v6246, %v6272
        %v6284 = vadd.f32 %v6247, %v6272
        %6293 = vrot.lane.b32.xlu0 %v6277, 16
        %v6294 = vpop.permute.xlu0 %6293
        %6295 = vrot.lane.b32.xlu0 %v6278, 16
        %v6296 = vpop.permute.xlu0 %6295
        %6297 = vrot.lane.b32.xlu0 %v6279, 16
        %v6298 = vpop.permute.xlu0 %6297
        %6299 = vrot.lane.b32.xlu0 %v6280, 16
        %v6300 = vpop.permute.xlu0 %6299
        %6301 = vrot.lane.b32.xlu0 %v6281, 16
        %v6302 = vpop.permute.xlu0 %6301
        %6303 = vrot.lane.b32.xlu0 %v6282, 16
        %v6304 = vpop.permute.xlu0 %6303
        %6305 = vrot.lane.b32.xlu0 %v6283, 16
        %v6306 = vpop.permute.xlu0 %6305
        %6307 = vrot.lane.b32.xlu0 %v6284, 16
        %v6308 = vpop.permute.xlu0 %6307
        %6317 = vst.msk [vmem:[#allocation3 + $0x10] sm:$0xff] %vm850, %v6294
        %6318 = vst.msk [vmem:[#allocation3 + $0x18] sm:$0xff] %vm850, %v6296
        %6319 = vst.msk [vmem:[#allocation3 + $0x40] sm:$0xff] %vm850, %v6298
        %6320 = vst.msk [vmem:[#allocation3 + $0x48] sm:$0xff] %vm850, %v6300
        %6321 = vst.msk [vmem:[#allocation3 + $0x70] sm:$0xff] %vm850, %v6302
        %6322 = vst.msk [vmem:[#allocation3 + $0x78] sm:$0xff] %vm850, %v6304
        %6323 = vst.msk [vmem:[#allocation3 + $0xa0] sm:$0xff] %vm850, %v6306
        %6324 = vst.msk [vmem:[#allocation3 + $0xa8] sm:$0xff] %vm850, %v6308
        %v6325 = vld [vmem:[#allocation25] sm:$0x1]
        %v6326 = vld [vmem:[#allocation25 + $0x1] sm:$0x1]
        %v6327 = vld [vmem:[#allocation25 + $0x2] sm:$0x1]
        %v6328 = vld [vmem:[#allocation25 + $0x3] sm:$0x1]
        %v6329 = vld [vmem:[#allocation3 + $0x1] sm:$0xff]
        %v6330 = vld [vmem:[#allocation3 + $0x9] sm:$0xff]
        %v6331 = vld [vmem:[#allocation3 + $0x31] sm:$0xff]
        %v6332 = vld [vmem:[#allocation3 + $0x39] sm:$0xff]
        %v6333 = vld [vmem:[#allocation3 + $0x61] sm:$0xff]
        %v6334 = vld [vmem:[#allocation3 + $0x69] sm:$0xff]
        %v6335 = vld [vmem:[#allocation3 + $0x91] sm:$0xff]
        %v6336 = vld [vmem:[#allocation3 + $0x99] sm:$0xff]
        %v6341 = vlaneseq
        %v6342 = vshrl.u32 %v6341, 7
        %v6343 = vsub.s32 0, %v6342
        %v6344 = vrot.slane %v6325, %v6343
        %v6345 = vlaneseq
        %v6346 = vshrl.u32 %v6345, 7
        %v6347 = vsub.s32 0, %v6346
        %v6348 = vrot.slane %v6326, %v6347
        %v6349 = vlaneseq
        %v6350 = vshrl.u32 %v6349, 7
        %v6351 = vsub.s32 0, %v6350
        %v6352 = vrot.slane %v6327, %v6351
        %v6353 = vlaneseq
        %v6354 = vshrl.u32 %v6353, 7
        %v6355 = vsub.s32 0, %v6354
        %v6356 = vrot.slane %v6328, %v6355
        %6369 = vrot.lane.b32.xlu0 %v6329, 112
        %v6370 = vpop.permute.xlu0 %6369
        %6371 = vrot.lane.b32.xlu0 %v6330, 112
        %v6372 = vpop.permute.xlu0 %6371
        %6373 = vrot.lane.b32.xlu0 %v6331, 112
        %v6374 = vpop.permute.xlu0 %6373
        %6375 = vrot.lane.b32.xlu0 %v6332, 112
        %v6376 = vpop.permute.xlu0 %6375
        %6377 = vrot.lane.b32.xlu0 %v6333, 112
        %v6378 = vpop.permute.xlu0 %6377
        %6379 = vrot.lane.b32.xlu0 %v6334, 112
        %v6380 = vpop.permute.xlu0 %6379
        %6381 = vrot.lane.b32.xlu0 %v6335, 112
        %v6382 = vpop.permute.xlu0 %6381
        %6383 = vrot.lane.b32.xlu0 %v6336, 112
        %v6384 = vpop.permute.xlu0 %6383
        %v6393 = vmul.f32 %v6344, %v6370
        %v6394 = vmul.f32 %v6344, %v6372
        %v6395 = vmul.f32 %v6348, %v6374
        %v6396 = vmul.f32 %v6348, %v6376
        %v6397 = vmul.f32 %v6352, %v6378
        %v6398 = vmul.f32 %v6352, %v6380
        %v6399 = vmul.f32 %v6356, %v6382
        %v6400 = vmul.f32 %v6356, %v6384
        %s6401 = scalar_lea.vmem [#allocation25], 4
        %v6402 = vld [vmem:[%s6401] sm:$0x1]
        %v6403 = vld [vmem:[%s6401 + $0x1] sm:$0x1]
        %v6404 = vld [vmem:[%s6401 + $0x2] sm:$0x1]
        %v6405 = vld [vmem:[%s6401 + $0x3] sm:$0x1]
        %v6406 = vld [vmem:[#allocation3 + $0x4] sm:$0xff]
        %v6407 = vld [vmem:[#allocation3 + $0xc] sm:$0xff]
        %v6408 = vld [vmem:[#allocation3 + $0x34] sm:$0xff]
        %v6409 = vld [vmem:[#allocation3 + $0x3c] sm:$0xff]
        %v6410 = vld [vmem:[#allocation3 + $0x64] sm:$0xff]
        %v6411 = vld [vmem:[#allocation3 + $0x6c] sm:$0xff]
        %v6412 = vld [vmem:[#allocation3 + $0x94] sm:$0xff]
        %v6413 = vld [vmem:[#allocation3 + $0x9c] sm:$0xff]
        %v6418 = vlaneseq
        %v6419 = vshrl.u32 %v6418, 7
        %v6420 = vsub.s32 0, %v6419
        %v6421 = vrot.slane %v6402, %v6420
        %v6422 = vlaneseq
        %v6423 = vshrl.u32 %v6422, 7
        %v6424 = vsub.s32 0, %v6423
        %v6425 = vrot.slane %v6403, %v6424
        %v6426 = vlaneseq
        %v6427 = vshrl.u32 %v6426, 7
        %v6428 = vsub.s32 0, %v6427
        %v6429 = vrot.slane %v6404, %v6428
        %v6430 = vlaneseq
        %v6431 = vshrl.u32 %v6430, 7
        %v6432 = vsub.s32 0, %v6431
        %v6433 = vrot.slane %v6405, %v6432
        %6446 = vrot.lane.b32.xlu0 %v6406, 112
        %v6447 = vpop.permute.xlu0 %6446
        %6448 = vrot.lane.b32.xlu0 %v6407, 112
        %v6449 = vpop.permute.xlu0 %6448
        %6450 = vrot.lane.b32.xlu0 %v6408, 112
        %v6451 = vpop.permute.xlu0 %6450
        %6452 = vrot.lane.b32.xlu0 %v6409, 112
        %v6453 = vpop.permute.xlu0 %6452
        %6454 = vrot.lane.b32.xlu0 %v6410, 112
        %v6455 = vpop.permute.xlu0 %6454
        %6456 = vrot.lane.b32.xlu0 %v6411, 112
        %v6457 = vpop.permute.xlu0 %6456
        %6458 = vrot.lane.b32.xlu0 %v6412, 112
        %v6459 = vpop.permute.xlu0 %6458
        %6460 = vrot.lane.b32.xlu0 %v6413, 112
        %v6461 = vpop.permute.xlu0 %6460
        %v6470 = vmul.f32 %v6421, %v6447
        %v6471 = vmul.f32 %v6421, %v6449
        %v6472 = vmul.f32 %v6425, %v6451
        %v6473 = vmul.f32 %v6425, %v6453
        %v6474 = vmul.f32 %v6429, %v6455
        %v6475 = vmul.f32 %v6429, %v6457
        %v6476 = vmul.f32 %v6433, %v6459
        %v6477 = vmul.f32 %v6433, %v6461
        %s6478 = scalar_lea.vmem [#allocation25], 8
        %v6479 = vld [vmem:[%s6478] sm:$0x1]
        %v6480 = vld [vmem:[%s6478 + $0x1] sm:$0x1]
        %v6481 = vld [vmem:[%s6478 + $0x2] sm:$0x1]
        %v6482 = vld [vmem:[%s6478 + $0x3] sm:$0x1]
        %v6483 = vld [vmem:[#allocation3 + $0x7] sm:$0xff]
        %v6484 = vld [vmem:[#allocation3 + $0xf] sm:$0xff]
        %v6485 = vld [vmem:[#allocation3 + $0x37] sm:$0xff]
        %v6486 = vld [vmem:[#allocation3 + $0x3f] sm:$0xff]
        %v6487 = vld [vmem:[#allocation3 + $0x67] sm:$0xff]
        %v6488 = vld [vmem:[#allocation3 + $0x6f] sm:$0xff]
        %v6489 = vld [vmem:[#allocation3 + $0x97] sm:$0xff]
        %v6490 = vld [vmem:[#allocation3 + $0x9f] sm:$0xff]
        %v6495 = vlaneseq
        %v6496 = vshrl.u32 %v6495, 7
        %v6497 = vsub.s32 0, %v6496
        %v6498 = vrot.slane %v6479, %v6497
        %v6499 = vlaneseq
        %v6500 = vshrl.u32 %v6499, 7
        %v6501 = vsub.s32 0, %v6500
        %v6502 = vrot.slane %v6480, %v6501
        %v6503 = vlaneseq
        %v6504 = vshrl.u32 %v6503, 7
        %v6505 = vsub.s32 0, %v6504
        %v6506 = vrot.slane %v6481, %v6505
        %v6507 = vlaneseq
        %v6508 = vshrl.u32 %v6507, 7
        %v6509 = vsub.s32 0, %v6508
        %v6510 = vrot.slane %v6482, %v6509
        %6523 = vrot.lane.b32.xlu0 %v6483, 112
        %v6524 = vpop.permute.xlu0 %6523
        %6525 = vrot.lane.b32.xlu0 %v6484, 112
        %v6526 = vpop.permute.xlu0 %6525
        %6527 = vrot.lane.b32.xlu0 %v6485, 112
        %v6528 = vpop.permute.xlu0 %6527
        %6529 = vrot.lane.b32.xlu0 %v6486, 112
        %v6530 = vpop.permute.xlu0 %6529
        %6531 = vrot.lane.b32.xlu0 %v6487, 112
        %v6532 = vpop.permute.xlu0 %6531
        %6533 = vrot.lane.b32.xlu0 %v6488, 112
        %v6534 = vpop.permute.xlu0 %6533
        %6535 = vrot.lane.b32.xlu0 %v6489, 112
        %v6536 = vpop.permute.xlu0 %6535
        %6537 = vrot.lane.b32.xlu0 %v6490, 112
        %v6538 = vpop.permute.xlu0 %6537
        %v6547 = vmul.f32 %v6498, %v6524
        %v6548 = vmul.f32 %v6498, %v6526
        %v6549 = vmul.f32 %v6502, %v6528
        %v6550 = vmul.f32 %v6502, %v6530
        %v6551 = vmul.f32 %v6506, %v6532
        %v6552 = vmul.f32 %v6506, %v6534
        %v6553 = vmul.f32 %v6510, %v6536
        %v6554 = vmul.f32 %v6510, %v6538
        %s6555 = scalar_lea.vmem [#allocation25], 12
        %v6556 = vld [vmem:[%s6555] sm:$0x1]
        %v6557 = vld [vmem:[%s6555 + $0x1] sm:$0x1]
        %v6558 = vld [vmem:[%s6555 + $0x2] sm:$0x1]
        %v6559 = vld [vmem:[%s6555 + $0x3] sm:$0x1]
        %v6560 = vld [vmem:[#allocation3 + $0xa] sm:$0xff]
        %v6561 = vld [vmem:[#allocation3 + $0x12] sm:$0xff]
        %v6562 = vld [vmem:[#allocation3 + $0x3a] sm:$0xff]
        %v6563 = vld [vmem:[#allocation3 + $0x42] sm:$0xff]
        %v6564 = vld [vmem:[#allocation3 + $0x6a] sm:$0xff]
        %v6565 = vld [vmem:[#allocation3 + $0x72] sm:$0xff]
        %v6566 = vld [vmem:[#allocation3 + $0x9a] sm:$0xff]
        %v6567 = vld [vmem:[#allocation3 + $0xa2] sm:$0xff]
        %v6572 = vlaneseq
        %v6573 = vshrl.u32 %v6572, 7
        %v6574 = vsub.s32 0, %v6573
        %v6575 = vrot.slane %v6556, %v6574
        %v6576 = vlaneseq
        %v6577 = vshrl.u32 %v6576, 7
        %v6578 = vsub.s32 0, %v6577
        %v6579 = vrot.slane %v6557, %v6578
        %v6580 = vlaneseq
        %v6581 = vshrl.u32 %v6580, 7
        %v6582 = vsub.s32 0, %v6581
        %v6583 = vrot.slane %v6558, %v6582
        %v6584 = vlaneseq
        %v6585 = vshrl.u32 %v6584, 7
        %v6586 = vsub.s32 0, %v6585
        %v6587 = vrot.slane %v6559, %v6586
        %6600 = vrot.lane.b32.xlu0 %v6560, 112
        %v6601 = vpop.permute.xlu0 %6600
        %6602 = vrot.lane.b32.xlu0 %v6561, 112
        %v6603 = vpop.permute.xlu0 %6602
        %6604 = vrot.lane.b32.xlu0 %v6562, 112
        %v6605 = vpop.permute.xlu0 %6604
        %6606 = vrot.lane.b32.xlu0 %v6563, 112
        %v6607 = vpop.permute.xlu0 %6606
        %6608 = vrot.lane.b32.xlu0 %v6564, 112
        %v6609 = vpop.permute.xlu0 %6608
        %6610 = vrot.lane.b32.xlu0 %v6565, 112
        %v6611 = vpop.permute.xlu0 %6610
        %6612 = vrot.lane.b32.xlu0 %v6566, 112
        %v6613 = vpop.permute.xlu0 %6612
        %6614 = vrot.lane.b32.xlu0 %v6567, 112
        %v6615 = vpop.permute.xlu0 %6614
        %v6624 = vmul.f32 %v6575, %v6601
        %v6625 = vmul.f32 %v6575, %v6603
        %v6626 = vmul.f32 %v6579, %v6605
        %v6627 = vmul.f32 %v6579, %v6607
        %v6628 = vmul.f32 %v6583, %v6609
        %v6629 = vmul.f32 %v6583, %v6611
        %v6630 = vmul.f32 %v6587, %v6613
        %v6631 = vmul.f32 %v6587, %v6615
        %s6632 = scalar_lea.vmem [#allocation25], 16
        %v6633 = vld [vmem:[%s6632] sm:$0x1]
        %v6634 = vld [vmem:[%s6632 + $0x1] sm:$0x1]
        %v6635 = vld [vmem:[%s6632 + $0x2] sm:$0x1]
        %v6636 = vld [vmem:[%s6632 + $0x3] sm:$0x1]
        %v6637 = vld [vmem:[#allocation3 + $0xd] sm:$0xff]
        %v6638 = vld [vmem:[#allocation3 + $0x15] sm:$0xff]
        %v6639 = vld [vmem:[#allocation3 + $0x3d] sm:$0xff]
        %v6640 = vld [vmem:[#allocation3 + $0x45] sm:$0xff]
        %v6641 = vld [vmem:[#allocation3 + $0x6d] sm:$0xff]
        %v6642 = vld [vmem:[#allocation3 + $0x75] sm:$0xff]
        %v6643 = vld [vmem:[#allocation3 + $0x9d] sm:$0xff]
        %v6644 = vld [vmem:[#allocation3 + $0xa5] sm:$0xff]
        %v6649 = vlaneseq
        %v6650 = vshrl.u32 %v6649, 7
        %v6651 = vsub.s32 0, %v6650
        %v6652 = vrot.slane %v6633, %v6651
        %v6653 = vlaneseq
        %v6654 = vshrl.u32 %v6653, 7
        %v6655 = vsub.s32 0, %v6654
        %v6656 = vrot.slane %v6634, %v6655
        %v6657 = vlaneseq
        %v6658 = vshrl.u32 %v6657, 7
        %v6659 = vsub.s32 0, %v6658
        %v6660 = vrot.slane %v6635, %v6659
        %v6661 = vlaneseq
        %v6662 = vshrl.u32 %v6661, 7
        %v6663 = vsub.s32 0, %v6662
        %v6664 = vrot.slane %v6636, %v6663
        %6677 = vrot.lane.b32.xlu0 %v6637, 112
        %v6678 = vpop.permute.xlu0 %6677
        %6679 = vrot.lane.b32.xlu0 %v6638, 112
        %v6680 = vpop.permute.xlu0 %6679
        %6681 = vrot.lane.b32.xlu0 %v6639, 112
        %v6682 = vpop.permute.xlu0 %6681
        %6683 = vrot.lane.b32.xlu0 %v6640, 112
        %v6684 = vpop.permute.xlu0 %6683
        %6685 = vrot.lane.b32.xlu0 %v6641, 112
        %v6686 = vpop.permute.xlu0 %6685
        %6687 = vrot.lane.b32.xlu0 %v6642, 112
        %v6688 = vpop.permute.xlu0 %6687
        %6689 = vrot.lane.b32.xlu0 %v6643, 112
        %v6690 = vpop.permute.xlu0 %6689
        %6691 = vrot.lane.b32.xlu0 %v6644, 112
        %v6692 = vpop.permute.xlu0 %6691
        %v6701 = vmul.f32 %v6652, %v6678
        %v6702 = vmul.f32 %v6652, %v6680
        %v6703 = vmul.f32 %v6656, %v6682
        %v6704 = vmul.f32 %v6656, %v6684
        %v6705 = vmul.f32 %v6660, %v6686
        %v6706 = vmul.f32 %v6660, %v6688
        %v6707 = vmul.f32 %v6664, %v6690
        %v6708 = vmul.f32 %v6664, %v6692
        %v6709 = vadd.f32 %v6393, %v6701
        %v6710 = vadd.f32 %v6394, %v6702
        %v6711 = vadd.f32 %v6395, %v6703
        %v6712 = vadd.f32 %v6396, %v6704
        %v6713 = vadd.f32 %v6397, %v6705
        %v6714 = vadd.f32 %v6398, %v6706
        %v6715 = vadd.f32 %v6399, %v6707
        %v6716 = vadd.f32 %v6400, %v6708
        %s6717 = scalar_lea.vmem [#allocation25], 20
        %v6718 = vld [vmem:[%s6717] sm:$0x1]
        %v6719 = vld [vmem:[%s6717 + $0x1] sm:$0x1]
        %v6720 = vld [vmem:[%s6717 + $0x2] sm:$0x1]
        %v6721 = vld [vmem:[%s6717 + $0x3] sm:$0x1]
        %v6722 = vld [vmem:[#allocation3 + $0x10] sm:$0xff]
        %v6723 = vld [vmem:[#allocation3 + $0x18] sm:$0xff]
        %v6724 = vld [vmem:[#allocation3 + $0x40] sm:$0xff]
        %v6725 = vld [vmem:[#allocation3 + $0x48] sm:$0xff]
        %v6726 = vld [vmem:[#allocation3 + $0x70] sm:$0xff]
        %v6727 = vld [vmem:[#allocation3 + $0x78] sm:$0xff]
        %v6728 = vld [vmem:[#allocation3 + $0xa0] sm:$0xff]
        %v6729 = vld [vmem:[#allocation3 + $0xa8] sm:$0xff]
        %v6734 = vlaneseq
        %v6735 = vshrl.u32 %v6734, 7
        %v6736 = vsub.s32 0, %v6735
        %v6737 = vrot.slane %v6718, %v6736
        %v6738 = vlaneseq
        %v6739 = vshrl.u32 %v6738, 7
        %v6740 = vsub.s32 0, %v6739
        %v6741 = vrot.slane %v6719, %v6740
        %v6742 = vlaneseq
        %v6743 = vshrl.u32 %v6742, 7
        %v6744 = vsub.s32 0, %v6743
        %v6745 = vrot.slane %v6720, %v6744
        %v6746 = vlaneseq
        %v6747 = vshrl.u32 %v6746, 7
        %v6748 = vsub.s32 0, %v6747
        %v6749 = vrot.slane %v6721, %v6748
        %6762 = vrot.lane.b32.xlu0 %v6722, 112
        %v6763 = vpop.permute.xlu0 %6762
        %6764 = vrot.lane.b32.xlu0 %v6723, 112
        %v6765 = vpop.permute.xlu0 %6764
        %6766 = vrot.lane.b32.xlu0 %v6724, 112
        %v6767 = vpop.permute.xlu0 %6766
        %6768 = vrot.lane.b32.xlu0 %v6725, 112
        %v6769 = vpop.permute.xlu0 %6768
        %6770 = vrot.lane.b32.xlu0 %v6726, 112
        %v6771 = vpop.permute.xlu0 %6770
        %6772 = vrot.lane.b32.xlu0 %v6727, 112
        %v6773 = vpop.permute.xlu0 %6772
        %6774 = vrot.lane.b32.xlu0 %v6728, 112
        %v6775 = vpop.permute.xlu0 %6774
        %6776 = vrot.lane.b32.xlu0 %v6729, 112
        %v6777 = vpop.permute.xlu0 %6776
        %v6786 = vmul.f32 %v6737, %v6763
        %v6787 = vmul.f32 %v6737, %v6765
        %v6788 = vmul.f32 %v6741, %v6767
        %v6789 = vmul.f32 %v6741, %v6769
        %v6790 = vmul.f32 %v6745, %v6771
        %v6791 = vmul.f32 %v6745, %v6773
        %v6792 = vmul.f32 %v6749, %v6775
        %v6793 = vmul.f32 %v6749, %v6777
        %v6794 = vadd.f32 %v6470, %v6786
        %v6795 = vadd.f32 %v6471, %v6787
        %v6796 = vadd.f32 %v6472, %v6788
        %v6797 = vadd.f32 %v6473, %v6789
        %v6798 = vadd.f32 %v6474, %v6790
        %v6799 = vadd.f32 %v6475, %v6791
        %v6800 = vadd.f32 %v6476, %v6792
        %v6801 = vadd.f32 %v6477, %v6793
        %s6802 = scalar_lea.vmem [#allocation25], 24
        %v6803 = vld [vmem:[%s6802] sm:$0x1]
        %v6804 = vld [vmem:[%s6802 + $0x1] sm:$0x1]
        %v6805 = vld [vmem:[%s6802 + $0x2] sm:$0x1]
        %v6806 = vld [vmem:[%s6802 + $0x3] sm:$0x1]
        %v6807 = vld [vmem:[#allocation3 + $0x13] sm:$0xff]
        %v6808 = vld [vmem:[#allocation3 + $0x1b] sm:$0xff]
        %v6809 = vld [vmem:[#allocation3 + $0x43] sm:$0xff]
        %v6810 = vld [vmem:[#allocation3 + $0x4b] sm:$0xff]
        %v6811 = vld [vmem:[#allocation3 + $0x73] sm:$0xff]
        %v6812 = vld [vmem:[#allocation3 + $0x7b] sm:$0xff]
        %v6813 = vld [vmem:[#allocation3 + $0xa3] sm:$0xff]
        %v6814 = vld [vmem:[#allocation3 + $0xab] sm:$0xff]
        %v6819 = vlaneseq
        %v6820 = vshrl.u32 %v6819, 7
        %v6821 = vsub.s32 0, %v6820
        %v6822 = vrot.slane %v6803, %v6821
        %v6823 = vlaneseq
        %v6824 = vshrl.u32 %v6823, 7
        %v6825 = vsub.s32 0, %v6824
        %v6826 = vrot.slane %v6804, %v6825
        %v6827 = vlaneseq
        %v6828 = vshrl.u32 %v6827, 7
        %v6829 = vsub.s32 0, %v6828
        %v6830 = vrot.slane %v6805, %v6829
        %v6831 = vlaneseq
        %v6832 = vshrl.u32 %v6831, 7
        %v6833 = vsub.s32 0, %v6832
        %v6834 = vrot.slane %v6806, %v6833
        %6847 = vrot.lane.b32.xlu0 %v6807, 112
        %v6848 = vpop.permute.xlu0 %6847
        %6849 = vrot.lane.b32.xlu0 %v6808, 112
        %v6850 = vpop.permute.xlu0 %6849
        %6851 = vrot.lane.b32.xlu0 %v6809, 112
        %v6852 = vpop.permute.xlu0 %6851
        %6853 = vrot.lane.b32.xlu0 %v6810, 112
        %v6854 = vpop.permute.xlu0 %6853
        %6855 = vrot.lane.b32.xlu0 %v6811, 112
        %v6856 = vpop.permute.xlu0 %6855
        %6857 = vrot.lane.b32.xlu0 %v6812, 112
        %v6858 = vpop.permute.xlu0 %6857
        %6859 = vrot.lane.b32.xlu0 %v6813, 112
        %v6860 = vpop.permute.xlu0 %6859
        %6861 = vrot.lane.b32.xlu0 %v6814, 112
        %v6862 = vpop.permute.xlu0 %6861
        %v6871 = vmul.f32 %v6822, %v6848
        %v6872 = vmul.f32 %v6822, %v6850
        %v6873 = vmul.f32 %v6826, %v6852
        %v6874 = vmul.f32 %v6826, %v6854
        %v6875 = vmul.f32 %v6830, %v6856
        %v6876 = vmul.f32 %v6830, %v6858
        %v6877 = vmul.f32 %v6834, %v6860
        %v6878 = vmul.f32 %v6834, %v6862
        %v6879 = vadd.f32 %v6547, %v6871
        %v6880 = vadd.f32 %v6548, %v6872
        %v6881 = vadd.f32 %v6549, %v6873
        %v6882 = vadd.f32 %v6550, %v6874
        %v6883 = vadd.f32 %v6551, %v6875
        %v6884 = vadd.f32 %v6552, %v6876
        %v6885 = vadd.f32 %v6553, %v6877
        %v6886 = vadd.f32 %v6554, %v6878
        %s6887 = scalar_lea.vmem [#allocation25], 28
        %v6888 = vld [vmem:[%s6887] sm:$0x1]
        %v6889 = vld [vmem:[%s6887 + $0x1] sm:$0x1]
        %v6890 = vld [vmem:[%s6887 + $0x2] sm:$0x1]
        %v6891 = vld [vmem:[%s6887 + $0x3] sm:$0x1]
        %v6892 = vld [vmem:[#allocation3 + $0x16] sm:$0xff]
        %v6893 = vld [vmem:[#allocation3 + $0x1e] sm:$0xff]
        %v6894 = vld [vmem:[#allocation3 + $0x46] sm:$0xff]
        %v6895 = vld [vmem:[#allocation3 + $0x4e] sm:$0xff]
        %v6896 = vld [vmem:[#allocation3 + $0x76] sm:$0xff]
        %v6897 = vld [vmem:[#allocation3 + $0x7e] sm:$0xff]
        %v6898 = vld [vmem:[#allocation3 + $0xa6] sm:$0xff]
        %v6899 = vld [vmem:[#allocation3 + $0xae] sm:$0xff]
        %v6904 = vlaneseq
        %v6905 = vshrl.u32 %v6904, 7
        %v6906 = vsub.s32 0, %v6905
        %v6907 = vrot.slane %v6888, %v6906
        %v6908 = vlaneseq
        %v6909 = vshrl.u32 %v6908, 7
        %v6910 = vsub.s32 0, %v6909
        %v6911 = vrot.slane %v6889, %v6910
        %v6912 = vlaneseq
        %v6913 = vshrl.u32 %v6912, 7
        %v6914 = vsub.s32 0, %v6913
        %v6915 = vrot.slane %v6890, %v6914
        %v6916 = vlaneseq
        %v6917 = vshrl.u32 %v6916, 7
        %v6918 = vsub.s32 0, %v6917
        %v6919 = vrot.slane %v6891, %v6918
        %6932 = vrot.lane.b32.xlu0 %v6892, 112
        %v6933 = vpop.permute.xlu0 %6932
        %6934 = vrot.lane.b32.xlu0 %v6893, 112
        %v6935 = vpop.permute.xlu0 %6934
        %6936 = vrot.lane.b32.xlu0 %v6894, 112
        %v6937 = vpop.permute.xlu0 %6936
        %6938 = vrot.lane.b32.xlu0 %v6895, 112
        %v6939 = vpop.permute.xlu0 %6938
        %6940 = vrot.lane.b32.xlu0 %v6896, 112
        %v6941 = vpop.permute.xlu0 %6940
        %6942 = vrot.lane.b32.xlu0 %v6897, 112
        %v6943 = vpop.permute.xlu0 %6942
        %6944 = vrot.lane.b32.xlu0 %v6898, 112
        %v6945 = vpop.permute.xlu0 %6944
        %6946 = vrot.lane.b32.xlu0 %v6899, 112
        %v6947 = vpop.permute.xlu0 %6946
        %v6956 = vmul.f32 %v6907, %v6933
        %v6957 = vmul.f32 %v6907, %v6935
        %v6958 = vmul.f32 %v6911, %v6937
        %v6959 = vmul.f32 %v6911, %v6939
        %v6960 = vmul.f32 %v6915, %v6941
        %v6961 = vmul.f32 %v6915, %v6943
        %v6962 = vmul.f32 %v6919, %v6945
        %v6963 = vmul.f32 %v6919, %v6947
        %v6964 = vadd.f32 %v6624, %v6956
        %v6965 = vadd.f32 %v6625, %v6957
        %v6966 = vadd.f32 %v6626, %v6958
        %v6967 = vadd.f32 %v6627, %v6959
        %v6968 = vadd.f32 %v6628, %v6960
        %v6969 = vadd.f32 %v6629, %v6961
        %v6970 = vadd.f32 %v6630, %v6962
        %v6971 = vadd.f32 %v6631, %v6963
        %s6972 = scalar_lea.vmem [#allocation25], 32
        %v6973 = vld [vmem:[%s6972] sm:$0x1]
        %v6974 = vld [vmem:[%s6972 + $0x1] sm:$0x1]
        %v6975 = vld [vmem:[%s6972 + $0x2] sm:$0x1]
        %v6976 = vld [vmem:[%s6972 + $0x3] sm:$0x1]
        %v6977 = vld [vmem:[#allocation3 + $0x19] sm:$0xff]
        %v6978 = vld [vmem:[#allocation3 + $0x21] sm:$0xff]
        %v6979 = vld [vmem:[#allocation3 + $0x49] sm:$0xff]
        %v6980 = vld [vmem:[#allocation3 + $0x51] sm:$0xff]
        %v6981 = vld [vmem:[#allocation3 + $0x79] sm:$0xff]
        %v6982 = vld [vmem:[#allocation3 + $0x81] sm:$0xff]
        %v6983 = vld [vmem:[#allocation3 + $0xa9] sm:$0xff]
        %v6984 = vld [vmem:[#allocation3 + $0xb1] sm:$0xff]
        %v6989 = vlaneseq
        %v6990 = vshrl.u32 %v6989, 7
        %v6991 = vsub.s32 0, %v6990
        %v6992 = vrot.slane %v6973, %v6991
        %v6993 = vlaneseq
        %v6994 = vshrl.u32 %v6993, 7
        %v6995 = vsub.s32 0, %v6994
        %v6996 = vrot.slane %v6974, %v6995
        %v6997 = vlaneseq
        %v6998 = vshrl.u32 %v6997, 7
        %v6999 = vsub.s32 0, %v6998
        %v7000 = vrot.slane %v6975, %v6999
        %v7001 = vlaneseq
        %v7002 = vshrl.u32 %v7001, 7
        %v7003 = vsub.s32 0, %v7002
        %v7004 = vrot.slane %v6976, %v7003
        %7017 = vrot.lane.b32.xlu0 %v6977, 112
        %v7018 = vpop.permute.xlu0 %7017
        %7019 = vrot.lane.b32.xlu0 %v6978, 112
        %v7020 = vpop.permute.xlu0 %7019
        %7021 = vrot.lane.b32.xlu0 %v6979, 112
        %v7022 = vpop.permute.xlu0 %7021
        %7023 = vrot.lane.b32.xlu0 %v6980, 112
        %v7024 = vpop.permute.xlu0 %7023
        %7025 = vrot.lane.b32.xlu0 %v6981, 112
        %v7026 = vpop.permute.xlu0 %7025
        %7027 = vrot.lane.b32.xlu0 %v6982, 112
        %v7028 = vpop.permute.xlu0 %7027
        %7029 = vrot.lane.b32.xlu0 %v6983, 112
        %v7030 = vpop.permute.xlu0 %7029
        %7031 = vrot.lane.b32.xlu0 %v6984, 112
        %v7032 = vpop.permute.xlu0 %7031
        %v7041 = vmul.f32 %v6992, %v7018
        %v7042 = vmul.f32 %v6992, %v7020
        %v7043 = vmul.f32 %v6996, %v7022
        %v7044 = vmul.f32 %v6996, %v7024
        %v7045 = vmul.f32 %v7000, %v7026
        %v7046 = vmul.f32 %v7000, %v7028
        %v7047 = vmul.f32 %v7004, %v7030
        %v7048 = vmul.f32 %v7004, %v7032
        %v7049 = vadd.f32 %v6709, %v7041
        %v7050 = vadd.f32 %v6710, %v7042
        %v7051 = vadd.f32 %v6711, %v7043
        %v7052 = vadd.f32 %v6712, %v7044
        %v7053 = vadd.f32 %v6713, %v7045
        %v7054 = vadd.f32 %v6714, %v7046
        %v7055 = vadd.f32 %v6715, %v7047
        %v7056 = vadd.f32 %v6716, %v7048
        %s7057 = scalar_lea.vmem [#allocation25], 36
        %v7058 = vld [vmem:[%s7057] sm:$0x1]
        %v7059 = vld [vmem:[%s7057 + $0x1] sm:$0x1]
        %v7060 = vld [vmem:[%s7057 + $0x2] sm:$0x1]
        %v7061 = vld [vmem:[%s7057 + $0x3] sm:$0x1]
        %v7062 = vld [vmem:[#allocation3 + $0x1c] sm:$0xff]
        %v7063 = vld [vmem:[#allocation3 + $0x24] sm:$0xff]
        %v7064 = vld [vmem:[#allocation3 + $0x4c] sm:$0xff]
        %v7065 = vld [vmem:[#allocation3 + $0x54] sm:$0xff]
        %v7066 = vld [vmem:[#allocation3 + $0x7c] sm:$0xff]
        %v7067 = vld [vmem:[#allocation3 + $0x84] sm:$0xff]
        %v7068 = vld [vmem:[#allocation3 + $0xac] sm:$0xff]
        %v7069 = vld [vmem:[#allocation3 + $0xb4] sm:$0xff]
        %v7074 = vlaneseq
        %v7075 = vshrl.u32 %v7074, 7
        %v7076 = vsub.s32 0, %v7075
        %v7077 = vrot.slane %v7058, %v7076
        %v7078 = vlaneseq
        %v7079 = vshrl.u32 %v7078, 7
        %v7080 = vsub.s32 0, %v7079
        %v7081 = vrot.slane %v7059, %v7080
        %v7082 = vlaneseq
        %v7083 = vshrl.u32 %v7082, 7
        %v7084 = vsub.s32 0, %v7083
        %v7085 = vrot.slane %v7060, %v7084
        %v7086 = vlaneseq
        %v7087 = vshrl.u32 %v7086, 7
        %v7088 = vsub.s32 0, %v7087
        %v7089 = vrot.slane %v7061, %v7088
        %7102 = vrot.lane.b32.xlu0 %v7062, 112
        %v7103 = vpop.permute.xlu0 %7102
        %7104 = vrot.lane.b32.xlu0 %v7063, 112
        %v7105 = vpop.permute.xlu0 %7104
        %7106 = vrot.lane.b32.xlu0 %v7064, 112
        %v7107 = vpop.permute.xlu0 %7106
        %7108 = vrot.lane.b32.xlu0 %v7065, 112
        %v7109 = vpop.permute.xlu0 %7108
        %7110 = vrot.lane.b32.xlu0 %v7066, 112
        %v7111 = vpop.permute.xlu0 %7110
        %7112 = vrot.lane.b32.xlu0 %v7067, 112
        %v7113 = vpop.permute.xlu0 %7112
        %7114 = vrot.lane.b32.xlu0 %v7068, 112
        %v7115 = vpop.permute.xlu0 %7114
        %7116 = vrot.lane.b32.xlu0 %v7069, 112
        %v7117 = vpop.permute.xlu0 %7116
        %v7126 = vmul.f32 %v7077, %v7103
        %v7127 = vmul.f32 %v7077, %v7105
        %v7128 = vmul.f32 %v7081, %v7107
        %v7129 = vmul.f32 %v7081, %v7109
        %v7130 = vmul.f32 %v7085, %v7111
        %v7131 = vmul.f32 %v7085, %v7113
        %v7132 = vmul.f32 %v7089, %v7115
        %v7133 = vmul.f32 %v7089, %v7117
        %v7134 = vadd.f32 %v6794, %v7126
        %v7135 = vadd.f32 %v6795, %v7127
        %v7136 = vadd.f32 %v6796, %v7128
        %v7137 = vadd.f32 %v6797, %v7129
        %v7138 = vadd.f32 %v6798, %v7130
        %v7139 = vadd.f32 %v6799, %v7131
        %v7140 = vadd.f32 %v6800, %v7132
        %v7141 = vadd.f32 %v6801, %v7133
        %s7142 = scalar_lea.vmem [#allocation25], 40
        %v7143 = vld [vmem:[%s7142] sm:$0x1]
        %v7144 = vld [vmem:[%s7142 + $0x1] sm:$0x1]
        %v7145 = vld [vmem:[%s7142 + $0x2] sm:$0x1]
        %v7146 = vld [vmem:[%s7142 + $0x3] sm:$0x1]
        %v7147 = vld [vmem:[#allocation3 + $0x1f] sm:$0xff]
        %v7148 = vld [vmem:[#allocation3 + $0x27] sm:$0xff]
        %v7149 = vld [vmem:[#allocation3 + $0x4f] sm:$0xff]
        %v7150 = vld [vmem:[#allocation3 + $0x57] sm:$0xff]
        %v7151 = vld [vmem:[#allocation3 + $0x7f] sm:$0xff]
        %v7152 = vld [vmem:[#allocation3 + $0x87] sm:$0xff]
        %v7153 = vld [vmem:[#allocation3 + $0xaf] sm:$0xff]
        %v7154 = vld [vmem:[#allocation3 + $0xb7] sm:$0xff]
        %v7159 = vlaneseq
        %v7160 = vshrl.u32 %v7159, 7
        %v7161 = vsub.s32 0, %v7160
        %v7162 = vrot.slane %v7143, %v7161
        %v7163 = vlaneseq
        %v7164 = vshrl.u32 %v7163, 7
        %v7165 = vsub.s32 0, %v7164
        %v7166 = vrot.slane %v7144, %v7165
        %v7167 = vlaneseq
        %v7168 = vshrl.u32 %v7167, 7
        %v7169 = vsub.s32 0, %v7168
        %v7170 = vrot.slane %v7145, %v7169
        %v7171 = vlaneseq
        %v7172 = vshrl.u32 %v7171, 7
        %v7173 = vsub.s32 0, %v7172
        %v7174 = vrot.slane %v7146, %v7173
        %7187 = vrot.lane.b32.xlu0 %v7147, 112
        %v7188 = vpop.permute.xlu0 %7187
        %7189 = vrot.lane.b32.xlu0 %v7148, 112
        %v7190 = vpop.permute.xlu0 %7189
        %7191 = vrot.lane.b32.xlu0 %v7149, 112
        %v7192 = vpop.permute.xlu0 %7191
        %7193 = vrot.lane.b32.xlu0 %v7150, 112
        %v7194 = vpop.permute.xlu0 %7193
        %7195 = vrot.lane.b32.xlu0 %v7151, 112
        %v7196 = vpop.permute.xlu0 %7195
        %7197 = vrot.lane.b32.xlu0 %v7152, 112
        %v7198 = vpop.permute.xlu0 %7197
        %7199 = vrot.lane.b32.xlu0 %v7153, 112
        %v7200 = vpop.permute.xlu0 %7199
        %7201 = vrot.lane.b32.xlu0 %v7154, 112
        %v7202 = vpop.permute.xlu0 %7201
        %v7211 = vmul.f32 %v7162, %v7188
        %v7212 = vmul.f32 %v7162, %v7190
        %v7213 = vmul.f32 %v7166, %v7192
        %v7214 = vmul.f32 %v7166, %v7194
        %v7215 = vmul.f32 %v7170, %v7196
        %v7216 = vmul.f32 %v7170, %v7198
        %v7217 = vmul.f32 %v7174, %v7200
        %v7218 = vmul.f32 %v7174, %v7202
        %v7219 = vadd.f32 %v6879, %v7211
        %v7220 = vadd.f32 %v6880, %v7212
        %v7221 = vadd.f32 %v6881, %v7213
        %v7222 = vadd.f32 %v6882, %v7214
        %v7223 = vadd.f32 %v6883, %v7215
        %v7224 = vadd.f32 %v6884, %v7216
        %v7225 = vadd.f32 %v6885, %v7217
        %v7226 = vadd.f32 %v6886, %v7218
        %v7227 = vadd.f32 %v7049, %v7134
        %v7228 = vadd.f32 %v7050, %v7135
        %v7229 = vadd.f32 %v7051, %v7136
        %v7230 = vadd.f32 %v7052, %v7137
        %v7231 = vadd.f32 %v7053, %v7138
        %v7232 = vadd.f32 %v7054, %v7139
        %v7233 = vadd.f32 %v7055, %v7140
        %v7234 = vadd.f32 %v7056, %v7141
        %v7235 = vadd.f32 %v7219, %v6964
        %v7236 = vadd.f32 %v7220, %v6965
        %v7237 = vadd.f32 %v7221, %v6966
        %v7238 = vadd.f32 %v7222, %v6967
        %v7239 = vadd.f32 %v7223, %v6968
        %v7240 = vadd.f32 %v7224, %v6969
        %v7241 = vadd.f32 %v7225, %v6970
        %v7242 = vadd.f32 %v7226, %v6971
        %v7243 = vadd.f32 %v7227, %v7235
        %v7244 = vadd.f32 %v7228, %v7236
        %v7245 = vadd.f32 %v7229, %v7237
        %v7246 = vadd.f32 %v7230, %v7238
        %v7247 = vadd.f32 %v7231, %v7239
        %v7248 = vadd.f32 %v7232, %v7240
        %v7249 = vadd.f32 %v7233, %v7241
        %v7250 = vadd.f32 %v7234, %v7242
        %s7251 = scalar_lea.vmem [#allocation27], 12
        %v7252 = vld [vmem:[%s7251] sm:$0x1]
        %v7253 = vld [vmem:[%s7251 + $0x1] sm:$0x1]
        %v7254 = vld [vmem:[%s7251 + $0x2] sm:$0x1]
        %v7255 = vld [vmem:[%s7251 + $0x3] sm:$0x1]
        %v7260 = vlaneseq
        %v7261 = vshrl.u32 %v7260, 7
        %v7262 = vsub.s32 0, %v7261
        %v7263 = vrot.slane %v7252, %v7262
        %v7264 = vlaneseq
        %v7265 = vshrl.u32 %v7264, 7
        %v7266 = vsub.s32 0, %v7265
        %v7267 = vrot.slane %v7253, %v7266
        %v7268 = vlaneseq
        %v7269 = vshrl.u32 %v7268, 7
        %v7270 = vsub.s32 0, %v7269
        %v7271 = vrot.slane %v7254, %v7270
        %v7272 = vlaneseq
        %v7273 = vshrl.u32 %v7272, 7
        %v7274 = vsub.s32 0, %v7273
        %v7275 = vrot.slane %v7255, %v7274
        %v7280 = vadd.f32 %v7243, %v7263
        %v7281 = vadd.f32 %v7244, %v7263
        %v7282 = vadd.f32 %v7245, %v7267
        %v7283 = vadd.f32 %v7246, %v7267
        %v7284 = vadd.f32 %v7247, %v7271
        %v7285 = vadd.f32 %v7248, %v7271
        %v7286 = vadd.f32 %v7249, %v7275
        %v7287 = vadd.f32 %v7250, %v7275
        %s7288 = scalar_lea.vmem %s742, 192 [#allocation28]
        %7289 = vst.msk [vmem:[%s7288] sm:$0xff] %vm800, %v7280
        %7290 = vst.msk [vmem:[%s7288 + $0x8] sm:$0xff] %vm800, %v7281
        %7291 = vst.msk [vmem:[%s7288 + $0x10] sm:$0xff] %vm800, %v7282
        %7292 = vst.msk [vmem:[%s7288 + $0x18] sm:$0xff] %vm800, %v7283
        %7293 = vst.msk [vmem:[%s7288 + $0x20] sm:$0xff] %vm800, %v7284
        %7294 = vst.msk [vmem:[%s7288 + $0x28] sm:$0xff] %vm800, %v7285
        %7295 = vst.msk [vmem:[%s7288 + $0x30] sm:$0xff] %vm800, %v7286
        %7296 = vst.msk [vmem:[%s7288 + $0x38] sm:$0xff] %vm800, %v7287
        %s7297 = sand.u32 %s389, 1
        %s7298 = scalar_lea.sflag [#allocation6], %s7297
        %s7299 = sand.u32 %s389, 1
        %s7300 = smul.addr %s7299, 256
        %s7301 = scalar_lea.vmem [#allocation28], %s7300
        // Predicated region
        $region145: #{tpu_custom_call.1} parent=83 // pred_check
          %p7302 = pneg %p399
        $region146: #{tpu_custom_call.1} parent=83 // pred_check_branch
          %7304 = sbr.rel (%p7302) target = $region148
        $region147: #{tpu_custom_call.1} parent=83 // pred_region
          %s7306 = ssub.s32 4096, 4096
          %7307 = vsyncadd %s7298, %s7306
          %s7308 = smul.addr %s40, 32
          %s7309 = smul.addr %s7308, 128
          %s7310 = scalar_lea.hbm %s16, %s7309
          %s7311 = sshll.u32 %s7301, 4
          %s7312 = int_to_ptr.vmem [resolvable:$true] %s7311
          %7317 = dma.vmem_to_hbm [thread:$0]  %s7312, 4096, %s7310, %s7298, 128, 128, 8
        $region148: #{tpu_custom_call.1} parent=83 // pred_fallthru
          _
      $region84: #{tpu_custom_call.1} parent=5 // pred_fallthru
        _
      %p7318 = scmp.le.s32.totalorder 2, %s35
      // Predicated region
      $region149: #{tpu_custom_call.1} parent=5 // pred_check
        %p7319 = pneg %p7318
      $region150: #{tpu_custom_call.1} parent=5 // pred_check_branch
        %7321 = sbr.rel (%p7319) target = $region152
      $region151: #{tpu_custom_call.1} parent=5 // pred_region
        %s7322 = ssub.s32 %s35, 2
        // Predicated region
        $region153: #{tpu_custom_call.1} parent=151 // pred_check
          %p7323 = pneg %p405
        $region154: #{tpu_custom_call.1} parent=151 // pred_check_branch
          %7325 = sbr.rel (%p7323) target = $region156
        $region155: #{tpu_custom_call.1} parent=151 // pred_region
          %s7326 = sand.u32 %s390, 1
          %s7327 = scalar_lea.sflag [#allocation6], %s7326
          %s7328 = sand.u32 %s390, 1
          %s7329 = smul.addr %s7328, 256
          %s7330 = scalar_lea.vmem [#allocation28], %s7329
          %7331 = dma.done %s7327, 4096
        $region156: #{tpu_custom_call.1} parent=151 // pred_fallthru
          _
      $region152: #{tpu_custom_call.1} parent=5 // pred_fallthru
        _
    $region6: #{tpu_custom_call.1} parent=1 // loop_footer
      %s39 = sadd.s32 1, %s35
    $region7: #{tpu_custom_call.1} parent=1 // loop_footer_branch
      %34 = sbr.rel target = $region3
    $region8: #{tpu_custom_call.1} parent=1 // loop_exit
      _
    %7332 = vsyncpa [#allocation5], 1
    %s7333 = scalar_lea.sflag [#allocation5], 1
    %7334 = vsyncpa %s7333, 1
    %7335 = vsyncpa [#allocation8], 1
    %7336 = vsyncpa [#allocation11], 1
    %7337 = vsyncpa [#allocation14], 1
    %7338 = vsyncpa [#allocation17], 1
    %7339 = vsyncpa [#allocation20], 1
    %7340 = vsyncpa [#allocation23], 1
    %7341 = vsyncpa [#allocation26], 1
    %7342 = vsyncpa [#allocation6], 1
    %s7343 = scalar_lea.sflag [#allocation6], 1
    %7344 = vsyncpa %s7343, 1

</llo_original>
